<compile_context>
chip_gen: v7x
topology: tpu7x:2x2x1
jax: 0.10.0
libtpu: 0.0.40
codegen_flags: <defaults>
</compile_context>

<pallas_src>
import functools

import jax
import jax.numpy as jnp
from jax import lax
from jax.experimental import pallas as pl
from jax.experimental.pallas import tpu as pltpu

EPS = 1e-5      # nn.BatchNorm2d default eps
LANE = 128
PC = 8          # front guard rows of the f32 staging slab (sublane aligned)


def _round_up(x, m):
    return (x + m - 1) // m * m


# ----------------------------- kernel helpers ------------------------------ #

def _zero_guards(cc_ref, ctr_ref, *, HW, PF):
    """Zero only the guard rows of the two scratch slabs (data region is fully
    overwritten every image, so guards are the only rows that must be clean)."""
    lr, kcp = cc_ref.shape
    cc_ref[0:PF, :] = jnp.zeros((PF, kcp), jnp.bfloat16)
    cc_ref[PF + HW:lr, :] = jnp.zeros((lr - PF - HW, kcp), jnp.bfloat16)
    lc, cp = ctr_ref.shape
    ctr_ref[0:PC, :] = jnp.zeros((PC, cp), jnp.float32)
    ctr_ref[PC + HW:lc, :] = jnp.zeros((lc - PC - HW, cp), jnp.float32)


def _conv3x3_acc(a, w_ref, cc_ref, ctr_ref, ml_ref, mr_ref, *, W, HW, CP, PF):
    """3x3 conv (pad=1, stride=1) of one image as 3 MXU dots with K = 3*CP.

    a       : (HW, CP) f32 activation (flattened NHWC, channel-padded).
    w_ref   : (3, 3*CP, CP) bf16 weights, w_ref[ky][kx*CP + ci, co].
    cc_ref  : (LR, 3*CP) bf16 slab; lanes hold the kx = -1/0/+1 column-shifted
              copies of the activation (column-edge masks folded in), rows are
              H-padded with zero guards so row edges need no masking.
    ctr_ref : (HW + 2*PC, CP) f32 staging slab used to build the two +/-1
              row-shifted planes from aligned data.
    """
    ctr_ref[PC:PC + HW, :] = a
    # one explicit f32 -> bf16 cast of the activation (center plane)
    cc_ref[PF:PF + HW, CP:2 * CP] = a.astype(jnp.bfloat16)
    # kx = -1 / +1 planes: row-shifted + column-edge-masked copies (2 shifted
    # copies per conv instead of 6 unaligned per-tap slices).
    cc_ref[PF:PF + HW, 0:CP] = (
        ctr_ref[PC - 1:PC - 1 + HW, :] * ml_ref[...]).astype(jnp.bfloat16)
    cc_ref[PF:PF + HW, 2 * CP:3 * CP] = (
        ctr_ref[PC + 1:PC + 1 + HW, :] * mr_ref[...]).astype(jnp.bfloat16)
    # 3 dots of K = 3*CP (fills the 256-deep MXU on v6e/v7x), 2 VPU adds.
    acc = jnp.dot(cc_ref[PF - W:PF - W + HW, :], w_ref[0],
                  preferred_element_type=jnp.float32)
    acc = acc + jnp.dot(cc_ref[PF:PF + HW, :], w_ref[1],
                        preferred_element_type=jnp.float32)
    acc = acc + jnp.dot(cc_ref[PF + W:PF + W + HW, :], w_ref[2],
                        preferred_element_type=jnp.float32)
    return acc


# ----------------------------- kernel bodies ------------------------------- #

def _conv1_stats_kernel(x_ref, w_ref, ml_ref, mr_ref,
                        y_ref, sm_ref, sq_ref, cc_ref, ctr_ref,
                        *, H, W, CP, PF, B):
    """conv1 on B images + per-step bn1 partial (sum, sum-of-squares)."""
    HW = H * W
    _zero_guards(cc_ref, ctr_ref, HW=HW, PF=PF)
    sm = jnp.zeros((1, CP), jnp.float32)
    sq = jnp.zeros((1, CP), jnp.float32)
    for b in range(B):                      # static unroll over images/step
        acc = _conv3x3_acc(x_ref[b], w_ref, cc_ref, ctr_ref, ml_ref, mr_ref,
                           W=W, HW=HW, CP=CP, PF=PF)
        y_ref[b] = acc.astype(y_ref.dtype)
        sm = sm + jnp.sum(acc, axis=0, keepdims=True)
        sq = sq + jnp.sum(acc * acc, axis=0, keepdims=True)
    sm_ref[0] = sm
    sq_ref[0] = sq


def _bn_relu_conv2_stats_kernel(y1_ref, sc_ref, sh_ref, w_ref, ml_ref, mr_ref,
                                y2_ref, sm_ref, sq_ref, cc_ref, ctr_ref,
                                *, H, W, CP, PF, B):
    """Fused bn1 -> relu -> conv2 on B images + per-step bn2 partial stats.
    The normalised intermediate never round-trips through HBM."""
    HW = H * W
    _zero_guards(cc_ref, ctr_ref, HW=HW, PF=PF)
    scale = sc_ref[...]
    shift = sh_ref[...]
    sm = jnp.zeros((1, CP), jnp.float32)
    sq = jnp.zeros((1, CP), jnp.float32)
    for b in range(B):
        a = jnp.maximum(y1_ref[b].astype(jnp.float32) * scale + shift, 0.0)
        acc = _conv3x3_acc(a, w_ref, cc_ref, ctr_ref, ml_ref, mr_ref,
                           W=W, HW=HW, CP=CP, PF=PF)
        y2_ref[b] = acc.astype(y2_ref.dtype)
        sm = sm + jnp.sum(acc, axis=0, keepdims=True)
        sq = sq + jnp.sum(acc * acc, axis=0, keepdims=True)
    sm_ref[0] = sm
    sq_ref[0] = sq


def _bn2_residual_relu_kernel(y2_ref, sc_ref, sh_ref, x_ref, o_ref):
    """bn2 -> + residual -> relu (all elementwise, f32 math)."""
    z = y2_ref[...].astype(jnp.float32) * sc_ref[...] + sh_ref[...] + x_ref[...]
    o_ref[...] = jnp.maximum(z, 0.0)


# ------------------------------ host helpers -------------------------------- #

def _bn_scale_shift(sm, sq, gamma, beta, count):
    """Fold global (N,H,W) batch statistics into a (1, CP) scale/shift pair."""
    mean = jnp.sum(sm, axis=0) / count
    var = jnp.maximum(jnp.sum(sq, axis=0) / count - mean * mean, 0.0)
    scale = gamma * lax.rsqrt(var + EPS)
    shift = beta - mean * scale
    return scale, shift


def _pick_vmem_limit():
    try:
        info = pltpu.get_tpu_info()
        cap = int(getattr(info, "vmem_capacity_bytes", 64 * 1024 * 1024))
    except Exception:                       # conservative fallback
        cap = 64 * 1024 * 1024
    return min(cap * 3 // 4, 112 * 1024 * 1024)


def _pick_images_per_block(n, hw, cp, lr, vmem_limit):
    """Largest divisor of n whose double-buffered footprint fits comfortably."""
    fixed = lr * 3 * cp * 2 + (hw + 2 * PC) * cp * 4 + 2 * 9 * cp * cp * 2
    for b in (8, 4, 2, 1):
        if n % b:
            continue
        per_img = 2 * hw * cp * 10          # worst-kernel, 2-buffered I/O bytes
        if fixed + b * per_img <= (vmem_limit * 3) // 5:
            return b
    return 1


# ------------------------------ forward pass -------------------------------- #

def basic_block_forward(x_nchw, params):
    """BasicBlock.forward (stride=1, downsample=None, training-mode BN)."""
    n, cin, h, w = x_nchw.shape
    cout = params["w1"].shape[0]
    assert cin == cout, "stride=1 / downsample=None BasicBlock needs Cin == Cout"

    cp = _round_up(max(cin, LANE), LANE)          # lane-dense padded channels
    hw = h * w
    pf = _round_up(max(w, 16), 16)                # front guard rows of cc slab
    lr = _round_up(pf + hw + w, 16)               # cc slab rows (guards + data)
    lc = hw + 2 * PC                              # f32 staging slab rows
    count = float(n * hw)
    f32, bf16 = jnp.float32, jnp.bfloat16

    vmem_limit = _pick_vmem_limit()
    if vmem_limit <= 48 * 1024 * 1024:            # v7x-class: keep 1 image/step
        bpb = 1
    else:                                         # v5e/v6e: amortize step cost
        bpb = _pick_images_per_block(n, hw, cp, lr, vmem_limit)
    steps = n // bpb

    # ---- plain-JAX layout glue: NCHW -> flattened, channel-padded NHWC ----
    x_flat = jnp.transpose(x_nchw, (0, 2, 3, 1)).astype(f32).reshape(n, hw, cin)
    x_pad = jnp.zeros((n, hw, cp), f32).at[:, :, :cin].set(x_flat)

    def flat_w(w_oihw):
        wt = jnp.transpose(w_oihw, (2, 3, 1, 0))                  # (ky,kx,ci,co)
        wp = jnp.zeros((3, 3, cp, cp), f32).at[:, :, :cin, :cout].set(wt)
        return wp.reshape(3, 3 * cp, cp).astype(bf16)             # [ky][kx*CP+ci, co]

    w1m, w2m = flat_w(params["w1"]), flat_w(params["w2"])

    def pad_vec(v):
        return jnp.zeros((1, cp), f32).at[:, :cout].set(v.reshape(1, -1))

    g1, b1 = pad_vec(params["g1"]), pad_vec(params["b1"])
    g2, b2 = pad_vec(params["g2"]), pad_vec(params["b2"])

    col = jnp.arange(hw) % w
    mask_l = (col >= 1).astype(f32).reshape(hw, 1)     # kx = -1 tap valid
    mask_r = (col <= w - 2).astype(f32).reshape(hw, 1)  # kx = +1 tap valid

    # ---- block specs ----
    act_spec = pl.BlockSpec((bpb, hw, cp), lambda i: (i, 0, 0))
    stat_spec = pl.BlockSpec((1, 1, cp), lambda i: (i, 0, 0))
    const_w = pl.BlockSpec((3, 3 * cp, cp), lambda i: (0, 0, 0))
    const_vec = pl.BlockSpec((1, cp), lambda i: (0, 0))
    const_mask = pl.BlockSpec((hw, 1), lambda i: (0, 0))

    cparams = pltpu.CompilerParams(dimension_semantics=("parallel",),
                                   vmem_limit_bytes=vmem_limit)
    scratch = [pltpu.VMEM((lr, 3 * cp), bf16), pltpu.VMEM((lc, cp), f32)]

    conv_flops = 2 * n * hw * 9 * cp * cp
    act_f32_bytes = n * hw * cp * 4
    act_bf16_bytes = n * hw * cp * 2
    w_bytes = 9 * cp * cp * 2

    # --- kernel 1: conv1 + per-step bn1 partial statistics ------------------
    y1, s1m, s1q = pl.pallas_call(
        functools.partial(_conv1_stats_kernel, H=h, W=w, CP=cp, PF=pf, B=bpb),
        grid=(steps,),
        in_specs=[act_spec, const_w, const_mask, const_mask],
        out_specs=(act_spec, stat_spec, stat_spec),
        out_shape=(jax.ShapeDtypeStruct((n, hw, cp), bf16),
                   jax.ShapeDtypeStruct((steps, 1, cp), f32),
                   jax.ShapeDtypeStruct((steps, 1, cp), f32)),
        scratch_shapes=scratch,
        compiler_params=cparams,
        cost_estimate=pl.CostEstimate(
            flops=conv_flops, transcendentals=0,
            bytes_accessed=act_f32_bytes + act_bf16_bytes + w_bytes),
    )(x_pad, w1m, mask_l, mask_r)

    scale1, shift1 = _bn_scale_shift(s1m, s1q, g1, b1, count)

    # --- kernel 2: fused bn1 -> relu -> conv2 + bn2 partial statistics ------
    y2, s2m, s2q = pl.pallas_call(
        functools.partial(_bn_relu_conv2_stats_kernel,
                          H=h, W=w, CP=cp, PF=pf, B=bpb),
        grid=(steps,),
        in_specs=[act_spec, const_vec, const_vec, const_w,
                  const_mask, const_mask],
        out_specs=(act_spec, stat_spec, stat_spec),
        out_shape=(jax.ShapeDtypeStruct((n, hw, cp), bf16),
                   jax.ShapeDtypeStruct((steps, 1, cp), f32),
                   jax.ShapeDtypeStruct((steps, 1, cp), f32)),
        scratch_shapes=scratch,
        compiler_params=cparams,
        cost_estimate=pl.CostEstimate(
            flops=conv_flops, transcendentals=0,
            bytes_accessed=2 * act_bf16_bytes + w_bytes),
    )(y1, scale1, shift1, w2m, mask_l, mask_r)

    scale2, shift2 = _bn_scale_shift(s2m, s2q, g2, b2, count)

    # --- kernel 3: bn2 -> + residual -> relu ---------------------------------
    out_flat = pl.pallas_call(
        _bn2_residual_relu_kernel,
        grid=(steps,),
        in_specs=[act_spec, const_vec, const_vec, act_spec],
        out_specs=act_spec,
        out_shape=jax.ShapeDtypeStruct((n, hw, cp), f32),
        compiler_params=cparams,
        cost_estimate=pl.CostEstimate(
            flops=4 * n * hw * cp, transcendentals=0,
            bytes_accessed=act_bf16_bytes + 2 * act_f32_bytes),
    )(y2, scale2, shift2, x_pad)

    out = out_flat.reshape(n, h, w, cp)[..., :cout]
    return jnp.transpose(out, (0, 3, 1, 2))


# --------------------------- pure-JAX reference ----------------------------- #

def _reference_basic_block(x_nchw, params):
    """Mirror of the kernel numerics: bf16 MXU operands with f32 accumulation,
    bf16 HBM storage of the two conv outputs, f32 training-mode BatchNorm
    statistics computed from the f32 conv outputs (eps=1e-5)."""
    def conv3x3(x, w):
        return lax.conv_general_dilated(
            x.astype(jnp.bfloat16), w.astype(jnp.bfloat16),
            window_strides=(1, 1), padding=((1, 1), (1, 1)),
            dimension_numbers=("NCHW", "OIHW", "NCHW"),
            preferred_element_type=jnp.float32)

    def bn(y_f32, y_apply, g, b):
        mean = jnp.mean(y_f32, axis=(0, 2, 3), keepdims=True)
        var = jnp.mean((y_f32 - mean) ** 2, axis=(0, 2, 3), keepdims=True)
        scale = lax.rsqrt(var + EPS) * g.reshape(1, -1, 1, 1)
        return y_apply * scale + (b.reshape(1, -1, 1, 1) - mean * scale)

    y1 = conv3x3(x_nchw, params["w1"])
    y1q = y1.astype(jnp.bfloat16).astype(jnp.float32)       # bf16 HBM storage
    a1 = jnp.maximum(bn(y1, y1q, params["g1"], params["b1"]), 0.0)
    y2 = conv3x3(a1, params["w2"])
    y2q = y2.astype(jnp.bfloat16).astype(jnp.float32)
    out = bn(y2, y2q, params["g2"], params["b2"]) + x_nchw
    return jnp.maximum(out, 0.0)


# ---------------------------------- main ------------------------------------ #

if __name__ == "__main__":
    N, C, H, W = 2, 4, 16, 16   # in_channels == out_channels (downsample=None)
    key = jax.random.PRNGKey(0)
    kx_, k1, k2, kg1, kb1, kg2, kb2 = jax.random.split(key, 7)

    x = jax.random.normal(kx_, (N, C, H, W), jnp.float32)
    params = {
        "w1": 0.1 * jax.random.normal(k1, (C, C, 3, 3), jnp.float32),
        "w2": 0.1 * jax.random.normal(k2, (C, C, 3, 3), jnp.float32),
        "g1": 1.0 + 0.1 * jax.random.normal(kg1, (1, C), jnp.float32),
        "b1": 0.1 * jax.random.normal(kb1, (1, C), jnp.float32),
        "g2": 1.0 + 0.1 * jax.random.normal(kg2, (1, C), jnp.float32),
        "b2": 0.1 * jax.random.normal(kb2, (1, C), jnp.float32),
    }

    fwd = jax.jit(basic_block_forward)
    out = jax.block_until_ready(fwd(x, params))
    ref = _reference_basic_block(x, params)

    assert out.shape == (N, C, H, W)
    err = float(jnp.max(jnp.abs(out - ref)))
    # bf16 MXU operands / bf16 intermediates => compare against the
    # bf16-mirroring reference with a correspondingly relaxed tolerance.
    assert err < 3e-2, f"max abs err = {err}"
    print("KERNEL_OK")
</pallas_src>

<mosaic_0001>
module attributes {stable_mosaic.version = 11 : i64} {
  func.func @_bn_relu_conv2_stats_kernel(%arg0: i32, %arg1: memref<1x256x128xbf16, #tpu.memory_space<vmem>>, %arg2: memref<1x128xf32, #tpu.memory_space<vmem>>, %arg3: memref<1x128xf32, #tpu.memory_space<vmem>>, %arg4: memref<3x384x128xbf16, #tpu.memory_space<vmem>>, %arg5: memref<256x1xf32, #tpu.memory_space<vmem>>, %arg6: memref<256x1xf32, #tpu.memory_space<vmem>>, %arg7: memref<1x256x128xbf16, #tpu.memory_space<vmem>>, %arg8: memref<1x1x128xf32, #tpu.memory_space<vmem>>, %arg9: memref<1x1x128xf32, #tpu.memory_space<vmem>>, %arg10: memref<288x384xbf16, #tpu.memory_space<vmem>>, %arg11: memref<272x128xf32, #tpu.memory_space<vmem>>) attributes {dimension_semantics = [#tpu.dimension_semantics<parallel>], iteration_bounds = array<i64: 2>, scalar_prefetch = 0 : i64, scratch_operands = 2 : i64, tpu.core_type = #tpu.core_type<tc>, window_params = [{transform_indices = @transform_0, window_bounds = array<i64: 1, 256, 128>}, {pipeline_mode = #tpu.pipeline_mode<synchronous>, transform_indices = @transform_1, window_bounds = array<i64: 1, 128>}, {pipeline_mode = #tpu.pipeline_mode<synchronous>, transform_indices = @transform_2, window_bounds = array<i64: 1, 128>}, {pipeline_mode = #tpu.pipeline_mode<synchronous>, transform_indices = @transform_3, window_bounds = array<i64: 3, 384, 128>}, {pipeline_mode = #tpu.pipeline_mode<synchronous>, transform_indices = @transform_4, window_bounds = array<i64: 256, 1>}, {pipeline_mode = #tpu.pipeline_mode<synchronous>, transform_indices = @transform_5, window_bounds = array<i64: 256, 1>}, {transform_indices = @transform_6, window_bounds = array<i64: 1, 256, 128>}, {transform_indices = @transform_7, window_bounds = array<i64: 1, 1, 128>}, {transform_indices = @transform_8, window_bounds = array<i64: 1, 1, 128>}]} {
    %cst = arith.constant 0.000000e+00 : bf16
    %0 = vector.broadcast %cst : bf16 to vector<16x384xbf16>
    %c0 = arith.constant 0 : index
    %c0_0 = arith.constant 0 : index
    %1 = vector.load %arg10[%c0, %c0_0] : memref<288x384xbf16, #tpu.memory_space<vmem>>, vector<16x384xbf16>
    tpu.vector_store %arg10[%c0, %c0_0], %0 {strides = array<i32>} : memref<288x384xbf16, #tpu.memory_space<vmem>>, vector<16x384xbf16>,
    %cst_1 = arith.constant 0.000000e+00 : bf16
    %2 = vector.broadcast %cst_1 : bf16 to vector<16x384xbf16>
    %c272 = arith.constant 272 : index
    %c0_2 = arith.constant 0 : index
    %3 = vector.load %arg10[%c272, %c0_2] : memref<288x384xbf16, #tpu.memory_space<vmem>>, vector<16x384xbf16>
    tpu.vector_store %arg10[%c272, %c0_2], %2 {strides = array<i32>} : memref<288x384xbf16, #tpu.memory_space<vmem>>, vector<16x384xbf16>,
    %cst_3 = arith.constant 0.000000e+00 : f32
    %4 = vector.broadcast %cst_3 : f32 to vector<8x128xf32>
    %c0_4 = arith.constant 0 : index
    %c0_5 = arith.constant 0 : index
    %5 = vector.load %arg11[%c0_4, %c0_5] : memref<272x128xf32, #tpu.memory_space<vmem>>, vector<8x128xf32>
    tpu.vector_store %arg11[%c0_4, %c0_5], %4 {strides = array<i32>} : memref<272x128xf32, #tpu.memory_space<vmem>>, vector<8x128xf32>,
    %cst_6 = arith.constant 0.000000e+00 : f32
    %6 = vector.broadcast %cst_6 : f32 to vector<8x128xf32>
    %c264 = arith.constant 264 : index
    %c0_7 = arith.constant 0 : index
    %7 = vector.load %arg11[%c264, %c0_7] : memref<272x128xf32, #tpu.memory_space<vmem>>, vector<8x128xf32>
    tpu.vector_store %arg11[%c264, %c0_7], %6 {strides = array<i32>} : memref<272x128xf32, #tpu.memory_space<vmem>>, vector<8x128xf32>,
    %c0_8 = arith.constant 0 : index
    %c0_9 = arith.constant 0 : index
    %8 = vector.load %arg2[%c0_8, %c0_9] : memref<1x128xf32, #tpu.memory_space<vmem>>, vector<1x128xf32>
    %c0_10 = arith.constant 0 : index
    %c0_11 = arith.constant 0 : index
    %9 = vector.load %arg3[%c0_10, %c0_11] : memref<1x128xf32, #tpu.memory_space<vmem>>, vector<1x128xf32>
    %cst_12 = arith.constant 0.000000e+00 : f32
    %10 = vector.broadcast %cst_12 : f32 to vector<1x128xf32>
    %cst_13 = arith.constant 0.000000e+00 : f32
    %11 = vector.broadcast %cst_13 : f32 to vector<1x128xf32>
    %c0_14 = arith.constant 0 : index
    %c0_15 = arith.constant 0 : index
    %c0_16 = arith.constant 0 : index
    %12 = vector.load %arg1[%c0_14, %c0_15, %c0_16] : memref<1x256x128xbf16, #tpu.memory_space<vmem>>, vector<1x256x128xbf16>
    %13 = vector.shape_cast %12 : vector<1x256x128xbf16> to vector<256x128xbf16>
    %14 = arith.extf %13 : vector<256x128xbf16> to vector<256x128xf32>
    %15 = vector.broadcast %8 : vector<1x128xf32> to vector<256x128xf32>
    %16 = arith.mulf %14, %15 : vector<256x128xf32>
    %17 = vector.broadcast %9 : vector<1x128xf32> to vector<256x128xf32>
    %18 = arith.addf %16, %17 : vector<256x128xf32>
    %cst_17 = arith.constant 0.000000e+00 : f32
    %19 = vector.broadcast %cst_17 : f32 to vector<256x128xf32>
    %20 = arith.maximumf %18, %19 : vector<256x128xf32>
    %c8 = arith.constant 8 : index
    %c0_18 = arith.constant 0 : index
    %21 = vector.load %arg11[%c8, %c0_18] : memref<272x128xf32, #tpu.memory_space<vmem>>, vector<256x128xf32>
    tpu.vector_store %arg11[%c8, %c0_18], %20 {strides = array<i32>} : memref<272x128xf32, #tpu.memory_space<vmem>>, vector<256x128xf32>,
    %22 = arith.truncf %20 : vector<256x128xf32> to vector<256x128xbf16>
    %c16 = arith.constant 16 : index
    %c128 = arith.constant 128 : index
    %23 = vector.load %arg10[%c16, %c128] : memref<288x384xbf16, #tpu.memory_space<vmem>>, vector<256x128xbf16>
    tpu.vector_store %arg10[%c16, %c128], %22 {strides = array<i32>} : memref<288x384xbf16, #tpu.memory_space<vmem>>, vector<256x128xbf16>,
    %c7 = arith.constant 7 : index
    %c0_19 = arith.constant 0 : index
    %24 = vector.load %arg11[%c7, %c0_19] : memref<272x128xf32, #tpu.memory_space<vmem>>, vector<256x128xf32>
    %c0_20 = arith.constant 0 : index
    %c0_21 = arith.constant 0 : index
    %25 = vector.load %arg5[%c0_20, %c0_21] : memref<256x1xf32, #tpu.memory_space<vmem>>, vector<256x1xf32>
    %26 = vector.broadcast %25 : vector<256x1xf32> to vector<256x128xf32>
    %27 = arith.mulf %24, %26 : vector<256x128xf32>
    %28 = arith.truncf %27 : vector<256x128xf32> to vector<256x128xbf16>
    %c16_22 = arith.constant 16 : index
    %c0_23 = arith.constant 0 : index
    %29 = vector.load %arg10[%c16_22, %c0_23] : memref<288x384xbf16, #tpu.memory_space<vmem>>, vector<256x128xbf16>
    tpu.vector_store %arg10[%c16_22, %c0_23], %28 {strides = array<i32>} : memref<288x384xbf16, #tpu.memory_space<vmem>>, vector<256x128xbf16>,
    %c9 = arith.constant 9 : index
    %c0_24 = arith.constant 0 : index
    %30 = vector.load %arg11[%c9, %c0_24] : memref<272x128xf32, #tpu.memory_space<vmem>>, vector<256x128xf32>
    %c0_25 = arith.constant 0 : index
    %c0_26 = arith.constant 0 : index
    %31 = vector.load %arg6[%c0_25, %c0_26] : memref<256x1xf32, #tpu.memory_space<vmem>>, vector<256x1xf32>
    %32 = vector.broadcast %31 : vector<256x1xf32> to vector<256x128xf32>
    %33 = arith.mulf %30, %32 : vector<256x128xf32>
    %34 = arith.truncf %33 : vector<256x128xf32> to vector<256x128xbf16>
    %c16_27 = arith.constant 16 : index
    %c256 = arith.constant 256 : index
    %35 = vector.load %arg10[%c16_27, %c256] : memref<288x384xbf16, #tpu.memory_space<vmem>>, vector<256x128xbf16>
    tpu.vector_store %arg10[%c16_27, %c256], %34 {strides = array<i32>} : memref<288x384xbf16, #tpu.memory_space<vmem>>, vector<256x128xbf16>,
    %c0_28 = arith.constant 0 : index
    %c0_29 = arith.constant 0 : index
    %36 = vector.load %arg10[%c0_28, %c0_29] : memref<288x384xbf16, #tpu.memory_space<vmem>>, vector<256x384xbf16>
    %c0_30 = arith.constant 0 : index
    %c0_31 = arith.constant 0 : index
    %c0_32 = arith.constant 0 : index
    %37 = vector.load %arg4[%c0_30, %c0_31, %c0_32] : memref<3x384x128xbf16, #tpu.memory_space<vmem>>, vector<1x384x128xbf16>
    %38 = vector.shape_cast %37 : vector<1x384x128xbf16> to vector<384x128xbf16>
    %cst_33 = arith.constant dense<0.000000e+00> : vector<256x128xf32>
    %39 = tpu.matmul %36, %38, %cst_33 {dimension_numbers = #tpu.dot_dimension_numbers<[1], [0], [0], [1], [0, 0, 1, 1], [], []>} : vector<256x384xbf16>, vector<384x128xbf16>, vector<256x128xf32> -> vector<256x128xf32>
    %c16_34 = arith.constant 16 : index
    %c0_35 = arith.constant 0 : index
    %40 = vector.load %arg10[%c16_34, %c0_35] : memref<288x384xbf16, #tpu.memory_space<vmem>>, vector<256x384xbf16>
    %c1 = arith.constant 1 : index
    %c0_36 = arith.constant 0 : index
    %c0_37 = arith.constant 0 : index
    %41 = vector.load %arg4[%c1, %c0_36, %c0_37] : memref<3x384x128xbf16, #tpu.memory_space<vmem>>, vector<1x384x128xbf16>
    %42 = vector.shape_cast %41 : vector<1x384x128xbf16> to vector<384x128xbf16>
    %cst_38 = arith.constant dense<0.000000e+00> : vector<256x128xf32>
    %43 = tpu.matmul %40, %42, %cst_38 {dimension_numbers = #tpu.dot_dimension_numbers<[1], [0], [0], [1], [0, 0, 1, 1], [], []>} : vector<256x384xbf16>, vector<384x128xbf16>, vector<256x128xf32> -> vector<256x128xf32>
    %44 = arith.addf %39, %43 : vector<256x128xf32>
    %c32 = arith.constant 32 : index
    %c0_39 = arith.constant 0 : index
    %45 = vector.load %arg10[%c32, %c0_39] : memref<288x384xbf16, #tpu.memory_space<vmem>>, vector<256x384xbf16>
    %c2 = arith.constant 2 : index
    %c0_40 = arith.constant 0 : index
    %c0_41 = arith.constant 0 : index
    %46 = vector.load %arg4[%c2, %c0_40, %c0_41] : memref<3x384x128xbf16, #tpu.memory_space<vmem>>, vector<1x384x128xbf16>
    %47 = vector.shape_cast %46 : vector<1x384x128xbf16> to vector<384x128xbf16>
    %cst_42 = arith.constant dense<0.000000e+00> : vector<256x128xf32>
    %48 = tpu.matmul %45, %47, %cst_42 {dimension_numbers = #tpu.dot_dimension_numbers<[1], [0], [0], [1], [0, 0, 1, 1], [], []>} : vector<256x384xbf16>, vector<384x128xbf16>, vector<256x128xf32> -> vector<256x128xf32>
    %49 = arith.addf %44, %48 : vector<256x128xf32>
    %50 = arith.truncf %49 : vector<256x128xf32> to vector<256x128xbf16>
    %c0_43 = arith.constant 0 : index
    %c0_44 = arith.constant 0 : index
    %c0_45 = arith.constant 0 : index
    %51 = vector.load %arg7[%c0_43, %c0_44, %c0_45] : memref<1x256x128xbf16, #tpu.memory_space<vmem>>, vector<1x256x128xbf16>
    %52 = vector.shape_cast %51 : vector<1x256x128xbf16> to vector<256x128xbf16>
    %53 = vector.shape_cast %50 : vector<256x128xbf16> to vector<1x256x128xbf16>
    tpu.vector_store %arg7[%c0_43, %c0_44, %c0_45], %53 {strides = array<i32>} : memref<1x256x128xbf16, #tpu.memory_space<vmem>>, vector<1x256x128xbf16>,
    %cst_46 = arith.constant dense<0.000000e+00> : vector<128xf32>
    %54 = vector.multi_reduction <add>, %49, %cst_46 [0] : vector<256x128xf32> to vector<128xf32>
    %55 = vector.shape_cast %54 : vector<128xf32> to vector<1x128xf32>
    %56 = arith.addf %10, %55 : vector<1x128xf32>
    %57 = arith.mulf %49, %49 : vector<256x128xf32>
    %cst_47 = arith.constant dense<0.000000e+00> : vector<128xf32>
    %58 = vector.multi_reduction <add>, %57, %cst_47 [0] : vector<256x128xf32> to vector<128xf32>
    %59 = vector.shape_cast %58 : vector<128xf32> to vector<1x128xf32>
    %60 = arith.addf %11, %59 : vector<1x128xf32>
    %c0_48 = arith.constant 0 : index
    %c0_49 = arith.constant 0 : index
    %c0_50 = arith.constant 0 : index
    %61 = vector.load %arg8[%c0_48, %c0_49, %c0_50] : memref<1x1x128xf32, #tpu.memory_space<vmem>>, vector<1x1x128xf32>
    %62 = vector.shape_cast %61 : vector<1x1x128xf32> to vector<1x128xf32>
    %63 = vector.shape_cast %56 : vector<1x128xf32> to vector<1x1x128xf32>
    tpu.vector_store %arg8[%c0_48, %c0_49, %c0_50], %63 {strides = array<i32>} : memref<1x1x128xf32, #tpu.memory_space<vmem>>, vector<1x1x128xf32>,
    %c0_51 = arith.constant 0 : index
    %c0_52 = arith.constant 0 : index
    %c0_53 = arith.constant 0 : index
    %64 = vector.load %arg9[%c0_51, %c0_52, %c0_53] : memref<1x1x128xf32, #tpu.memory_space<vmem>>, vector<1x1x128xf32>
    %65 = vector.shape_cast %64 : vector<1x1x128xf32> to vector<1x128xf32>
    %66 = vector.shape_cast %60 : vector<1x128xf32> to vector<1x1x128xf32>
    tpu.vector_store %arg9[%c0_51, %c0_52, %c0_53], %66 {strides = array<i32>} : memref<1x1x128xf32, #tpu.memory_space<vmem>>, vector<1x1x128xf32>,
    return
  }
  func.func @transform_0(%arg0: i32) -> (i32, i32, i32) {
    %c0_i32 = arith.constant 0 : i32
    %c0_i32_0 = arith.constant 0 : i32
    %c0_i32_1 = arith.constant 0 : i32
    return %arg0, %c0_i32, %c0_i32_0 : i32, i32, i32
  }
  func.func @transform_1(%arg0: i32) -> (i32, i32) {
    %c0_i32 = arith.constant 0 : i32
    %c0_i32_0 = arith.constant 0 : i32
    %c0_i32_1 = arith.constant 0 : i32
    return %c0_i32, %c0_i32_0 : i32, i32
  }
  func.func @transform_2(%arg0: i32) -> (i32, i32) {
    %c0_i32 = arith.constant 0 : i32
    %c0_i32_0 = arith.constant 0 : i32
    %c0_i32_1 = arith.constant 0 : i32
    return %c0_i32, %c0_i32_0 : i32, i32
  }
  func.func @transform_3(%arg0: i32) -> (i32, i32, i32) {
    %c0_i32 = arith.constant 0 : i32
    %c0_i32_0 = arith.constant 0 : i32
    %c0_i32_1 = arith.constant 0 : i32
    %c0_i32_2 = arith.constant 0 : i32
    return %c0_i32, %c0_i32_0, %c0_i32_1 : i32, i32, i32
  }
  func.func @transform_4(%arg0: i32) -> (i32, i32) {
    %c0_i32 = arith.constant 0 : i32
    %c0_i32_0 = arith.constant 0 : i32
    %c0_i32_1 = arith.constant 0 : i32
    return %c0_i32, %c0_i32_0 : i32, i32
  }
  func.func @transform_5(%arg0: i32) -> (i32, i32) {
    %c0_i32 = arith.constant 0 : i32
    %c0_i32_0 = arith.constant 0 : i32
    %c0_i32_1 = arith.constant 0 : i32
    return %c0_i32, %c0_i32_0 : i32, i32
  }
  func.func @transform_6(%arg0: i32) -> (i32, i32, i32) {
    %c0_i32 = arith.constant 0 : i32
    %c0_i32_0 = arith.constant 0 : i32
    %c0_i32_1 = arith.constant 0 : i32
    return %arg0, %c0_i32, %c0_i32_0 : i32, i32, i32
  }
  func.func @transform_7(%arg0: i32) -> (i32, i32, i32) {
    %c0_i32 = arith.constant 0 : i32
    %c0_i32_0 = arith.constant 0 : i32
    %c0_i32_1 = arith.constant 0 : i32
    return %arg0, %c0_i32, %c0_i32_0 : i32, i32, i32
  }
  func.func @transform_8(%arg0: i32) -> (i32, i32, i32) {
    %c0_i32 = arith.constant 0 : i32
    %c0_i32_0 = arith.constant 0 : i32
    %c0_i32_1 = arith.constant 0 : i32
    return %arg0, %c0_i32, %c0_i32_0 : i32, i32, i32
  }
}

module attributes {stable_mosaic.version = 11 : i64} {
  func.func @_conv1_stats_kernel(%arg0: i32, %arg1: memref<1x256x128xf32, #tpu.memory_space<vmem>>, %arg2: memref<3x384x128xbf16, #tpu.memory_space<vmem>>, %arg3: memref<256x1xf32, #tpu.memory_space<vmem>>, %arg4: memref<256x1xf32, #tpu.memory_space<vmem>>, %arg5: memref<1x256x128xbf16, #tpu.memory_space<vmem>>, %arg6: memref<1x1x128xf32, #tpu.memory_space<vmem>>, %arg7: memref<1x1x128xf32, #tpu.memory_space<vmem>>, %arg8: memref<288x384xbf16, #tpu.memory_space<vmem>>, %arg9: memref<272x128xf32, #tpu.memory_space<vmem>>) attributes {dimension_semantics = [#tpu.dimension_semantics<parallel>], iteration_bounds = array<i64: 2>, scalar_prefetch = 0 : i64, scratch_operands = 2 : i64, tpu.core_type = #tpu.core_type<tc>, window_params = [{transform_indices = @transform_0, window_bounds = array<i64: 1, 256, 128>}, {pipeline_mode = #tpu.pipeline_mode<synchronous>, transform_indices = @transform_1, window_bounds = array<i64: 3, 384, 128>}, {pipeline_mode = #tpu.pipeline_mode<synchronous>, transform_indices = @transform_2, window_bounds = array<i64: 256, 1>}, {pipeline_mode = #tpu.pipeline_mode<synchronous>, transform_indices = @transform_3, window_bounds = array<i64: 256, 1>}, {transform_indices = @transform_4, window_bounds = array<i64: 1, 256, 128>}, {transform_indices = @transform_5, window_bounds = array<i64: 1, 1, 128>}, {transform_indices = @transform_6, window_bounds = array<i64: 1, 1, 128>}]} {
    %cst = arith.constant 0.000000e+00 : bf16
    %0 = vector.broadcast %cst : bf16 to vector<16x384xbf16>
    %c0 = arith.constant 0 : index
    %c0_0 = arith.constant 0 : index
    %1 = vector.load %arg8[%c0, %c0_0] : memref<288x384xbf16, #tpu.memory_space<vmem>>, vector<16x384xbf16>
    tpu.vector_store %arg8[%c0, %c0_0], %0 {strides = array<i32>} : memref<288x384xbf16, #tpu.memory_space<vmem>>, vector<16x384xbf16>,
    %cst_1 = arith.constant 0.000000e+00 : bf16
    %2 = vector.broadcast %cst_1 : bf16 to vector<16x384xbf16>
    %c272 = arith.constant 272 : index
    %c0_2 = arith.constant 0 : index
    %3 = vector.load %arg8[%c272, %c0_2] : memref<288x384xbf16, #tpu.memory_space<vmem>>, vector<16x384xbf16>
    tpu.vector_store %arg8[%c272, %c0_2], %2 {strides = array<i32>} : memref<288x384xbf16, #tpu.memory_space<vmem>>, vector<16x384xbf16>,
    %cst_3 = arith.constant 0.000000e+00 : f32
    %4 = vector.broadcast %cst_3 : f32 to vector<8x128xf32>
    %c0_4 = arith.constant 0 : index
    %c0_5 = arith.constant 0 : index
    %5 = vector.load %arg9[%c0_4, %c0_5] : memref<272x128xf32, #tpu.memory_space<vmem>>, vector<8x128xf32>
    tpu.vector_store %arg9[%c0_4, %c0_5], %4 {strides = array<i32>} : memref<272x128xf32, #tpu.memory_space<vmem>>, vector<8x128xf32>,
    %cst_6 = arith.constant 0.000000e+00 : f32
    %6 = vector.broadcast %cst_6 : f32 to vector<8x128xf32>
    %c264 = arith.constant 264 : index
    %c0_7 = arith.constant 0 : index
    %7 = vector.load %arg9[%c264, %c0_7] : memref<272x128xf32, #tpu.memory_space<vmem>>, vector<8x128xf32>
    tpu.vector_store %arg9[%c264, %c0_7], %6 {strides = array<i32>} : memref<272x128xf32, #tpu.memory_space<vmem>>, vector<8x128xf32>,
    %cst_8 = arith.constant 0.000000e+00 : f32
    %8 = vector.broadcast %cst_8 : f32 to vector<1x128xf32>
    %cst_9 = arith.constant 0.000000e+00 : f32
    %9 = vector.broadcast %cst_9 : f32 to vector<1x128xf32>
    %c0_10 = arith.constant 0 : index
    %c0_11 = arith.constant 0 : index
    %c0_12 = arith.constant 0 : index
    %10 = vector.load %arg1[%c0_10, %c0_11, %c0_12] : memref<1x256x128xf32, #tpu.memory_space<vmem>>, vector<1x256x128xf32>
    %11 = vector.shape_cast %10 : vector<1x256x128xf32> to vector<256x128xf32>
    %c8 = arith.constant 8 : index
    %c0_13 = arith.constant 0 : index
    %12 = vector.load %arg9[%c8, %c0_13] : memref<272x128xf32, #tpu.memory_space<vmem>>, vector<256x128xf32>
    tpu.vector_store %arg9[%c8, %c0_13], %11 {strides = array<i32>} : memref<272x128xf32, #tpu.memory_space<vmem>>, vector<256x128xf32>,
    %13 = arith.truncf %11 : vector<256x128xf32> to vector<256x128xbf16>
    %c16 = arith.constant 16 : index
    %c128 = arith.constant 128 : index
    %14 = vector.load %arg8[%c16, %c128] : memref<288x384xbf16, #tpu.memory_space<vmem>>, vector<256x128xbf16>
    tpu.vector_store %arg8[%c16, %c128], %13 {strides = array<i32>} : memref<288x384xbf16, #tpu.memory_space<vmem>>, vector<256x128xbf16>,
    %c7 = arith.constant 7 : index
    %c0_14 = arith.constant 0 : index
    %15 = vector.load %arg9[%c7, %c0_14] : memref<272x128xf32, #tpu.memory_space<vmem>>, vector<256x128xf32>
    %c0_15 = arith.constant 0 : index
    %c0_16 = arith.constant 0 : index
    %16 = vector.load %arg3[%c0_15, %c0_16] : memref<256x1xf32, #tpu.memory_space<vmem>>, vector<256x1xf32>
    %17 = vector.broadcast %16 : vector<256x1xf32> to vector<256x128xf32>
    %18 = arith.mulf %15, %17 : vector<256x128xf32>
    %19 = arith.truncf %18 : vector<256x128xf32> to vector<256x128xbf16>
    %c16_17 = arith.constant 16 : index
    %c0_18 = arith.constant 0 : index
    %20 = vector.load %arg8[%c16_17, %c0_18] : memref<288x384xbf16, #tpu.memory_space<vmem>>, vector<256x128xbf16>
    tpu.vector_store %arg8[%c16_17, %c0_18], %19 {strides = array<i32>} : memref<288x384xbf16, #tpu.memory_space<vmem>>, vector<256x128xbf16>,
    %c9 = arith.constant 9 : index
    %c0_19 = arith.constant 0 : index
    %21 = vector.load %arg9[%c9, %c0_19] : memref<272x128xf32, #tpu.memory_space<vmem>>, vector<256x128xf32>
    %c0_20 = arith.constant 0 : index
    %c0_21 = arith.constant 0 : index
    %22 = vector.load %arg4[%c0_20, %c0_21] : memref<256x1xf32, #tpu.memory_space<vmem>>, vector<256x1xf32>
    %23 = vector.broadcast %22 : vector<256x1xf32> to vector<256x128xf32>
    %24 = arith.mulf %21, %23 : vector<256x128xf32>
    %25 = arith.truncf %24 : vector<256x128xf32> to vector<256x128xbf16>
    %c16_22 = arith.constant 16 : index
    %c256 = arith.constant 256 : index
    %26 = vector.load %arg8[%c16_22, %c256] : memref<288x384xbf16, #tpu.memory_space<vmem>>, vector<256x128xbf16>
    tpu.vector_store %arg8[%c16_22, %c256], %25 {strides = array<i32>} : memref<288x384xbf16, #tpu.memory_space<vmem>>, vector<256x128xbf16>,
    %c0_23 = arith.constant 0 : index
    %c0_24 = arith.constant 0 : index
    %27 = vector.load %arg8[%c0_23, %c0_24] : memref<288x384xbf16, #tpu.memory_space<vmem>>, vector<256x384xbf16>
    %c0_25 = arith.constant 0 : index
    %c0_26 = arith.constant 0 : index
    %c0_27 = arith.constant 0 : index
    %28 = vector.load %arg2[%c0_25, %c0_26, %c0_27] : memref<3x384x128xbf16, #tpu.memory_space<vmem>>, vector<1x384x128xbf16>
    %29 = vector.shape_cast %28 : vector<1x384x128xbf16> to vector<384x128xbf16>
    %cst_28 = arith.constant dense<0.000000e+00> : vector<256x128xf32>
    %30 = tpu.matmul %27, %29, %cst_28 {dimension_numbers = #tpu.dot_dimension_numbers<[1], [0], [0], [1], [0, 0, 1, 1], [], []>} : vector<256x384xbf16>, vector<384x128xbf16>, vector<256x128xf32> -> vector<256x128xf32>
    %c16_29 = arith.constant 16 : index
    %c0_30 = arith.constant 0 : index
    %31 = vector.load %arg8[%c16_29, %c0_30] : memref<288x384xbf16, #tpu.memory_space<vmem>>, vector<256x384xbf16>
    %c1 = arith.constant 1 : index
    %c0_31 = arith.constant 0 : index
    %c0_32 = arith.constant 0 : index
    %32 = vector.load %arg2[%c1, %c0_31, %c0_32] : memref<3x384x128xbf16, #tpu.memory_space<vmem>>, vector<1x384x128xbf16>
    %33 = vector.shape_cast %32 : vector<1x384x128xbf16> to vector<384x128xbf16>
    %cst_33 = arith.constant dense<0.000000e+00> : vector<256x128xf32>
    %34 = tpu.matmul %31, %33, %cst_33 {dimension_numbers = #tpu.dot_dimension_numbers<[1], [0], [0], [1], [0, 0, 1, 1], [], []>} : vector<256x384xbf16>, vector<384x128xbf16>, vector<256x128xf32> -> vector<256x128xf32>
    %35 = arith.addf %30, %34 : vector<256x128xf32>
    %c32 = arith.constant 32 : index
    %c0_34 = arith.constant 0 : index
    %36 = vector.load %arg8[%c32, %c0_34] : memref<288x384xbf16, #tpu.memory_space<vmem>>, vector<256x384xbf16>
    %c2 = arith.constant 2 : index
    %c0_35 = arith.constant 0 : index
    %c0_36 = arith.constant 0 : index
    %37 = vector.load %arg2[%c2, %c0_35, %c0_36] : memref<3x384x128xbf16, #tpu.memory_space<vmem>>, vector<1x384x128xbf16>
    %38 = vector.shape_cast %37 : vector<1x384x128xbf16> to vector<384x128xbf16>
    %cst_37 = arith.constant dense<0.000000e+00> : vector<256x128xf32>
    %39 = tpu.matmul %36, %38, %cst_37 {dimension_numbers = #tpu.dot_dimension_numbers<[1], [0], [0], [1], [0, 0, 1, 1], [], []>} : vector<256x384xbf16>, vector<384x128xbf16>, vector<256x128xf32> -> vector<256x128xf32>
    %40 = arith.addf %35, %39 : vector<256x128xf32>
    %41 = arith.truncf %40 : vector<256x128xf32> to vector<256x128xbf16>
    %c0_38 = arith.constant 0 : index
    %c0_39 = arith.constant 0 : index
    %c0_40 = arith.constant 0 : index
    %42 = vector.load %arg5[%c0_38, %c0_39, %c0_40] : memref<1x256x128xbf16, #tpu.memory_space<vmem>>, vector<1x256x128xbf16>
    %43 = vector.shape_cast %42 : vector<1x256x128xbf16> to vector<256x128xbf16>
    %44 = vector.shape_cast %41 : vector<256x128xbf16> to vector<1x256x128xbf16>
    tpu.vector_store %arg5[%c0_38, %c0_39, %c0_40], %44 {strides = array<i32>} : memref<1x256x128xbf16, #tpu.memory_space<vmem>>, vector<1x256x128xbf16>,
    %cst_41 = arith.constant dense<0.000000e+00> : vector<128xf32>
    %45 = vector.multi_reduction <add>, %40, %cst_41 [0] : vector<256x128xf32> to vector<128xf32>
    %46 = vector.shape_cast %45 : vector<128xf32> to vector<1x128xf32>
    %47 = arith.addf %8, %46 : vector<1x128xf32>
    %48 = arith.mulf %40, %40 : vector<256x128xf32>
    %cst_42 = arith.constant dense<0.000000e+00> : vector<128xf32>
    %49 = vector.multi_reduction <add>, %48, %cst_42 [0] : vector<256x128xf32> to vector<128xf32>
    %50 = vector.shape_cast %49 : vector<128xf32> to vector<1x128xf32>
    %51 = arith.addf %9, %50 : vector<1x128xf32>
    %c0_43 = arith.constant 0 : index
    %c0_44 = arith.constant 0 : index
    %c0_45 = arith.constant 0 : index
    %52 = vector.load %arg6[%c0_43, %c0_44, %c0_45] : memref<1x1x128xf32, #tpu.memory_space<vmem>>, vector<1x1x128xf32>
    %53 = vector.shape_cast %52 : vector<1x1x128xf32> to vector<1x128xf32>
    %54 = vector.shape_cast %47 : vector<1x128xf32> to vector<1x1x128xf32>
    tpu.vector_store %arg6[%c0_43, %c0_44, %c0_45], %54 {strides = array<i32>} : memref<1x1x128xf32, #tpu.memory_space<vmem>>, vector<1x1x128xf32>,
    %c0_46 = arith.constant 0 : index
    %c0_47 = arith.constant 0 : index
    %c0_48 = arith.constant 0 : index
    %55 = vector.load %arg7[%c0_46, %c0_47, %c0_48] : memref<1x1x128xf32, #tpu.memory_space<vmem>>, vector<1x1x128xf32>
    %56 = vector.shape_cast %55 : vector<1x1x128xf32> to vector<1x128xf32>
    %57 = vector.shape_cast %51 : vector<1x128xf32> to vector<1x1x128xf32>
    tpu.vector_store %arg7[%c0_46, %c0_47, %c0_48], %57 {strides = array<i32>} : memref<1x1x128xf32, #tpu.memory_space<vmem>>, vector<1x1x128xf32>,
    return
  }
  func.func @transform_0(%arg0: i32) -> (i32, i32, i32) {
    %c0_i32 = arith.constant 0 : i32
    %c0_i32_0 = arith.constant 0 : i32
    %c0_i32_1 = arith.constant 0 : i32
    return %arg0, %c0_i32, %c0_i32_0 : i32, i32, i32
  }
  func.func @transform_1(%arg0: i32) -> (i32, i32, i32) {
    %c0_i32 = arith.constant 0 : i32
    %c0_i32_0 = arith.constant 0 : i32
    %c0_i32_1 = arith.constant 0 : i32
    %c0_i32_2 = arith.constant 0 : i32
    return %c0_i32, %c0_i32_0, %c0_i32_1 : i32, i32, i32
  }
  func.func @transform_2(%arg0: i32) -> (i32, i32) {
    %c0_i32 = arith.constant 0 : i32
    %c0_i32_0 = arith.constant 0 : i32
    %c0_i32_1 = arith.constant 0 : i32
    return %c0_i32, %c0_i32_0 : i32, i32
  }
  func.func @transform_3(%arg0: i32) -> (i32, i32) {
    %c0_i32 = arith.constant 0 : i32
    %c0_i32_0 = arith.constant 0 : i32
    %c0_i32_1 = arith.constant 0 : i32
    return %c0_i32, %c0_i32_0 : i32, i32
  }
  func.func @transform_4(%arg0: i32) -> (i32, i32, i32) {
    %c0_i32 = arith.constant 0 : i32
    %c0_i32_0 = arith.constant 0 : i32
    %c0_i32_1 = arith.constant 0 : i32
    return %arg0, %c0_i32, %c0_i32_0 : i32, i32, i32
  }
  func.func @transform_5(%arg0: i32) -> (i32, i32, i32) {
    %c0_i32 = arith.constant 0 : i32
    %c0_i32_0 = arith.constant 0 : i32
    %c0_i32_1 = arith.constant 0 : i32
    return %arg0, %c0_i32, %c0_i32_0 : i32, i32, i32
  }
  func.func @transform_6(%arg0: i32) -> (i32, i32, i32) {
    %c0_i32 = arith.constant 0 : i32
    %c0_i32_0 = arith.constant 0 : i32
    %c0_i32_1 = arith.constant 0 : i32
    return %arg0, %c0_i32, %c0_i32_0 : i32, i32, i32
  }
}

module attributes {stable_mosaic.version = 11 : i64} {
  func.func @_bn2_residual_relu_kernel(%arg0: i32, %arg1: memref<1x256x128xbf16, #tpu.memory_space<vmem>>, %arg2: memref<1x128xf32, #tpu.memory_space<vmem>>, %arg3: memref<1x128xf32, #tpu.memory_space<vmem>>, %arg4: memref<1x256x128xf32, #tpu.memory_space<vmem>>, %arg5: memref<1x256x128xf32, #tpu.memory_space<vmem>>) attributes {dimension_semantics = [#tpu.dimension_semantics<parallel>], iteration_bounds = array<i64: 2>, scalar_prefetch = 0 : i64, scratch_operands = 0 : i64, tpu.core_type = #tpu.core_type<tc>, window_params = [{transform_indices = @transform_0, window_bounds = array<i64: 1, 256, 128>}, {pipeline_mode = #tpu.pipeline_mode<synchronous>, transform_indices = @transform_1, window_bounds = array<i64: 1, 128>}, {pipeline_mode = #tpu.pipeline_mode<synchronous>, transform_indices = @transform_2, window_bounds = array<i64: 1, 128>}, {transform_indices = @transform_3, window_bounds = array<i64: 1, 256, 128>}, {transform_indices = @transform_4, window_bounds = array<i64: 1, 256, 128>}]} {
    %c0 = arith.constant 0 : index
    %c0_0 = arith.constant 0 : index
    %c0_1 = arith.constant 0 : index
    %0 = vector.load %arg1[%c0, %c0_0, %c0_1] : memref<1x256x128xbf16, #tpu.memory_space<vmem>>, vector<1x256x128xbf16>
    %1 = arith.extf %0 : vector<1x256x128xbf16> to vector<1x256x128xf32>
    %c0_2 = arith.constant 0 : index
    %c0_3 = arith.constant 0 : index
    %2 = vector.load %arg2[%c0_2, %c0_3] : memref<1x128xf32, #tpu.memory_space<vmem>>, vector<1x128xf32>
    %3 = vector.shape_cast %2 : vector<1x128xf32> to vector<1x1x128xf32>
    %4 = vector.broadcast %3 : vector<1x1x128xf32> to vector<1x256x128xf32>
    %5 = arith.mulf %1, %4 : vector<1x256x128xf32>
    %c0_4 = arith.constant 0 : index
    %c0_5 = arith.constant 0 : index
    %6 = vector.load %arg3[%c0_4, %c0_5] : memref<1x128xf32, #tpu.memory_space<vmem>>, vector<1x128xf32>
    %7 = vector.shape_cast %6 : vector<1x128xf32> to vector<1x1x128xf32>
    %8 = vector.broadcast %7 : vector<1x1x128xf32> to vector<1x256x128xf32>
    %9 = arith.addf %5, %8 : vector<1x256x128xf32>
    %c0_6 = arith.constant 0 : index
    %c0_7 = arith.constant 0 : index
    %c0_8 = arith.constant 0 : index
    %10 = vector.load %arg4[%c0_6, %c0_7, %c0_8] : memref<1x256x128xf32, #tpu.memory_space<vmem>>, vector<1x256x128xf32>
    %11 = arith.addf %9, %10 : vector<1x256x128xf32>
    %cst = arith.constant 0.000000e+00 : f32
    %12 = vector.broadcast %cst : f32 to vector<1x256x128xf32>
    %13 = arith.maximumf %11, %12 : vector<1x256x128xf32>
    %c0_9 = arith.constant 0 : index
    %c0_10 = arith.constant 0 : index
    %c0_11 = arith.constant 0 : index
    %14 = vector.load %arg5[%c0_9, %c0_10, %c0_11] : memref<1x256x128xf32, #tpu.memory_space<vmem>>, vector<1x256x128xf32>
    tpu.vector_store %arg5[%c0_9, %c0_10, %c0_11], %13 {strides = array<i32>} : memref<1x256x128xf32, #tpu.memory_space<vmem>>, vector<1x256x128xf32>,
    return
  }
  func.func @transform_0(%arg0: i32) -> (i32, i32, i32) {
    %c0_i32 = arith.constant 0 : i32
    %c0_i32_0 = arith.constant 0 : i32
    %c0_i32_1 = arith.constant 0 : i32
    return %arg0, %c0_i32, %c0_i32_0 : i32, i32, i32
  }
  func.func @transform_1(%arg0: i32) -> (i32, i32) {
    %c0_i32 = arith.constant 0 : i32
    %c0_i32_0 = arith.constant 0 : i32
    %c0_i32_1 = arith.constant 0 : i32
    return %c0_i32, %c0_i32_0 : i32, i32
  }
  func.func @transform_2(%arg0: i32) -> (i32, i32) {
    %c0_i32 = arith.constant 0 : i32
    %c0_i32_0 = arith.constant 0 : i32
    %c0_i32_1 = arith.constant 0 : i32
    return %c0_i32, %c0_i32_0 : i32, i32
  }
  func.func @transform_3(%arg0: i32) -> (i32, i32, i32) {
    %c0_i32 = arith.constant 0 : i32
    %c0_i32_0 = arith.constant 0 : i32
    %c0_i32_1 = arith.constant 0 : i32
    return %arg0, %c0_i32, %c0_i32_0 : i32, i32, i32
  }
  func.func @transform_4(%arg0: i32) -> (i32, i32, i32) {
    %c0_i32 = arith.constant 0 : i32
    %c0_i32_0 = arith.constant 0 : i32
    %c0_i32_1 = arith.constant 0 : i32
    return %arg0, %c0_i32, %c0_i32_0 : i32, i32, i32
  }
}

</mosaic_0001>

<llo_original>
// kernel: basic_block_forward.5
$region0: #{basic_block_forward.5}
  #allocation0 [shape = 'u32[]', space=smem, size = 0x4, offset = 0x4, fixed_abs, tag = 'smem constant byte address 0x4 - core index']
  #allocation1 [shape = 'u32[144,128]{1,0:T(1,128)}', space=vmem, size = 0x12000, scoped, tag = 'internal scratch']
  %s0 = inlined_call_operand.vmem [shape: bf16[2,256,128], index: 0, kind: input, shape index: {}]
  %s1 = inlined_call_operand.vmem [shape: f32[1,128], index: 1, kind: input, shape index: {}]
  %s2 = inlined_call_operand.vmem [shape: f32[1,128], index: 2, kind: input, shape index: {}]
  %s3 = inlined_call_operand.vmem [shape: f32[2,256,128], index: 3, kind: input, shape index: {}]
  %s4 = inlined_call_operand.vmem [shape: f32[2,256,128], index: 4, kind: output, shape index: {}]
  %s5 = sld [smem:[#allocation0]]
  $region49: #{basic_block_forward.5} parent=0
    _
  %s7 = ssub.s32 1, %s5
  %s8 = scalar_select 0, %s7, %s5
  loop: start=0, step=1, limit=4
  $region2: #{basic_block_forward.5} parent=0 // loop_pre_header
    _
  $region3: #{basic_block_forward.5} parent=0 // loop_header
    %s10 = sphi 0, %s14
    %p11 = scmp.ge.s32.totalorder %s10, 4
    %s20 = sphi 0, %s22
    %s23 = sphi 0, %s20
    %s24 = sphi 0, %s23
    %s40 = sphi 0, %s24
    %s44 = sphi 0, %s44
    %s46 = sphi 0, %s44
    %s47 = sphi 0, %s46
    %s61 = sphi 0, %s47
    %s65 = sphi 0, %s65
    %s67 = sphi 0, %s65
    %s68 = sphi 0, %s67
    %s82 = sphi 0, %s68
    %s88 = sphi 0, %s90
    %s91 = sphi 0, %s88
    %s92 = sphi 0, %s91
    %s108 = sphi 0, %s92
    %s114 = sphi 0, %s116
    %s117 = sphi 0, %s114
    %s118 = sphi 0, %s117
    %s134 = sphi 0, %s118
  $region4: #{basic_block_forward.5} parent=0 // loop_header_branch
    %13 = sbr.rel (%p11) target = $region8
  $region5: #{basic_block_forward.5} parent=0 // loop_body
    %s15 = ssub.s32 %s10, 1
    %s16 = ssub.s32 %s10, 2
    %s17 = sadd.s32 %s10, 1
    %s18 = ssub.s32 %s10, %s17
    %p19 = scmp.eq.s32.totalorder %s18, 0
    %s21 = sadd.s32 %s20, 1
    %s22 = scalar_select %p19, %s20, %s21
    %p25 = pneg %p19
    %p26 = scmp.eq.s32.totalorder %s10, 1
    %p27 = por %p25, %p26
    %p28 = scmp.ne.s32.totalorder %s20, %s23
    %p29 = scmp.eq.s32.totalorder %s10, 0
    %p30 = por %p28, %p29
    %p31 = scmp.ne.s32.totalorder %s20, %s23
    %p32 = scmp.eq.s32.totalorder %s15, 1
    %p33 = por %p31, %p32
    %p34 = scmp.ne.s32.totalorder %s23, %s24
    %p35 = scmp.eq.s32.totalorder %s15, 0
    %p36 = por %p34, %p35
    %p37 = scmp.ne.s32.totalorder %s23, %s24
    %p38 = scmp.eq.s32.totalorder %s16, 1
    %p39 = por %p37, %p38
    %p41 = scmp.ne.s32.totalorder %s24, %s40
    %p42 = scmp.eq.s32.totalorder %s16, 0
    %p43 = por %p41, %p42
    %s45 = sadd.s32 %s44, 1
    %p48 = scmp.eq.s32.totalorder %s10, 1
    %p49 = scmp.ne.s32.totalorder %s44, %s46
    %p50 = scmp.eq.s32.totalorder %s10, 0
    %p51 = por %p49, %p50
    %p52 = scmp.ne.s32.totalorder %s44, %s46
    %p53 = scmp.eq.s32.totalorder %s15, 1
    %p54 = por %p52, %p53
    %p55 = scmp.ne.s32.totalorder %s46, %s47
    %p56 = scmp.eq.s32.totalorder %s15, 0
    %p57 = por %p55, %p56
    %p58 = scmp.ne.s32.totalorder %s46, %s47
    %p59 = scmp.eq.s32.totalorder %s16, 1
    %p60 = por %p58, %p59
    %p62 = scmp.ne.s32.totalorder %s47, %s61
    %p63 = scmp.eq.s32.totalorder %s16, 0
    %p64 = por %p62, %p63
    %s66 = sadd.s32 %s65, 1
    %p69 = scmp.eq.s32.totalorder %s10, 1
    %p70 = scmp.ne.s32.totalorder %s65, %s67
    %p71 = scmp.eq.s32.totalorder %s10, 0
    %p72 = por %p70, %p71
    %p73 = scmp.ne.s32.totalorder %s65, %s67
    %p74 = scmp.eq.s32.totalorder %s15, 1
    %p75 = por %p73, %p74
    %p76 = scmp.ne.s32.totalorder %s67, %s68
    %p77 = scmp.eq.s32.totalorder %s15, 0
    %p78 = por %p76, %p77
    %p79 = scmp.ne.s32.totalorder %s67, %s68
    %p80 = scmp.eq.s32.totalorder %s16, 1
    %p81 = por %p79, %p80
    %p83 = scmp.ne.s32.totalorder %s68, %s82
    %p84 = scmp.eq.s32.totalorder %s16, 0
    %p85 = por %p83, %p84
    %s86 = ssub.s32 %s10, %s17
    %p87 = scmp.eq.s32.totalorder %s86, 0
    %s89 = sadd.s32 %s88, 1
    %s90 = scalar_select %p87, %s88, %s89
    %p93 = pneg %p87
    %p94 = scmp.eq.s32.totalorder %s10, 1
    %p95 = por %p93, %p94
    %p96 = scmp.ne.s32.totalorder %s88, %s91
    %p97 = scmp.eq.s32.totalorder %s10, 0
    %p98 = por %p96, %p97
    %p99 = scmp.ne.s32.totalorder %s88, %s91
    %p100 = scmp.eq.s32.totalorder %s15, 1
    %p101 = por %p99, %p100
    %p102 = scmp.ne.s32.totalorder %s91, %s92
    %p103 = scmp.eq.s32.totalorder %s15, 0
    %p104 = por %p102, %p103
    %p105 = scmp.ne.s32.totalorder %s91, %s92
    %p106 = scmp.eq.s32.totalorder %s16, 1
    %p107 = por %p105, %p106
    %p109 = scmp.ne.s32.totalorder %s92, %s108
    %p110 = scmp.eq.s32.totalorder %s16, 0
    %p111 = por %p109, %p110
    %s112 = ssub.s32 %s10, %s17
    %p113 = scmp.eq.s32.totalorder %s112, 0
    %s115 = sadd.s32 %s114, 1
    %s116 = scalar_select %p113, %s114, %s115
    %p119 = pneg %p113
    %p120 = scmp.eq.s32.totalorder %s10, 1
    %p121 = por %p119, %p120
    %p122 = scmp.ne.s32.totalorder %s114, %s117
    %p123 = scmp.eq.s32.totalorder %s10, 0
    %p124 = por %p122, %p123
    %p125 = scmp.ne.s32.totalorder %s114, %s117
    %p126 = scmp.eq.s32.totalorder %s15, 1
    %p127 = por %p125, %p126
    %p128 = scmp.ne.s32.totalorder %s117, %s118
    %p129 = scmp.eq.s32.totalorder %s15, 0
    %p130 = por %p128, %p129
    %p131 = scmp.ne.s32.totalorder %s117, %s118
    %p132 = scmp.eq.s32.totalorder %s16, 1
    %p133 = por %p131, %p132
    %p135 = scmp.ne.s32.totalorder %s118, %s134
    %p136 = scmp.eq.s32.totalorder %s16, 0
    %p137 = por %p135, %p136
    %p138 = scmp.le.s32.totalorder 1, %s10
    %p139 = scmp.lt.s32.totalorder %s10, 3
    %p140 = pnand %p138, %p139
    %p141 = pneg %p140
    // Predicated region
    $region9: #{basic_block_forward.5} parent=5 // pred_check
      _
    $region10: #{basic_block_forward.5} parent=5 // pred_check_branch
      %143 = sbr.rel (%p140) target = $region12
    $region11: #{basic_block_forward.5} parent=5 // pred_region
      %s144 = ssub.s32 %s10, 1
      // Predicated region
      $region13: #{basic_block_forward.5} parent=11 // pred_check
        %p145 = pneg %p57
      $region14: #{basic_block_forward.5} parent=11 // pred_check_branch
        %147 = sbr.rel (%p145) target = $region16
      $region15: #{basic_block_forward.5} parent=11 // pred_region
        _
      $region16: #{basic_block_forward.5} parent=11 // pred_fallthru
        _
      // Predicated region
      $region17: #{basic_block_forward.5} parent=11 // pred_check
        %p148 = pneg %p78
      $region18: #{basic_block_forward.5} parent=11 // pred_check_branch
        %150 = sbr.rel (%p148) target = $region20
      $region19: #{basic_block_forward.5} parent=11 // pred_region
        _
      $region20: #{basic_block_forward.5} parent=11 // pred_fallthru
        _
    $region12: #{basic_block_forward.5} parent=5 // pred_fallthru
      _
    %p151 = scmp.lt.s32.totalorder %s10, 2
    // Predicated region
    $region21: #{basic_block_forward.5} parent=5 // pred_check
      %p152 = pneg %p151
    $region22: #{basic_block_forward.5} parent=5 // pred_check_branch
      %154 = sbr.rel (%p152) target = $region24
    $region23: #{basic_block_forward.5} parent=5 // pred_region
      // Predicated region
      $region25: #{basic_block_forward.5} parent=23 // pred_check
        %p155 = pneg %p30
      $region26: #{basic_block_forward.5} parent=23 // pred_check_branch
        %157 = sbr.rel (%p155) target = $region28
      $region27: #{basic_block_forward.5} parent=23 // pred_region
        %p158 = scmp.lt.s32.totalorder %s10, 1
        %s159 = scalar_select %p158, %s10, 1
        %s160 = smul.addr %s159, 32
        %s161 = smul.addr %s160, 4
        %s162 = scalar_lea.vmem %s0, %s161
      $region28: #{basic_block_forward.5} parent=23 // pred_fallthru
        _
      // Predicated region
      $region29: #{basic_block_forward.5} parent=23 // pred_check
        %p163 = pneg %p98
      $region30: #{basic_block_forward.5} parent=23 // pred_check_branch
        %165 = sbr.rel (%p163) target = $region32
      $region31: #{basic_block_forward.5} parent=23 // pred_region
        %p166 = scmp.lt.s32.totalorder %s10, 1
        %s167 = scalar_select %p166, %s10, 1
        %s168 = smul.addr %s167, 32
        %s169 = smul.addr %s168, 8
        %s170 = scalar_lea.vmem %s3, %s169
      $region32: #{basic_block_forward.5} parent=23 // pred_fallthru
        _
    $region24: #{basic_block_forward.5} parent=5 // pred_fallthru
      _
    %p171 = scmp.le.s32.totalorder 1, %s10
    %p172 = scmp.lt.s32.totalorder %s10, 3
    %p173 = pnand %p171, %p172
    %p174 = pneg %p173
    // Predicated region
    $region33: #{basic_block_forward.5} parent=5 // pred_check
      _
    $region34: #{basic_block_forward.5} parent=5 // pred_check_branch
      %176 = sbr.rel (%p173) target = $region36
    $region35: #{basic_block_forward.5} parent=5 // pred_region
      %s177 = ssub.s32 %s10, 1
      %p178 = scmp.lt.s32.totalorder %s15, 1
      %s179 = scalar_select %p178, %s15, 1
      %s180 = smul.addr %s179, 32
      %s181 = smul.addr %s180, 4
      %s182 = scalar_lea.vmem %s0, %s181
      %p183 = pneg %p36
      %p184 = pneg %p33
      %p185 = pneg %p57
      %p186 = pneg %p54
      %p187 = pneg %p78
      %p188 = pneg %p75
      %p189 = scmp.lt.s32.totalorder %s15, 1
      %s190 = scalar_select %p189, %s15, 1
      %s191 = smul.addr %s190, 32
      %s192 = smul.addr %s191, 8
      %s193 = scalar_lea.vmem %s3, %s192
      %p194 = pneg %p104
      %p195 = pneg %p101
      %p196 = pneg %p130
      %p197 = pneg %p127
      %p198 = scmp.lt.s32.totalorder %s15, 1
      %s199 = scalar_select %p198, %s15, 1
      %s200 = smul.addr %s199, 32
      %s201 = smul.addr %s200, 8
      %s202 = scalar_lea.vmem %s4, %s201
      %p203 = scmp.lt.s32.totalorder %s15, 1
      %s204 = scalar_select %p203, %s15, 1
      %s205 = smul.addr %s204, 32
      %s206 = smul.addr %s205, 4
      %s207 = scalar_lea.vmem %s0, %s206
      %p208 = scmp.lt.s32.totalorder %s15, 1
      %s209 = scalar_select %p208, %s15, 1
      %s210 = smul.addr %s209, 32
      %s211 = smul.addr %s210, 8
      %s212 = scalar_lea.vmem %s3, %s211
      %p213 = scmp.lt.s32.totalorder %s15, 1
      %s214 = scalar_select %p213, %s15, 1
      %s215 = smul.addr %s214, 32
      %s216 = smul.addr %s215, 8
      %s217 = scalar_lea.vmem %s4, %s216
      %v218 = vld [vmem:[%s207] sm:$0xf]
      %v219 = vld [vmem:[%s207 + $0x4] sm:$0xf]
      %v220 = vld [vmem:[%s207 + $0x8] sm:$0xf]
      %v221 = vld [vmem:[%s207 + $0xc] sm:$0xf]
      %v222 = vld [vmem:[%s207 + $0x10] sm:$0xf]
      %v223 = vld [vmem:[%s207 + $0x14] sm:$0xf]
      %v224 = vld [vmem:[%s207 + $0x18] sm:$0xf]
      %v225 = vld [vmem:[%s207 + $0x1c] sm:$0xf]
      %v226 = vld [vmem:[%s207 + $0x20] sm:$0xf]
      %v227 = vld [vmem:[%s207 + $0x24] sm:$0xf]
      %v228 = vld [vmem:[%s207 + $0x28] sm:$0xf]
      %v229 = vld [vmem:[%s207 + $0x2c] sm:$0xf]
      %v230 = vld [vmem:[%s207 + $0x30] sm:$0xf]
      %v231 = vld [vmem:[%s207 + $0x34] sm:$0xf]
      %v232 = vld [vmem:[%s207 + $0x38] sm:$0xf]
      %v233 = vld [vmem:[%s207 + $0x3c] sm:$0xf]
      %v234 = vld [vmem:[%s207 + $0x40] sm:$0xf]
      %v235 = vld [vmem:[%s207 + $0x44] sm:$0xf]
      %v236 = vld [vmem:[%s207 + $0x48] sm:$0xf]
      %v237 = vld [vmem:[%s207 + $0x4c] sm:$0xf]
      %v238 = vld [vmem:[%s207 + $0x50] sm:$0xf]
      %v239 = vld [vmem:[%s207 + $0x54] sm:$0xf]
      %v240 = vld [vmem:[%s207 + $0x58] sm:$0xf]
      %v241 = vld [vmem:[%s207 + $0x5c] sm:$0xf]
      %v242 = vld [vmem:[%s207 + $0x60] sm:$0xf]
      %v243 = vld [vmem:[%s207 + $0x64] sm:$0xf]
      %v244 = vld [vmem:[%s207 + $0x68] sm:$0xf]
      %v245 = vld [vmem:[%s207 + $0x6c] sm:$0xf]
      %v246 = vld [vmem:[%s207 + $0x70] sm:$0xf]
      %v247 = vld [vmem:[%s207 + $0x74] sm:$0xf]
      %v248 = vld [vmem:[%s207 + $0x78] sm:$0xf]
      %v249 = vld [vmem:[%s207 + $0x7c] sm:$0xf]
      %v250 = vunpack.c.l.bf16 %v218
      %v251 = vunpack.c.l.bf16 %v219
      %v252 = vunpack.c.l.bf16 %v220
      %v253 = vunpack.c.l.bf16 %v221
      %v254 = vunpack.c.l.bf16 %v222
      %v255 = vunpack.c.l.bf16 %v223
      %v256 = vunpack.c.l.bf16 %v224
      %v257 = vunpack.c.l.bf16 %v225
      %v258 = vunpack.c.l.bf16 %v226
      %v259 = vunpack.c.l.bf16 %v227
      %v260 = vunpack.c.l.bf16 %v228
      %v261 = vunpack.c.l.bf16 %v229
      %v262 = vunpack.c.l.bf16 %v230
      %v263 = vunpack.c.l.bf16 %v231
      %v264 = vunpack.c.l.bf16 %v232
      %v265 = vunpack.c.l.bf16 %v233
      %v266 = vunpack.c.l.bf16 %v234
      %v267 = vunpack.c.l.bf16 %v235
      %v268 = vunpack.c.l.bf16 %v236
      %v269 = vunpack.c.l.bf16 %v237
      %v270 = vunpack.c.l.bf16 %v238
      %v271 = vunpack.c.l.bf16 %v239
      %v272 = vunpack.c.l.bf16 %v240
      %v273 = vunpack.c.l.bf16 %v241
      %v274 = vunpack.c.l.bf16 %v242
      %v275 = vunpack.c.l.bf16 %v243
      %v276 = vunpack.c.l.bf16 %v244
      %v277 = vunpack.c.l.bf16 %v245
      %v278 = vunpack.c.l.bf16 %v246
      %v279 = vunpack.c.l.bf16 %v247
      %v280 = vunpack.c.l.bf16 %v248
      %v281 = vunpack.c.l.bf16 %v249
      %v282 = vld [vmem:[%s1] sm:$0x1]
      %v284 = vlaneseq
      %v285 = vshrl.u32 %v284, 7
      %v286 = vsub.s32 0, %v285
      %v287 = vrot.slane %v282, %v286
      %v289 = vmul.f32 %v250, %v287
      %v290 = vmul.f32 %v251, %v287
      %v291 = vmul.f32 %v252, %v287
      %v292 = vmul.f32 %v253, %v287
      %v293 = vmul.f32 %v254, %v287
      %v294 = vmul.f32 %v255, %v287
      %v295 = vmul.f32 %v256, %v287
      %v296 = vmul.f32 %v257, %v287
      %v297 = vmul.f32 %v258, %v287
      %v298 = vmul.f32 %v259, %v287
      %v299 = vmul.f32 %v260, %v287
      %v300 = vmul.f32 %v261, %v287
      %v301 = vmul.f32 %v262, %v287
      %v302 = vmul.f32 %v263, %v287
      %v303 = vmul.f32 %v264, %v287
      %v304 = vmul.f32 %v265, %v287
      %v305 = vmul.f32 %v266, %v287
      %v306 = vmul.f32 %v267, %v287
      %v307 = vmul.f32 %v268, %v287
      %v308 = vmul.f32 %v269, %v287
      %v309 = vmul.f32 %v270, %v287
      %v310 = vmul.f32 %v271, %v287
      %v311 = vmul.f32 %v272, %v287
      %v312 = vmul.f32 %v273, %v287
      %v313 = vmul.f32 %v274, %v287
      %v314 = vmul.f32 %v275, %v287
      %v315 = vmul.f32 %v276, %v287
      %v316 = vmul.f32 %v277, %v287
      %v317 = vmul.f32 %v278, %v287
      %v318 = vmul.f32 %v279, %v287
      %v319 = vmul.f32 %v280, %v287
      %v320 = vmul.f32 %v281, %v287
      %v321 = vld [vmem:[%s2] sm:$0x1]
      %v323 = vlaneseq
      %v324 = vshrl.u32 %v323, 7
      %v325 = vsub.s32 0, %v324
      %v326 = vrot.slane %v321, %v325
      %v328 = vadd.f32 %v289, %v326
      %v329 = vadd.f32 %v290, %v326
      %v330 = vadd.f32 %v291, %v326
      %v331 = vadd.f32 %v292, %v326
      %v332 = vadd.f32 %v293, %v326
      %v333 = vadd.f32 %v294, %v326
      %v334 = vadd.f32 %v295, %v326
      %v335 = vadd.f32 %v296, %v326
      %v336 = vadd.f32 %v297, %v326
      %v337 = vadd.f32 %v298, %v326
      %v338 = vadd.f32 %v299, %v326
      %v339 = vadd.f32 %v300, %v326
      %v340 = vadd.f32 %v301, %v326
      %v341 = vadd.f32 %v302, %v326
      %v342 = vadd.f32 %v303, %v326
      %v343 = vadd.f32 %v304, %v326
      %v344 = vadd.f32 %v305, %v326
      %v345 = vadd.f32 %v306, %v326
      %v346 = vadd.f32 %v307, %v326
      %v347 = vadd.f32 %v308, %v326
      %v348 = vadd.f32 %v309, %v326
      %v349 = vadd.f32 %v310, %v326
      %v350 = vadd.f32 %v311, %v326
      %v351 = vadd.f32 %v312, %v326
      %v352 = vadd.f32 %v313, %v326
      %v353 = vadd.f32 %v314, %v326
      %v354 = vadd.f32 %v315, %v326
      %v355 = vadd.f32 %v316, %v326
      %v356 = vadd.f32 %v317, %v326
      %v357 = vadd.f32 %v318, %v326
      %v358 = vadd.f32 %v319, %v326
      %v359 = vadd.f32 %v320, %v326
      %v360 = vld [vmem:[%s212] sm:$0xff]
      %v361 = vld [vmem:[%s212 + $0x8] sm:$0xff]
      %v362 = vld [vmem:[%s212 + $0x10] sm:$0xff]
      %v363 = vld [vmem:[%s212 + $0x18] sm:$0xff]
      %v364 = vld [vmem:[%s212 + $0x20] sm:$0xff]
      %v365 = vld [vmem:[%s212 + $0x28] sm:$0xff]
      %v366 = vld [vmem:[%s212 + $0x30] sm:$0xff]
      %v367 = vld [vmem:[%s212 + $0x38] sm:$0xff]
      %v368 = vld [vmem:[%s212 + $0x40] sm:$0xff]
      %v369 = vld [vmem:[%s212 + $0x48] sm:$0xff]
      %v370 = vld [vmem:[%s212 + $0x50] sm:$0xff]
      %v371 = vld [vmem:[%s212 + $0x58] sm:$0xff]
      %v372 = vld [vmem:[%s212 + $0x60] sm:$0xff]
      %v373 = vld [vmem:[%s212 + $0x68] sm:$0xff]
      %v374 = vld [vmem:[%s212 + $0x70] sm:$0xff]
      %v375 = vld [vmem:[%s212 + $0x78] sm:$0xff]
      %v376 = vld [vmem:[%s212 + $0x80] sm:$0xff]
      %v377 = vld [vmem:[%s212 + $0x88] sm:$0xff]
      %v378 = vld [vmem:[%s212 + $0x90] sm:$0xff]
      %v379 = vld [vmem:[%s212 + $0x98] sm:$0xff]
      %v380 = vld [vmem:[%s212 + $0xa0] sm:$0xff]
      %v381 = vld [vmem:[%s212 + $0xa8] sm:$0xff]
      %v382 = vld [vmem:[%s212 + $0xb0] sm:$0xff]
      %v383 = vld [vmem:[%s212 + $0xb8] sm:$0xff]
      %v384 = vld [vmem:[%s212 + $0xc0] sm:$0xff]
      %v385 = vld [vmem:[%s212 + $0xc8] sm:$0xff]
      %v386 = vld [vmem:[%s212 + $0xd0] sm:$0xff]
      %v387 = vld [vmem:[%s212 + $0xd8] sm:$0xff]
      %v388 = vld [vmem:[%s212 + $0xe0] sm:$0xff]
      %v389 = vld [vmem:[%s212 + $0xe8] sm:$0xff]
      %v390 = vld [vmem:[%s212 + $0xf0] sm:$0xff]
      %v391 = vld [vmem:[%s212 + $0xf8] sm:$0xff]
      %v392 = vadd.f32 %v328, %v360
      %v393 = vadd.f32 %v329, %v361
      %v394 = vadd.f32 %v330, %v362
      %v395 = vadd.f32 %v331, %v363
      %v396 = vadd.f32 %v332, %v364
      %v397 = vadd.f32 %v333, %v365
      %v398 = vadd.f32 %v334, %v366
      %v399 = vadd.f32 %v335, %v367
      %v400 = vadd.f32 %v336, %v368
      %v401 = vadd.f32 %v337, %v369
      %v402 = vadd.f32 %v338, %v370
      %v403 = vadd.f32 %v339, %v371
      %v404 = vadd.f32 %v340, %v372
      %v405 = vadd.f32 %v341, %v373
      %v406 = vadd.f32 %v342, %v374
      %v407 = vadd.f32 %v343, %v375
      %v408 = vadd.f32 %v344, %v376
      %v409 = vadd.f32 %v345, %v377
      %v410 = vadd.f32 %v346, %v378
      %v411 = vadd.f32 %v347, %v379
      %v412 = vadd.f32 %v348, %v380
      %v413 = vadd.f32 %v349, %v381
      %v414 = vadd.f32 %v350, %v382
      %v415 = vadd.f32 %v351, %v383
      %v416 = vadd.f32 %v352, %v384
      %v417 = vadd.f32 %v353, %v385
      %v418 = vadd.f32 %v354, %v386
      %v419 = vadd.f32 %v355, %v387
      %v420 = vadd.f32 %v356, %v388
      %v421 = vadd.f32 %v357, %v389
      %v422 = vadd.f32 %v358, %v390
      %v423 = vadd.f32 %v359, %v391
      %v424 = vmax.f32 %v392, 0.0
      %v425 = vmax.f32 %v393, 0.0
      %v426 = vmax.f32 %v394, 0.0
      %v427 = vmax.f32 %v395, 0.0
      %v428 = vmax.f32 %v396, 0.0
      %v429 = vmax.f32 %v397, 0.0
      %v430 = vmax.f32 %v398, 0.0
      %v431 = vmax.f32 %v399, 0.0
      %v432 = vmax.f32 %v400, 0.0
      %v433 = vmax.f32 %v401, 0.0
      %v434 = vmax.f32 %v402, 0.0
      %v435 = vmax.f32 %v403, 0.0
      %v436 = vmax.f32 %v404, 0.0
      %v437 = vmax.f32 %v405, 0.0
      %v438 = vmax.f32 %v406, 0.0
      %v439 = vmax.f32 %v407, 0.0
      %v440 = vmax.f32 %v408, 0.0
      %v441 = vmax.f32 %v409, 0.0
      %v442 = vmax.f32 %v410, 0.0
      %v443 = vmax.f32 %v411, 0.0
      %v444 = vmax.f32 %v412, 0.0
      %v445 = vmax.f32 %v413, 0.0
      %v446 = vmax.f32 %v414, 0.0
      %v447 = vmax.f32 %v415, 0.0
      %v448 = vmax.f32 %v416, 0.0
      %v449 = vmax.f32 %v417, 0.0
      %v450 = vmax.f32 %v418, 0.0
      %v451 = vmax.f32 %v419, 0.0
      %v452 = vmax.f32 %v420, 0.0
      %v453 = vmax.f32 %v421, 0.0
      %v454 = vmax.f32 %v422, 0.0
      %v455 = vmax.f32 %v423, 0.0
      %456 = vst [vmem:[%s217] sm:$0xff] %v424
      %457 = vst [vmem:[%s217 + $0x8] sm:$0xff] %v425
      %458 = vst [vmem:[%s217 + $0x10] sm:$0xff] %v426
      %459 = vst [vmem:[%s217 + $0x18] sm:$0xff] %v427
      %460 = vst [vmem:[%s217 + $0x20] sm:$0xff] %v428
      %461 = vst [vmem:[%s217 + $0x28] sm:$0xff] %v429
      %462 = vst [vmem:[%s217 + $0x30] sm:$0xff] %v430
      %463 = vst [vmem:[%s217 + $0x38] sm:$0xff] %v431
      %464 = vst [vmem:[%s217 + $0x40] sm:$0xff] %v432
      %465 = vst [vmem:[%s217 + $0x48] sm:$0xff] %v433
      %466 = vst [vmem:[%s217 + $0x50] sm:$0xff] %v434
      %467 = vst [vmem:[%s217 + $0x58] sm:$0xff] %v435
      %468 = vst [vmem:[%s217 + $0x60] sm:$0xff] %v436
      %469 = vst [vmem:[%s217 + $0x68] sm:$0xff] %v437
      %470 = vst [vmem:[%s217 + $0x70] sm:$0xff] %v438
      %471 = vst [vmem:[%s217 + $0x78] sm:$0xff] %v439
      %472 = vst [vmem:[%s217 + $0x80] sm:$0xff] %v440
      %473 = vst [vmem:[%s217 + $0x88] sm:$0xff] %v441
      %474 = vst [vmem:[%s217 + $0x90] sm:$0xff] %v442
      %475 = vst [vmem:[%s217 + $0x98] sm:$0xff] %v443
      %476 = vst [vmem:[%s217 + $0xa0] sm:$0xff] %v444
      %477 = vst [vmem:[%s217 + $0xa8] sm:$0xff] %v445
      %478 = vst [vmem:[%s217 + $0xb0] sm:$0xff] %v446
      %479 = vst [vmem:[%s217 + $0xb8] sm:$0xff] %v447
      %480 = vst [vmem:[%s217 + $0xc0] sm:$0xff] %v448
      %481 = vst [vmem:[%s217 + $0xc8] sm:$0xff] %v449
      %482 = vst [vmem:[%s217 + $0xd0] sm:$0xff] %v450
      %483 = vst [vmem:[%s217 + $0xd8] sm:$0xff] %v451
      %484 = vst [vmem:[%s217 + $0xe0] sm:$0xff] %v452
      %485 = vst [vmem:[%s217 + $0xe8] sm:$0xff] %v453
      %486 = vst [vmem:[%s217 + $0xf0] sm:$0xff] %v454
      %487 = vst [vmem:[%s217 + $0xf8] sm:$0xff] %v455
      %p488 = scmp.lt.s32.totalorder %s15, 1
      %s489 = scalar_select %p488, %s15, 1
      %s490 = smul.addr %s489, 32
      %s491 = smul.addr %s490, 8
      %s492 = scalar_lea.vmem %s4, %s491
      // Predicated region
      $region37: #{basic_block_forward.5} parent=35 // pred_check
        %p493 = pneg %p127
      $region38: #{basic_block_forward.5} parent=35 // pred_check_branch
        %495 = sbr.rel (%p493) target = $region40
      $region39: #{basic_block_forward.5} parent=35 // pred_region
        _
      $region40: #{basic_block_forward.5} parent=35 // pred_fallthru
        _
    $region36: #{basic_block_forward.5} parent=5 // pred_fallthru
      _
    %p496 = scmp.le.s32.totalorder 2, %s10
    // Predicated region
    $region41: #{basic_block_forward.5} parent=5 // pred_check
      %p497 = pneg %p496
    $region42: #{basic_block_forward.5} parent=5 // pred_check_branch
      %499 = sbr.rel (%p497) target = $region44
    $region43: #{basic_block_forward.5} parent=5 // pred_region
      %s500 = ssub.s32 %s10, 2
      // Predicated region
      $region45: #{basic_block_forward.5} parent=43 // pred_check
        %p501 = pneg %p133
      $region46: #{basic_block_forward.5} parent=43 // pred_check_branch
        %503 = sbr.rel (%p501) target = $region48
      $region47: #{basic_block_forward.5} parent=43 // pred_region
        %p504 = scmp.lt.s32.totalorder %s16, 1
        %s505 = scalar_select %p504, %s16, 1
        %s506 = smul.addr %s505, 32
        %s507 = smul.addr %s506, 8
        %s508 = scalar_lea.vmem %s4, %s507
      $region48: #{basic_block_forward.5} parent=43 // pred_fallthru
        _
    $region44: #{basic_block_forward.5} parent=5 // pred_fallthru
      _
  $region6: #{basic_block_forward.5} parent=0 // loop_footer
    %s14 = sadd.s32 1, %s10
  $region7: #{basic_block_forward.5} parent=0 // loop_footer_branch
    %9 = sbr.rel target = $region3
  $region8: #{basic_block_forward.5} parent=0 // loop_exit
    _

// kernel: basic_block_forward.4
$region0: #{basic_block_forward.4}
  #allocation0 [shape = 'u32[]', space=smem, size = 0x4, offset = 0x4, fixed_abs, tag = 'smem constant byte address 0x4 - core index']
  #allocation1 [shape = 'u32[144,128]{1,0:T(1,128)}', space=vmem, size = 0x12000, scoped, tag = 'internal scratch']
  #allocation2 [shape = 'bf16[288,384]{1,0:T(16,128)(2,1)}', space=vmem, size = 0x36000, scoped, tag = 'scratch operand']
  #allocation3 [shape = 'f32[272,128]{1,0:T(8,128)}', space=vmem, size = 0x22000, scoped, tag = 'scratch operand']
  %s0 = inlined_call_operand.vmem [shape: bf16[2,256,128], index: 0, kind: input, shape index: {}]
  %s1 = inlined_call_operand.vmem [shape: f32[1,128], index: 1, kind: input, shape index: {}]
  %s2 = inlined_call_operand.vmem [shape: f32[1,128], index: 2, kind: input, shape index: {}]
  %s3 = inlined_call_operand.vmem [shape: bf16[3,384,128], index: 3, kind: input, shape index: {}]
  %s4 = inlined_call_operand.vmem [shape: f32[256,1], index: 4, kind: input, shape index: {}]
  %s5 = inlined_call_operand.vmem [shape: f32[256,1], index: 5, kind: input, shape index: {}]
  %s6 = inlined_call_operand.vmem [shape: bf16[2,256,128], index: 6, kind: output, shape index: {0}]
  %s7 = inlined_call_operand.vmem [shape: f32[2,1,128], index: 7, kind: output, shape index: {1}]
  %s8 = inlined_call_operand.vmem [shape: f32[2,1,128], index: 8, kind: output, shape index: {2}]
  %9 = xla_tuple %s6, %s7, %s8
  %s10 = sld [smem:[#allocation0]]
  $region73: #{basic_block_forward.4} parent=0
    _
  %s12 = ssub.s32 1, %s10
  %s13 = scalar_select 0, %s12, %s10
  loop: start=0, step=1, limit=4
  $region2: #{basic_block_forward.4} parent=0 // loop_pre_header
    _
  $region3: #{basic_block_forward.4} parent=0 // loop_header
    %s15 = sphi 0, %s19
    %p16 = scmp.ge.s32.totalorder %s15, 4
    %s25 = sphi 0, %s27
    %s28 = sphi 0, %s25
    %s29 = sphi 0, %s28
    %s45 = sphi 0, %s29
    %s49 = sphi 0, %s49
    %s51 = sphi 0, %s49
    %s52 = sphi 0, %s51
    %s66 = sphi 0, %s52
    %s70 = sphi 0, %s70
    %s72 = sphi 0, %s70
    %s73 = sphi 0, %s72
    %s87 = sphi 0, %s73
    %s91 = sphi 0, %s91
    %s93 = sphi 0, %s91
    %s94 = sphi 0, %s93
    %s108 = sphi 0, %s94
    %s112 = sphi 0, %s112
    %s114 = sphi 0, %s112
    %s115 = sphi 0, %s114
    %s129 = sphi 0, %s115
    %s133 = sphi 0, %s133
    %s135 = sphi 0, %s133
    %s136 = sphi 0, %s135
    %s150 = sphi 0, %s136
    %s156 = sphi 0, %s158
    %s159 = sphi 0, %s156
    %s160 = sphi 0, %s159
    %s176 = sphi 0, %s160
    %s182 = sphi 0, %s184
    %s185 = sphi 0, %s182
    %s186 = sphi 0, %s185
    %s202 = sphi 0, %s186
    %s208 = sphi 0, %s210
    %s211 = sphi 0, %s208
    %s212 = sphi 0, %s211
    %s228 = sphi 0, %s212
  $region4: #{basic_block_forward.4} parent=0 // loop_header_branch
    %18 = sbr.rel (%p16) target = $region8
  $region5: #{basic_block_forward.4} parent=0 // loop_body
    %s20 = ssub.s32 %s15, 1
    %s21 = ssub.s32 %s15, 2
    %s22 = sadd.s32 %s15, 1
    %s23 = ssub.s32 %s15, %s22
    %p24 = scmp.eq.s32.totalorder %s23, 0
    %s26 = sadd.s32 %s25, 1
    %s27 = scalar_select %p24, %s25, %s26
    %p30 = pneg %p24
    %p31 = scmp.eq.s32.totalorder %s15, 1
    %p32 = por %p30, %p31
    %p33 = scmp.ne.s32.totalorder %s25, %s28
    %p34 = scmp.eq.s32.totalorder %s15, 0
    %p35 = por %p33, %p34
    %p36 = scmp.ne.s32.totalorder %s25, %s28
    %p37 = scmp.eq.s32.totalorder %s20, 1
    %p38 = por %p36, %p37
    %p39 = scmp.ne.s32.totalorder %s28, %s29
    %p40 = scmp.eq.s32.totalorder %s20, 0
    %p41 = por %p39, %p40
    %p42 = scmp.ne.s32.totalorder %s28, %s29
    %p43 = scmp.eq.s32.totalorder %s21, 1
    %p44 = por %p42, %p43
    %p46 = scmp.ne.s32.totalorder %s29, %s45
    %p47 = scmp.eq.s32.totalorder %s21, 0
    %p48 = por %p46, %p47
    %s50 = sadd.s32 %s49, 1
    %p53 = scmp.eq.s32.totalorder %s15, 1
    %p54 = scmp.ne.s32.totalorder %s49, %s51
    %p55 = scmp.eq.s32.totalorder %s15, 0
    %p56 = por %p54, %p55
    %p57 = scmp.ne.s32.totalorder %s49, %s51
    %p58 = scmp.eq.s32.totalorder %s20, 1
    %p59 = por %p57, %p58
    %p60 = scmp.ne.s32.totalorder %s51, %s52
    %p61 = scmp.eq.s32.totalorder %s20, 0
    %p62 = por %p60, %p61
    %p63 = scmp.ne.s32.totalorder %s51, %s52
    %p64 = scmp.eq.s32.totalorder %s21, 1
    %p65 = por %p63, %p64
    %p67 = scmp.ne.s32.totalorder %s52, %s66
    %p68 = scmp.eq.s32.totalorder %s21, 0
    %p69 = por %p67, %p68
    %s71 = sadd.s32 %s70, 1
    %p74 = scmp.eq.s32.totalorder %s15, 1
    %p75 = scmp.ne.s32.totalorder %s70, %s72
    %p76 = scmp.eq.s32.totalorder %s15, 0
    %p77 = por %p75, %p76
    %p78 = scmp.ne.s32.totalorder %s70, %s72
    %p79 = scmp.eq.s32.totalorder %s20, 1
    %p80 = por %p78, %p79
    %p81 = scmp.ne.s32.totalorder %s72, %s73
    %p82 = scmp.eq.s32.totalorder %s20, 0
    %p83 = por %p81, %p82
    %p84 = scmp.ne.s32.totalorder %s72, %s73
    %p85 = scmp.eq.s32.totalorder %s21, 1
    %p86 = por %p84, %p85
    %p88 = scmp.ne.s32.totalorder %s73, %s87
    %p89 = scmp.eq.s32.totalorder %s21, 0
    %p90 = por %p88, %p89
    %s92 = sadd.s32 %s91, 1
    %p95 = scmp.eq.s32.totalorder %s15, 1
    %p96 = scmp.ne.s32.totalorder %s91, %s93
    %p97 = scmp.eq.s32.totalorder %s15, 0
    %p98 = por %p96, %p97
    %p99 = scmp.ne.s32.totalorder %s91, %s93
    %p100 = scmp.eq.s32.totalorder %s20, 1
    %p101 = por %p99, %p100
    %p102 = scmp.ne.s32.totalorder %s93, %s94
    %p103 = scmp.eq.s32.totalorder %s20, 0
    %p104 = por %p102, %p103
    %p105 = scmp.ne.s32.totalorder %s93, %s94
    %p106 = scmp.eq.s32.totalorder %s21, 1
    %p107 = por %p105, %p106
    %p109 = scmp.ne.s32.totalorder %s94, %s108
    %p110 = scmp.eq.s32.totalorder %s21, 0
    %p111 = por %p109, %p110
    %s113 = sadd.s32 %s112, 1
    %p116 = scmp.eq.s32.totalorder %s15, 1
    %p117 = scmp.ne.s32.totalorder %s112, %s114
    %p118 = scmp.eq.s32.totalorder %s15, 0
    %p119 = por %p117, %p118
    %p120 = scmp.ne.s32.totalorder %s112, %s114
    %p121 = scmp.eq.s32.totalorder %s20, 1
    %p122 = por %p120, %p121
    %p123 = scmp.ne.s32.totalorder %s114, %s115
    %p124 = scmp.eq.s32.totalorder %s20, 0
    %p125 = por %p123, %p124
    %p126 = scmp.ne.s32.totalorder %s114, %s115
    %p127 = scmp.eq.s32.totalorder %s21, 1
    %p128 = por %p126, %p127
    %p130 = scmp.ne.s32.totalorder %s115, %s129
    %p131 = scmp.eq.s32.totalorder %s21, 0
    %p132 = por %p130, %p131
    %s134 = sadd.s32 %s133, 1
    %p137 = scmp.eq.s32.totalorder %s15, 1
    %p138 = scmp.ne.s32.totalorder %s133, %s135
    %p139 = scmp.eq.s32.totalorder %s15, 0
    %p140 = por %p138, %p139
    %p141 = scmp.ne.s32.totalorder %s133, %s135
    %p142 = scmp.eq.s32.totalorder %s20, 1
    %p143 = por %p141, %p142
    %p144 = scmp.ne.s32.totalorder %s135, %s136
    %p145 = scmp.eq.s32.totalorder %s20, 0
    %p146 = por %p144, %p145
    %p147 = scmp.ne.s32.totalorder %s135, %s136
    %p148 = scmp.eq.s32.totalorder %s21, 1
    %p149 = por %p147, %p148
    %p151 = scmp.ne.s32.totalorder %s136, %s150
    %p152 = scmp.eq.s32.totalorder %s21, 0
    %p153 = por %p151, %p152
    %s154 = ssub.s32 %s15, %s22
    %p155 = scmp.eq.s32.totalorder %s154, 0
    %s157 = sadd.s32 %s156, 1
    %s158 = scalar_select %p155, %s156, %s157
    %p161 = pneg %p155
    %p162 = scmp.eq.s32.totalorder %s15, 1
    %p163 = por %p161, %p162
    %p164 = scmp.ne.s32.totalorder %s156, %s159
    %p165 = scmp.eq.s32.totalorder %s15, 0
    %p166 = por %p164, %p165
    %p167 = scmp.ne.s32.totalorder %s156, %s159
    %p168 = scmp.eq.s32.totalorder %s20, 1
    %p169 = por %p167, %p168
    %p170 = scmp.ne.s32.totalorder %s159, %s160
    %p171 = scmp.eq.s32.totalorder %s20, 0
    %p172 = por %p170, %p171
    %p173 = scmp.ne.s32.totalorder %s159, %s160
    %p174 = scmp.eq.s32.totalorder %s21, 1
    %p175 = por %p173, %p174
    %p177 = scmp.ne.s32.totalorder %s160, %s176
    %p178 = scmp.eq.s32.totalorder %s21, 0
    %p179 = por %p177, %p178
    %s180 = ssub.s32 %s15, %s22
    %p181 = scmp.eq.s32.totalorder %s180, 0
    %s183 = sadd.s32 %s182, 1
    %s184 = scalar_select %p181, %s182, %s183
    %p187 = pneg %p181
    %p188 = scmp.eq.s32.totalorder %s15, 1
    %p189 = por %p187, %p188
    %p190 = scmp.ne.s32.totalorder %s182, %s185
    %p191 = scmp.eq.s32.totalorder %s15, 0
    %p192 = por %p190, %p191
    %p193 = scmp.ne.s32.totalorder %s182, %s185
    %p194 = scmp.eq.s32.totalorder %s20, 1
    %p195 = por %p193, %p194
    %p196 = scmp.ne.s32.totalorder %s185, %s186
    %p197 = scmp.eq.s32.totalorder %s20, 0
    %p198 = por %p196, %p197
    %p199 = scmp.ne.s32.totalorder %s185, %s186
    %p200 = scmp.eq.s32.totalorder %s21, 1
    %p201 = por %p199, %p200
    %p203 = scmp.ne.s32.totalorder %s186, %s202
    %p204 = scmp.eq.s32.totalorder %s21, 0
    %p205 = por %p203, %p204
    %s206 = ssub.s32 %s15, %s22
    %p207 = scmp.eq.s32.totalorder %s206, 0
    %s209 = sadd.s32 %s208, 1
    %s210 = scalar_select %p207, %s208, %s209
    %p213 = pneg %p207
    %p214 = scmp.eq.s32.totalorder %s15, 1
    %p215 = por %p213, %p214
    %p216 = scmp.ne.s32.totalorder %s208, %s211
    %p217 = scmp.eq.s32.totalorder %s15, 0
    %p218 = por %p216, %p217
    %p219 = scmp.ne.s32.totalorder %s208, %s211
    %p220 = scmp.eq.s32.totalorder %s20, 1
    %p221 = por %p219, %p220
    %p222 = scmp.ne.s32.totalorder %s211, %s212
    %p223 = scmp.eq.s32.totalorder %s20, 0
    %p224 = por %p222, %p223
    %p225 = scmp.ne.s32.totalorder %s211, %s212
    %p226 = scmp.eq.s32.totalorder %s21, 1
    %p227 = por %p225, %p226
    %p229 = scmp.ne.s32.totalorder %s212, %s228
    %p230 = scmp.eq.s32.totalorder %s21, 0
    %p231 = por %p229, %p230
    %p232 = scmp.le.s32.totalorder 1, %s15
    %p233 = scmp.lt.s32.totalorder %s15, 3
    %p234 = pnand %p232, %p233
    %p235 = pneg %p234
    // Predicated region
    $region9: #{basic_block_forward.4} parent=5 // pred_check
      _
    $region10: #{basic_block_forward.4} parent=5 // pred_check_branch
      %237 = sbr.rel (%p234) target = $region12
    $region11: #{basic_block_forward.4} parent=5 // pred_region
      %s238 = ssub.s32 %s15, 1
      // Predicated region
      $region13: #{basic_block_forward.4} parent=11 // pred_check
        %p239 = pneg %p62
      $region14: #{basic_block_forward.4} parent=11 // pred_check_branch
        %241 = sbr.rel (%p239) target = $region16
      $region15: #{basic_block_forward.4} parent=11 // pred_region
        _
      $region16: #{basic_block_forward.4} parent=11 // pred_fallthru
        _
      // Predicated region
      $region17: #{basic_block_forward.4} parent=11 // pred_check
        %p242 = pneg %p83
      $region18: #{basic_block_forward.4} parent=11 // pred_check_branch
        %244 = sbr.rel (%p242) target = $region20
      $region19: #{basic_block_forward.4} parent=11 // pred_region
        _
      $region20: #{basic_block_forward.4} parent=11 // pred_fallthru
        _
      // Predicated region
      $region21: #{basic_block_forward.4} parent=11 // pred_check
        %p245 = pneg %p104
      $region22: #{basic_block_forward.4} parent=11 // pred_check_branch
        %247 = sbr.rel (%p245) target = $region24
      $region23: #{basic_block_forward.4} parent=11 // pred_region
        _
      $region24: #{basic_block_forward.4} parent=11 // pred_fallthru
        _
      // Predicated region
      $region25: #{basic_block_forward.4} parent=11 // pred_check
        %p248 = pneg %p125
      $region26: #{basic_block_forward.4} parent=11 // pred_check_branch
        %250 = sbr.rel (%p248) target = $region28
      $region27: #{basic_block_forward.4} parent=11 // pred_region
        _
      $region28: #{basic_block_forward.4} parent=11 // pred_fallthru
        _
      // Predicated region
      $region29: #{basic_block_forward.4} parent=11 // pred_check
        %p251 = pneg %p146
      $region30: #{basic_block_forward.4} parent=11 // pred_check_branch
        %253 = sbr.rel (%p251) target = $region32
      $region31: #{basic_block_forward.4} parent=11 // pred_region
        _
      $region32: #{basic_block_forward.4} parent=11 // pred_fallthru
        _
    $region12: #{basic_block_forward.4} parent=5 // pred_fallthru
      _
    %p254 = scmp.lt.s32.totalorder %s15, 2
    // Predicated region
    $region33: #{basic_block_forward.4} parent=5 // pred_check
      %p255 = pneg %p254
    $region34: #{basic_block_forward.4} parent=5 // pred_check_branch
      %257 = sbr.rel (%p255) target = $region36
    $region35: #{basic_block_forward.4} parent=5 // pred_region
      // Predicated region
      $region37: #{basic_block_forward.4} parent=35 // pred_check
        %p258 = pneg %p35
      $region38: #{basic_block_forward.4} parent=35 // pred_check_branch
        %260 = sbr.rel (%p258) target = $region40
      $region39: #{basic_block_forward.4} parent=35 // pred_region
        %p261 = scmp.lt.s32.totalorder %s15, 1
        %s262 = scalar_select %p261, %s15, 1
        %s263 = smul.addr %s262, 32
        %s264 = smul.addr %s263, 4
        %s265 = scalar_lea.vmem %s0, %s264
      $region40: #{basic_block_forward.4} parent=35 // pred_fallthru
        _
    $region36: #{basic_block_forward.4} parent=5 // pred_fallthru
      _
    %p266 = scmp.le.s32.totalorder 1, %s15
    %p267 = scmp.lt.s32.totalorder %s15, 3
    %p268 = pnand %p266, %p267
    %p269 = pneg %p268
    // Predicated region
    $region41: #{basic_block_forward.4} parent=5 // pred_check
      _
    $region42: #{basic_block_forward.4} parent=5 // pred_check_branch
      %271 = sbr.rel (%p268) target = $region44
    $region43: #{basic_block_forward.4} parent=5 // pred_region
      %s272 = ssub.s32 %s15, 1
      %p273 = scmp.lt.s32.totalorder %s20, 1
      %s274 = scalar_select %p273, %s20, 1
      %s275 = smul.addr %s274, 32
      %s276 = smul.addr %s275, 4
      %s277 = scalar_lea.vmem %s0, %s276
      %p278 = pneg %p41
      %p279 = pneg %p38
      %p280 = pneg %p62
      %p281 = pneg %p59
      %p282 = pneg %p83
      %p283 = pneg %p80
      %p284 = pneg %p104
      %p285 = pneg %p101
      %p286 = pneg %p125
      %p287 = pneg %p122
      %p288 = pneg %p146
      %p289 = pneg %p143
      %p290 = pneg %p172
      %p291 = pneg %p169
      %p292 = scmp.lt.s32.totalorder %s20, 1
      %s293 = scalar_select %p292, %s20, 1
      %s294 = smul.addr %s293, 32
      %s295 = smul.addr %s294, 4
      %s296 = scalar_lea.vmem %s6, %s295
      %p297 = pneg %p198
      %p298 = pneg %p195
      %p299 = scmp.lt.s32.totalorder %s20, 1
      %s300 = scalar_select %p299, %s20, 1
      %s301 = scalar_lea.vmem %s7, %s300
      %p302 = pneg %p224
      %p303 = pneg %p221
      %p304 = scmp.lt.s32.totalorder %s20, 1
      %s305 = scalar_select %p304, %s20, 1
      %s306 = scalar_lea.vmem %s8, %s305
      %p307 = scmp.lt.s32.totalorder %s20, 1
      %s308 = scalar_select %p307, %s20, 1
      %s309 = smul.addr %s308, 32
      %s310 = smul.addr %s309, 4
      %s311 = scalar_lea.vmem %s0, %s310
      %p312 = scmp.lt.s32.totalorder %s20, 1
      %s313 = scalar_select %p312, %s20, 1
      %s314 = smul.addr %s313, 32
      %s315 = smul.addr %s314, 4
      %s316 = scalar_lea.vmem %s6, %s315
      %p317 = scmp.lt.s32.totalorder %s20, 1
      %s318 = scalar_select %p317, %s20, 1
      %s319 = scalar_lea.vmem %s7, %s318
      %p320 = scmp.lt.s32.totalorder %s20, 1
      %s321 = scalar_select %p320, %s20, 1
      %s322 = scalar_lea.vmem %s8, %s321
      %324 = vst [vmem:[#allocation2] sm:$0xff] 0
      %325 = vst [vmem:[#allocation2 + $0x8] sm:$0xff] 0
      %326 = vst [vmem:[#allocation2 + $0x10] sm:$0xff] 0
      %327 = vst [vmem:[#allocation2 + $0x198] sm:$0xff] 0
      %328 = vst [vmem:[#allocation2 + $0x1a0] sm:$0xff] 0
      %329 = vst [vmem:[#allocation2 + $0x1a8] sm:$0xff] 0
      %330 = vst [vmem:[#allocation3] sm:$0xff] 0.0
      %331 = vst [vmem:[#allocation3 + $0x108] sm:$0xff] 0.0
      %v332 = vld [vmem:[%s1] sm:$0x1]
      %v333 = vld [vmem:[%s2] sm:$0x1]
      %v334 = vld [vmem:[%s311] sm:$0xf]
      %v335 = vld [vmem:[%s311 + $0x4] sm:$0xf]
      %v336 = vld [vmem:[%s311 + $0x8] sm:$0xf]
      %v337 = vld [vmem:[%s311 + $0xc] sm:$0xf]
      %v338 = vld [vmem:[%s311 + $0x10] sm:$0xf]
      %v339 = vld [vmem:[%s311 + $0x14] sm:$0xf]
      %v340 = vld [vmem:[%s311 + $0x18] sm:$0xf]
      %v341 = vld [vmem:[%s311 + $0x1c] sm:$0xf]
      %v342 = vld [vmem:[%s311 + $0x20] sm:$0xf]
      %v343 = vld [vmem:[%s311 + $0x24] sm:$0xf]
      %v344 = vld [vmem:[%s311 + $0x28] sm:$0xf]
      %v345 = vld [vmem:[%s311 + $0x2c] sm:$0xf]
      %v346 = vld [vmem:[%s311 + $0x30] sm:$0xf]
      %v347 = vld [vmem:[%s311 + $0x34] sm:$0xf]
      %v348 = vld [vmem:[%s311 + $0x38] sm:$0xf]
      %v349 = vld [vmem:[%s311 + $0x3c] sm:$0xf]
      %v350 = vld [vmem:[%s311 + $0x40] sm:$0xf]
      %v351 = vld [vmem:[%s311 + $0x44] sm:$0xf]
      %v352 = vld [vmem:[%s311 + $0x48] sm:$0xf]
      %v353 = vld [vmem:[%s311 + $0x4c] sm:$0xf]
      %v354 = vld [vmem:[%s311 + $0x50] sm:$0xf]
      %v355 = vld [vmem:[%s311 + $0x54] sm:$0xf]
      %v356 = vld [vmem:[%s311 + $0x58] sm:$0xf]
      %v357 = vld [vmem:[%s311 + $0x5c] sm:$0xf]
      %v358 = vld [vmem:[%s311 + $0x60] sm:$0xf]
      %v359 = vld [vmem:[%s311 + $0x64] sm:$0xf]
      %v360 = vld [vmem:[%s311 + $0x68] sm:$0xf]
      %v361 = vld [vmem:[%s311 + $0x6c] sm:$0xf]
      %v362 = vld [vmem:[%s311 + $0x70] sm:$0xf]
      %v363 = vld [vmem:[%s311 + $0x74] sm:$0xf]
      %v364 = vld [vmem:[%s311 + $0x78] sm:$0xf]
      %v365 = vld [vmem:[%s311 + $0x7c] sm:$0xf]
      %v366 = vunpack.c.l.bf16 %v334
      %v367 = vunpack.c.l.bf16 %v335
      %v368 = vunpack.c.l.bf16 %v336
      %v369 = vunpack.c.l.bf16 %v337
      %v370 = vunpack.c.l.bf16 %v338
      %v371 = vunpack.c.l.bf16 %v339
      %v372 = vunpack.c.l.bf16 %v340
      %v373 = vunpack.c.l.bf16 %v341
      %v374 = vunpack.c.l.bf16 %v342
      %v375 = vunpack.c.l.bf16 %v343
      %v376 = vunpack.c.l.bf16 %v344
      %v377 = vunpack.c.l.bf16 %v345
      %v378 = vunpack.c.l.bf16 %v346
      %v379 = vunpack.c.l.bf16 %v347
      %v380 = vunpack.c.l.bf16 %v348
      %v381 = vunpack.c.l.bf16 %v349
      %v382 = vunpack.c.l.bf16 %v350
      %v383 = vunpack.c.l.bf16 %v351
      %v384 = vunpack.c.l.bf16 %v352
      %v385 = vunpack.c.l.bf16 %v353
      %v386 = vunpack.c.l.bf16 %v354
      %v387 = vunpack.c.l.bf16 %v355
      %v388 = vunpack.c.l.bf16 %v356
      %v389 = vunpack.c.l.bf16 %v357
      %v390 = vunpack.c.l.bf16 %v358
      %v391 = vunpack.c.l.bf16 %v359
      %v392 = vunpack.c.l.bf16 %v360
      %v393 = vunpack.c.l.bf16 %v361
      %v394 = vunpack.c.l.bf16 %v362
      %v395 = vunpack.c.l.bf16 %v363
      %v396 = vunpack.c.l.bf16 %v364
      %v397 = vunpack.c.l.bf16 %v365
      %v399 = vlaneseq
      %v400 = vshrl.u32 %v399, 7
      %v401 = vsub.s32 0, %v400
      %v402 = vrot.slane %v332, %v401
      %v404 = vmul.f32 %v366, %v402
      %v405 = vmul.f32 %v367, %v402
      %v406 = vmul.f32 %v368, %v402
      %v407 = vmul.f32 %v369, %v402
      %v408 = vmul.f32 %v370, %v402
      %v409 = vmul.f32 %v371, %v402
      %v410 = vmul.f32 %v372, %v402
      %v411 = vmul.f32 %v373, %v402
      %v412 = vmul.f32 %v374, %v402
      %v413 = vmul.f32 %v375, %v402
      %v414 = vmul.f32 %v376, %v402
      %v415 = vmul.f32 %v377, %v402
      %v416 = vmul.f32 %v378, %v402
      %v417 = vmul.f32 %v379, %v402
      %v418 = vmul.f32 %v380, %v402
      %v419 = vmul.f32 %v381, %v402
      %v420 = vmul.f32 %v382, %v402
      %v421 = vmul.f32 %v383, %v402
      %v422 = vmul.f32 %v384, %v402
      %v423 = vmul.f32 %v385, %v402
      %v424 = vmul.f32 %v386, %v402
      %v425 = vmul.f32 %v387, %v402
      %v426 = vmul.f32 %v388, %v402
      %v427 = vmul.f32 %v389, %v402
      %v428 = vmul.f32 %v390, %v402
      %v429 = vmul.f32 %v391, %v402
      %v430 = vmul.f32 %v392, %v402
      %v431 = vmul.f32 %v393, %v402
      %v432 = vmul.f32 %v394, %v402
      %v433 = vmul.f32 %v395, %v402
      %v434 = vmul.f32 %v396, %v402
      %v435 = vmul.f32 %v397, %v402
      %v437 = vlaneseq
      %v438 = vshrl.u32 %v437, 7
      %v439 = vsub.s32 0, %v438
      %v440 = vrot.slane %v333, %v439
      %v442 = vadd.f32 %v404, %v440
      %v443 = vadd.f32 %v405, %v440
      %v444 = vadd.f32 %v406, %v440
      %v445 = vadd.f32 %v407, %v440
      %v446 = vadd.f32 %v408, %v440
      %v447 = vadd.f32 %v409, %v440
      %v448 = vadd.f32 %v410, %v440
      %v449 = vadd.f32 %v411, %v440
      %v450 = vadd.f32 %v412, %v440
      %v451 = vadd.f32 %v413, %v440
      %v452 = vadd.f32 %v414, %v440
      %v453 = vadd.f32 %v415, %v440
      %v454 = vadd.f32 %v416, %v440
      %v455 = vadd.f32 %v417, %v440
      %v456 = vadd.f32 %v418, %v440
      %v457 = vadd.f32 %v419, %v440
      %v458 = vadd.f32 %v420, %v440
      %v459 = vadd.f32 %v421, %v440
      %v460 = vadd.f32 %v422, %v440
      %v461 = vadd.f32 %v423, %v440
      %v462 = vadd.f32 %v424, %v440
      %v463 = vadd.f32 %v425, %v440
      %v464 = vadd.f32 %v426, %v440
      %v465 = vadd.f32 %v427, %v440
      %v466 = vadd.f32 %v428, %v440
      %v467 = vadd.f32 %v429, %v440
      %v468 = vadd.f32 %v430, %v440
      %v469 = vadd.f32 %v431, %v440
      %v470 = vadd.f32 %v432, %v440
      %v471 = vadd.f32 %v433, %v440
      %v472 = vadd.f32 %v434, %v440
      %v473 = vadd.f32 %v435, %v440
      %v474 = vmax.f32 %v442, 0.0
      %v475 = vmax.f32 %v443, 0.0
      %v476 = vmax.f32 %v444, 0.0
      %v477 = vmax.f32 %v445, 0.0
      %v478 = vmax.f32 %v446, 0.0
      %v479 = vmax.f32 %v447, 0.0
      %v480 = vmax.f32 %v448, 0.0
      %v481 = vmax.f32 %v449, 0.0
      %v482 = vmax.f32 %v450, 0.0
      %v483 = vmax.f32 %v451, 0.0
      %v484 = vmax.f32 %v452, 0.0
      %v485 = vmax.f32 %v453, 0.0
      %v486 = vmax.f32 %v454, 0.0
      %v487 = vmax.f32 %v455, 0.0
      %v488 = vmax.f32 %v456, 0.0
      %v489 = vmax.f32 %v457, 0.0
      %v490 = vmax.f32 %v458, 0.0
      %v491 = vmax.f32 %v459, 0.0
      %v492 = vmax.f32 %v460, 0.0
      %v493 = vmax.f32 %v461, 0.0
      %v494 = vmax.f32 %v462, 0.0
      %v495 = vmax.f32 %v463, 0.0
      %v496 = vmax.f32 %v464, 0.0
      %v497 = vmax.f32 %v465, 0.0
      %v498 = vmax.f32 %v466, 0.0
      %v499 = vmax.f32 %v467, 0.0
      %v500 = vmax.f32 %v468, 0.0
      %v501 = vmax.f32 %v469, 0.0
      %v502 = vmax.f32 %v470, 0.0
      %v503 = vmax.f32 %v471, 0.0
      %v504 = vmax.f32 %v472, 0.0
      %v505 = vmax.f32 %v473, 0.0
      %506 = vst [vmem:[#allocation3 + $0x8] sm:$0xff] %v474
      %507 = vst [vmem:[#allocation3 + $0x10] sm:$0xff] %v475
      %508 = vst [vmem:[#allocation3 + $0x18] sm:$0xff] %v476
      %509 = vst [vmem:[#allocation3 + $0x20] sm:$0xff] %v477
      %510 = vst [vmem:[#allocation3 + $0x28] sm:$0xff] %v478
      %511 = vst [vmem:[#allocation3 + $0x30] sm:$0xff] %v479
      %512 = vst [vmem:[#allocation3 + $0x38] sm:$0xff] %v480
      %513 = vst [vmem:[#allocation3 + $0x40] sm:$0xff] %v481
      %514 = vst [vmem:[#allocation3 + $0x48] sm:$0xff] %v482
      %515 = vst [vmem:[#allocation3 + $0x50] sm:$0xff] %v483
      %516 = vst [vmem:[#allocation3 + $0x58] sm:$0xff] %v484
      %517 = vst [vmem:[#allocation3 + $0x60] sm:$0xff] %v485
      %518 = vst [vmem:[#allocation3 + $0x68] sm:$0xff] %v486
      %519 = vst [vmem:[#allocation3 + $0x70] sm:$0xff] %v487
      %520 = vst [vmem:[#allocation3 + $0x78] sm:$0xff] %v488
      %521 = vst [vmem:[#allocation3 + $0x80] sm:$0xff] %v489
      %522 = vst [vmem:[#allocation3 + $0x88] sm:$0xff] %v490
      %523 = vst [vmem:[#allocation3 + $0x90] sm:$0xff] %v491
      %524 = vst [vmem:[#allocation3 + $0x98] sm:$0xff] %v492
      %525 = vst [vmem:[#allocation3 + $0xa0] sm:$0xff] %v493
      %526 = vst [vmem:[#allocation3 + $0xa8] sm:$0xff] %v494
      %527 = vst [vmem:[#allocation3 + $0xb0] sm:$0xff] %v495
      %528 = vst [vmem:[#allocation3 + $0xb8] sm:$0xff] %v496
      %529 = vst [vmem:[#allocation3 + $0xc0] sm:$0xff] %v497
      %530 = vst [vmem:[#allocation3 + $0xc8] sm:$0xff] %v498
      %531 = vst [vmem:[#allocation3 + $0xd0] sm:$0xff] %v499
      %532 = vst [vmem:[#allocation3 + $0xd8] sm:$0xff] %v500
      %533 = vst [vmem:[#allocation3 + $0xe0] sm:$0xff] %v501
      %534 = vst [vmem:[#allocation3 + $0xe8] sm:$0xff] %v502
      %535 = vst [vmem:[#allocation3 + $0xf0] sm:$0xff] %v503
      %536 = vst [vmem:[#allocation3 + $0xf8] sm:$0xff] %v504
      %537 = vst [vmem:[#allocation3 + $0x100] sm:$0xff] %v505
      %v538 = vpack.c.bf16 %v475, %v474
      %v539 = vpack.c.bf16 %v477, %v476
      %v540 = vpack.c.bf16 %v479, %v478
      %v541 = vpack.c.bf16 %v481, %v480
      %v542 = vpack.c.bf16 %v483, %v482
      %v543 = vpack.c.bf16 %v485, %v484
      %v544 = vpack.c.bf16 %v487, %v486
      %v545 = vpack.c.bf16 %v489, %v488
      %v546 = vpack.c.bf16 %v491, %v490
      %v547 = vpack.c.bf16 %v493, %v492
      %v548 = vpack.c.bf16 %v495, %v494
      %v549 = vpack.c.bf16 %v497, %v496
      %v550 = vpack.c.bf16 %v499, %v498
      %v551 = vpack.c.bf16 %v501, %v500
      %v552 = vpack.c.bf16 %v503, %v502
      %v553 = vpack.c.bf16 %v505, %v504
      %554 = vst [vmem:[#allocation2 + $0x20] sm:$0xff] %v538
      %555 = vst [vmem:[#allocation2 + $0x38] sm:$0xff] %v539
      %556 = vst [vmem:[#allocation2 + $0x50] sm:$0xff] %v540
      %557 = vst [vmem:[#allocation2 + $0x68] sm:$0xff] %v541
      %558 = vst [vmem:[#allocation2 + $0x80] sm:$0xff] %v542
      %559 = vst [vmem:[#allocation2 + $0x98] sm:$0xff] %v543
      %560 = vst [vmem:[#allocation2 + $0xb0] sm:$0xff] %v544
      %561 = vst [vmem:[#allocation2 + $0xc8] sm:$0xff] %v545
      %562 = vst [vmem:[#allocation2 + $0xe0] sm:$0xff] %v546
      %563 = vst [vmem:[#allocation2 + $0xf8] sm:$0xff] %v547
      %564 = vst [vmem:[#allocation2 + $0x110] sm:$0xff] %v548
      %565 = vst [vmem:[#allocation2 + $0x128] sm:$0xff] %v549
      %566 = vst [vmem:[#allocation2 + $0x140] sm:$0xff] %v550
      %567 = vst [vmem:[#allocation2 + $0x158] sm:$0xff] %v551
      %568 = vst [vmem:[#allocation2 + $0x170] sm:$0xff] %v552
      %569 = vst [vmem:[#allocation2 + $0x188] sm:$0xff] %v553
      %v570 = vld [vmem:[#allocation3 + $0x7] sm:$0xff]
      %v571 = vld [vmem:[#allocation3 + $0xf] sm:$0xff]
      %v572 = vld [vmem:[#allocation3 + $0x17] sm:$0xff]
      %v573 = vld [vmem:[#allocation3 + $0x1f] sm:$0xff]
      %v574 = vld [vmem:[#allocation3 + $0x27] sm:$0xff]
      %v575 = vld [vmem:[#allocation3 + $0x2f] sm:$0xff]
      %v576 = vld [vmem:[#allocation3 + $0x37] sm:$0xff]
      %v577 = vld [vmem:[#allocation3 + $0x3f] sm:$0xff]
      %v578 = vld [vmem:[#allocation3 + $0x47] sm:$0xff]
      %v579 = vld [vmem:[#allocation3 + $0x4f] sm:$0xff]
      %v580 = vld [vmem:[#allocation3 + $0x57] sm:$0xff]
      %v581 = vld [vmem:[#allocation3 + $0x5f] sm:$0xff]
      %v582 = vld [vmem:[#allocation3 + $0x67] sm:$0xff]
      %v583 = vld [vmem:[#allocation3 + $0x6f] sm:$0xff]
      %v584 = vld [vmem:[#allocation3 + $0x77] sm:$0xff]
      %v585 = vld [vmem:[#allocation3 + $0x7f] sm:$0xff]
      %v586 = vld [vmem:[#allocation3 + $0x87] sm:$0xff]
      %v587 = vld [vmem:[#allocation3 + $0x8f] sm:$0xff]
      %v588 = vld [vmem:[#allocation3 + $0x97] sm:$0xff]
      %v589 = vld [vmem:[#allocation3 + $0x9f] sm:$0xff]
      %v590 = vld [vmem:[#allocation3 + $0xa7] sm:$0xff]
      %v591 = vld [vmem:[#allocation3 + $0xaf] sm:$0xff]
      %v592 = vld [vmem:[#allocation3 + $0xb7] sm:$0xff]
      %v593 = vld [vmem:[#allocation3 + $0xbf] sm:$0xff]
      %v594 = vld [vmem:[#allocation3 + $0xc7] sm:$0xff]
      %v595 = vld [vmem:[#allocation3 + $0xcf] sm:$0xff]
      %v596 = vld [vmem:[#allocation3 + $0xd7] sm:$0xff]
      %v597 = vld [vmem:[#allocation3 + $0xdf] sm:$0xff]
      %v598 = vld [vmem:[#allocation3 + $0xe7] sm:$0xff]
      %v599 = vld [vmem:[#allocation3 + $0xef] sm:$0xff]
      %v600 = vld [vmem:[#allocation3 + $0xf7] sm:$0xff]
      %v601 = vld [vmem:[#allocation3 + $0xff] sm:$0xff]
      %v602 = vld [vmem:[%s4] sm:$0xff]
      %v603 = vld [vmem:[%s4 + $0x8] sm:$0xff]
      %v604 = vld [vmem:[%s4 + $0x10] sm:$0xff]
      %v605 = vld [vmem:[%s4 + $0x18] sm:$0xff]
      %v606 = vld [vmem:[%s4 + $0x20] sm:$0xff]
      %v607 = vld [vmem:[%s4 + $0x28] sm:$0xff]
      %v608 = vld [vmem:[%s4 + $0x30] sm:$0xff]
      %v609 = vld [vmem:[%s4 + $0x38] sm:$0xff]
      %v610 = vld [vmem:[%s4 + $0x40] sm:$0xff]
      %v611 = vld [vmem:[%s4 + $0x48] sm:$0xff]
      %v612 = vld [vmem:[%s4 + $0x50] sm:$0xff]
      %v613 = vld [vmem:[%s4 + $0x58] sm:$0xff]
      %v614 = vld [vmem:[%s4 + $0x60] sm:$0xff]
      %v615 = vld [vmem:[%s4 + $0x68] sm:$0xff]
      %v616 = vld [vmem:[%s4 + $0x70] sm:$0xff]
      %v617 = vld [vmem:[%s4 + $0x78] sm:$0xff]
      %v618 = vld [vmem:[%s4 + $0x80] sm:$0xff]
      %v619 = vld [vmem:[%s4 + $0x88] sm:$0xff]
      %v620 = vld [vmem:[%s4 + $0x90] sm:$0xff]
      %v621 = vld [vmem:[%s4 + $0x98] sm:$0xff]
      %v622 = vld [vmem:[%s4 + $0xa0] sm:$0xff]
      %v623 = vld [vmem:[%s4 + $0xa8] sm:$0xff]
      %v624 = vld [vmem:[%s4 + $0xb0] sm:$0xff]
      %v625 = vld [vmem:[%s4 + $0xb8] sm:$0xff]
      %v626 = vld [vmem:[%s4 + $0xc0] sm:$0xff]
      %v627 = vld [vmem:[%s4 + $0xc8] sm:$0xff]
      %v628 = vld [vmem:[%s4 + $0xd0] sm:$0xff]
      %v629 = vld [vmem:[%s4 + $0xd8] sm:$0xff]
      %v630 = vld [vmem:[%s4 + $0xe0] sm:$0xff]
      %v631 = vld [vmem:[%s4 + $0xe8] sm:$0xff]
      %v632 = vld [vmem:[%s4 + $0xf0] sm:$0xff]
      %v633 = vld [vmem:[%s4 + $0xf8] sm:$0xff]
      %635 = vset.pattern.permute.xlu0 0
      %636 = vperm.xlu0 %635, %v602
      %v637 = vpop.permute.xlu0 %636
      %640 = vset.pattern.permute.xlu0 0
      %641 = vperm.xlu0 %640, %v603
      %v642 = vpop.permute.xlu0 %641
      %645 = vset.pattern.permute.xlu0 0
      %646 = vperm.xlu0 %645, %v604
      %v647 = vpop.permute.xlu0 %646
      %650 = vset.pattern.permute.xlu0 0
      %651 = vperm.xlu0 %650, %v605
      %v652 = vpop.permute.xlu0 %651
      %655 = vset.pattern.permute.xlu0 0
      %656 = vperm.xlu0 %655, %v606
      %v657 = vpop.permute.xlu0 %656
      %660 = vset.pattern.permute.xlu0 0
      %661 = vperm.xlu0 %660, %v607
      %v662 = vpop.permute.xlu0 %661
      %665 = vset.pattern.permute.xlu0 0
      %666 = vperm.xlu0 %665, %v608
      %v667 = vpop.permute.xlu0 %666
      %670 = vset.pattern.permute.xlu0 0
      %671 = vperm.xlu0 %670, %v609
      %v672 = vpop.permute.xlu0 %671
      %675 = vset.pattern.permute.xlu0 0
      %676 = vperm.xlu0 %675, %v610
      %v677 = vpop.permute.xlu0 %676
      %680 = vset.pattern.permute.xlu0 0
      %681 = vperm.xlu0 %680, %v611
      %v682 = vpop.permute.xlu0 %681
      %685 = vset.pattern.permute.xlu0 0
      %686 = vperm.xlu0 %685, %v612
      %v687 = vpop.permute.xlu0 %686
      %690 = vset.pattern.permute.xlu0 0
      %691 = vperm.xlu0 %690, %v613
      %v692 = vpop.permute.xlu0 %691
      %695 = vset.pattern.permute.xlu0 0
      %696 = vperm.xlu0 %695, %v614
      %v697 = vpop.permute.xlu0 %696
      %700 = vset.pattern.permute.xlu0 0
      %701 = vperm.xlu0 %700, %v615
      %v702 = vpop.permute.xlu0 %701
      %705 = vset.pattern.permute.xlu0 0
      %706 = vperm.xlu0 %705, %v616
      %v707 = vpop.permute.xlu0 %706
      %710 = vset.pattern.permute.xlu0 0
      %711 = vperm.xlu0 %710, %v617
      %v712 = vpop.permute.xlu0 %711
      %715 = vset.pattern.permute.xlu0 0
      %716 = vperm.xlu0 %715, %v618
      %v717 = vpop.permute.xlu0 %716
      %720 = vset.pattern.permute.xlu0 0
      %721 = vperm.xlu0 %720, %v619
      %v722 = vpop.permute.xlu0 %721
      %725 = vset.pattern.permute.xlu0 0
      %726 = vperm.xlu0 %725, %v620
      %v727 = vpop.permute.xlu0 %726
      %730 = vset.pattern.permute.xlu0 0
      %731 = vperm.xlu0 %730, %v621
      %v732 = vpop.permute.xlu0 %731
      %735 = vset.pattern.permute.xlu0 0
      %736 = vperm.xlu0 %735, %v622
      %v737 = vpop.permute.xlu0 %736
      %740 = vset.pattern.permute.xlu0 0
      %741 = vperm.xlu0 %740, %v623
      %v742 = vpop.permute.xlu0 %741
      %745 = vset.pattern.permute.xlu0 0
      %746 = vperm.xlu0 %745, %v624
      %v747 = vpop.permute.xlu0 %746
      %750 = vset.pattern.permute.xlu0 0
      %751 = vperm.xlu0 %750, %v625
      %v752 = vpop.permute.xlu0 %751
      %755 = vset.pattern.permute.xlu0 0
      %756 = vperm.xlu0 %755, %v626
      %v757 = vpop.permute.xlu0 %756
      %760 = vset.pattern.permute.xlu0 0
      %761 = vperm.xlu0 %760, %v627
      %v762 = vpop.permute.xlu0 %761
      %765 = vset.pattern.permute.xlu0 0
      %766 = vperm.xlu0 %765, %v628
      %v767 = vpop.permute.xlu0 %766
      %770 = vset.pattern.permute.xlu0 0
      %771 = vperm.xlu0 %770, %v629
      %v772 = vpop.permute.xlu0 %771
      %775 = vset.pattern.permute.xlu0 0
      %776 = vperm.xlu0 %775, %v630
      %v777 = vpop.permute.xlu0 %776
      %780 = vset.pattern.permute.xlu0 0
      %781 = vperm.xlu0 %780, %v631
      %v782 = vpop.permute.xlu0 %781
      %785 = vset.pattern.permute.xlu0 0
      %786 = vperm.xlu0 %785, %v632
      %v787 = vpop.permute.xlu0 %786
      %790 = vset.pattern.permute.xlu0 0
      %791 = vperm.xlu0 %790, %v633
      %v792 = vpop.permute.xlu0 %791
      %v794 = vmul.f32 %v570, %v637
      %v795 = vmul.f32 %v571, %v642
      %v796 = vmul.f32 %v572, %v647
      %v797 = vmul.f32 %v573, %v652
      %v798 = vmul.f32 %v574, %v657
      %v799 = vmul.f32 %v575, %v662
      %v800 = vmul.f32 %v576, %v667
      %v801 = vmul.f32 %v577, %v672
      %v802 = vmul.f32 %v578, %v677
      %v803 = vmul.f32 %v579, %v682
      %v804 = vmul.f32 %v580, %v687
      %v805 = vmul.f32 %v581, %v692
      %v806 = vmul.f32 %v582, %v697
      %v807 = vmul.f32 %v583, %v702
      %v808 = vmul.f32 %v584, %v707
      %v809 = vmul.f32 %v585, %v712
      %v810 = vmul.f32 %v586, %v717
      %v811 = vmul.f32 %v587, %v722
      %v812 = vmul.f32 %v588, %v727
      %v813 = vmul.f32 %v589, %v732
      %v814 = vmul.f32 %v590, %v737
      %v815 = vmul.f32 %v591, %v742
      %v816 = vmul.f32 %v592, %v747
      %v817 = vmul.f32 %v593, %v752
      %v818 = vmul.f32 %v594, %v757
      %v819 = vmul.f32 %v595, %v762
      %v820 = vmul.f32 %v596, %v767
      %v821 = vmul.f32 %v597, %v772
      %v822 = vmul.f32 %v598, %v777
      %v823 = vmul.f32 %v599, %v782
      %v824 = vmul.f32 %v600, %v787
      %v825 = vmul.f32 %v601, %v792
      %v826 = vpack.c.bf16 %v795, %v794
      %v827 = vpack.c.bf16 %v797, %v796
      %v828 = vpack.c.bf16 %v799, %v798
      %v829 = vpack.c.bf16 %v801, %v800
      %v830 = vpack.c.bf16 %v803, %v802
      %v831 = vpack.c.bf16 %v805, %v804
      %v832 = vpack.c.bf16 %v807, %v806
      %v833 = vpack.c.bf16 %v809, %v808
      %v834 = vpack.c.bf16 %v811, %v810
      %v835 = vpack.c.bf16 %v813, %v812
      %v836 = vpack.c.bf16 %v815, %v814
      %v837 = vpack.c.bf16 %v817, %v816
      %v838 = vpack.c.bf16 %v819, %v818
      %v839 = vpack.c.bf16 %v821, %v820
      %v840 = vpack.c.bf16 %v823, %v822
      %v841 = vpack.c.bf16 %v825, %v824
      %842 = vst [vmem:[#allocation2 + $0x18] sm:$0xff] %v826
      %843 = vst [vmem:[#allocation2 + $0x30] sm:$0xff] %v827
      %844 = vst [vmem:[#allocation2 + $0x48] sm:$0xff] %v828
      %845 = vst [vmem:[#allocation2 + $0x60] sm:$0xff] %v829
      %846 = vst [vmem:[#allocation2 + $0x78] sm:$0xff] %v830
      %847 = vst [vmem:[#allocation2 + $0x90] sm:$0xff] %v831
      %848 = vst [vmem:[#allocation2 + $0xa8] sm:$0xff] %v832
      %849 = vst [vmem:[#allocation2 + $0xc0] sm:$0xff] %v833
      %850 = vst [vmem:[#allocation2 + $0xd8] sm:$0xff] %v834
      %851 = vst [vmem:[#allocation2 + $0xf0] sm:$0xff] %v835
      %852 = vst [vmem:[#allocation2 + $0x108] sm:$0xff] %v836
      %853 = vst [vmem:[#allocation2 + $0x120] sm:$0xff] %v837
      %854 = vst [vmem:[#allocation2 + $0x138] sm:$0xff] %v838
      %855 = vst [vmem:[#allocation2 + $0x150] sm:$0xff] %v839
      %856 = vst [vmem:[#allocation2 + $0x168] sm:$0xff] %v840
      %857 = vst [vmem:[#allocation2 + $0x180] sm:$0xff] %v841
      %v858 = vld [vmem:[#allocation3 + $0x9] sm:$0xff]
      %v859 = vld [vmem:[#allocation3 + $0x11] sm:$0xff]
      %v860 = vld [vmem:[#allocation3 + $0x19] sm:$0xff]
      %v861 = vld [vmem:[#allocation3 + $0x21] sm:$0xff]
      %v862 = vld [vmem:[#allocation3 + $0x29] sm:$0xff]
      %v863 = vld [vmem:[#allocation3 + $0x31] sm:$0xff]
      %v864 = vld [vmem:[#allocation3 + $0x39] sm:$0xff]
      %v865 = vld [vmem:[#allocation3 + $0x41] sm:$0xff]
      %v866 = vld [vmem:[#allocation3 + $0x49] sm:$0xff]
      %v867 = vld [vmem:[#allocation3 + $0x51] sm:$0xff]
      %v868 = vld [vmem:[#allocation3 + $0x59] sm:$0xff]
      %v869 = vld [vmem:[#allocation3 + $0x61] sm:$0xff]
      %v870 = vld [vmem:[#allocation3 + $0x69] sm:$0xff]
      %v871 = vld [vmem:[#allocation3 + $0x71] sm:$0xff]
      %v872 = vld [vmem:[#allocation3 + $0x79] sm:$0xff]
      %v873 = vld [vmem:[#allocation3 + $0x81] sm:$0xff]
      %v874 = vld [vmem:[#allocation3 + $0x89] sm:$0xff]
      %v875 = vld [vmem:[#allocation3 + $0x91] sm:$0xff]
      %v876 = vld [vmem:[#allocation3 + $0x99] sm:$0xff]
      %v877 = vld [vmem:[#allocation3 + $0xa1] sm:$0xff]
      %v878 = vld [vmem:[#allocation3 + $0xa9] sm:$0xff]
      %v879 = vld [vmem:[#allocation3 + $0xb1] sm:$0xff]
      %v880 = vld [vmem:[#allocation3 + $0xb9] sm:$0xff]
      %v881 = vld [vmem:[#allocation3 + $0xc1] sm:$0xff]
      %v882 = vld [vmem:[#allocation3 + $0xc9] sm:$0xff]
      %v883 = vld [vmem:[#allocation3 + $0xd1] sm:$0xff]
      %v884 = vld [vmem:[#allocation3 + $0xd9] sm:$0xff]
      %v885 = vld [vmem:[#allocation3 + $0xe1] sm:$0xff]
      %v886 = vld [vmem:[#allocation3 + $0xe9] sm:$0xff]
      %v887 = vld [vmem:[#allocation3 + $0xf1] sm:$0xff]
      %v888 = vld [vmem:[#allocation3 + $0xf9] sm:$0xff]
      %v889 = vld [vmem:[#allocation3 + $0x101] sm:$0xff]
      %v890 = vld [vmem:[%s5] sm:$0xff]
      %v891 = vld [vmem:[%s5 + $0x8] sm:$0xff]
      %v892 = vld [vmem:[%s5 + $0x10] sm:$0xff]
      %v893 = vld [vmem:[%s5 + $0x18] sm:$0xff]
      %v894 = vld [vmem:[%s5 + $0x20] sm:$0xff]
      %v895 = vld [vmem:[%s5 + $0x28] sm:$0xff]
      %v896 = vld [vmem:[%s5 + $0x30] sm:$0xff]
      %v897 = vld [vmem:[%s5 + $0x38] sm:$0xff]
      %v898 = vld [vmem:[%s5 + $0x40] sm:$0xff]
      %v899 = vld [vmem:[%s5 + $0x48] sm:$0xff]
      %v900 = vld [vmem:[%s5 + $0x50] sm:$0xff]
      %v901 = vld [vmem:[%s5 + $0x58] sm:$0xff]
      %v902 = vld [vmem:[%s5 + $0x60] sm:$0xff]
      %v903 = vld [vmem:[%s5 + $0x68] sm:$0xff]
      %v904 = vld [vmem:[%s5 + $0x70] sm:$0xff]
      %v905 = vld [vmem:[%s5 + $0x78] sm:$0xff]
      %v906 = vld [vmem:[%s5 + $0x80] sm:$0xff]
      %v907 = vld [vmem:[%s5 + $0x88] sm:$0xff]
      %v908 = vld [vmem:[%s5 + $0x90] sm:$0xff]
      %v909 = vld [vmem:[%s5 + $0x98] sm:$0xff]
      %v910 = vld [vmem:[%s5 + $0xa0] sm:$0xff]
      %v911 = vld [vmem:[%s5 + $0xa8] sm:$0xff]
      %v912 = vld [vmem:[%s5 + $0xb0] sm:$0xff]
      %v913 = vld [vmem:[%s5 + $0xb8] sm:$0xff]
      %v914 = vld [vmem:[%s5 + $0xc0] sm:$0xff]
      %v915 = vld [vmem:[%s5 + $0xc8] sm:$0xff]
      %v916 = vld [vmem:[%s5 + $0xd0] sm:$0xff]
      %v917 = vld [vmem:[%s5 + $0xd8] sm:$0xff]
      %v918 = vld [vmem:[%s5 + $0xe0] sm:$0xff]
      %v919 = vld [vmem:[%s5 + $0xe8] sm:$0xff]
      %v920 = vld [vmem:[%s5 + $0xf0] sm:$0xff]
      %v921 = vld [vmem:[%s5 + $0xf8] sm:$0xff]
      %923 = vset.pattern.permute.xlu0 0
      %924 = vperm.xlu0 %923, %v890
      %v925 = vpop.permute.xlu0 %924
      %928 = vset.pattern.permute.xlu0 0
      %929 = vperm.xlu0 %928, %v891
      %v930 = vpop.permute.xlu0 %929
      %933 = vset.pattern.permute.xlu0 0
      %934 = vperm.xlu0 %933, %v892
      %v935 = vpop.permute.xlu0 %934
      %938 = vset.pattern.permute.xlu0 0
      %939 = vperm.xlu0 %938, %v893
      %v940 = vpop.permute.xlu0 %939
      %943 = vset.pattern.permute.xlu0 0
      %944 = vperm.xlu0 %943, %v894
      %v945 = vpop.permute.xlu0 %944
      %948 = vset.pattern.permute.xlu0 0
      %949 = vperm.xlu0 %948, %v895
      %v950 = vpop.permute.xlu0 %949
      %953 = vset.pattern.permute.xlu0 0
      %954 = vperm.xlu0 %953, %v896
      %v955 = vpop.permute.xlu0 %954
      %958 = vset.pattern.permute.xlu0 0
      %959 = vperm.xlu0 %958, %v897
      %v960 = vpop.permute.xlu0 %959
      %963 = vset.pattern.permute.xlu0 0
      %964 = vperm.xlu0 %963, %v898
      %v965 = vpop.permute.xlu0 %964
      %968 = vset.pattern.permute.xlu0 0
      %969 = vperm.xlu0 %968, %v899
      %v970 = vpop.permute.xlu0 %969
      %973 = vset.pattern.permute.xlu0 0
      %974 = vperm.xlu0 %973, %v900
      %v975 = vpop.permute.xlu0 %974
      %978 = vset.pattern.permute.xlu0 0
      %979 = vperm.xlu0 %978, %v901
      %v980 = vpop.permute.xlu0 %979
      %983 = vset.pattern.permute.xlu0 0
      %984 = vperm.xlu0 %983, %v902
      %v985 = vpop.permute.xlu0 %984
      %988 = vset.pattern.permute.xlu0 0
      %989 = vperm.xlu0 %988, %v903
      %v990 = vpop.permute.xlu0 %989
      %993 = vset.pattern.permute.xlu0 0
      %994 = vperm.xlu0 %993, %v904
      %v995 = vpop.permute.xlu0 %994
      %998 = vset.pattern.permute.xlu0 0
      %999 = vperm.xlu0 %998, %v905
      %v1000 = vpop.permute.xlu0 %999
      %1003 = vset.pattern.permute.xlu0 0
      %1004 = vperm.xlu0 %1003, %v906
      %v1005 = vpop.permute.xlu0 %1004
      %1008 = vset.pattern.permute.xlu0 0
      %1009 = vperm.xlu0 %1008, %v907
      %v1010 = vpop.permute.xlu0 %1009
      %1013 = vset.pattern.permute.xlu0 0
      %1014 = vperm.xlu0 %1013, %v908
      %v1015 = vpop.permute.xlu0 %1014
      %1018 = vset.pattern.permute.xlu0 0
      %1019 = vperm.xlu0 %1018, %v909
      %v1020 = vpop.permute.xlu0 %1019
      %1023 = vset.pattern.permute.xlu0 0
      %1024 = vperm.xlu0 %1023, %v910
      %v1025 = vpop.permute.xlu0 %1024
      %1028 = vset.pattern.permute.xlu0 0
      %1029 = vperm.xlu0 %1028, %v911
      %v1030 = vpop.permute.xlu0 %1029
      %1033 = vset.pattern.permute.xlu0 0
      %1034 = vperm.xlu0 %1033, %v912
      %v1035 = vpop.permute.xlu0 %1034
      %1038 = vset.pattern.permute.xlu0 0
      %1039 = vperm.xlu0 %1038, %v913
      %v1040 = vpop.permute.xlu0 %1039
      %1043 = vset.pattern.permute.xlu0 0
      %1044 = vperm.xlu0 %1043, %v914
      %v1045 = vpop.permute.xlu0 %1044
      %1048 = vset.pattern.permute.xlu0 0
      %1049 = vperm.xlu0 %1048, %v915
      %v1050 = vpop.permute.xlu0 %1049
      %1053 = vset.pattern.permute.xlu0 0
      %1054 = vperm.xlu0 %1053, %v916
      %v1055 = vpop.permute.xlu0 %1054
      %1058 = vset.pattern.permute.xlu0 0
      %1059 = vperm.xlu0 %1058, %v917
      %v1060 = vpop.permute.xlu0 %1059
      %1063 = vset.pattern.permute.xlu0 0
      %1064 = vperm.xlu0 %1063, %v918
      %v1065 = vpop.permute.xlu0 %1064
      %1068 = vset.pattern.permute.xlu0 0
      %1069 = vperm.xlu0 %1068, %v919
      %v1070 = vpop.permute.xlu0 %1069
      %1073 = vset.pattern.permute.xlu0 0
      %1074 = vperm.xlu0 %1073, %v920
      %v1075 = vpop.permute.xlu0 %1074
      %1078 = vset.pattern.permute.xlu0 0
      %1079 = vperm.xlu0 %1078, %v921
      %v1080 = vpop.permute.xlu0 %1079
      %v1082 = vmul.f32 %v858, %v925
      %v1083 = vmul.f32 %v859, %v930
      %v1084 = vmul.f32 %v860, %v935
      %v1085 = vmul.f32 %v861, %v940
      %v1086 = vmul.f32 %v862, %v945
      %v1087 = vmul.f32 %v863, %v950
      %v1088 = vmul.f32 %v864, %v955
      %v1089 = vmul.f32 %v865, %v960
      %v1090 = vmul.f32 %v866, %v965
      %v1091 = vmul.f32 %v867, %v970
      %v1092 = vmul.f32 %v868, %v975
      %v1093 = vmul.f32 %v869, %v980
      %v1094 = vmul.f32 %v870, %v985
      %v1095 = vmul.f32 %v871, %v990
      %v1096 = vmul.f32 %v872, %v995
      %v1097 = vmul.f32 %v873, %v1000
      %v1098 = vmul.f32 %v874, %v1005
      %v1099 = vmul.f32 %v875, %v1010
      %v1100 = vmul.f32 %v876, %v1015
      %v1101 = vmul.f32 %v877, %v1020
      %v1102 = vmul.f32 %v878, %v1025
      %v1103 = vmul.f32 %v879, %v1030
      %v1104 = vmul.f32 %v880, %v1035
      %v1105 = vmul.f32 %v881, %v1040
      %v1106 = vmul.f32 %v882, %v1045
      %v1107 = vmul.f32 %v883, %v1050
      %v1108 = vmul.f32 %v884, %v1055
      %v1109 = vmul.f32 %v885, %v1060
      %v1110 = vmul.f32 %v886, %v1065
      %v1111 = vmul.f32 %v887, %v1070
      %v1112 = vmul.f32 %v888, %v1075
      %v1113 = vmul.f32 %v889, %v1080
      %v1114 = vpack.c.bf16 %v1083, %v1082
      %v1115 = vpack.c.bf16 %v1085, %v1084
      %v1116 = vpack.c.bf16 %v1087, %v1086
      %v1117 = vpack.c.bf16 %v1089, %v1088
      %v1118 = vpack.c.bf16 %v1091, %v1090
      %v1119 = vpack.c.bf16 %v1093, %v1092
      %v1120 = vpack.c.bf16 %v1095, %v1094
      %v1121 = vpack.c.bf16 %v1097, %v1096
      %v1122 = vpack.c.bf16 %v1099, %v1098
      %v1123 = vpack.c.bf16 %v1101, %v1100
      %v1124 = vpack.c.bf16 %v1103, %v1102
      %v1125 = vpack.c.bf16 %v1105, %v1104
      %v1126 = vpack.c.bf16 %v1107, %v1106
      %v1127 = vpack.c.bf16 %v1109, %v1108
      %v1128 = vpack.c.bf16 %v1111, %v1110
      %v1129 = vpack.c.bf16 %v1113, %v1112
      %1130 = vst [vmem:[#allocation2 + $0x28] sm:$0xff] %v1114
      %1131 = vst [vmem:[#allocation2 + $0x40] sm:$0xff] %v1115
      %1132 = vst [vmem:[#allocation2 + $0x58] sm:$0xff] %v1116
      %1133 = vst [vmem:[#allocation2 + $0x70] sm:$0xff] %v1117
      %1134 = vst [vmem:[#allocation2 + $0x88] sm:$0xff] %v1118
      %1135 = vst [vmem:[#allocation2 + $0xa0] sm:$0xff] %v1119
      %1136 = vst [vmem:[#allocation2 + $0xb8] sm:$0xff] %v1120
      %1137 = vst [vmem:[#allocation2 + $0xd0] sm:$0xff] %v1121
      %1138 = vst [vmem:[#allocation2 + $0xe8] sm:$0xff] %v1122
      %1139 = vst [vmem:[#allocation2 + $0x100] sm:$0xff] %v1123
      %1140 = vst [vmem:[#allocation2 + $0x118] sm:$0xff] %v1124
      %1141 = vst [vmem:[#allocation2 + $0x130] sm:$0xff] %v1125
      %1142 = vst [vmem:[#allocation2 + $0x148] sm:$0xff] %v1126
      %1143 = vst [vmem:[#allocation2 + $0x160] sm:$0xff] %v1127
      %1144 = vst [vmem:[#allocation2 + $0x178] sm:$0xff] %v1128
      %1145 = vst [vmem:[#allocation2 + $0x190] sm:$0xff] %v1129
      %v1146 = vld [vmem:[#allocation2] sm:$0xff]
      %v1147 = vld [vmem:[#allocation2 + $0x8] sm:$0xff]
      %v1148 = vld [vmem:[#allocation2 + $0x10] sm:$0xff]
      %v1149 = vld [vmem:[#allocation2 + $0x18] sm:$0xff]
      %v1150 = vld [vmem:[#allocation2 + $0x20] sm:$0xff]
      %v1151 = vld [vmem:[#allocation2 + $0x28] sm:$0xff]
      %v1152 = vld [vmem:[#allocation2 + $0x30] sm:$0xff]
      %v1153 = vld [vmem:[#allocation2 + $0x38] sm:$0xff]
      %v1154 = vld [vmem:[#allocation2 + $0x40] sm:$0xff]
      %v1155 = vld [vmem:[#allocation2 + $0x48] sm:$0xff]
      %v1156 = vld [vmem:[#allocation2 + $0x50] sm:$0xff]
      %v1157 = vld [vmem:[#allocation2 + $0x58] sm:$0xff]
      %v1158 = vld [vmem:[#allocation2 + $0x60] sm:$0xff]
      %v1159 = vld [vmem:[#allocation2 + $0x68] sm:$0xff]
      %v1160 = vld [vmem:[#allocation2 + $0x70] sm:$0xff]
      %v1161 = vld [vmem:[#allocation2 + $0x78] sm:$0xff]
      %v1162 = vld [vmem:[#allocation2 + $0x80] sm:$0xff]
      %v1163 = vld [vmem:[#allocation2 + $0x88] sm:$0xff]
      %v1164 = vld [vmem:[#allocation2 + $0x90] sm:$0xff]
      %v1165 = vld [vmem:[#allocation2 + $0x98] sm:$0xff]
      %v1166 = vld [vmem:[#allocation2 + $0xa0] sm:$0xff]
      %v1167 = vld [vmem:[#allocation2 + $0xa8] sm:$0xff]
      %v1168 = vld [vmem:[#allocation2 + $0xb0] sm:$0xff]
      %v1169 = vld [vmem:[#allocation2 + $0xb8] sm:$0xff]
      %v1170 = vld [vmem:[#allocation2 + $0xc0] sm:$0xff]
      %v1171 = vld [vmem:[#allocation2 + $0xc8] sm:$0xff]
      %v1172 = vld [vmem:[#allocation2 + $0xd0] sm:$0xff]
      %v1173 = vld [vmem:[#allocation2 + $0xd8] sm:$0xff]
      %v1174 = vld [vmem:[#allocation2 + $0xe0] sm:$0xff]
      %v1175 = vld [vmem:[#allocation2 + $0xe8] sm:$0xff]
      %v1176 = vld [vmem:[#allocation2 + $0xf0] sm:$0xff]
      %v1177 = vld [vmem:[#allocation2 + $0xf8] sm:$0xff]
      %v1178 = vld [vmem:[#allocation2 + $0x100] sm:$0xff]
      %v1179 = vld [vmem:[#allocation2 + $0x108] sm:$0xff]
      %v1180 = vld [vmem:[#allocation2 + $0x110] sm:$0xff]
      %v1181 = vld [vmem:[#allocation2 + $0x118] sm:$0xff]
      %v1182 = vld [vmem:[#allocation2 + $0x120] sm:$0xff]
      %v1183 = vld [vmem:[#allocation2 + $0x128] sm:$0xff]
      %v1184 = vld [vmem:[#allocation2 + $0x130] sm:$0xff]
      %v1185 = vld [vmem:[#allocation2 + $0x138] sm:$0xff]
      %v1186 = vld [vmem:[#allocation2 + $0x140] sm:$0xff]
      %v1187 = vld [vmem:[#allocation2 + $0x148] sm:$0xff]
      %v1188 = vld [vmem:[#allocation2 + $0x150] sm:$0xff]
      %v1189 = vld [vmem:[#allocation2 + $0x158] sm:$0xff]
      %v1190 = vld [vmem:[#allocation2 + $0x160] sm:$0xff]
      %v1191 = vld [vmem:[#allocation2 + $0x168] sm:$0xff]
      %v1192 = vld [vmem:[#allocation2 + $0x170] sm:$0xff]
      %v1193 = vld [vmem:[#allocation2 + $0x178] sm:$0xff]
      %v1194 = vld [vmem:[%s3] sm:$0xf]
      %v1195 = vld [vmem:[%s3 + $0x4] sm:$0xf]
      %v1196 = vld [vmem:[%s3 + $0x8] sm:$0xf]
      %v1197 = vld [vmem:[%s3 + $0xc] sm:$0xf]
      %v1198 = vld [vmem:[%s3 + $0x10] sm:$0xf]
      %v1199 = vld [vmem:[%s3 + $0x14] sm:$0xf]
      %v1200 = vld [vmem:[%s3 + $0x18] sm:$0xf]
      %v1201 = vld [vmem:[%s3 + $0x1c] sm:$0xf]
      %v1202 = vld [vmem:[%s3 + $0x20] sm:$0xf]
      %v1203 = vld [vmem:[%s3 + $0x24] sm:$0xf]
      %v1204 = vld [vmem:[%s3 + $0x28] sm:$0xf]
      %v1205 = vld [vmem:[%s3 + $0x2c] sm:$0xf]
      %v1206 = vld [vmem:[%s3 + $0x30] sm:$0xf]
      %v1207 = vld [vmem:[%s3 + $0x34] sm:$0xf]
      %v1208 = vld [vmem:[%s3 + $0x38] sm:$0xf]
      %v1209 = vld [vmem:[%s3 + $0x3c] sm:$0xf]
      %v1210 = vld [vmem:[%s3 + $0x40] sm:$0xf]
      %v1211 = vld [vmem:[%s3 + $0x44] sm:$0xf]
      %v1212 = vld [vmem:[%s3 + $0x48] sm:$0xf]
      %v1213 = vld [vmem:[%s3 + $0x4c] sm:$0xf]
      %v1214 = vld [vmem:[%s3 + $0x50] sm:$0xf]
      %v1215 = vld [vmem:[%s3 + $0x54] sm:$0xf]
      %v1216 = vld [vmem:[%s3 + $0x58] sm:$0xf]
      %v1217 = vld [vmem:[%s3 + $0x5c] sm:$0xf]
      %v1218 = vld [vmem:[%s3 + $0x60] sm:$0xf]
      %v1219 = vld [vmem:[%s3 + $0x64] sm:$0xf]
      %v1220 = vld [vmem:[%s3 + $0x68] sm:$0xf]
      %v1221 = vld [vmem:[%s3 + $0x6c] sm:$0xf]
      %v1222 = vld [vmem:[%s3 + $0x70] sm:$0xf]
      %v1223 = vld [vmem:[%s3 + $0x74] sm:$0xf]
      %v1224 = vld [vmem:[%s3 + $0x78] sm:$0xf]
      %v1225 = vld [vmem:[%s3 + $0x7c] sm:$0xf]
      %v1226 = vld [vmem:[%s3 + $0x80] sm:$0xf]
      %v1227 = vld [vmem:[%s3 + $0x84] sm:$0xf]
      %v1228 = vld [vmem:[%s3 + $0x88] sm:$0xf]
      %v1229 = vld [vmem:[%s3 + $0x8c] sm:$0xf]
      %v1230 = vld [vmem:[%s3 + $0x90] sm:$0xf]
      %v1231 = vld [vmem:[%s3 + $0x94] sm:$0xf]
      %v1232 = vld [vmem:[%s3 + $0x98] sm:$0xf]
      %v1233 = vld [vmem:[%s3 + $0x9c] sm:$0xf]
      %v1234 = vld [vmem:[%s3 + $0xa0] sm:$0xf]
      %v1235 = vld [vmem:[%s3 + $0xa4] sm:$0xf]
      %v1236 = vld [vmem:[%s3 + $0xa8] sm:$0xf]
      %v1237 = vld [vmem:[%s3 + $0xac] sm:$0xf]
      %v1238 = vld [vmem:[%s3 + $0xb0] sm:$0xf]
      %v1239 = vld [vmem:[%s3 + $0xb4] sm:$0xf]
      %v1240 = vld [vmem:[%s3 + $0xb8] sm:$0xf]
      %v1241 = vld [vmem:[%s3 + $0xbc] sm:$0xf]
      %v1242 = vld [vmem:[#allocation2 + $0x180] sm:$0xff]
      %v1243 = vld [vmem:[#allocation2 + $0x188] sm:$0xff]
      %v1244 = vld [vmem:[#allocation2 + $0x190] sm:$0xff]
      %s1245 = scalar_lea.vmem %s3, 192
      %v1246 = vld [vmem:[%s1245] sm:$0xf]
      %v1247 = vld [vmem:[%s1245 + $0x4] sm:$0xf]
      %v1248 = vld [vmem:[%s1245 + $0x8] sm:$0xf]
      %v1249 = vld [vmem:[%s1245 + $0xc] sm:$0xf]
      %v1250 = vld [vmem:[%s1245 + $0x10] sm:$0xf]
      %v1251 = vld [vmem:[%s1245 + $0x14] sm:$0xf]
      %v1252 = vld [vmem:[%s1245 + $0x18] sm:$0xf]
      %v1253 = vld [vmem:[%s1245 + $0x1c] sm:$0xf]
      %v1254 = vld [vmem:[%s1245 + $0x20] sm:$0xf]
      %v1255 = vld [vmem:[%s1245 + $0x24] sm:$0xf]
      %v1256 = vld [vmem:[%s1245 + $0x28] sm:$0xf]
      %v1257 = vld [vmem:[%s1245 + $0x2c] sm:$0xf]
      %v1258 = vld [vmem:[%s1245 + $0x30] sm:$0xf]
      %v1259 = vld [vmem:[%s1245 + $0x34] sm:$0xf]
      %v1260 = vld [vmem:[%s1245 + $0x38] sm:$0xf]
      %v1261 = vld [vmem:[%s1245 + $0x3c] sm:$0xf]
      %v1262 = vld [vmem:[%s1245 + $0x40] sm:$0xf]
      %v1263 = vld [vmem:[%s1245 + $0x44] sm:$0xf]
      %v1264 = vld [vmem:[%s1245 + $0x48] sm:$0xf]
      %v1265 = vld [vmem:[%s1245 + $0x4c] sm:$0xf]
      %v1266 = vld [vmem:[%s1245 + $0x50] sm:$0xf]
      %v1267 = vld [vmem:[%s1245 + $0x54] sm:$0xf]
      %v1268 = vld [vmem:[%s1245 + $0x58] sm:$0xf]
      %v1269 = vld [vmem:[%s1245 + $0x5c] sm:$0xf]
      %v1270 = vld [vmem:[%s1245 + $0x60] sm:$0xf]
      %v1271 = vld [vmem:[%s1245 + $0x64] sm:$0xf]
      %v1272 = vld [vmem:[%s1245 + $0x68] sm:$0xf]
      %v1273 = vld [vmem:[%s1245 + $0x6c] sm:$0xf]
      %v1274 = vld [vmem:[%s1245 + $0x70] sm:$0xf]
      %v1275 = vld [vmem:[%s1245 + $0x74] sm:$0xf]
      %v1276 = vld [vmem:[%s1245 + $0x78] sm:$0xf]
      %v1277 = vld [vmem:[%s1245 + $0x7c] sm:$0xf]
      %v1278 = vld [vmem:[%s1245 + $0x80] sm:$0xf]
      %v1279 = vld [vmem:[%s1245 + $0x84] sm:$0xf]
      %v1280 = vld [vmem:[%s1245 + $0x88] sm:$0xf]
      %v1281 = vld [vmem:[%s1245 + $0x8c] sm:$0xf]
      %v1282 = vld [vmem:[%s1245 + $0x90] sm:$0xf]
      %v1283 = vld [vmem:[%s1245 + $0x94] sm:$0xf]
      %v1284 = vld [vmem:[%s1245 + $0x98] sm:$0xf]
      %v1285 = vld [vmem:[%s1245 + $0x9c] sm:$0xf]
      %v1286 = vld [vmem:[%s1245 + $0xa0] sm:$0xf]
      %v1287 = vld [vmem:[%s1245 + $0xa4] sm:$0xf]
      %v1288 = vld [vmem:[%s1245 + $0xa8] sm:$0xf]
      %v1289 = vld [vmem:[%s1245 + $0xac] sm:$0xf]
      %v1290 = vld [vmem:[%s1245 + $0xb0] sm:$0xf]
      %v1291 = vld [vmem:[%s1245 + $0xb4] sm:$0xf]
      %v1292 = vld [vmem:[%s1245 + $0xb8] sm:$0xf]
      %v1293 = vld [vmem:[%s1245 + $0xbc] sm:$0xf]
      %v1342 = vunpack.c.l.b16 %v1246
      %v1343 = vunpack.c.l.b16 %v1247
      %v1344 = vunpack.c.l.b16 %v1248
      %v1345 = vunpack.c.l.b16 %v1249
      %v1346 = vunpack.c.l.b16 %v1250
      %v1347 = vunpack.c.l.b16 %v1251
      %v1348 = vunpack.c.l.b16 %v1252
      %v1349 = vunpack.c.l.b16 %v1253
      %v1350 = vunpack.c.l.b16 %v1254
      %v1351 = vunpack.c.l.b16 %v1255
      %v1352 = vunpack.c.l.b16 %v1256
      %v1353 = vunpack.c.l.b16 %v1257
      %v1354 = vunpack.c.l.b16 %v1258
      %v1355 = vunpack.c.l.b16 %v1259
      %v1356 = vunpack.c.l.b16 %v1260
      %v1357 = vunpack.c.l.b16 %v1261
      %v1358 = vunpack.c.l.b16 %v1262
      %v1359 = vunpack.c.l.b16 %v1263
      %v1360 = vunpack.c.l.b16 %v1264
      %v1361 = vunpack.c.l.b16 %v1265
      %v1362 = vunpack.c.l.b16 %v1266
      %v1363 = vunpack.c.l.b16 %v1267
      %v1364 = vunpack.c.l.b16 %v1268
      %v1365 = vunpack.c.l.b16 %v1269
      %v1366 = vunpack.c.l.b16 %v1270
      %v1367 = vunpack.c.l.b16 %v1271
      %v1368 = vunpack.c.l.b16 %v1272
      %v1369 = vunpack.c.l.b16 %v1273
      %v1370 = vunpack.c.l.b16 %v1274
      %v1371 = vunpack.c.l.b16 %v1275
      %v1372 = vunpack.c.l.b16 %v1276
      %v1373 = vunpack.c.l.b16 %v1277
      %v1374 = vunpack.c.l.b16 %v1278
      %v1375 = vunpack.c.l.b16 %v1279
      %v1376 = vunpack.c.l.b16 %v1280
      %v1377 = vunpack.c.l.b16 %v1281
      %v1378 = vunpack.c.l.b16 %v1282
      %v1379 = vunpack.c.l.b16 %v1283
      %v1380 = vunpack.c.l.b16 %v1284
      %v1381 = vunpack.c.l.b16 %v1285
      %v1382 = vunpack.c.l.b16 %v1286
      %v1383 = vunpack.c.l.b16 %v1287
      %v1384 = vunpack.c.l.b16 %v1288
      %v1385 = vunpack.c.l.b16 %v1289
      %v1386 = vunpack.c.l.b16 %v1290
      %v1387 = vunpack.c.l.b16 %v1291
      %v1388 = vunpack.c.l.b16 %v1292
      %v1389 = vunpack.c.l.b16 %v1293
      %v1390 = vpack.c.b16 %v1343, %v1342
      %v1391 = vpack.c.b16 %v1345, %v1344
      %v1392 = vpack.c.b16 %v1347, %v1346
      %v1393 = vpack.c.b16 %v1349, %v1348
      %v1394 = vpack.c.b16 %v1351, %v1350
      %v1395 = vpack.c.b16 %v1353, %v1352
      %v1396 = vpack.c.b16 %v1355, %v1354
      %v1397 = vpack.c.b16 %v1357, %v1356
      %v1398 = vpack.c.b16 %v1359, %v1358
      %v1399 = vpack.c.b16 %v1361, %v1360
      %v1400 = vpack.c.b16 %v1363, %v1362
      %v1401 = vpack.c.b16 %v1365, %v1364
      %v1402 = vpack.c.b16 %v1367, %v1366
      %v1403 = vpack.c.b16 %v1369, %v1368
      %v1404 = vpack.c.b16 %v1371, %v1370
      %v1405 = vpack.c.b16 %v1373, %v1372
      %v1406 = vpack.c.b16 %v1375, %v1374
      %v1407 = vpack.c.b16 %v1377, %v1376
      %v1408 = vpack.c.b16 %v1379, %v1378
      %v1409 = vpack.c.b16 %v1381, %v1380
      %v1410 = vpack.c.b16 %v1383, %v1382
      %v1411 = vpack.c.b16 %v1385, %v1384
      %v1412 = vpack.c.b16 %v1387, %v1386
      %v1413 = vpack.c.b16 %v1389, %v1388
      %1438 = vmatprep.subr.bf16.mxu0 0
      %1439 = vmatpush1.bf16.msra.mxu0 %v1390
      %1440 = vmatprep.subr.bf16.mxu0 0
      %1441 = vmatpush1.bf16.msra.mxu0 %v1391
      %1442 = vmatprep.subr.bf16.mxu0 0
      %1443 = vmatpush1.bf16.msra.mxu0 %v1392
      %1444 = vmatprep.subr.bf16.mxu0 0
      %1445 = vmatpush1.bf16.msra.mxu0 %v1393
      %1446 = vmatprep.subr.bf16.mxu0 0
      %1447 = vmatpush1.bf16.msra.mxu0 %v1394
      %1448 = vmatprep.subr.bf16.mxu0 0
      %1449 = vmatpush1.bf16.msra.mxu0 %v1395
      %1450 = vmatprep.subr.bf16.mxu0 0
      %1451 = vmatpush1.bf16.msra.mxu0 %v1396
      %1452 = vmatprep.subr.bf16.mxu0 0
      %1453 = vmatpush1.bf16.msra.mxu0 %v1397
      %1454 = vmatprep.subr.bf16.mxu0 0
      %1455 = vmatpush1.bf16.msra.mxu0 %v1398
      %1456 = vmatprep.subr.bf16.mxu0 0
      %1457 = vmatpush1.bf16.msra.mxu0 %v1399
      %1458 = vmatprep.subr.bf16.mxu0 0
      %1459 = vmatpush1.bf16.msra.mxu0 %v1400
      %1460 = vmatprep.subr.bf16.mxu0 0
      %1461 = vmatpush1.bf16.msra.mxu0 %v1401
      %1462 = vmatprep.subr.bf16.mxu0 0
      %1463 = vmatpush1.bf16.msra.mxu0 %v1402
      %1464 = vmatprep.subr.bf16.mxu0 0
      %1465 = vmatpush1.bf16.msra.mxu0 %v1403
      %1466 = vmatprep.subr.bf16.mxu0 0
      %1467 = vmatpush1.bf16.msra.mxu0 %v1404
      %1468 = vmatprep.subr.bf16.mxu0 0
      %1469 = vmatpush1.bf16.msra.mxu0 %v1405
      %1470 = vmatprep.mubr.bf16.mxu0 %v1150
      %1471 = vmatmul.mubr.bf16.gmra.mrb[0].mxu0 %v1149
      %v1472 = vpop.f32.mrb[0].mxu0
      %v1473 = vadd.f32 0.0, %v1472
      %v1474 = vpop.f32.mrb[0].mxu0
      %v1475 = vpop.f32.mrb[0].mxu0
      %v1476 = vadd.f32 0.0, %v1475
      %v1477 = vpop.f32.mrb[0].mxu0
      %1478 = vmatprep.mubr.bf16.mxu0 %v1153
      %1479 = vmatmul.mubr.bf16.gmra.mrb[0].mxu0 %v1152
      %v1480 = vpop.f32.mrb[0].mxu0
      %v1481 = vadd.f32 0.0, %v1480
      %v1482 = vpop.f32.mrb[0].mxu0
      %v1483 = vpop.f32.mrb[0].mxu0
      %v1484 = vadd.f32 0.0, %v1483
      %v1485 = vpop.f32.mrb[0].mxu0
      %1486 = vmatprep.mubr.bf16.mxu0 %v1156
      %1487 = vmatmul.mubr.bf16.gmra.mrb[0].mxu0 %v1155
      %v1488 = vpop.f32.mrb[0].mxu0
      %v1489 = vadd.f32 0.0, %v1488
      %v1490 = vpop.f32.mrb[0].mxu0
      %v1491 = vpop.f32.mrb[0].mxu0
      %v1492 = vadd.f32 0.0, %v1491
      %v1493 = vpop.f32.mrb[0].mxu0
      %1494 = vmatprep.mubr.bf16.mxu0 %v1159
      %1495 = vmatmul.mubr.bf16.gmra.mrb[0].mxu0 %v1158
      %v1496 = vpop.f32.mrb[0].mxu0
      %v1497 = vadd.f32 0.0, %v1496
      %v1498 = vpop.f32.mrb[0].mxu0
      %v1499 = vpop.f32.mrb[0].mxu0
      %v1500 = vadd.f32 0.0, %v1499
      %v1501 = vpop.f32.mrb[0].mxu0
      %1502 = vmatprep.mubr.bf16.mxu0 %v1162
      %1503 = vmatmul.mubr.bf16.gmra.mrb[0].mxu0 %v1161
      %v1504 = vpop.f32.mrb[0].mxu0
      %v1505 = vadd.f32 0.0, %v1504
      %v1506 = vpop.f32.mrb[0].mxu0
      %v1507 = vpop.f32.mrb[0].mxu0
      %v1508 = vadd.f32 0.0, %v1507
      %v1509 = vpop.f32.mrb[0].mxu0
      %1510 = vmatprep.mubr.bf16.mxu0 %v1165
      %1511 = vmatmul.mubr.bf16.gmra.mrb[0].mxu0 %v1164
      %v1512 = vpop.f32.mrb[0].mxu0
      %v1513 = vadd.f32 0.0, %v1512
      %v1514 = vpop.f32.mrb[0].mxu0
      %v1515 = vpop.f32.mrb[0].mxu0
      %v1516 = vadd.f32 0.0, %v1515
      %v1517 = vpop.f32.mrb[0].mxu0
      %1518 = vmatprep.mubr.bf16.mxu0 %v1168
      %1519 = vmatmul.mubr.bf16.gmra.mrb[0].mxu0 %v1167
      %v1520 = vpop.f32.mrb[0].mxu0
      %v1521 = vadd.f32 0.0, %v1520
      %v1522 = vpop.f32.mrb[0].mxu0
      %v1523 = vpop.f32.mrb[0].mxu0
      %v1524 = vadd.f32 0.0, %v1523
      %v1525 = vpop.f32.mrb[0].mxu0
      %1526 = vmatprep.mubr.bf16.mxu0 %v1171
      %1527 = vmatmul.mubr.bf16.gmra.mrb[0].mxu0 %v1170
      %v1528 = vpop.f32.mrb[0].mxu0
      %v1529 = vadd.f32 0.0, %v1528
      %v1530 = vpop.f32.mrb[0].mxu0
      %v1531 = vpop.f32.mrb[0].mxu0
      %v1532 = vadd.f32 0.0, %v1531
      %v1533 = vpop.f32.mrb[0].mxu0
      %1534 = vmatprep.mubr.bf16.mxu0 %v1174
      %1535 = vmatmul.mubr.bf16.gmra.mrb[0].mxu0 %v1173
      %v1536 = vpop.f32.mrb[0].mxu0
      %v1537 = vadd.f32 0.0, %v1536
      %v1538 = vpop.f32.mrb[0].mxu0
      %v1539 = vpop.f32.mrb[0].mxu0
      %v1540 = vadd.f32 0.0, %v1539
      %v1541 = vpop.f32.mrb[0].mxu0
      %1542 = vmatprep.mubr.bf16.mxu0 %v1177
      %1543 = vmatmul.mubr.bf16.gmra.mrb[0].mxu0 %v1176
      %v1544 = vpop.f32.mrb[0].mxu0
      %v1545 = vadd.f32 0.0, %v1544
      %v1546 = vpop.f32.mrb[0].mxu0
      %v1547 = vpop.f32.mrb[0].mxu0
      %v1548 = vadd.f32 0.0, %v1547
      %v1549 = vpop.f32.mrb[0].mxu0
      %1550 = vmatprep.mubr.bf16.mxu0 %v1180
      %1551 = vmatmul.mubr.bf16.gmra.mrb[0].mxu0 %v1179
      %v1552 = vpop.f32.mrb[0].mxu0
      %v1553 = vadd.f32 0.0, %v1552
      %v1554 = vpop.f32.mrb[0].mxu0
      %v1555 = vpop.f32.mrb[0].mxu0
      %v1556 = vadd.f32 0.0, %v1555
      %v1557 = vpop.f32.mrb[0].mxu0
      %1558 = vmatprep.mubr.bf16.mxu0 %v1183
      %1559 = vmatmul.mubr.bf16.gmra.mrb[0].mxu0 %v1182
      %v1560 = vpop.f32.mrb[0].mxu0
      %v1561 = vadd.f32 0.0, %v1560
      %v1562 = vpop.f32.mrb[0].mxu0
      %v1563 = vpop.f32.mrb[0].mxu0
      %v1564 = vadd.f32 0.0, %v1563
      %v1565 = vpop.f32.mrb[0].mxu0
      %1566 = vmatprep.mubr.bf16.mxu0 %v1186
      %1567 = vmatmul.mubr.bf16.gmra.mrb[0].mxu0 %v1185
      %v1568 = vpop.f32.mrb[0].mxu0
      %v1569 = vadd.f32 0.0, %v1568
      %v1570 = vpop.f32.mrb[0].mxu0
      %v1571 = vpop.f32.mrb[0].mxu0
      %v1572 = vadd.f32 0.0, %v1571
      %v1573 = vpop.f32.mrb[0].mxu0
      %1574 = vmatprep.mubr.bf16.mxu0 %v1189
      %1575 = vmatmul.mubr.bf16.gmra.mrb[0].mxu0 %v1188
      %v1576 = vpop.f32.mrb[0].mxu0
      %v1577 = vadd.f32 0.0, %v1576
      %v1578 = vpop.f32.mrb[0].mxu0
      %v1579 = vpop.f32.mrb[0].mxu0
      %v1580 = vadd.f32 0.0, %v1579
      %v1581 = vpop.f32.mrb[0].mxu0
      %1582 = vmatprep.mubr.bf16.mxu0 %v1192
      %1583 = vmatmul.mubr.bf16.gmra.mrb[0].mxu0 %v1191
      %v1584 = vpop.f32.mrb[0].mxu0
      %v1585 = vadd.f32 0.0, %v1584
      %v1586 = vpop.f32.mrb[0].mxu0
      %v1587 = vpop.f32.mrb[0].mxu0
      %v1588 = vadd.f32 0.0, %v1587
      %v1589 = vpop.f32.mrb[0].mxu0
      %1590 = vmatprep.mubr.bf16.mxu0 %v1243
      %1591 = vmatmul.mubr.bf16.gmra.mrb[0].mxu0 %v1242
      %v1592 = vpop.f32.mrb[0].mxu0
      %v1593 = vadd.f32 0.0, %v1592
      %v1594 = vpop.f32.mrb[0].mxu0
      %v1595 = vpop.f32.mrb[0].mxu0
      %v1596 = vadd.f32 0.0, %v1595
      %v1597 = vpop.f32.mrb[0].mxu0
      %1598 = vdwg.mxu0
      %1599 = vmatprep.subr.bf16.mxu0 0
      %1600 = vmatpush1.bf16.msra.mxu0 %v1406
      %1601 = vmatprep.subr.bf16.mxu0 0
      %1602 = vmatpush1.bf16.msra.mxu0 %v1407
      %1603 = vmatprep.subr.bf16.mxu0 0
      %1604 = vmatpush1.bf16.msra.mxu0 %v1408
      %1605 = vmatprep.subr.bf16.mxu0 0
      %1606 = vmatpush1.bf16.msra.mxu0 %v1409
      %1607 = vmatprep.subr.bf16.mxu0 0
      %1608 = vmatpush1.bf16.msra.mxu0 %v1410
      %1609 = vmatprep.subr.bf16.mxu0 0
      %1610 = vmatpush1.bf16.msra.mxu0 %v1411
      %1611 = vmatprep.subr.bf16.mxu0 0
      %1612 = vmatpush1.bf16.msra.mxu0 %v1412
      %1613 = vmatprep.subr.bf16.mxu0 0
      %1614 = vmatpush1.bf16.msra.mxu0 %v1413
      %1615 = vmatprep.subr.bf16.mxu0 0
      %1616 = vmatpush1.bf16.msra.mxu0 0
      %1617 = vmatprep.subr.bf16.mxu0 0
      %1618 = vmatpush1.bf16.msra.mxu0 0
      %1619 = vmatprep.subr.bf16.mxu0 0
      %1620 = vmatpush1.bf16.msra.mxu0 0
      %1621 = vmatprep.subr.bf16.mxu0 0
      %1622 = vmatpush1.bf16.msra.mxu0 0
      %1623 = vmatprep.subr.bf16.mxu0 0
      %1624 = vmatpush1.bf16.msra.mxu0 0
      %1625 = vmatprep.subr.bf16.mxu0 0
      %1626 = vmatpush1.bf16.msra.mxu0 0
      %1627 = vmatprep.subr.bf16.mxu0 0
      %1628 = vmatpush1.bf16.msra.mxu0 0
      %1629 = vmatprep.subr.bf16.mxu0 0
      %1630 = vmatpush1.bf16.msra.mxu0 0
      %1631 = vmatprep.mubr.bf16.mxu0 0
      %1632 = vmatmul.mubr.bf16.gmra.mrb[0].mxu0 %v1151
      %v1633 = vpop.f32.mrb[0].mxu0
      %v1634 = vadd.f32 %v1473, %v1633
      %v1635 = vpop.f32.mrb[0].mxu0
      %v1636 = vpop.f32.mrb[0].mxu0
      %v1637 = vadd.f32 %v1476, %v1636
      %v1638 = vpop.f32.mrb[0].mxu0
      %1639 = vmatprep.mubr.bf16.mxu0 0
      %1640 = vmatmul.mubr.bf16.gmra.mrb[0].mxu0 %v1154
      %v1641 = vpop.f32.mrb[0].mxu0
      %v1642 = vadd.f32 %v1481, %v1641
      %v1643 = vpop.f32.mrb[0].mxu0
      %v1644 = vpop.f32.mrb[0].mxu0
      %v1645 = vadd.f32 %v1484, %v1644
      %v1646 = vpop.f32.mrb[0].mxu0
      %1647 = vmatprep.mubr.bf16.mxu0 0
      %1648 = vmatmul.mubr.bf16.gmra.mrb[0].mxu0 %v1157
      %v1649 = vpop.f32.mrb[0].mxu0
      %v1650 = vadd.f32 %v1489, %v1649
      %v1651 = vpop.f32.mrb[0].mxu0
      %v1652 = vpop.f32.mrb[0].mxu0
      %v1653 = vadd.f32 %v1492, %v1652
      %v1654 = vpop.f32.mrb[0].mxu0
      %1655 = vmatprep.mubr.bf16.mxu0 0
      %1656 = vmatmul.mubr.bf16.gmra.mrb[0].mxu0 %v1160
      %v1657 = vpop.f32.mrb[0].mxu0
      %v1658 = vadd.f32 %v1497, %v1657
      %v1659 = vpop.f32.mrb[0].mxu0
      %v1660 = vpop.f32.mrb[0].mxu0
      %v1661 = vadd.f32 %v1500, %v1660
      %v1662 = vpop.f32.mrb[0].mxu0
      %1663 = vmatprep.mubr.bf16.mxu0 0
      %1664 = vmatmul.mubr.bf16.gmra.mrb[0].mxu0 %v1163
      %v1665 = vpop.f32.mrb[0].mxu0
      %v1666 = vadd.f32 %v1505, %v1665
      %v1667 = vpop.f32.mrb[0].mxu0
      %v1668 = vpop.f32.mrb[0].mxu0
      %v1669 = vadd.f32 %v1508, %v1668
      %v1670 = vpop.f32.mrb[0].mxu0
      %1671 = vmatprep.mubr.bf16.mxu0 0
      %1672 = vmatmul.mubr.bf16.gmra.mrb[0].mxu0 %v1166
      %v1673 = vpop.f32.mrb[0].mxu0
      %v1674 = vadd.f32 %v1513, %v1673
      %v1675 = vpop.f32.mrb[0].mxu0
      %v1676 = vpop.f32.mrb[0].mxu0
      %v1677 = vadd.f32 %v1516, %v1676
      %v1678 = vpop.f32.mrb[0].mxu0
      %1679 = vmatprep.mubr.bf16.mxu0 0
      %1680 = vmatmul.mubr.bf16.gmra.mrb[0].mxu0 %v1169
      %v1681 = vpop.f32.mrb[0].mxu0
      %v1682 = vadd.f32 %v1521, %v1681
      %v1683 = vpop.f32.mrb[0].mxu0
      %v1684 = vpop.f32.mrb[0].mxu0
      %v1685 = vadd.f32 %v1524, %v1684
      %v1686 = vpop.f32.mrb[0].mxu0
      %1687 = vmatprep.mubr.bf16.mxu0 0
      %1688 = vmatmul.mubr.bf16.gmra.mrb[0].mxu0 %v1172
      %v1689 = vpop.f32.mrb[0].mxu0
      %v1690 = vadd.f32 %v1529, %v1689
      %v1691 = vpop.f32.mrb[0].mxu0
      %v1692 = vpop.f32.mrb[0].mxu0
      %v1693 = vadd.f32 %v1532, %v1692
      %v1694 = vpop.f32.mrb[0].mxu0
      %1695 = vmatprep.mubr.bf16.mxu0 0
      %1696 = vmatmul.mubr.bf16.gmra.mrb[0].mxu0 %v1175
      %v1697 = vpop.f32.mrb[0].mxu0
      %v1698 = vadd.f32 %v1537, %v1697
      %v1699 = vpop.f32.mrb[0].mxu0
      %v1700 = vpop.f32.mrb[0].mxu0
      %v1701 = vadd.f32 %v1540, %v1700
      %v1702 = vpop.f32.mrb[0].mxu0
      %1703 = vmatprep.mubr.bf16.mxu0 0
      %1704 = vmatmul.mubr.bf16.gmra.mrb[0].mxu0 %v1178
      %v1705 = vpop.f32.mrb[0].mxu0
      %v1706 = vadd.f32 %v1545, %v1705
      %v1707 = vpop.f32.mrb[0].mxu0
      %v1708 = vpop.f32.mrb[0].mxu0
      %v1709 = vadd.f32 %v1548, %v1708
      %v1710 = vpop.f32.mrb[0].mxu0
      %1711 = vmatprep.mubr.bf16.mxu0 0
      %1712 = vmatmul.mubr.bf16.gmra.mrb[0].mxu0 %v1181
      %v1713 = vpop.f32.mrb[0].mxu0
      %v1714 = vadd.f32 %v1553, %v1713
      %v1715 = vpop.f32.mrb[0].mxu0
      %v1716 = vpop.f32.mrb[0].mxu0
      %v1717 = vadd.f32 %v1556, %v1716
      %v1718 = vpop.f32.mrb[0].mxu0
      %1719 = vmatprep.mubr.bf16.mxu0 0
      %1720 = vmatmul.mubr.bf16.gmra.mrb[0].mxu0 %v1184
      %v1721 = vpop.f32.mrb[0].mxu0
      %v1722 = vadd.f32 %v1561, %v1721
      %v1723 = vpop.f32.mrb[0].mxu0
      %v1724 = vpop.f32.mrb[0].mxu0
      %v1725 = vadd.f32 %v1564, %v1724
      %v1726 = vpop.f32.mrb[0].mxu0
      %1727 = vmatprep.mubr.bf16.mxu0 0
      %1728 = vmatmul.mubr.bf16.gmra.mrb[0].mxu0 %v1187
      %v1729 = vpop.f32.mrb[0].mxu0
      %v1730 = vadd.f32 %v1569, %v1729
      %v1731 = vpop.f32.mrb[0].mxu0
      %v1732 = vpop.f32.mrb[0].mxu0
      %v1733 = vadd.f32 %v1572, %v1732
      %v1734 = vpop.f32.mrb[0].mxu0
      %1735 = vmatprep.mubr.bf16.mxu0 0
      %1736 = vmatmul.mubr.bf16.gmra.mrb[0].mxu0 %v1190
      %v1737 = vpop.f32.mrb[0].mxu0
      %v1738 = vadd.f32 %v1577, %v1737
      %v1739 = vpop.f32.mrb[0].mxu0
      %v1740 = vpop.f32.mrb[0].mxu0
      %v1741 = vadd.f32 %v1580, %v1740
      %v1742 = vpop.f32.mrb[0].mxu0
      %1743 = vmatprep.mubr.bf16.mxu0 0
      %1744 = vmatmul.mubr.bf16.gmra.mrb[0].mxu0 %v1193
      %v1745 = vpop.f32.mrb[0].mxu0
      %v1746 = vadd.f32 %v1585, %v1745
      %v1747 = vpop.f32.mrb[0].mxu0
      %v1748 = vpop.f32.mrb[0].mxu0
      %v1749 = vadd.f32 %v1588, %v1748
      %v1750 = vpop.f32.mrb[0].mxu0
      %1751 = vmatprep.mubr.bf16.mxu0 0
      %1752 = vmatmul.mubr.bf16.gmra.mrb[0].mxu0 %v1244
      %v1753 = vpop.f32.mrb[0].mxu0
      %v1754 = vadd.f32 %v1593, %v1753
      %v1755 = vpop.f32.mrb[0].mxu0
      %v1756 = vpop.f32.mrb[0].mxu0
      %v1757 = vadd.f32 %v1596, %v1756
      %v1758 = vpop.f32.mrb[0].mxu0
      %1759 = vdwg.mxu0
      %v1808 = vunpack.c.l.b16 %v1194
      %v1809 = vunpack.c.l.b16 %v1195
      %v1810 = vunpack.c.l.b16 %v1196
      %v1811 = vunpack.c.l.b16 %v1197
      %v1812 = vunpack.c.l.b16 %v1198
      %v1813 = vunpack.c.l.b16 %v1199
      %v1814 = vunpack.c.l.b16 %v1200
      %v1815 = vunpack.c.l.b16 %v1201
      %v1816 = vunpack.c.l.b16 %v1202
      %v1817 = vunpack.c.l.b16 %v1203
      %v1818 = vunpack.c.l.b16 %v1204
      %v1819 = vunpack.c.l.b16 %v1205
      %v1820 = vunpack.c.l.b16 %v1206
      %v1821 = vunpack.c.l.b16 %v1207
      %v1822 = vunpack.c.l.b16 %v1208
      %v1823 = vunpack.c.l.b16 %v1209
      %v1824 = vunpack.c.l.b16 %v1210
      %v1825 = vunpack.c.l.b16 %v1211
      %v1826 = vunpack.c.l.b16 %v1212
      %v1827 = vunpack.c.l.b16 %v1213
      %v1828 = vunpack.c.l.b16 %v1214
      %v1829 = vunpack.c.l.b16 %v1215
      %v1830 = vunpack.c.l.b16 %v1216
      %v1831 = vunpack.c.l.b16 %v1217
      %v1832 = vunpack.c.l.b16 %v1218
      %v1833 = vunpack.c.l.b16 %v1219
      %v1834 = vunpack.c.l.b16 %v1220
      %v1835 = vunpack.c.l.b16 %v1221
      %v1836 = vunpack.c.l.b16 %v1222
      %v1837 = vunpack.c.l.b16 %v1223
      %v1838 = vunpack.c.l.b16 %v1224
      %v1839 = vunpack.c.l.b16 %v1225
      %v1840 = vunpack.c.l.b16 %v1226
      %v1841 = vunpack.c.l.b16 %v1227
      %v1842 = vunpack.c.l.b16 %v1228
      %v1843 = vunpack.c.l.b16 %v1229
      %v1844 = vunpack.c.l.b16 %v1230
      %v1845 = vunpack.c.l.b16 %v1231
      %v1846 = vunpack.c.l.b16 %v1232
      %v1847 = vunpack.c.l.b16 %v1233
      %v1848 = vunpack.c.l.b16 %v1234
      %v1849 = vunpack.c.l.b16 %v1235
      %v1850 = vunpack.c.l.b16 %v1236
      %v1851 = vunpack.c.l.b16 %v1237
      %v1852 = vunpack.c.l.b16 %v1238
      %v1853 = vunpack.c.l.b16 %v1239
      %v1854 = vunpack.c.l.b16 %v1240
      %v1855 = vunpack.c.l.b16 %v1241
      %v1856 = vpack.c.b16 %v1809, %v1808
      %v1857 = vpack.c.b16 %v1811, %v1810
      %v1858 = vpack.c.b16 %v1813, %v1812
      %v1859 = vpack.c.b16 %v1815, %v1814
      %v1860 = vpack.c.b16 %v1817, %v1816
      %v1861 = vpack.c.b16 %v1819, %v1818
      %v1862 = vpack.c.b16 %v1821, %v1820
      %v1863 = vpack.c.b16 %v1823, %v1822
      %v1864 = vpack.c.b16 %v1825, %v1824
      %v1865 = vpack.c.b16 %v1827, %v1826
      %v1866 = vpack.c.b16 %v1829, %v1828
      %v1867 = vpack.c.b16 %v1831, %v1830
      %v1868 = vpack.c.b16 %v1833, %v1832
      %v1869 = vpack.c.b16 %v1835, %v1834
      %v1870 = vpack.c.b16 %v1837, %v1836
      %v1871 = vpack.c.b16 %v1839, %v1838
      %v1872 = vpack.c.b16 %v1841, %v1840
      %v1873 = vpack.c.b16 %v1843, %v1842
      %v1874 = vpack.c.b16 %v1845, %v1844
      %v1875 = vpack.c.b16 %v1847, %v1846
      %v1876 = vpack.c.b16 %v1849, %v1848
      %v1877 = vpack.c.b16 %v1851, %v1850
      %v1878 = vpack.c.b16 %v1853, %v1852
      %v1879 = vpack.c.b16 %v1855, %v1854
      %1904 = vmatprep.subr.bf16.mxu0 0
      %1905 = vmatpush1.bf16.msra.mxu0 %v1856
      %1906 = vmatprep.subr.bf16.mxu0 0
      %1907 = vmatpush1.bf16.msra.mxu0 %v1857
      %1908 = vmatprep.subr.bf16.mxu0 0
      %1909 = vmatpush1.bf16.msra.mxu0 %v1858
      %1910 = vmatprep.subr.bf16.mxu0 0
      %1911 = vmatpush1.bf16.msra.mxu0 %v1859
      %1912 = vmatprep.subr.bf16.mxu0 0
      %1913 = vmatpush1.bf16.msra.mxu0 %v1860
      %1914 = vmatprep.subr.bf16.mxu0 0
      %1915 = vmatpush1.bf16.msra.mxu0 %v1861
      %1916 = vmatprep.subr.bf16.mxu0 0
      %1917 = vmatpush1.bf16.msra.mxu0 %v1862
      %1918 = vmatprep.subr.bf16.mxu0 0
      %1919 = vmatpush1.bf16.msra.mxu0 %v1863
      %1920 = vmatprep.subr.bf16.mxu0 0
      %1921 = vmatpush1.bf16.msra.mxu0 %v1864
      %1922 = vmatprep.subr.bf16.mxu0 0
      %1923 = vmatpush1.bf16.msra.mxu0 %v1865
      %1924 = vmatprep.subr.bf16.mxu0 0
      %1925 = vmatpush1.bf16.msra.mxu0 %v1866
      %1926 = vmatprep.subr.bf16.mxu0 0
      %1927 = vmatpush1.bf16.msra.mxu0 %v1867
      %1928 = vmatprep.subr.bf16.mxu0 0
      %1929 = vmatpush1.bf16.msra.mxu0 %v1868
      %1930 = vmatprep.subr.bf16.mxu0 0
      %1931 = vmatpush1.bf16.msra.mxu0 %v1869
      %1932 = vmatprep.subr.bf16.mxu0 0
      %1933 = vmatpush1.bf16.msra.mxu0 %v1870
      %1934 = vmatprep.subr.bf16.mxu0 0
      %1935 = vmatpush1.bf16.msra.mxu0 %v1871
      %1936 = vmatprep.mubr.bf16.mxu0 %v1147
      %1937 = vmatmul.mubr.bf16.gmra.mrb[0].mxu0 %v1146
      %v1938 = vpop.f32.mrb[0].mxu0
      %v1939 = vadd.f32 %v1634, %v1938
      %v1940 = vpop.f32.mrb[0].mxu0
      %v1941 = vpop.f32.mrb[0].mxu0
      %v1942 = vadd.f32 %v1637, %v1941
      %v1943 = vpop.f32.mrb[0].mxu0
      %1944 = vmatprep.mubr.bf16.mxu0 %v1150
      %1945 = vmatmul.mubr.bf16.gmra.mrb[0].mxu0 %v1149
      %v1946 = vpop.f32.mrb[0].mxu0
      %v1947 = vadd.f32 %v1642, %v1946
      %v1948 = vpop.f32.mrb[0].mxu0
      %v1949 = vpop.f32.mrb[0].mxu0
      %v1950 = vadd.f32 %v1645, %v1949
      %v1951 = vpop.f32.mrb[0].mxu0
      %1952 = vmatprep.mubr.bf16.mxu0 %v1153
      %1953 = vmatmul.mubr.bf16.gmra.mrb[0].mxu0 %v1152
      %v1954 = vpop.f32.mrb[0].mxu0
      %v1955 = vadd.f32 %v1650, %v1954
      %v1956 = vpop.f32.mrb[0].mxu0
      %v1957 = vpop.f32.mrb[0].mxu0
      %v1958 = vadd.f32 %v1653, %v1957
      %v1959 = vpop.f32.mrb[0].mxu0
      %1960 = vmatprep.mubr.bf16.mxu0 %v1156
      %1961 = vmatmul.mubr.bf16.gmra.mrb[0].mxu0 %v1155
      %v1962 = vpop.f32.mrb[0].mxu0
      %v1963 = vadd.f32 %v1658, %v1962
      %v1964 = vpop.f32.mrb[0].mxu0
      %v1965 = vpop.f32.mrb[0].mxu0
      %v1966 = vadd.f32 %v1661, %v1965
      %v1967 = vpop.f32.mrb[0].mxu0
      %1968 = vmatprep.mubr.bf16.mxu0 %v1159
      %1969 = vmatmul.mubr.bf16.gmra.mrb[0].mxu0 %v1158
      %v1970 = vpop.f32.mrb[0].mxu0
      %v1971 = vadd.f32 %v1666, %v1970
      %v1972 = vpop.f32.mrb[0].mxu0
      %v1973 = vpop.f32.mrb[0].mxu0
      %v1974 = vadd.f32 %v1669, %v1973
      %v1975 = vpop.f32.mrb[0].mxu0
      %1976 = vmatprep.mubr.bf16.mxu0 %v1162
      %1977 = vmatmul.mubr.bf16.gmra.mrb[0].mxu0 %v1161
      %v1978 = vpop.f32.mrb[0].mxu0
      %v1979 = vadd.f32 %v1674, %v1978
      %v1980 = vpop.f32.mrb[0].mxu0
      %v1981 = vpop.f32.mrb[0].mxu0
      %v1982 = vadd.f32 %v1677, %v1981
      %v1983 = vpop.f32.mrb[0].mxu0
      %1984 = vmatprep.mubr.bf16.mxu0 %v1165
      %1985 = vmatmul.mubr.bf16.gmra.mrb[0].mxu0 %v1164
      %v1986 = vpop.f32.mrb[0].mxu0
      %v1987 = vadd.f32 %v1682, %v1986
      %v1988 = vpop.f32.mrb[0].mxu0
      %v1989 = vpop.f32.mrb[0].mxu0
      %v1990 = vadd.f32 %v1685, %v1989
      %v1991 = vpop.f32.mrb[0].mxu0
      %1992 = vmatprep.mubr.bf16.mxu0 %v1168
      %1993 = vmatmul.mubr.bf16.gmra.mrb[0].mxu0 %v1167
      %v1994 = vpop.f32.mrb[0].mxu0
      %v1995 = vadd.f32 %v1690, %v1994
      %v1996 = vpop.f32.mrb[0].mxu0
      %v1997 = vpop.f32.mrb[0].mxu0
      %v1998 = vadd.f32 %v1693, %v1997
      %v1999 = vpop.f32.mrb[0].mxu0
      %2000 = vmatprep.mubr.bf16.mxu0 %v1171
      %2001 = vmatmul.mubr.bf16.gmra.mrb[0].mxu0 %v1170
      %v2002 = vpop.f32.mrb[0].mxu0
      %v2003 = vadd.f32 %v1698, %v2002
      %v2004 = vpop.f32.mrb[0].mxu0
      %v2005 = vpop.f32.mrb[0].mxu0
      %v2006 = vadd.f32 %v1701, %v2005
      %v2007 = vpop.f32.mrb[0].mxu0
      %2008 = vmatprep.mubr.bf16.mxu0 %v1174
      %2009 = vmatmul.mubr.bf16.gmra.mrb[0].mxu0 %v1173
      %v2010 = vpop.f32.mrb[0].mxu0
      %v2011 = vadd.f32 %v1706, %v2010
      %v2012 = vpop.f32.mrb[0].mxu0
      %v2013 = vpop.f32.mrb[0].mxu0
      %v2014 = vadd.f32 %v1709, %v2013
      %v2015 = vpop.f32.mrb[0].mxu0
      %2016 = vmatprep.mubr.bf16.mxu0 %v1177
      %2017 = vmatmul.mubr.bf16.gmra.mrb[0].mxu0 %v1176
      %v2018 = vpop.f32.mrb[0].mxu0
      %v2019 = vadd.f32 %v1714, %v2018
      %v2020 = vpop.f32.mrb[0].mxu0
      %v2021 = vpop.f32.mrb[0].mxu0
      %v2022 = vadd.f32 %v1717, %v2021
      %v2023 = vpop.f32.mrb[0].mxu0
      %2024 = vmatprep.mubr.bf16.mxu0 %v1180
      %2025 = vmatmul.mubr.bf16.gmra.mrb[0].mxu0 %v1179
      %v2026 = vpop.f32.mrb[0].mxu0
      %v2027 = vadd.f32 %v1722, %v2026
      %v2028 = vpop.f32.mrb[0].mxu0
      %v2029 = vpop.f32.mrb[0].mxu0
      %v2030 = vadd.f32 %v1725, %v2029
      %v2031 = vpop.f32.mrb[0].mxu0
      %2032 = vmatprep.mubr.bf16.mxu0 %v1183
      %2033 = vmatmul.mubr.bf16.gmra.mrb[0].mxu0 %v1182
      %v2034 = vpop.f32.mrb[0].mxu0
      %v2035 = vadd.f32 %v1730, %v2034
      %v2036 = vpop.f32.mrb[0].mxu0
      %v2037 = vpop.f32.mrb[0].mxu0
      %v2038 = vadd.f32 %v1733, %v2037
      %v2039 = vpop.f32.mrb[0].mxu0
      %2040 = vmatprep.mubr.bf16.mxu0 %v1186
      %2041 = vmatmul.mubr.bf16.gmra.mrb[0].mxu0 %v1185
      %v2042 = vpop.f32.mrb[0].mxu0
      %v2043 = vadd.f32 %v1738, %v2042
      %v2044 = vpop.f32.mrb[0].mxu0
      %v2045 = vpop.f32.mrb[0].mxu0
      %v2046 = vadd.f32 %v1741, %v2045
      %v2047 = vpop.f32.mrb[0].mxu0
      %2048 = vmatprep.mubr.bf16.mxu0 %v1189
      %2049 = vmatmul.mubr.bf16.gmra.mrb[0].mxu0 %v1188
      %v2050 = vpop.f32.mrb[0].mxu0
      %v2051 = vadd.f32 %v1746, %v2050
      %v2052 = vpop.f32.mrb[0].mxu0
      %v2053 = vpop.f32.mrb[0].mxu0
      %v2054 = vadd.f32 %v1749, %v2053
      %v2055 = vpop.f32.mrb[0].mxu0
      %2056 = vmatprep.mubr.bf16.mxu0 %v1192
      %2057 = vmatmul.mubr.bf16.gmra.mrb[0].mxu0 %v1191
      %v2058 = vpop.f32.mrb[0].mxu0
      %v2059 = vadd.f32 %v1754, %v2058
      %v2060 = vpop.f32.mrb[0].mxu0
      %v2061 = vpop.f32.mrb[0].mxu0
      %v2062 = vadd.f32 %v1757, %v2061
      %v2063 = vpop.f32.mrb[0].mxu0
      %2064 = vdwg.mxu0
      %2065 = vmatprep.subr.bf16.mxu0 0
      %2066 = vmatpush1.bf16.msra.mxu0 %v1872
      %2067 = vmatprep.subr.bf16.mxu0 0
      %2068 = vmatpush1.bf16.msra.mxu0 %v1873
      %2069 = vmatprep.subr.bf16.mxu0 0
      %2070 = vmatpush1.bf16.msra.mxu0 %v1874
      %2071 = vmatprep.subr.bf16.mxu0 0
      %2072 = vmatpush1.bf16.msra.mxu0 %v1875
      %2073 = vmatprep.subr.bf16.mxu0 0
      %2074 = vmatpush1.bf16.msra.mxu0 %v1876
      %2075 = vmatprep.subr.bf16.mxu0 0
      %2076 = vmatpush1.bf16.msra.mxu0 %v1877
      %2077 = vmatprep.subr.bf16.mxu0 0
      %2078 = vmatpush1.bf16.msra.mxu0 %v1878
      %2079 = vmatprep.subr.bf16.mxu0 0
      %2080 = vmatpush1.bf16.msra.mxu0 %v1879
      %2081 = vmatprep.subr.bf16.mxu0 0
      %2082 = vmatpush1.bf16.msra.mxu0 0
      %2083 = vmatprep.subr.bf16.mxu0 0
      %2084 = vmatpush1.bf16.msra.mxu0 0
      %2085 = vmatprep.subr.bf16.mxu0 0
      %2086 = vmatpush1.bf16.msra.mxu0 0
      %2087 = vmatprep.subr.bf16.mxu0 0
      %2088 = vmatpush1.bf16.msra.mxu0 0
      %2089 = vmatprep.subr.bf16.mxu0 0
      %2090 = vmatpush1.bf16.msra.mxu0 0
      %2091 = vmatprep.subr.bf16.mxu0 0
      %2092 = vmatpush1.bf16.msra.mxu0 0
      %2093 = vmatprep.subr.bf16.mxu0 0
      %2094 = vmatpush1.bf16.msra.mxu0 0
      %2095 = vmatprep.subr.bf16.mxu0 0
      %2096 = vmatpush1.bf16.msra.mxu0 0
      %2097 = vmatprep.mubr.bf16.mxu0 0
      %2098 = vmatmul.mubr.bf16.gmra.mrb[0].mxu0 %v1148
      %v2099 = vpop.f32.mrb[0].mxu0
      %v2100 = vadd.f32 %v1939, %v2099
      %v2101 = vpop.f32.mrb[0].mxu0
      %v2102 = vpop.f32.mrb[0].mxu0
      %v2103 = vadd.f32 %v1942, %v2102
      %v2104 = vpop.f32.mrb[0].mxu0
      %2105 = vmatprep.mubr.bf16.mxu0 0
      %2106 = vmatmul.mubr.bf16.gmra.mrb[0].mxu0 %v1151
      %v2107 = vpop.f32.mrb[0].mxu0
      %v2108 = vadd.f32 %v1947, %v2107
      %v2109 = vpop.f32.mrb[0].mxu0
      %v2110 = vpop.f32.mrb[0].mxu0
      %v2111 = vadd.f32 %v1950, %v2110
      %v2112 = vpop.f32.mrb[0].mxu0
      %2113 = vmatprep.mubr.bf16.mxu0 0
      %2114 = vmatmul.mubr.bf16.gmra.mrb[0].mxu0 %v1154
      %v2115 = vpop.f32.mrb[0].mxu0
      %v2116 = vadd.f32 %v1955, %v2115
      %v2117 = vpop.f32.mrb[0].mxu0
      %v2118 = vpop.f32.mrb[0].mxu0
      %v2119 = vadd.f32 %v1958, %v2118
      %v2120 = vpop.f32.mrb[0].mxu0
      %2121 = vmatprep.mubr.bf16.mxu0 0
      %2122 = vmatmul.mubr.bf16.gmra.mrb[0].mxu0 %v1157
      %v2123 = vpop.f32.mrb[0].mxu0
      %v2124 = vadd.f32 %v1963, %v2123
      %v2125 = vpop.f32.mrb[0].mxu0
      %v2126 = vpop.f32.mrb[0].mxu0
      %v2127 = vadd.f32 %v1966, %v2126
      %v2128 = vpop.f32.mrb[0].mxu0
      %2129 = vmatprep.mubr.bf16.mxu0 0
      %2130 = vmatmul.mubr.bf16.gmra.mrb[0].mxu0 %v1160
      %v2131 = vpop.f32.mrb[0].mxu0
      %v2132 = vadd.f32 %v1971, %v2131
      %v2133 = vpop.f32.mrb[0].mxu0
      %v2134 = vpop.f32.mrb[0].mxu0
      %v2135 = vadd.f32 %v1974, %v2134
      %v2136 = vpop.f32.mrb[0].mxu0
      %2137 = vmatprep.mubr.bf16.mxu0 0
      %2138 = vmatmul.mubr.bf16.gmra.mrb[0].mxu0 %v1163
      %v2139 = vpop.f32.mrb[0].mxu0
      %v2140 = vadd.f32 %v1979, %v2139
      %v2141 = vpop.f32.mrb[0].mxu0
      %v2142 = vpop.f32.mrb[0].mxu0
      %v2143 = vadd.f32 %v1982, %v2142
      %v2144 = vpop.f32.mrb[0].mxu0
      %2145 = vmatprep.mubr.bf16.mxu0 0
      %2146 = vmatmul.mubr.bf16.gmra.mrb[0].mxu0 %v1166
      %v2147 = vpop.f32.mrb[0].mxu0
      %v2148 = vadd.f32 %v1987, %v2147
      %v2149 = vpop.f32.mrb[0].mxu0
      %v2150 = vpop.f32.mrb[0].mxu0
      %v2151 = vadd.f32 %v1990, %v2150
      %v2152 = vpop.f32.mrb[0].mxu0
      %2153 = vmatprep.mubr.bf16.mxu0 0
      %2154 = vmatmul.mubr.bf16.gmra.mrb[0].mxu0 %v1169
      %v2155 = vpop.f32.mrb[0].mxu0
      %v2156 = vadd.f32 %v1995, %v2155
      %v2157 = vpop.f32.mrb[0].mxu0
      %v2158 = vpop.f32.mrb[0].mxu0
      %v2159 = vadd.f32 %v1998, %v2158
      %v2160 = vpop.f32.mrb[0].mxu0
      %2161 = vmatprep.mubr.bf16.mxu0 0
      %2162 = vmatmul.mubr.bf16.gmra.mrb[0].mxu0 %v1172
      %v2163 = vpop.f32.mrb[0].mxu0
      %v2164 = vadd.f32 %v2003, %v2163
      %v2165 = vpop.f32.mrb[0].mxu0
      %v2166 = vpop.f32.mrb[0].mxu0
      %v2167 = vadd.f32 %v2006, %v2166
      %v2168 = vpop.f32.mrb[0].mxu0
      %2169 = vmatprep.mubr.bf16.mxu0 0
      %2170 = vmatmul.mubr.bf16.gmra.mrb[0].mxu0 %v1175
      %v2171 = vpop.f32.mrb[0].mxu0
      %v2172 = vadd.f32 %v2011, %v2171
      %v2173 = vpop.f32.mrb[0].mxu0
      %v2174 = vpop.f32.mrb[0].mxu0
      %v2175 = vadd.f32 %v2014, %v2174
      %v2176 = vpop.f32.mrb[0].mxu0
      %2177 = vmatprep.mubr.bf16.mxu0 0
      %2178 = vmatmul.mubr.bf16.gmra.mrb[0].mxu0 %v1178
      %v2179 = vpop.f32.mrb[0].mxu0
      %v2180 = vadd.f32 %v2019, %v2179
      %v2181 = vpop.f32.mrb[0].mxu0
      %v2182 = vpop.f32.mrb[0].mxu0
      %v2183 = vadd.f32 %v2022, %v2182
      %v2184 = vpop.f32.mrb[0].mxu0
      %2185 = vmatprep.mubr.bf16.mxu0 0
      %2186 = vmatmul.mubr.bf16.gmra.mrb[0].mxu0 %v1181
      %v2187 = vpop.f32.mrb[0].mxu0
      %v2188 = vadd.f32 %v2027, %v2187
      %v2189 = vpop.f32.mrb[0].mxu0
      %v2190 = vpop.f32.mrb[0].mxu0
      %v2191 = vadd.f32 %v2030, %v2190
      %v2192 = vpop.f32.mrb[0].mxu0
      %2193 = vmatprep.mubr.bf16.mxu0 0
      %2194 = vmatmul.mubr.bf16.gmra.mrb[0].mxu0 %v1184
      %v2195 = vpop.f32.mrb[0].mxu0
      %v2196 = vadd.f32 %v2035, %v2195
      %v2197 = vpop.f32.mrb[0].mxu0
      %v2198 = vpop.f32.mrb[0].mxu0
      %v2199 = vadd.f32 %v2038, %v2198
      %v2200 = vpop.f32.mrb[0].mxu0
      %2201 = vmatprep.mubr.bf16.mxu0 0
      %2202 = vmatmul.mubr.bf16.gmra.mrb[0].mxu0 %v1187
      %v2203 = vpop.f32.mrb[0].mxu0
      %v2204 = vadd.f32 %v2043, %v2203
      %v2205 = vpop.f32.mrb[0].mxu0
      %v2206 = vpop.f32.mrb[0].mxu0
      %v2207 = vadd.f32 %v2046, %v2206
      %v2208 = vpop.f32.mrb[0].mxu0
      %2209 = vmatprep.mubr.bf16.mxu0 0
      %2210 = vmatmul.mubr.bf16.gmra.mrb[0].mxu0 %v1190
      %v2211 = vpop.f32.mrb[0].mxu0
      %v2212 = vadd.f32 %v2051, %v2211
      %v2213 = vpop.f32.mrb[0].mxu0
      %v2214 = vpop.f32.mrb[0].mxu0
      %v2215 = vadd.f32 %v2054, %v2214
      %v2216 = vpop.f32.mrb[0].mxu0
      %2217 = vmatprep.mubr.bf16.mxu0 0
      %2218 = vmatmul.mubr.bf16.gmra.mrb[0].mxu0 %v1193
      %v2219 = vpop.f32.mrb[0].mxu0
      %v2220 = vadd.f32 %v2059, %v2219
      %v2221 = vpop.f32.mrb[0].mxu0
      %v2222 = vpop.f32.mrb[0].mxu0
      %v2223 = vadd.f32 %v2062, %v2222
      %v2224 = vpop.f32.mrb[0].mxu0
      %2225 = vdwg.mxu0
      %v2226 = vld [vmem:[#allocation2 + $0x30] sm:$0xff]
      %v2227 = vld [vmem:[#allocation2 + $0x38] sm:$0xff]
      %v2228 = vld [vmem:[#allocation2 + $0x40] sm:$0xff]
      %v2229 = vld [vmem:[#allocation2 + $0x48] sm:$0xff]
      %v2230 = vld [vmem:[#allocation2 + $0x50] sm:$0xff]
      %v2231 = vld [vmem:[#allocation2 + $0x58] sm:$0xff]
      %v2232 = vld [vmem:[#allocation2 + $0x60] sm:$0xff]
      %v2233 = vld [vmem:[#allocation2 + $0x68] sm:$0xff]
      %v2234 = vld [vmem:[#allocation2 + $0x70] sm:$0xff]
      %v2235 = vld [vmem:[#allocation2 + $0x78] sm:$0xff]
      %v2236 = vld [vmem:[#allocation2 + $0x80] sm:$0xff]
      %v2237 = vld [vmem:[#allocation2 + $0x88] sm:$0xff]
      %v2238 = vld [vmem:[#allocation2 + $0x90] sm:$0xff]
      %v2239 = vld [vmem:[#allocation2 + $0x98] sm:$0xff]
      %v2240 = vld [vmem:[#allocation2 + $0xa0] sm:$0xff]
      %v2241 = vld [vmem:[#allocation2 + $0xa8] sm:$0xff]
      %v2242 = vld [vmem:[#allocation2 + $0xb0] sm:$0xff]
      %v2243 = vld [vmem:[#allocation2 + $0xb8] sm:$0xff]
      %v2244 = vld [vmem:[#allocation2 + $0xc0] sm:$0xff]
      %v2245 = vld [vmem:[#allocation2 + $0xc8] sm:$0xff]
      %v2246 = vld [vmem:[#allocation2 + $0xd0] sm:$0xff]
      %v2247 = vld [vmem:[#allocation2 + $0xd8] sm:$0xff]
      %v2248 = vld [vmem:[#allocation2 + $0xe0] sm:$0xff]
      %v2249 = vld [vmem:[#allocation2 + $0xe8] sm:$0xff]
      %v2250 = vld [vmem:[#allocation2 + $0xf0] sm:$0xff]
      %v2251 = vld [vmem:[#allocation2 + $0xf8] sm:$0xff]
      %v2252 = vld [vmem:[#allocation2 + $0x100] sm:$0xff]
      %v2253 = vld [vmem:[#allocation2 + $0x108] sm:$0xff]
      %v2254 = vld [vmem:[#allocation2 + $0x110] sm:$0xff]
      %v2255 = vld [vmem:[#allocation2 + $0x118] sm:$0xff]
      %v2256 = vld [vmem:[#allocation2 + $0x120] sm:$0xff]
      %v2257 = vld [vmem:[#allocation2 + $0x128] sm:$0xff]
      %v2258 = vld [vmem:[#allocation2 + $0x130] sm:$0xff]
      %v2259 = vld [vmem:[#allocation2 + $0x138] sm:$0xff]
      %v2260 = vld [vmem:[#allocation2 + $0x140] sm:$0xff]
      %v2261 = vld [vmem:[#allocation2 + $0x148] sm:$0xff]
      %v2262 = vld [vmem:[#allocation2 + $0x150] sm:$0xff]
      %v2263 = vld [vmem:[#allocation2 + $0x158] sm:$0xff]
      %v2264 = vld [vmem:[#allocation2 + $0x160] sm:$0xff]
      %v2265 = vld [vmem:[#allocation2 + $0x168] sm:$0xff]
      %v2266 = vld [vmem:[#allocation2 + $0x170] sm:$0xff]
      %v2267 = vld [vmem:[#allocation2 + $0x178] sm:$0xff]
      %v2268 = vld [vmem:[#allocation2 + $0x180] sm:$0xff]
      %v2269 = vld [vmem:[#allocation2 + $0x188] sm:$0xff]
      %v2270 = vld [vmem:[#allocation2 + $0x190] sm:$0xff]
      %v2271 = vld [vmem:[#allocation2 + $0x198] sm:$0xff]
      %v2272 = vld [vmem:[#allocation2 + $0x1a0] sm:$0xff]
      %v2273 = vld [vmem:[#allocation2 + $0x1a8] sm:$0xff]
      %s2274 = scalar_lea.vmem %s3, 384
      %v2275 = vld [vmem:[%s2274] sm:$0xf]
      %v2276 = vld [vmem:[%s2274 + $0x4] sm:$0xf]
      %v2277 = vld [vmem:[%s2274 + $0x8] sm:$0xf]
      %v2278 = vld [vmem:[%s2274 + $0xc] sm:$0xf]
      %v2279 = vld [vmem:[%s2274 + $0x10] sm:$0xf]
      %v2280 = vld [vmem:[%s2274 + $0x14] sm:$0xf]
      %v2281 = vld [vmem:[%s2274 + $0x18] sm:$0xf]
      %v2282 = vld [vmem:[%s2274 + $0x1c] sm:$0xf]
      %v2283 = vld [vmem:[%s2274 + $0x20] sm:$0xf]
      %v2284 = vld [vmem:[%s2274 + $0x24] sm:$0xf]
      %v2285 = vld [vmem:[%s2274 + $0x28] sm:$0xf]
      %v2286 = vld [vmem:[%s2274 + $0x2c] sm:$0xf]
      %v2287 = vld [vmem:[%s2274 + $0x30] sm:$0xf]
      %v2288 = vld [vmem:[%s2274 + $0x34] sm:$0xf]
      %v2289 = vld [vmem:[%s2274 + $0x38] sm:$0xf]
      %v2290 = vld [vmem:[%s2274 + $0x3c] sm:$0xf]
      %v2291 = vld [vmem:[%s2274 + $0x40] sm:$0xf]
      %v2292 = vld [vmem:[%s2274 + $0x44] sm:$0xf]
      %v2293 = vld [vmem:[%s2274 + $0x48] sm:$0xf]
      %v2294 = vld [vmem:[%s2274 + $0x4c] sm:$0xf]
      %v2295 = vld [vmem:[%s2274 + $0x50] sm:$0xf]
      %v2296 = vld [vmem:[%s2274 + $0x54] sm:$0xf]
      %v2297 = vld [vmem:[%s2274 + $0x58] sm:$0xf]
      %v2298 = vld [vmem:[%s2274 + $0x5c] sm:$0xf]
      %v2299 = vld [vmem:[%s2274 + $0x60] sm:$0xf]
      %v2300 = vld [vmem:[%s2274 + $0x64] sm:$0xf]
      %v2301 = vld [vmem:[%s2274 + $0x68] sm:$0xf]
      %v2302 = vld [vmem:[%s2274 + $0x6c] sm:$0xf]
      %v2303 = vld [vmem:[%s2274 + $0x70] sm:$0xf]
      %v2304 = vld [vmem:[%s2274 + $0x74] sm:$0xf]
      %v2305 = vld [vmem:[%s2274 + $0x78] sm:$0xf]
      %v2306 = vld [vmem:[%s2274 + $0x7c] sm:$0xf]
      %v2307 = vld [vmem:[%s2274 + $0x80] sm:$0xf]
      %v2308 = vld [vmem:[%s2274 + $0x84] sm:$0xf]
      %v2309 = vld [vmem:[%s2274 + $0x88] sm:$0xf]
      %v2310 = vld [vmem:[%s2274 + $0x8c] sm:$0xf]
      %v2311 = vld [vmem:[%s2274 + $0x90] sm:$0xf]
      %v2312 = vld [vmem:[%s2274 + $0x94] sm:$0xf]
      %v2313 = vld [vmem:[%s2274 + $0x98] sm:$0xf]
      %v2314 = vld [vmem:[%s2274 + $0x9c] sm:$0xf]
      %v2315 = vld [vmem:[%s2274 + $0xa0] sm:$0xf]
      %v2316 = vld [vmem:[%s2274 + $0xa4] sm:$0xf]
      %v2317 = vld [vmem:[%s2274 + $0xa8] sm:$0xf]
      %v2318 = vld [vmem:[%s2274 + $0xac] sm:$0xf]
      %v2319 = vld [vmem:[%s2274 + $0xb0] sm:$0xf]
      %v2320 = vld [vmem:[%s2274 + $0xb4] sm:$0xf]
      %v2321 = vld [vmem:[%s2274 + $0xb8] sm:$0xf]
      %v2322 = vld [vmem:[%s2274 + $0xbc] sm:$0xf]
      %v2371 = vunpack.c.l.b16 %v2275
      %v2372 = vunpack.c.l.b16 %v2276
      %v2373 = vunpack.c.l.b16 %v2277
      %v2374 = vunpack.c.l.b16 %v2278
      %v2375 = vunpack.c.l.b16 %v2279
      %v2376 = vunpack.c.l.b16 %v2280
      %v2377 = vunpack.c.l.b16 %v2281
      %v2378 = vunpack.c.l.b16 %v2282
      %v2379 = vunpack.c.l.b16 %v2283
      %v2380 = vunpack.c.l.b16 %v2284
      %v2381 = vunpack.c.l.b16 %v2285
      %v2382 = vunpack.c.l.b16 %v2286
      %v2383 = vunpack.c.l.b16 %v2287
      %v2384 = vunpack.c.l.b16 %v2288
      %v2385 = vunpack.c.l.b16 %v2289
      %v2386 = vunpack.c.l.b16 %v2290
      %v2387 = vunpack.c.l.b16 %v2291
      %v2388 = vunpack.c.l.b16 %v2292
      %v2389 = vunpack.c.l.b16 %v2293
      %v2390 = vunpack.c.l.b16 %v2294
      %v2391 = vunpack.c.l.b16 %v2295
      %v2392 = vunpack.c.l.b16 %v2296
      %v2393 = vunpack.c.l.b16 %v2297
      %v2394 = vunpack.c.l.b16 %v2298
      %v2395 = vunpack.c.l.b16 %v2299
      %v2396 = vunpack.c.l.b16 %v2300
      %v2397 = vunpack.c.l.b16 %v2301
      %v2398 = vunpack.c.l.b16 %v2302
      %v2399 = vunpack.c.l.b16 %v2303
      %v2400 = vunpack.c.l.b16 %v2304
      %v2401 = vunpack.c.l.b16 %v2305
      %v2402 = vunpack.c.l.b16 %v2306
      %v2403 = vunpack.c.l.b16 %v2307
      %v2404 = vunpack.c.l.b16 %v2308
      %v2405 = vunpack.c.l.b16 %v2309
      %v2406 = vunpack.c.l.b16 %v2310
      %v2407 = vunpack.c.l.b16 %v2311
      %v2408 = vunpack.c.l.b16 %v2312
      %v2409 = vunpack.c.l.b16 %v2313
      %v2410 = vunpack.c.l.b16 %v2314
      %v2411 = vunpack.c.l.b16 %v2315
      %v2412 = vunpack.c.l.b16 %v2316
      %v2413 = vunpack.c.l.b16 %v2317
      %v2414 = vunpack.c.l.b16 %v2318
      %v2415 = vunpack.c.l.b16 %v2319
      %v2416 = vunpack.c.l.b16 %v2320
      %v2417 = vunpack.c.l.b16 %v2321
      %v2418 = vunpack.c.l.b16 %v2322
      %v2419 = vpack.c.b16 %v2372, %v2371
      %v2420 = vpack.c.b16 %v2374, %v2373
      %v2421 = vpack.c.b16 %v2376, %v2375
      %v2422 = vpack.c.b16 %v2378, %v2377
      %v2423 = vpack.c.b16 %v2380, %v2379
      %v2424 = vpack.c.b16 %v2382, %v2381
      %v2425 = vpack.c.b16 %v2384, %v2383
      %v2426 = vpack.c.b16 %v2386, %v2385
      %v2427 = vpack.c.b16 %v2388, %v2387
      %v2428 = vpack.c.b16 %v2390, %v2389
      %v2429 = vpack.c.b16 %v2392, %v2391
      %v2430 = vpack.c.b16 %v2394, %v2393
      %v2431 = vpack.c.b16 %v2396, %v2395
      %v2432 = vpack.c.b16 %v2398, %v2397
      %v2433 = vpack.c.b16 %v2400, %v2399
      %v2434 = vpack.c.b16 %v2402, %v2401
      %v2435 = vpack.c.b16 %v2404, %v2403
      %v2436 = vpack.c.b16 %v2406, %v2405
      %v2437 = vpack.c.b16 %v2408, %v2407
      %v2438 = vpack.c.b16 %v2410, %v2409
      %v2439 = vpack.c.b16 %v2412, %v2411
      %v2440 = vpack.c.b16 %v2414, %v2413
      %v2441 = vpack.c.b16 %v2416, %v2415
      %v2442 = vpack.c.b16 %v2418, %v2417
      %2467 = vmatprep.subr.bf16.mxu0 0
      %2468 = vmatpush1.bf16.msra.mxu0 %v2419
      %2469 = vmatprep.subr.bf16.mxu0 0
      %2470 = vmatpush1.bf16.msra.mxu0 %v2420
      %2471 = vmatprep.subr.bf16.mxu0 0
      %2472 = vmatpush1.bf16.msra.mxu0 %v2421
      %2473 = vmatprep.subr.bf16.mxu0 0
      %2474 = vmatpush1.bf16.msra.mxu0 %v2422
      %2475 = vmatprep.subr.bf16.mxu0 0
      %2476 = vmatpush1.bf16.msra.mxu0 %v2423
      %2477 = vmatprep.subr.bf16.mxu0 0
      %2478 = vmatpush1.bf16.msra.mxu0 %v2424
      %2479 = vmatprep.subr.bf16.mxu0 0
      %2480 = vmatpush1.bf16.msra.mxu0 %v2425
      %2481 = vmatprep.subr.bf16.mxu0 0
      %2482 = vmatpush1.bf16.msra.mxu0 %v2426
      %2483 = vmatprep.subr.bf16.mxu0 0
      %2484 = vmatpush1.bf16.msra.mxu0 %v2427
      %2485 = vmatprep.subr.bf16.mxu0 0
      %2486 = vmatpush1.bf16.msra.mxu0 %v2428
      %2487 = vmatprep.subr.bf16.mxu0 0
      %2488 = vmatpush1.bf16.msra.mxu0 %v2429
      %2489 = vmatprep.subr.bf16.mxu0 0
      %2490 = vmatpush1.bf16.msra.mxu0 %v2430
      %2491 = vmatprep.subr.bf16.mxu0 0
      %2492 = vmatpush1.bf16.msra.mxu0 %v2431
      %2493 = vmatprep.subr.bf16.mxu0 0
      %2494 = vmatpush1.bf16.msra.mxu0 %v2432
      %2495 = vmatprep.subr.bf16.mxu0 0
      %2496 = vmatpush1.bf16.msra.mxu0 %v2433
      %2497 = vmatprep.subr.bf16.mxu0 0
      %2498 = vmatpush1.bf16.msra.mxu0 %v2434
      %2499 = vmatprep.mubr.bf16.mxu0 %v2227
      %2500 = vmatmul.mubr.bf16.gmra.mrb[0].mxu0 %v2226
      %v2501 = vpop.f32.mrb[0].mxu0
      %v2502 = vadd.f32 0.0, %v2501
      %v2503 = vpop.f32.mrb[0].mxu0
      %v2504 = vpop.f32.mrb[0].mxu0
      %v2505 = vadd.f32 0.0, %v2504
      %v2506 = vpop.f32.mrb[0].mxu0
      %2507 = vmatprep.mubr.bf16.mxu0 %v2230
      %2508 = vmatmul.mubr.bf16.gmra.mrb[0].mxu0 %v2229
      %v2509 = vpop.f32.mrb[0].mxu0
      %v2510 = vadd.f32 0.0, %v2509
      %v2511 = vpop.f32.mrb[0].mxu0
      %v2512 = vpop.f32.mrb[0].mxu0
      %v2513 = vadd.f32 0.0, %v2512
      %v2514 = vpop.f32.mrb[0].mxu0
      %2515 = vmatprep.mubr.bf16.mxu0 %v2233
      %2516 = vmatmul.mubr.bf16.gmra.mrb[0].mxu0 %v2232
      %v2517 = vpop.f32.mrb[0].mxu0
      %v2518 = vadd.f32 0.0, %v2517
      %v2519 = vpop.f32.mrb[0].mxu0
      %v2520 = vpop.f32.mrb[0].mxu0
      %v2521 = vadd.f32 0.0, %v2520
      %v2522 = vpop.f32.mrb[0].mxu0
      %2523 = vmatprep.mubr.bf16.mxu0 %v2236
      %2524 = vmatmul.mubr.bf16.gmra.mrb[0].mxu0 %v2235
      %v2525 = vpop.f32.mrb[0].mxu0
      %v2526 = vadd.f32 0.0, %v2525
      %v2527 = vpop.f32.mrb[0].mxu0
      %v2528 = vpop.f32.mrb[0].mxu0
      %v2529 = vadd.f32 0.0, %v2528
      %v2530 = vpop.f32.mrb[0].mxu0
      %2531 = vmatprep.mubr.bf16.mxu0 %v2239
      %2532 = vmatmul.mubr.bf16.gmra.mrb[0].mxu0 %v2238
      %v2533 = vpop.f32.mrb[0].mxu0
      %v2534 = vadd.f32 0.0, %v2533
      %v2535 = vpop.f32.mrb[0].mxu0
      %v2536 = vpop.f32.mrb[0].mxu0
      %v2537 = vadd.f32 0.0, %v2536
      %v2538 = vpop.f32.mrb[0].mxu0
      %2539 = vmatprep.mubr.bf16.mxu0 %v2242
      %2540 = vmatmul.mubr.bf16.gmra.mrb[0].mxu0 %v2241
      %v2541 = vpop.f32.mrb[0].mxu0
      %v2542 = vadd.f32 0.0, %v2541
      %v2543 = vpop.f32.mrb[0].mxu0
      %v2544 = vpop.f32.mrb[0].mxu0
      %v2545 = vadd.f32 0.0, %v2544
      %v2546 = vpop.f32.mrb[0].mxu0
      %2547 = vmatprep.mubr.bf16.mxu0 %v2245
      %2548 = vmatmul.mubr.bf16.gmra.mrb[0].mxu0 %v2244
      %v2549 = vpop.f32.mrb[0].mxu0
      %v2550 = vadd.f32 0.0, %v2549
      %v2551 = vpop.f32.mrb[0].mxu0
      %v2552 = vpop.f32.mrb[0].mxu0
      %v2553 = vadd.f32 0.0, %v2552
      %v2554 = vpop.f32.mrb[0].mxu0
      %2555 = vmatprep.mubr.bf16.mxu0 %v2248
      %2556 = vmatmul.mubr.bf16.gmra.mrb[0].mxu0 %v2247
      %v2557 = vpop.f32.mrb[0].mxu0
      %v2558 = vadd.f32 0.0, %v2557
      %v2559 = vpop.f32.mrb[0].mxu0
      %v2560 = vpop.f32.mrb[0].mxu0
      %v2561 = vadd.f32 0.0, %v2560
      %v2562 = vpop.f32.mrb[0].mxu0
      %2563 = vmatprep.mubr.bf16.mxu0 %v2251
      %2564 = vmatmul.mubr.bf16.gmra.mrb[0].mxu0 %v2250
      %v2565 = vpop.f32.mrb[0].mxu0
      %v2566 = vadd.f32 0.0, %v2565
      %v2567 = vpop.f32.mrb[0].mxu0
      %v2568 = vpop.f32.mrb[0].mxu0
      %v2569 = vadd.f32 0.0, %v2568
      %v2570 = vpop.f32.mrb[0].mxu0
      %2571 = vmatprep.mubr.bf16.mxu0 %v2254
      %2572 = vmatmul.mubr.bf16.gmra.mrb[0].mxu0 %v2253
      %v2573 = vpop.f32.mrb[0].mxu0
      %v2574 = vadd.f32 0.0, %v2573
      %v2575 = vpop.f32.mrb[0].mxu0
      %v2576 = vpop.f32.mrb[0].mxu0
      %v2577 = vadd.f32 0.0, %v2576
      %v2578 = vpop.f32.mrb[0].mxu0
      %2579 = vmatprep.mubr.bf16.mxu0 %v2257
      %2580 = vmatmul.mubr.bf16.gmra.mrb[0].mxu0 %v2256
      %v2581 = vpop.f32.mrb[0].mxu0
      %v2582 = vadd.f32 0.0, %v2581
      %v2583 = vpop.f32.mrb[0].mxu0
      %v2584 = vpop.f32.mrb[0].mxu0
      %v2585 = vadd.f32 0.0, %v2584
      %v2586 = vpop.f32.mrb[0].mxu0
      %2587 = vmatprep.mubr.bf16.mxu0 %v2260
      %2588 = vmatmul.mubr.bf16.gmra.mrb[0].mxu0 %v2259
      %v2589 = vpop.f32.mrb[0].mxu0
      %v2590 = vadd.f32 0.0, %v2589
      %v2591 = vpop.f32.mrb[0].mxu0
      %v2592 = vpop.f32.mrb[0].mxu0
      %v2593 = vadd.f32 0.0, %v2592
      %v2594 = vpop.f32.mrb[0].mxu0
      %2595 = vmatprep.mubr.bf16.mxu0 %v2263
      %2596 = vmatmul.mubr.bf16.gmra.mrb[0].mxu0 %v2262
      %v2597 = vpop.f32.mrb[0].mxu0
      %v2598 = vadd.f32 0.0, %v2597
      %v2599 = vpop.f32.mrb[0].mxu0
      %v2600 = vpop.f32.mrb[0].mxu0
      %v2601 = vadd.f32 0.0, %v2600
      %v2602 = vpop.f32.mrb[0].mxu0
      %2603 = vmatprep.mubr.bf16.mxu0 %v2266
      %2604 = vmatmul.mubr.bf16.gmra.mrb[0].mxu0 %v2265
      %v2605 = vpop.f32.mrb[0].mxu0
      %v2606 = vadd.f32 0.0, %v2605
      %v2607 = vpop.f32.mrb[0].mxu0
      %v2608 = vpop.f32.mrb[0].mxu0
      %v2609 = vadd.f32 0.0, %v2608
      %v2610 = vpop.f32.mrb[0].mxu0
      %2611 = vmatprep.mubr.bf16.mxu0 %v2269
      %2612 = vmatmul.mubr.bf16.gmra.mrb[0].mxu0 %v2268
      %v2613 = vpop.f32.mrb[0].mxu0
      %v2614 = vadd.f32 0.0, %v2613
      %v2615 = vpop.f32.mrb[0].mxu0
      %v2616 = vpop.f32.mrb[0].mxu0
      %v2617 = vadd.f32 0.0, %v2616
      %v2618 = vpop.f32.mrb[0].mxu0
      %2619 = vmatprep.mubr.bf16.mxu0 %v2272
      %2620 = vmatmul.mubr.bf16.gmra.mrb[0].mxu0 %v2271
      %v2621 = vpop.f32.mrb[0].mxu0
      %v2622 = vadd.f32 0.0, %v2621
      %v2623 = vpop.f32.mrb[0].mxu0
      %v2624 = vpop.f32.mrb[0].mxu0
      %v2625 = vadd.f32 0.0, %v2624
      %v2626 = vpop.f32.mrb[0].mxu0
      %2627 = vdwg.mxu0
      %2628 = vmatprep.subr.bf16.mxu0 0
      %2629 = vmatpush1.bf16.msra.mxu0 %v2435
      %2630 = vmatprep.subr.bf16.mxu0 0
      %2631 = vmatpush1.bf16.msra.mxu0 %v2436
      %2632 = vmatprep.subr.bf16.mxu0 0
      %2633 = vmatpush1.bf16.msra.mxu0 %v2437
      %2634 = vmatprep.subr.bf16.mxu0 0
      %2635 = vmatpush1.bf16.msra.mxu0 %v2438
      %2636 = vmatprep.subr.bf16.mxu0 0
      %2637 = vmatpush1.bf16.msra.mxu0 %v2439
      %2638 = vmatprep.subr.bf16.mxu0 0
      %2639 = vmatpush1.bf16.msra.mxu0 %v2440
      %2640 = vmatprep.subr.bf16.mxu0 0
      %2641 = vmatpush1.bf16.msra.mxu0 %v2441
      %2642 = vmatprep.subr.bf16.mxu0 0
      %2643 = vmatpush1.bf16.msra.mxu0 %v2442
      %2644 = vmatprep.subr.bf16.mxu0 0
      %2645 = vmatpush1.bf16.msra.mxu0 0
      %2646 = vmatprep.subr.bf16.mxu0 0
      %2647 = vmatpush1.bf16.msra.mxu0 0
      %2648 = vmatprep.subr.bf16.mxu0 0
      %2649 = vmatpush1.bf16.msra.mxu0 0
      %2650 = vmatprep.subr.bf16.mxu0 0
      %2651 = vmatpush1.bf16.msra.mxu0 0
      %2652 = vmatprep.subr.bf16.mxu0 0
      %2653 = vmatpush1.bf16.msra.mxu0 0
      %2654 = vmatprep.subr.bf16.mxu0 0
      %2655 = vmatpush1.bf16.msra.mxu0 0
      %2656 = vmatprep.subr.bf16.mxu0 0
      %2657 = vmatpush1.bf16.msra.mxu0 0
      %2658 = vmatprep.subr.bf16.mxu0 0
      %2659 = vmatpush1.bf16.msra.mxu0 0
      %2660 = vmatprep.mubr.bf16.mxu0 0
      %2661 = vmatmul.mubr.bf16.gmra.mrb[0].mxu0 %v2228
      %v2662 = vpop.f32.mrb[0].mxu0
      %v2663 = vadd.f32 %v2502, %v2662
      %v2664 = vpop.f32.mrb[0].mxu0
      %v2665 = vpop.f32.mrb[0].mxu0
      %v2666 = vadd.f32 %v2505, %v2665
      %v2667 = vpop.f32.mrb[0].mxu0
      %2668 = vmatprep.mubr.bf16.mxu0 0
      %2669 = vmatmul.mubr.bf16.gmra.mrb[0].mxu0 %v2231
      %v2670 = vpop.f32.mrb[0].mxu0
      %v2671 = vadd.f32 %v2510, %v2670
      %v2672 = vpop.f32.mrb[0].mxu0
      %v2673 = vpop.f32.mrb[0].mxu0
      %v2674 = vadd.f32 %v2513, %v2673
      %v2675 = vpop.f32.mrb[0].mxu0
      %2676 = vmatprep.mubr.bf16.mxu0 0
      %2677 = vmatmul.mubr.bf16.gmra.mrb[0].mxu0 %v2234
      %v2678 = vpop.f32.mrb[0].mxu0
      %v2679 = vadd.f32 %v2518, %v2678
      %v2680 = vpop.f32.mrb[0].mxu0
      %v2681 = vpop.f32.mrb[0].mxu0
      %v2682 = vadd.f32 %v2521, %v2681
      %v2683 = vpop.f32.mrb[0].mxu0
      %2684 = vmatprep.mubr.bf16.mxu0 0
      %2685 = vmatmul.mubr.bf16.gmra.mrb[0].mxu0 %v2237
      %v2686 = vpop.f32.mrb[0].mxu0
      %v2687 = vadd.f32 %v2526, %v2686
      %v2688 = vpop.f32.mrb[0].mxu0
      %v2689 = vpop.f32.mrb[0].mxu0
      %v2690 = vadd.f32 %v2529, %v2689
      %v2691 = vpop.f32.mrb[0].mxu0
      %2692 = vmatprep.mubr.bf16.mxu0 0
      %2693 = vmatmul.mubr.bf16.gmra.mrb[0].mxu0 %v2240
      %v2694 = vpop.f32.mrb[0].mxu0
      %v2695 = vadd.f32 %v2534, %v2694
      %v2696 = vpop.f32.mrb[0].mxu0
      %v2697 = vpop.f32.mrb[0].mxu0
      %v2698 = vadd.f32 %v2537, %v2697
      %v2699 = vpop.f32.mrb[0].mxu0
      %2700 = vmatprep.mubr.bf16.mxu0 0
      %2701 = vmatmul.mubr.bf16.gmra.mrb[0].mxu0 %v2243
      %v2702 = vpop.f32.mrb[0].mxu0
      %v2703 = vadd.f32 %v2542, %v2702
      %v2704 = vpop.f32.mrb[0].mxu0
      %v2705 = vpop.f32.mrb[0].mxu0
      %v2706 = vadd.f32 %v2545, %v2705
      %v2707 = vpop.f32.mrb[0].mxu0
      %2708 = vmatprep.mubr.bf16.mxu0 0
      %2709 = vmatmul.mubr.bf16.gmra.mrb[0].mxu0 %v2246
      %v2710 = vpop.f32.mrb[0].mxu0
      %v2711 = vadd.f32 %v2550, %v2710
      %v2712 = vpop.f32.mrb[0].mxu0
      %v2713 = vpop.f32.mrb[0].mxu0
      %v2714 = vadd.f32 %v2553, %v2713
      %v2715 = vpop.f32.mrb[0].mxu0
      %2716 = vmatprep.mubr.bf16.mxu0 0
      %2717 = vmatmul.mubr.bf16.gmra.mrb[0].mxu0 %v2249
      %v2718 = vpop.f32.mrb[0].mxu0
      %v2719 = vadd.f32 %v2558, %v2718
      %v2720 = vpop.f32.mrb[0].mxu0
      %v2721 = vpop.f32.mrb[0].mxu0
      %v2722 = vadd.f32 %v2561, %v2721
      %v2723 = vpop.f32.mrb[0].mxu0
      %2724 = vmatprep.mubr.bf16.mxu0 0
      %2725 = vmatmul.mubr.bf16.gmra.mrb[0].mxu0 %v2252
      %v2726 = vpop.f32.mrb[0].mxu0
      %v2727 = vadd.f32 %v2566, %v2726
      %v2728 = vpop.f32.mrb[0].mxu0
      %v2729 = vpop.f32.mrb[0].mxu0
      %v2730 = vadd.f32 %v2569, %v2729
      %v2731 = vpop.f32.mrb[0].mxu0
      %2732 = vmatprep.mubr.bf16.mxu0 0
      %2733 = vmatmul.mubr.bf16.gmra.mrb[0].mxu0 %v2255
      %v2734 = vpop.f32.mrb[0].mxu0
      %v2735 = vadd.f32 %v2574, %v2734
      %v2736 = vpop.f32.mrb[0].mxu0
      %v2737 = vpop.f32.mrb[0].mxu0
      %v2738 = vadd.f32 %v2577, %v2737
      %v2739 = vpop.f32.mrb[0].mxu0
      %2740 = vmatprep.mubr.bf16.mxu0 0
      %2741 = vmatmul.mubr.bf16.gmra.mrb[0].mxu0 %v2258
      %v2742 = vpop.f32.mrb[0].mxu0
      %v2743 = vadd.f32 %v2582, %v2742
      %v2744 = vpop.f32.mrb[0].mxu0
      %v2745 = vpop.f32.mrb[0].mxu0
      %v2746 = vadd.f32 %v2585, %v2745
      %v2747 = vpop.f32.mrb[0].mxu0
      %2748 = vmatprep.mubr.bf16.mxu0 0
      %2749 = vmatmul.mubr.bf16.gmra.mrb[0].mxu0 %v2261
      %v2750 = vpop.f32.mrb[0].mxu0
      %v2751 = vadd.f32 %v2590, %v2750
      %v2752 = vpop.f32.mrb[0].mxu0
      %v2753 = vpop.f32.mrb[0].mxu0
      %v2754 = vadd.f32 %v2593, %v2753
      %v2755 = vpop.f32.mrb[0].mxu0
      %2756 = vmatprep.mubr.bf16.mxu0 0
      %2757 = vmatmul.mubr.bf16.gmra.mrb[0].mxu0 %v2264
      %v2758 = vpop.f32.mrb[0].mxu0
      %v2759 = vadd.f32 %v2598, %v2758
      %v2760 = vpop.f32.mrb[0].mxu0
      %v2761 = vpop.f32.mrb[0].mxu0
      %v2762 = vadd.f32 %v2601, %v2761
      %v2763 = vpop.f32.mrb[0].mxu0
      %2764 = vmatprep.mubr.bf16.mxu0 0
      %2765 = vmatmul.mubr.bf16.gmra.mrb[0].mxu0 %v2267
      %v2766 = vpop.f32.mrb[0].mxu0
      %v2767 = vadd.f32 %v2606, %v2766
      %v2768 = vpop.f32.mrb[0].mxu0
      %v2769 = vpop.f32.mrb[0].mxu0
      %v2770 = vadd.f32 %v2609, %v2769
      %v2771 = vpop.f32.mrb[0].mxu0
      %2772 = vmatprep.mubr.bf16.mxu0 0
      %2773 = vmatmul.mubr.bf16.gmra.mrb[0].mxu0 %v2270
      %v2774 = vpop.f32.mrb[0].mxu0
      %v2775 = vadd.f32 %v2614, %v2774
      %v2776 = vpop.f32.mrb[0].mxu0
      %v2777 = vpop.f32.mrb[0].mxu0
      %v2778 = vadd.f32 %v2617, %v2777
      %v2779 = vpop.f32.mrb[0].mxu0
      %2780 = vmatprep.mubr.bf16.mxu0 0
      %2781 = vmatmul.mubr.bf16.gmra.mrb[0].mxu0 %v2273
      %v2782 = vpop.f32.mrb[0].mxu0
      %v2783 = vadd.f32 %v2622, %v2782
      %v2784 = vpop.f32.mrb[0].mxu0
      %v2785 = vpop.f32.mrb[0].mxu0
      %v2786 = vadd.f32 %v2625, %v2785
      %v2787 = vpop.f32.mrb[0].mxu0
      %2788 = vdwg.mxu0
      %v2789 = vadd.f32 %v2100, %v2663
      %v2790 = vadd.f32 %v2103, %v2666
      %v2791 = vadd.f32 %v2108, %v2671
      %v2792 = vadd.f32 %v2111, %v2674
      %v2793 = vadd.f32 %v2116, %v2679
      %v2794 = vadd.f32 %v2119, %v2682
      %v2795 = vadd.f32 %v2124, %v2687
      %v2796 = vadd.f32 %v2127, %v2690
      %v2797 = vadd.f32 %v2132, %v2695
      %v2798 = vadd.f32 %v2135, %v2698
      %v2799 = vadd.f32 %v2140, %v2703
      %v2800 = vadd.f32 %v2143, %v2706
      %v2801 = vadd.f32 %v2148, %v2711
      %v2802 = vadd.f32 %v2151, %v2714
      %v2803 = vadd.f32 %v2156, %v2719
      %v2804 = vadd.f32 %v2159, %v2722
      %v2805 = vadd.f32 %v2164, %v2727
      %v2806 = vadd.f32 %v2167, %v2730
      %v2807 = vadd.f32 %v2172, %v2735
      %v2808 = vadd.f32 %v2175, %v2738
      %v2809 = vadd.f32 %v2180, %v2743
      %v2810 = vadd.f32 %v2183, %v2746
      %v2811 = vadd.f32 %v2188, %v2751
      %v2812 = vadd.f32 %v2191, %v2754
      %v2813 = vadd.f32 %v2196, %v2759
      %v2814 = vadd.f32 %v2199, %v2762
      %v2815 = vadd.f32 %v2204, %v2767
      %v2816 = vadd.f32 %v2207, %v2770
      %v2817 = vadd.f32 %v2212, %v2775
      %v2818 = vadd.f32 %v2215, %v2778
      %v2819 = vadd.f32 %v2220, %v2783
      %v2820 = vadd.f32 %v2223, %v2786
      %v2821 = vpack.c.bf16 %v2790, %v2789
      %v2822 = vpack.c.bf16 %v2792, %v2791
      %v2823 = vpack.c.bf16 %v2794, %v2793
      %v2824 = vpack.c.bf16 %v2796, %v2795
      %v2825 = vpack.c.bf16 %v2798, %v2797
      %v2826 = vpack.c.bf16 %v2800, %v2799
      %v2827 = vpack.c.bf16 %v2802, %v2801
      %v2828 = vpack.c.bf16 %v2804, %v2803
      %v2829 = vpack.c.bf16 %v2806, %v2805
      %v2830 = vpack.c.bf16 %v2808, %v2807
      %v2831 = vpack.c.bf16 %v2810, %v2809
      %v2832 = vpack.c.bf16 %v2812, %v2811
      %v2833 = vpack.c.bf16 %v2814, %v2813
      %v2834 = vpack.c.bf16 %v2816, %v2815
      %v2835 = vpack.c.bf16 %v2818, %v2817
      %v2836 = vpack.c.bf16 %v2820, %v2819
      %v2853 = vunpack.c.l.b16 %v2821
      %v2854 = vunpack.c.h.b16 %v2821
      %v2855 = vunpack.c.l.b16 %v2822
      %v2856 = vunpack.c.h.b16 %v2822
      %v2857 = vunpack.c.l.b16 %v2823
      %v2858 = vunpack.c.h.b16 %v2823
      %v2859 = vunpack.c.l.b16 %v2824
      %v2860 = vunpack.c.h.b16 %v2824
      %v2861 = vunpack.c.l.b16 %v2825
      %v2862 = vunpack.c.h.b16 %v2825
      %v2863 = vunpack.c.l.b16 %v2826
      %v2864 = vunpack.c.h.b16 %v2826
      %v2865 = vunpack.c.l.b16 %v2827
      %v2866 = vunpack.c.h.b16 %v2827
      %v2867 = vunpack.c.l.b16 %v2828
      %v2868 = vunpack.c.h.b16 %v2828
      %v2869 = vunpack.c.l.b16 %v2829
      %v2870 = vunpack.c.h.b16 %v2829
      %v2871 = vunpack.c.l.b16 %v2830
      %v2872 = vunpack.c.h.b16 %v2830
      %v2873 = vunpack.c.l.b16 %v2831
      %v2874 = vunpack.c.h.b16 %v2831
      %v2875 = vunpack.c.l.b16 %v2832
      %v2876 = vunpack.c.h.b16 %v2832
      %v2877 = vunpack.c.l.b16 %v2833
      %v2878 = vunpack.c.h.b16 %v2833
      %v2879 = vunpack.c.l.b16 %v2834
      %v2880 = vunpack.c.h.b16 %v2834
      %v2881 = vunpack.c.l.b16 %v2835
      %v2882 = vunpack.c.h.b16 %v2835
      %v2883 = vunpack.c.l.b16 %v2836
      %v2884 = vunpack.c.h.b16 %v2836
      %v2885 = vpack.c.b16 %v2853, %v2853
      %v2886 = vpack.c.b16 %v2854, %v2854
      %v2887 = vpack.c.b16 %v2855, %v2855
      %v2888 = vpack.c.b16 %v2856, %v2856
      %v2889 = vpack.c.b16 %v2857, %v2857
      %v2890 = vpack.c.b16 %v2858, %v2858
      %v2891 = vpack.c.b16 %v2859, %v2859
      %v2892 = vpack.c.b16 %v2860, %v2860
      %v2893 = vpack.c.b16 %v2861, %v2861
      %v2894 = vpack.c.b16 %v2862, %v2862
      %v2895 = vpack.c.b16 %v2863, %v2863
      %v2896 = vpack.c.b16 %v2864, %v2864
      %v2897 = vpack.c.b16 %v2865, %v2865
      %v2898 = vpack.c.b16 %v2866, %v2866
      %v2899 = vpack.c.b16 %v2867, %v2867
      %v2900 = vpack.c.b16 %v2868, %v2868
      %v2901 = vpack.c.b16 %v2869, %v2869
      %v2902 = vpack.c.b16 %v2870, %v2870
      %v2903 = vpack.c.b16 %v2871, %v2871
      %v2904 = vpack.c.b16 %v2872, %v2872
      %v2905 = vpack.c.b16 %v2873, %v2873
      %v2906 = vpack.c.b16 %v2874, %v2874
      %v2907 = vpack.c.b16 %v2875, %v2875
      %v2908 = vpack.c.b16 %v2876, %v2876
      %v2909 = vpack.c.b16 %v2877, %v2877
      %v2910 = vpack.c.b16 %v2878, %v2878
      %v2911 = vpack.c.b16 %v2879, %v2879
      %v2912 = vpack.c.b16 %v2880, %v2880
      %v2913 = vpack.c.b16 %v2881, %v2881
      %v2914 = vpack.c.b16 %v2882, %v2882
      %v2915 = vpack.c.b16 %v2883, %v2883
      %v2916 = vpack.c.b16 %v2884, %v2884
      %2949 = vst [vmem:[%s316] sm:$0xf] %v2885
      %2950 = vst [vmem:[%s316 + $0x4] sm:$0xf] %v2886
      %2951 = vst [vmem:[%s316 + $0x8] sm:$0xf] %v2887
      %2952 = vst [vmem:[%s316 + $0xc] sm:$0xf] %v2888
      %2953 = vst [vmem:[%s316 + $0x10] sm:$0xf] %v2889
      %2954 = vst [vmem:[%s316 + $0x14] sm:$0xf] %v2890
      %2955 = vst [vmem:[%s316 + $0x18] sm:$0xf] %v2891
      %2956 = vst [vmem:[%s316 + $0x1c] sm:$0xf] %v2892
      %2957 = vst [vmem:[%s316 + $0x20] sm:$0xf] %v2893
      %2958 = vst [vmem:[%s316 + $0x24] sm:$0xf] %v2894
      %2959 = vst [vmem:[%s316 + $0x28] sm:$0xf] %v2895
      %2960 = vst [vmem:[%s316 + $0x2c] sm:$0xf] %v2896
      %2961 = vst [vmem:[%s316 + $0x30] sm:$0xf] %v2897
      %2962 = vst [vmem:[%s316 + $0x34] sm:$0xf] %v2898
      %2963 = vst [vmem:[%s316 + $0x38] sm:$0xf] %v2899
      %2964 = vst [vmem:[%s316 + $0x3c] sm:$0xf] %v2900
      %2965 = vst [vmem:[%s316 + $0x40] sm:$0xf] %v2901
      %2966 = vst [vmem:[%s316 + $0x44] sm:$0xf] %v2902
      %2967 = vst [vmem:[%s316 + $0x48] sm:$0xf] %v2903
      %2968 = vst [vmem:[%s316 + $0x4c] sm:$0xf] %v2904
      %2969 = vst [vmem:[%s316 + $0x50] sm:$0xf] %v2905
      %2970 = vst [vmem:[%s316 + $0x54] sm:$0xf] %v2906
      %2971 = vst [vmem:[%s316 + $0x58] sm:$0xf] %v2907
      %2972 = vst [vmem:[%s316 + $0x5c] sm:$0xf] %v2908
      %2973 = vst [vmem:[%s316 + $0x60] sm:$0xf] %v2909
      %2974 = vst [vmem:[%s316 + $0x64] sm:$0xf] %v2910
      %2975 = vst [vmem:[%s316 + $0x68] sm:$0xf] %v2911
      %2976 = vst [vmem:[%s316 + $0x6c] sm:$0xf] %v2912
      %2977 = vst [vmem:[%s316 + $0x70] sm:$0xf] %v2913
      %2978 = vst [vmem:[%s316 + $0x74] sm:$0xf] %v2914
      %2979 = vst [vmem:[%s316 + $0x78] sm:$0xf] %v2915
      %2980 = vst [vmem:[%s316 + $0x7c] sm:$0xf] %v2916
      %v2981 = vadd.f32 %v2789, %v2790
      %v2982 = vadd.f32 %v2981, %v2791
      %v2983 = vadd.f32 %v2982, %v2792
      %v2984 = vadd.f32 %v2983, %v2793
      %v2985 = vadd.f32 %v2984, %v2794
      %v2986 = vadd.f32 %v2985, %v2795
      %v2987 = vadd.f32 %v2986, %v2796
      %v2988 = vadd.f32 %v2987, %v2797
      %v2989 = vadd.f32 %v2988, %v2798
      %v2990 = vadd.f32 %v2989, %v2799
      %v2991 = vadd.f32 %v2990, %v2800
      %v2992 = vadd.f32 %v2991, %v2801
      %v2993 = vadd.f32 %v2992, %v2802
      %v2994 = vadd.f32 %v2993, %v2803
      %v2995 = vadd.f32 %v2994, %v2804
      %v2996 = vadd.f32 %v2995, %v2805
      %v2997 = vadd.f32 %v2996, %v2806
      %v2998 = vadd.f32 %v2997, %v2807
      %v2999 = vadd.f32 %v2998, %v2808
      %v3000 = vadd.f32 %v2999, %v2809
      %v3001 = vadd.f32 %v3000, %v2810
      %v3002 = vadd.f32 %v3001, %v2811
      %v3003 = vadd.f32 %v3002, %v2812
      %v3004 = vadd.f32 %v3003, %v2813
      %v3005 = vadd.f32 %v3004, %v2814
      %v3006 = vadd.f32 %v3005, %v2815
      %v3007 = vadd.f32 %v3006, %v2816
      %v3008 = vadd.f32 %v3007, %v2817
      %v3009 = vadd.f32 %v3008, %v2818
      %v3010 = vadd.f32 %v3009, %v2819
      %v3011 = vadd.f32 %v3010, %v2820
      %v3012 = vrot.slane %v3011, 4
      %v3013 = vadd.f32 %v3011, %v3012
      %v3014 = vrot.slane %v3013, 2
      %v3015 = vadd.f32 %v3013, %v3014
      %v3016 = vrot.slane %v3015, 1
      %v3017 = vadd.f32 %v3015, %v3016
      %v3018 = vadd.f32 %v3017, 0.0
      %v3019 = vmul.f32 %v2789, %v2789
      %v3020 = vmul.f32 %v2790, %v2790
      %v3021 = vmul.f32 %v2791, %v2791
      %v3022 = vmul.f32 %v2792, %v2792
      %v3023 = vmul.f32 %v2793, %v2793
      %v3024 = vmul.f32 %v2794, %v2794
      %v3025 = vmul.f32 %v2795, %v2795
      %v3026 = vmul.f32 %v2796, %v2796
      %v3027 = vmul.f32 %v2797, %v2797
      %v3028 = vmul.f32 %v2798, %v2798
      %v3029 = vmul.f32 %v2799, %v2799
      %v3030 = vmul.f32 %v2800, %v2800
      %v3031 = vmul.f32 %v2801, %v2801
      %v3032 = vmul.f32 %v2802, %v2802
      %v3033 = vmul.f32 %v2803, %v2803
      %v3034 = vmul.f32 %v2804, %v2804
      %v3035 = vmul.f32 %v2805, %v2805
      %v3036 = vmul.f32 %v2806, %v2806
      %v3037 = vmul.f32 %v2807, %v2807
      %v3038 = vmul.f32 %v2808, %v2808
      %v3039 = vmul.f32 %v2809, %v2809
      %v3040 = vmul.f32 %v2810, %v2810
      %v3041 = vmul.f32 %v2811, %v2811
      %v3042 = vmul.f32 %v2812, %v2812
      %v3043 = vmul.f32 %v2813, %v2813
      %v3044 = vmul.f32 %v2814, %v2814
      %v3045 = vmul.f32 %v2815, %v2815
      %v3046 = vmul.f32 %v2816, %v2816
      %v3047 = vmul.f32 %v2817, %v2817
      %v3048 = vmul.f32 %v2818, %v2818
      %v3049 = vmul.f32 %v2819, %v2819
      %v3050 = vmul.f32 %v2820, %v2820
      %v3051 = vadd.f32 %v3019, %v3020
      %v3052 = vadd.f32 %v3051, %v3021
      %v3053 = vadd.f32 %v3052, %v3022
      %v3054 = vadd.f32 %v3053, %v3023
      %v3055 = vadd.f32 %v3054, %v3024
      %v3056 = vadd.f32 %v3055, %v3025
      %v3057 = vadd.f32 %v3056, %v3026
      %v3058 = vadd.f32 %v3057, %v3027
      %v3059 = vadd.f32 %v3058, %v3028
      %v3060 = vadd.f32 %v3059, %v3029
      %v3061 = vadd.f32 %v3060, %v3030
      %v3062 = vadd.f32 %v3061, %v3031
      %v3063 = vadd.f32 %v3062, %v3032
      %v3064 = vadd.f32 %v3063, %v3033
      %v3065 = vadd.f32 %v3064, %v3034
      %v3066 = vadd.f32 %v3065, %v3035
      %v3067 = vadd.f32 %v3066, %v3036
      %v3068 = vadd.f32 %v3067, %v3037
      %v3069 = vadd.f32 %v3068, %v3038
      %v3070 = vadd.f32 %v3069, %v3039
      %v3071 = vadd.f32 %v3070, %v3040
      %v3072 = vadd.f32 %v3071, %v3041
      %v3073 = vadd.f32 %v3072, %v3042
      %v3074 = vadd.f32 %v3073, %v3043
      %v3075 = vadd.f32 %v3074, %v3044
      %v3076 = vadd.f32 %v3075, %v3045
      %v3077 = vadd.f32 %v3076, %v3046
      %v3078 = vadd.f32 %v3077, %v3047
      %v3079 = vadd.f32 %v3078, %v3048
      %v3080 = vadd.f32 %v3079, %v3049
      %v3081 = vadd.f32 %v3080, %v3050
      %v3082 = vrot.slane %v3081, 4
      %v3083 = vadd.f32 %v3081, %v3082
      %v3084 = vrot.slane %v3083, 2
      %v3085 = vadd.f32 %v3083, %v3084
      %v3086 = vrot.slane %v3085, 1
      %v3087 = vadd.f32 %v3085, %v3086
      %v3088 = vadd.f32 %v3087, 0.0
      %3089 = vst [vmem:[%s319] sm:$0x1] %v3018
      %3090 = vst [vmem:[%s322] sm:$0x1] %v3088
      %p3091 = scmp.lt.s32.totalorder %s20, 1
      %s3092 = scalar_select %p3091, %s20, 1
      %s3093 = smul.addr %s3092, 32
      %s3094 = smul.addr %s3093, 4
      %s3095 = scalar_lea.vmem %s6, %s3094
      %p3096 = scmp.lt.s32.totalorder %s20, 1
      %s3097 = scalar_select %p3096, %s20, 1
      %s3098 = scalar_lea.vmem %s7, %s3097
      %p3099 = scmp.lt.s32.totalorder %s20, 1
      %s3100 = scalar_select %p3099, %s20, 1
      %s3101 = scalar_lea.vmem %s8, %s3100
      // Predicated region
      $region45: #{basic_block_forward.4} parent=43 // pred_check
        %p3102 = pneg %p169
      $region46: #{basic_block_forward.4} parent=43 // pred_check_branch
        %3104 = sbr.rel (%p3102) target = $region48
      $region47: #{basic_block_forward.4} parent=43 // pred_region
        _
      $region48: #{basic_block_forward.4} parent=43 // pred_fallthru
        _
      // Predicated region
      $region49: #{basic_block_forward.4} parent=43 // pred_check
        %p3105 = pneg %p195
      $region50: #{basic_block_forward.4} parent=43 // pred_check_branch
        %3107 = sbr.rel (%p3105) target = $region52
      $region51: #{basic_block_forward.4} parent=43 // pred_region
        _
      $region52: #{basic_block_forward.4} parent=43 // pred_fallthru
        _
      // Predicated region
      $region53: #{basic_block_forward.4} parent=43 // pred_check
        %p3108 = pneg %p221
      $region54: #{basic_block_forward.4} parent=43 // pred_check_branch
        %3110 = sbr.rel (%p3108) target = $region56
      $region55: #{basic_block_forward.4} parent=43 // pred_region
        _
      $region56: #{basic_block_forward.4} parent=43 // pred_fallthru
        _
    $region44: #{basic_block_forward.4} parent=5 // pred_fallthru
      _
    %p3111 = scmp.le.s32.totalorder 2, %s15
    // Predicated region
    $region57: #{basic_block_forward.4} parent=5 // pred_check
      %p3112 = pneg %p3111
    $region58: #{basic_block_forward.4} parent=5 // pred_check_branch
      %3114 = sbr.rel (%p3112) target = $region60
    $region59: #{basic_block_forward.4} parent=5 // pred_region
      %s3115 = ssub.s32 %s15, 2
      // Predicated region
      $region61: #{basic_block_forward.4} parent=59 // pred_check
        %p3116 = pneg %p175
      $region62: #{basic_block_forward.4} parent=59 // pred_check_branch
        %3118 = sbr.rel (%p3116) target = $region64
      $region63: #{basic_block_forward.4} parent=59 // pred_region
        %p3119 = scmp.lt.s32.totalorder %s21, 1
        %s3120 = scalar_select %p3119, %s21, 1
        %s3121 = smul.addr %s3120, 32
        %s3122 = smul.addr %s3121, 4
        %s3123 = scalar_lea.vmem %s6, %s3122
      $region64: #{basic_block_forward.4} parent=59 // pred_fallthru
        _
      // Predicated region
      $region65: #{basic_block_forward.4} parent=59 // pred_check
        %p3124 = pneg %p201
      $region66: #{basic_block_forward.4} parent=59 // pred_check_branch
        %3126 = sbr.rel (%p3124) target = $region68
      $region67: #{basic_block_forward.4} parent=59 // pred_region
        %p3127 = scmp.lt.s32.totalorder %s21, 1
        %s3128 = scalar_select %p3127, %s21, 1
        %s3129 = scalar_lea.vmem %s7, %s3128
      $region68: #{basic_block_forward.4} parent=59 // pred_fallthru
        _
      // Predicated region
      $region69: #{basic_block_forward.4} parent=59 // pred_check
        %p3130 = pneg %p227
      $region70: #{basic_block_forward.4} parent=59 // pred_check_branch
        %3132 = sbr.rel (%p3130) target = $region72
      $region71: #{basic_block_forward.4} parent=59 // pred_region
        %p3133 = scmp.lt.s32.totalorder %s21, 1
        %s3134 = scalar_select %p3133, %s21, 1
        %s3135 = scalar_lea.vmem %s8, %s3134
      $region72: #{basic_block_forward.4} parent=59 // pred_fallthru
        _
    $region60: #{basic_block_forward.4} parent=5 // pred_fallthru
      _
  $region6: #{basic_block_forward.4} parent=0 // loop_footer
    %s19 = sadd.s32 1, %s15
  $region7: #{basic_block_forward.4} parent=0 // loop_footer_branch
    %14 = sbr.rel target = $region3
  $region8: #{basic_block_forward.4} parent=0 // loop_exit
    _

// kernel: basic_block_forward.3
$region0: #{basic_block_forward.3}
  #allocation0 [shape = 'u32[]', space=smem, size = 0x4, offset = 0x4, fixed_abs, tag = 'smem constant byte address 0x4 - core index']
  #allocation1 [shape = 'u32[144,128]{1,0:T(1,128)}', space=vmem, size = 0x12000, scoped, tag = 'internal scratch']
  #allocation2 [shape = 'bf16[288,384]{1,0:T(16,128)(2,1)}', space=vmem, size = 0x36000, scoped, tag = 'scratch operand']
  #allocation3 [shape = 'f32[272,128]{1,0:T(8,128)}', space=vmem, size = 0x22000, scoped, tag = 'scratch operand']
  %s0 = inlined_call_operand.vmem [shape: f32[2,256,128], index: 0, kind: input, shape index: {}]
  %s1 = inlined_call_operand.vmem [shape: bf16[3,384,128], index: 1, kind: input, shape index: {}]
  %s2 = inlined_call_operand.vmem [shape: f32[256,1], index: 2, kind: input, shape index: {}]
  %s3 = inlined_call_operand.vmem [shape: f32[256,1], index: 3, kind: input, shape index: {}]
  %s4 = inlined_call_operand.vmem [shape: bf16[2,256,128], index: 4, kind: output, shape index: {0}]
  %s5 = inlined_call_operand.vmem [shape: f32[2,1,128], index: 5, kind: output, shape index: {1}]
  %s6 = inlined_call_operand.vmem [shape: f32[2,1,128], index: 6, kind: output, shape index: {2}]
  %7 = xla_tuple %s4, %s5, %s6
  %s8 = sld [smem:[#allocation0]]
  $region65: #{basic_block_forward.3} parent=0
    _
  %s10 = ssub.s32 1, %s8
  %s11 = scalar_select 0, %s10, %s8
  loop: start=0, step=1, limit=4
  $region2: #{basic_block_forward.3} parent=0 // loop_pre_header
    _
  $region3: #{basic_block_forward.3} parent=0 // loop_header
    %s13 = sphi 0, %s17
    %p14 = scmp.ge.s32.totalorder %s13, 4
    %s23 = sphi 0, %s25
    %s26 = sphi 0, %s23
    %s27 = sphi 0, %s26
    %s43 = sphi 0, %s27
    %s47 = sphi 0, %s47
    %s49 = sphi 0, %s47
    %s50 = sphi 0, %s49
    %s64 = sphi 0, %s50
    %s68 = sphi 0, %s68
    %s70 = sphi 0, %s68
    %s71 = sphi 0, %s70
    %s85 = sphi 0, %s71
    %s89 = sphi 0, %s89
    %s91 = sphi 0, %s89
    %s92 = sphi 0, %s91
    %s106 = sphi 0, %s92
    %s112 = sphi 0, %s114
    %s115 = sphi 0, %s112
    %s116 = sphi 0, %s115
    %s132 = sphi 0, %s116
    %s138 = sphi 0, %s140
    %s141 = sphi 0, %s138
    %s142 = sphi 0, %s141
    %s158 = sphi 0, %s142
    %s164 = sphi 0, %s166
    %s167 = sphi 0, %s164
    %s168 = sphi 0, %s167
    %s184 = sphi 0, %s168
  $region4: #{basic_block_forward.3} parent=0 // loop_header_branch
    %16 = sbr.rel (%p14) target = $region8
  $region5: #{basic_block_forward.3} parent=0 // loop_body
    %s18 = ssub.s32 %s13, 1
    %s19 = ssub.s32 %s13, 2
    %s20 = sadd.s32 %s13, 1
    %s21 = ssub.s32 %s13, %s20
    %p22 = scmp.eq.s32.totalorder %s21, 0
    %s24 = sadd.s32 %s23, 1
    %s25 = scalar_select %p22, %s23, %s24
    %p28 = pneg %p22
    %p29 = scmp.eq.s32.totalorder %s13, 1
    %p30 = por %p28, %p29
    %p31 = scmp.ne.s32.totalorder %s23, %s26
    %p32 = scmp.eq.s32.totalorder %s13, 0
    %p33 = por %p31, %p32
    %p34 = scmp.ne.s32.totalorder %s23, %s26
    %p35 = scmp.eq.s32.totalorder %s18, 1
    %p36 = por %p34, %p35
    %p37 = scmp.ne.s32.totalorder %s26, %s27
    %p38 = scmp.eq.s32.totalorder %s18, 0
    %p39 = por %p37, %p38
    %p40 = scmp.ne.s32.totalorder %s26, %s27
    %p41 = scmp.eq.s32.totalorder %s19, 1
    %p42 = por %p40, %p41
    %p44 = scmp.ne.s32.totalorder %s27, %s43
    %p45 = scmp.eq.s32.totalorder %s19, 0
    %p46 = por %p44, %p45
    %s48 = sadd.s32 %s47, 1
    %p51 = scmp.eq.s32.totalorder %s13, 1
    %p52 = scmp.ne.s32.totalorder %s47, %s49
    %p53 = scmp.eq.s32.totalorder %s13, 0
    %p54 = por %p52, %p53
    %p55 = scmp.ne.s32.totalorder %s47, %s49
    %p56 = scmp.eq.s32.totalorder %s18, 1
    %p57 = por %p55, %p56
    %p58 = scmp.ne.s32.totalorder %s49, %s50
    %p59 = scmp.eq.s32.totalorder %s18, 0
    %p60 = por %p58, %p59
    %p61 = scmp.ne.s32.totalorder %s49, %s50
    %p62 = scmp.eq.s32.totalorder %s19, 1
    %p63 = por %p61, %p62
    %p65 = scmp.ne.s32.totalorder %s50, %s64
    %p66 = scmp.eq.s32.totalorder %s19, 0
    %p67 = por %p65, %p66
    %s69 = sadd.s32 %s68, 1
    %p72 = scmp.eq.s32.totalorder %s13, 1
    %p73 = scmp.ne.s32.totalorder %s68, %s70
    %p74 = scmp.eq.s32.totalorder %s13, 0
    %p75 = por %p73, %p74
    %p76 = scmp.ne.s32.totalorder %s68, %s70
    %p77 = scmp.eq.s32.totalorder %s18, 1
    %p78 = por %p76, %p77
    %p79 = scmp.ne.s32.totalorder %s70, %s71
    %p80 = scmp.eq.s32.totalorder %s18, 0
    %p81 = por %p79, %p80
    %p82 = scmp.ne.s32.totalorder %s70, %s71
    %p83 = scmp.eq.s32.totalorder %s19, 1
    %p84 = por %p82, %p83
    %p86 = scmp.ne.s32.totalorder %s71, %s85
    %p87 = scmp.eq.s32.totalorder %s19, 0
    %p88 = por %p86, %p87
    %s90 = sadd.s32 %s89, 1
    %p93 = scmp.eq.s32.totalorder %s13, 1
    %p94 = scmp.ne.s32.totalorder %s89, %s91
    %p95 = scmp.eq.s32.totalorder %s13, 0
    %p96 = por %p94, %p95
    %p97 = scmp.ne.s32.totalorder %s89, %s91
    %p98 = scmp.eq.s32.totalorder %s18, 1
    %p99 = por %p97, %p98
    %p100 = scmp.ne.s32.totalorder %s91, %s92
    %p101 = scmp.eq.s32.totalorder %s18, 0
    %p102 = por %p100, %p101
    %p103 = scmp.ne.s32.totalorder %s91, %s92
    %p104 = scmp.eq.s32.totalorder %s19, 1
    %p105 = por %p103, %p104
    %p107 = scmp.ne.s32.totalorder %s92, %s106
    %p108 = scmp.eq.s32.totalorder %s19, 0
    %p109 = por %p107, %p108
    %s110 = ssub.s32 %s13, %s20
    %p111 = scmp.eq.s32.totalorder %s110, 0
    %s113 = sadd.s32 %s112, 1
    %s114 = scalar_select %p111, %s112, %s113
    %p117 = pneg %p111
    %p118 = scmp.eq.s32.totalorder %s13, 1
    %p119 = por %p117, %p118
    %p120 = scmp.ne.s32.totalorder %s112, %s115
    %p121 = scmp.eq.s32.totalorder %s13, 0
    %p122 = por %p120, %p121
    %p123 = scmp.ne.s32.totalorder %s112, %s115
    %p124 = scmp.eq.s32.totalorder %s18, 1
    %p125 = por %p123, %p124
    %p126 = scmp.ne.s32.totalorder %s115, %s116
    %p127 = scmp.eq.s32.totalorder %s18, 0
    %p128 = por %p126, %p127
    %p129 = scmp.ne.s32.totalorder %s115, %s116
    %p130 = scmp.eq.s32.totalorder %s19, 1
    %p131 = por %p129, %p130
    %p133 = scmp.ne.s32.totalorder %s116, %s132
    %p134 = scmp.eq.s32.totalorder %s19, 0
    %p135 = por %p133, %p134
    %s136 = ssub.s32 %s13, %s20
    %p137 = scmp.eq.s32.totalorder %s136, 0
    %s139 = sadd.s32 %s138, 1
    %s140 = scalar_select %p137, %s138, %s139
    %p143 = pneg %p137
    %p144 = scmp.eq.s32.totalorder %s13, 1
    %p145 = por %p143, %p144
    %p146 = scmp.ne.s32.totalorder %s138, %s141
    %p147 = scmp.eq.s32.totalorder %s13, 0
    %p148 = por %p146, %p147
    %p149 = scmp.ne.s32.totalorder %s138, %s141
    %p150 = scmp.eq.s32.totalorder %s18, 1
    %p151 = por %p149, %p150
    %p152 = scmp.ne.s32.totalorder %s141, %s142
    %p153 = scmp.eq.s32.totalorder %s18, 0
    %p154 = por %p152, %p153
    %p155 = scmp.ne.s32.totalorder %s141, %s142
    %p156 = scmp.eq.s32.totalorder %s19, 1
    %p157 = por %p155, %p156
    %p159 = scmp.ne.s32.totalorder %s142, %s158
    %p160 = scmp.eq.s32.totalorder %s19, 0
    %p161 = por %p159, %p160
    %s162 = ssub.s32 %s13, %s20
    %p163 = scmp.eq.s32.totalorder %s162, 0
    %s165 = sadd.s32 %s164, 1
    %s166 = scalar_select %p163, %s164, %s165
    %p169 = pneg %p163
    %p170 = scmp.eq.s32.totalorder %s13, 1
    %p171 = por %p169, %p170
    %p172 = scmp.ne.s32.totalorder %s164, %s167
    %p173 = scmp.eq.s32.totalorder %s13, 0
    %p174 = por %p172, %p173
    %p175 = scmp.ne.s32.totalorder %s164, %s167
    %p176 = scmp.eq.s32.totalorder %s18, 1
    %p177 = por %p175, %p176
    %p178 = scmp.ne.s32.totalorder %s167, %s168
    %p179 = scmp.eq.s32.totalorder %s18, 0
    %p180 = por %p178, %p179
    %p181 = scmp.ne.s32.totalorder %s167, %s168
    %p182 = scmp.eq.s32.totalorder %s19, 1
    %p183 = por %p181, %p182
    %p185 = scmp.ne.s32.totalorder %s168, %s184
    %p186 = scmp.eq.s32.totalorder %s19, 0
    %p187 = por %p185, %p186
    %p188 = scmp.le.s32.totalorder 1, %s13
    %p189 = scmp.lt.s32.totalorder %s13, 3
    %p190 = pnand %p188, %p189
    %p191 = pneg %p190
    // Predicated region
    $region9: #{basic_block_forward.3} parent=5 // pred_check
      _
    $region10: #{basic_block_forward.3} parent=5 // pred_check_branch
      %193 = sbr.rel (%p190) target = $region12
    $region11: #{basic_block_forward.3} parent=5 // pred_region
      %s194 = ssub.s32 %s13, 1
      // Predicated region
      $region13: #{basic_block_forward.3} parent=11 // pred_check
        %p195 = pneg %p60
      $region14: #{basic_block_forward.3} parent=11 // pred_check_branch
        %197 = sbr.rel (%p195) target = $region16
      $region15: #{basic_block_forward.3} parent=11 // pred_region
        _
      $region16: #{basic_block_forward.3} parent=11 // pred_fallthru
        _
      // Predicated region
      $region17: #{basic_block_forward.3} parent=11 // pred_check
        %p198 = pneg %p81
      $region18: #{basic_block_forward.3} parent=11 // pred_check_branch
        %200 = sbr.rel (%p198) target = $region20
      $region19: #{basic_block_forward.3} parent=11 // pred_region
        _
      $region20: #{basic_block_forward.3} parent=11 // pred_fallthru
        _
      // Predicated region
      $region21: #{basic_block_forward.3} parent=11 // pred_check
        %p201 = pneg %p102
      $region22: #{basic_block_forward.3} parent=11 // pred_check_branch
        %203 = sbr.rel (%p201) target = $region24
      $region23: #{basic_block_forward.3} parent=11 // pred_region
        _
      $region24: #{basic_block_forward.3} parent=11 // pred_fallthru
        _
    $region12: #{basic_block_forward.3} parent=5 // pred_fallthru
      _
    %p204 = scmp.lt.s32.totalorder %s13, 2
    // Predicated region
    $region25: #{basic_block_forward.3} parent=5 // pred_check
      %p205 = pneg %p204
    $region26: #{basic_block_forward.3} parent=5 // pred_check_branch
      %207 = sbr.rel (%p205) target = $region28
    $region27: #{basic_block_forward.3} parent=5 // pred_region
      // Predicated region
      $region29: #{basic_block_forward.3} parent=27 // pred_check
        %p208 = pneg %p33
      $region30: #{basic_block_forward.3} parent=27 // pred_check_branch
        %210 = sbr.rel (%p208) target = $region32
      $region31: #{basic_block_forward.3} parent=27 // pred_region
        %p211 = scmp.lt.s32.totalorder %s13, 1
        %s212 = scalar_select %p211, %s13, 1
        %s213 = smul.addr %s212, 32
        %s214 = smul.addr %s213, 8
        %s215 = scalar_lea.vmem %s0, %s214
      $region32: #{basic_block_forward.3} parent=27 // pred_fallthru
        _
    $region28: #{basic_block_forward.3} parent=5 // pred_fallthru
      _
    %p216 = scmp.le.s32.totalorder 1, %s13
    %p217 = scmp.lt.s32.totalorder %s13, 3
    %p218 = pnand %p216, %p217
    %p219 = pneg %p218
    // Predicated region
    $region33: #{basic_block_forward.3} parent=5 // pred_check
      _
    $region34: #{basic_block_forward.3} parent=5 // pred_check_branch
      %221 = sbr.rel (%p218) target = $region36
    $region35: #{basic_block_forward.3} parent=5 // pred_region
      %s222 = ssub.s32 %s13, 1
      %p223 = scmp.lt.s32.totalorder %s18, 1
      %s224 = scalar_select %p223, %s18, 1
      %s225 = smul.addr %s224, 32
      %s226 = smul.addr %s225, 8
      %s227 = scalar_lea.vmem %s0, %s226
      %p228 = pneg %p39
      %p229 = pneg %p36
      %p230 = pneg %p60
      %p231 = pneg %p57
      %p232 = pneg %p81
      %p233 = pneg %p78
      %p234 = pneg %p102
      %p235 = pneg %p99
      %p236 = pneg %p128
      %p237 = pneg %p125
      %p238 = scmp.lt.s32.totalorder %s18, 1
      %s239 = scalar_select %p238, %s18, 1
      %s240 = smul.addr %s239, 32
      %s241 = smul.addr %s240, 4
      %s242 = scalar_lea.vmem %s4, %s241
      %p243 = pneg %p154
      %p244 = pneg %p151
      %p245 = scmp.lt.s32.totalorder %s18, 1
      %s246 = scalar_select %p245, %s18, 1
      %s247 = scalar_lea.vmem %s5, %s246
      %p248 = pneg %p180
      %p249 = pneg %p177
      %p250 = scmp.lt.s32.totalorder %s18, 1
      %s251 = scalar_select %p250, %s18, 1
      %s252 = scalar_lea.vmem %s6, %s251
      %p253 = scmp.lt.s32.totalorder %s18, 1
      %s254 = scalar_select %p253, %s18, 1
      %s255 = smul.addr %s254, 32
      %s256 = smul.addr %s255, 8
      %s257 = scalar_lea.vmem %s0, %s256
      %p258 = scmp.lt.s32.totalorder %s18, 1
      %s259 = scalar_select %p258, %s18, 1
      %s260 = smul.addr %s259, 32
      %s261 = smul.addr %s260, 4
      %s262 = scalar_lea.vmem %s4, %s261
      %p263 = scmp.lt.s32.totalorder %s18, 1
      %s264 = scalar_select %p263, %s18, 1
      %s265 = scalar_lea.vmem %s5, %s264
      %p266 = scmp.lt.s32.totalorder %s18, 1
      %s267 = scalar_select %p266, %s18, 1
      %s268 = scalar_lea.vmem %s6, %s267
      %270 = vst [vmem:[#allocation2] sm:$0xff] 0
      %271 = vst [vmem:[#allocation2 + $0x8] sm:$0xff] 0
      %272 = vst [vmem:[#allocation2 + $0x10] sm:$0xff] 0
      %273 = vst [vmem:[#allocation2 + $0x198] sm:$0xff] 0
      %274 = vst [vmem:[#allocation2 + $0x1a0] sm:$0xff] 0
      %275 = vst [vmem:[#allocation2 + $0x1a8] sm:$0xff] 0
      %276 = vst [vmem:[#allocation3] sm:$0xff] 0.0
      %277 = vst [vmem:[#allocation3 + $0x108] sm:$0xff] 0.0
      %v278 = vld [vmem:[%s257] sm:$0xff]
      %v279 = vld [vmem:[%s257 + $0x8] sm:$0xff]
      %v280 = vld [vmem:[%s257 + $0x10] sm:$0xff]
      %v281 = vld [vmem:[%s257 + $0x18] sm:$0xff]
      %v282 = vld [vmem:[%s257 + $0x20] sm:$0xff]
      %v283 = vld [vmem:[%s257 + $0x28] sm:$0xff]
      %v284 = vld [vmem:[%s257 + $0x30] sm:$0xff]
      %v285 = vld [vmem:[%s257 + $0x38] sm:$0xff]
      %v286 = vld [vmem:[%s257 + $0x40] sm:$0xff]
      %v287 = vld [vmem:[%s257 + $0x48] sm:$0xff]
      %v288 = vld [vmem:[%s257 + $0x50] sm:$0xff]
      %v289 = vld [vmem:[%s257 + $0x58] sm:$0xff]
      %v290 = vld [vmem:[%s257 + $0x60] sm:$0xff]
      %v291 = vld [vmem:[%s257 + $0x68] sm:$0xff]
      %v292 = vld [vmem:[%s257 + $0x70] sm:$0xff]
      %v293 = vld [vmem:[%s257 + $0x78] sm:$0xff]
      %v294 = vld [vmem:[%s257 + $0x80] sm:$0xff]
      %v295 = vld [vmem:[%s257 + $0x88] sm:$0xff]
      %v296 = vld [vmem:[%s257 + $0x90] sm:$0xff]
      %v297 = vld [vmem:[%s257 + $0x98] sm:$0xff]
      %v298 = vld [vmem:[%s257 + $0xa0] sm:$0xff]
      %v299 = vld [vmem:[%s257 + $0xa8] sm:$0xff]
      %v300 = vld [vmem:[%s257 + $0xb0] sm:$0xff]
      %v301 = vld [vmem:[%s257 + $0xb8] sm:$0xff]
      %v302 = vld [vmem:[%s257 + $0xc0] sm:$0xff]
      %v303 = vld [vmem:[%s257 + $0xc8] sm:$0xff]
      %v304 = vld [vmem:[%s257 + $0xd0] sm:$0xff]
      %v305 = vld [vmem:[%s257 + $0xd8] sm:$0xff]
      %v306 = vld [vmem:[%s257 + $0xe0] sm:$0xff]
      %v307 = vld [vmem:[%s257 + $0xe8] sm:$0xff]
      %v308 = vld [vmem:[%s257 + $0xf0] sm:$0xff]
      %v309 = vld [vmem:[%s257 + $0xf8] sm:$0xff]
      %310 = vst [vmem:[#allocation3 + $0x8] sm:$0xff] %v278
      %311 = vst [vmem:[#allocation3 + $0x10] sm:$0xff] %v279
      %312 = vst [vmem:[#allocation3 + $0x18] sm:$0xff] %v280
      %313 = vst [vmem:[#allocation3 + $0x20] sm:$0xff] %v281
      %314 = vst [vmem:[#allocation3 + $0x28] sm:$0xff] %v282
      %315 = vst [vmem:[#allocation3 + $0x30] sm:$0xff] %v283
      %316 = vst [vmem:[#allocation3 + $0x38] sm:$0xff] %v284
      %317 = vst [vmem:[#allocation3 + $0x40] sm:$0xff] %v285
      %318 = vst [vmem:[#allocation3 + $0x48] sm:$0xff] %v286
      %319 = vst [vmem:[#allocation3 + $0x50] sm:$0xff] %v287
      %320 = vst [vmem:[#allocation3 + $0x58] sm:$0xff] %v288
      %321 = vst [vmem:[#allocation3 + $0x60] sm:$0xff] %v289
      %322 = vst [vmem:[#allocation3 + $0x68] sm:$0xff] %v290
      %323 = vst [vmem:[#allocation3 + $0x70] sm:$0xff] %v291
      %324 = vst [vmem:[#allocation3 + $0x78] sm:$0xff] %v292
      %325 = vst [vmem:[#allocation3 + $0x80] sm:$0xff] %v293
      %326 = vst [vmem:[#allocation3 + $0x88] sm:$0xff] %v294
      %327 = vst [vmem:[#allocation3 + $0x90] sm:$0xff] %v295
      %328 = vst [vmem:[#allocation3 + $0x98] sm:$0xff] %v296
      %329 = vst [vmem:[#allocation3 + $0xa0] sm:$0xff] %v297
      %330 = vst [vmem:[#allocation3 + $0xa8] sm:$0xff] %v298
      %331 = vst [vmem:[#allocation3 + $0xb0] sm:$0xff] %v299
      %332 = vst [vmem:[#allocation3 + $0xb8] sm:$0xff] %v300
      %333 = vst [vmem:[#allocation3 + $0xc0] sm:$0xff] %v301
      %334 = vst [vmem:[#allocation3 + $0xc8] sm:$0xff] %v302
      %335 = vst [vmem:[#allocation3 + $0xd0] sm:$0xff] %v303
      %336 = vst [vmem:[#allocation3 + $0xd8] sm:$0xff] %v304
      %337 = vst [vmem:[#allocation3 + $0xe0] sm:$0xff] %v305
      %338 = vst [vmem:[#allocation3 + $0xe8] sm:$0xff] %v306
      %339 = vst [vmem:[#allocation3 + $0xf0] sm:$0xff] %v307
      %340 = vst [vmem:[#allocation3 + $0xf8] sm:$0xff] %v308
      %341 = vst [vmem:[#allocation3 + $0x100] sm:$0xff] %v309
      %v342 = vpack.c.bf16 %v279, %v278
      %v343 = vpack.c.bf16 %v281, %v280
      %v344 = vpack.c.bf16 %v283, %v282
      %v345 = vpack.c.bf16 %v285, %v284
      %v346 = vpack.c.bf16 %v287, %v286
      %v347 = vpack.c.bf16 %v289, %v288
      %v348 = vpack.c.bf16 %v291, %v290
      %v349 = vpack.c.bf16 %v293, %v292
      %v350 = vpack.c.bf16 %v295, %v294
      %v351 = vpack.c.bf16 %v297, %v296
      %v352 = vpack.c.bf16 %v299, %v298
      %v353 = vpack.c.bf16 %v301, %v300
      %v354 = vpack.c.bf16 %v303, %v302
      %v355 = vpack.c.bf16 %v305, %v304
      %v356 = vpack.c.bf16 %v307, %v306
      %v357 = vpack.c.bf16 %v309, %v308
      %358 = vst [vmem:[#allocation2 + $0x20] sm:$0xff] %v342
      %359 = vst [vmem:[#allocation2 + $0x38] sm:$0xff] %v343
      %360 = vst [vmem:[#allocation2 + $0x50] sm:$0xff] %v344
      %361 = vst [vmem:[#allocation2 + $0x68] sm:$0xff] %v345
      %362 = vst [vmem:[#allocation2 + $0x80] sm:$0xff] %v346
      %363 = vst [vmem:[#allocation2 + $0x98] sm:$0xff] %v347
      %364 = vst [vmem:[#allocation2 + $0xb0] sm:$0xff] %v348
      %365 = vst [vmem:[#allocation2 + $0xc8] sm:$0xff] %v349
      %366 = vst [vmem:[#allocation2 + $0xe0] sm:$0xff] %v350
      %367 = vst [vmem:[#allocation2 + $0xf8] sm:$0xff] %v351
      %368 = vst [vmem:[#allocation2 + $0x110] sm:$0xff] %v352
      %369 = vst [vmem:[#allocation2 + $0x128] sm:$0xff] %v353
      %370 = vst [vmem:[#allocation2 + $0x140] sm:$0xff] %v354
      %371 = vst [vmem:[#allocation2 + $0x158] sm:$0xff] %v355
      %372 = vst [vmem:[#allocation2 + $0x170] sm:$0xff] %v356
      %373 = vst [vmem:[#allocation2 + $0x188] sm:$0xff] %v357
      %v374 = vld [vmem:[#allocation3 + $0x7] sm:$0xff]
      %v375 = vld [vmem:[#allocation3 + $0xf] sm:$0xff]
      %v376 = vld [vmem:[#allocation3 + $0x17] sm:$0xff]
      %v377 = vld [vmem:[#allocation3 + $0x1f] sm:$0xff]
      %v378 = vld [vmem:[#allocation3 + $0x27] sm:$0xff]
      %v379 = vld [vmem:[#allocation3 + $0x2f] sm:$0xff]
      %v380 = vld [vmem:[#allocation3 + $0x37] sm:$0xff]
      %v381 = vld [vmem:[#allocation3 + $0x3f] sm:$0xff]
      %v382 = vld [vmem:[#allocation3 + $0x47] sm:$0xff]
      %v383 = vld [vmem:[#allocation3 + $0x4f] sm:$0xff]
      %v384 = vld [vmem:[#allocation3 + $0x57] sm:$0xff]
      %v385 = vld [vmem:[#allocation3 + $0x5f] sm:$0xff]
      %v386 = vld [vmem:[#allocation3 + $0x67] sm:$0xff]
      %v387 = vld [vmem:[#allocation3 + $0x6f] sm:$0xff]
      %v388 = vld [vmem:[#allocation3 + $0x77] sm:$0xff]
      %v389 = vld [vmem:[#allocation3 + $0x7f] sm:$0xff]
      %v390 = vld [vmem:[#allocation3 + $0x87] sm:$0xff]
      %v391 = vld [vmem:[#allocation3 + $0x8f] sm:$0xff]
      %v392 = vld [vmem:[#allocation3 + $0x97] sm:$0xff]
      %v393 = vld [vmem:[#allocation3 + $0x9f] sm:$0xff]
      %v394 = vld [vmem:[#allocation3 + $0xa7] sm:$0xff]
      %v395 = vld [vmem:[#allocation3 + $0xaf] sm:$0xff]
      %v396 = vld [vmem:[#allocation3 + $0xb7] sm:$0xff]
      %v397 = vld [vmem:[#allocation3 + $0xbf] sm:$0xff]
      %v398 = vld [vmem:[#allocation3 + $0xc7] sm:$0xff]
      %v399 = vld [vmem:[#allocation3 + $0xcf] sm:$0xff]
      %v400 = vld [vmem:[#allocation3 + $0xd7] sm:$0xff]
      %v401 = vld [vmem:[#allocation3 + $0xdf] sm:$0xff]
      %v402 = vld [vmem:[#allocation3 + $0xe7] sm:$0xff]
      %v403 = vld [vmem:[#allocation3 + $0xef] sm:$0xff]
      %v404 = vld [vmem:[#allocation3 + $0xf7] sm:$0xff]
      %v405 = vld [vmem:[#allocation3 + $0xff] sm:$0xff]
      %v406 = vld [vmem:[%s2] sm:$0xff]
      %v407 = vld [vmem:[%s2 + $0x8] sm:$0xff]
      %v408 = vld [vmem:[%s2 + $0x10] sm:$0xff]
      %v409 = vld [vmem:[%s2 + $0x18] sm:$0xff]
      %v410 = vld [vmem:[%s2 + $0x20] sm:$0xff]
      %v411 = vld [vmem:[%s2 + $0x28] sm:$0xff]
      %v412 = vld [vmem:[%s2 + $0x30] sm:$0xff]
      %v413 = vld [vmem:[%s2 + $0x38] sm:$0xff]
      %v414 = vld [vmem:[%s2 + $0x40] sm:$0xff]
      %v415 = vld [vmem:[%s2 + $0x48] sm:$0xff]
      %v416 = vld [vmem:[%s2 + $0x50] sm:$0xff]
      %v417 = vld [vmem:[%s2 + $0x58] sm:$0xff]
      %v418 = vld [vmem:[%s2 + $0x60] sm:$0xff]
      %v419 = vld [vmem:[%s2 + $0x68] sm:$0xff]
      %v420 = vld [vmem:[%s2 + $0x70] sm:$0xff]
      %v421 = vld [vmem:[%s2 + $0x78] sm:$0xff]
      %v422 = vld [vmem:[%s2 + $0x80] sm:$0xff]
      %v423 = vld [vmem:[%s2 + $0x88] sm:$0xff]
      %v424 = vld [vmem:[%s2 + $0x90] sm:$0xff]
      %v425 = vld [vmem:[%s2 + $0x98] sm:$0xff]
      %v426 = vld [vmem:[%s2 + $0xa0] sm:$0xff]
      %v427 = vld [vmem:[%s2 + $0xa8] sm:$0xff]
      %v428 = vld [vmem:[%s2 + $0xb0] sm:$0xff]
      %v429 = vld [vmem:[%s2 + $0xb8] sm:$0xff]
      %v430 = vld [vmem:[%s2 + $0xc0] sm:$0xff]
      %v431 = vld [vmem:[%s2 + $0xc8] sm:$0xff]
      %v432 = vld [vmem:[%s2 + $0xd0] sm:$0xff]
      %v433 = vld [vmem:[%s2 + $0xd8] sm:$0xff]
      %v434 = vld [vmem:[%s2 + $0xe0] sm:$0xff]
      %v435 = vld [vmem:[%s2 + $0xe8] sm:$0xff]
      %v436 = vld [vmem:[%s2 + $0xf0] sm:$0xff]
      %v437 = vld [vmem:[%s2 + $0xf8] sm:$0xff]
      %439 = vset.pattern.permute.xlu0 0
      %440 = vperm.xlu0 %439, %v406
      %v441 = vpop.permute.xlu0 %440
      %444 = vset.pattern.permute.xlu0 0
      %445 = vperm.xlu0 %444, %v407
      %v446 = vpop.permute.xlu0 %445
      %449 = vset.pattern.permute.xlu0 0
      %450 = vperm.xlu0 %449, %v408
      %v451 = vpop.permute.xlu0 %450
      %454 = vset.pattern.permute.xlu0 0
      %455 = vperm.xlu0 %454, %v409
      %v456 = vpop.permute.xlu0 %455
      %459 = vset.pattern.permute.xlu0 0
      %460 = vperm.xlu0 %459, %v410
      %v461 = vpop.permute.xlu0 %460
      %464 = vset.pattern.permute.xlu0 0
      %465 = vperm.xlu0 %464, %v411
      %v466 = vpop.permute.xlu0 %465
      %469 = vset.pattern.permute.xlu0 0
      %470 = vperm.xlu0 %469, %v412
      %v471 = vpop.permute.xlu0 %470
      %474 = vset.pattern.permute.xlu0 0
      %475 = vperm.xlu0 %474, %v413
      %v476 = vpop.permute.xlu0 %475
      %479 = vset.pattern.permute.xlu0 0
      %480 = vperm.xlu0 %479, %v414
      %v481 = vpop.permute.xlu0 %480
      %484 = vset.pattern.permute.xlu0 0
      %485 = vperm.xlu0 %484, %v415
      %v486 = vpop.permute.xlu0 %485
      %489 = vset.pattern.permute.xlu0 0
      %490 = vperm.xlu0 %489, %v416
      %v491 = vpop.permute.xlu0 %490
      %494 = vset.pattern.permute.xlu0 0
      %495 = vperm.xlu0 %494, %v417
      %v496 = vpop.permute.xlu0 %495
      %499 = vset.pattern.permute.xlu0 0
      %500 = vperm.xlu0 %499, %v418
      %v501 = vpop.permute.xlu0 %500
      %504 = vset.pattern.permute.xlu0 0
      %505 = vperm.xlu0 %504, %v419
      %v506 = vpop.permute.xlu0 %505
      %509 = vset.pattern.permute.xlu0 0
      %510 = vperm.xlu0 %509, %v420
      %v511 = vpop.permute.xlu0 %510
      %514 = vset.pattern.permute.xlu0 0
      %515 = vperm.xlu0 %514, %v421
      %v516 = vpop.permute.xlu0 %515
      %519 = vset.pattern.permute.xlu0 0
      %520 = vperm.xlu0 %519, %v422
      %v521 = vpop.permute.xlu0 %520
      %524 = vset.pattern.permute.xlu0 0
      %525 = vperm.xlu0 %524, %v423
      %v526 = vpop.permute.xlu0 %525
      %529 = vset.pattern.permute.xlu0 0
      %530 = vperm.xlu0 %529, %v424
      %v531 = vpop.permute.xlu0 %530
      %534 = vset.pattern.permute.xlu0 0
      %535 = vperm.xlu0 %534, %v425
      %v536 = vpop.permute.xlu0 %535
      %539 = vset.pattern.permute.xlu0 0
      %540 = vperm.xlu0 %539, %v426
      %v541 = vpop.permute.xlu0 %540
      %544 = vset.pattern.permute.xlu0 0
      %545 = vperm.xlu0 %544, %v427
      %v546 = vpop.permute.xlu0 %545
      %549 = vset.pattern.permute.xlu0 0
      %550 = vperm.xlu0 %549, %v428
      %v551 = vpop.permute.xlu0 %550
      %554 = vset.pattern.permute.xlu0 0
      %555 = vperm.xlu0 %554, %v429
      %v556 = vpop.permute.xlu0 %555
      %559 = vset.pattern.permute.xlu0 0
      %560 = vperm.xlu0 %559, %v430
      %v561 = vpop.permute.xlu0 %560
      %564 = vset.pattern.permute.xlu0 0
      %565 = vperm.xlu0 %564, %v431
      %v566 = vpop.permute.xlu0 %565
      %569 = vset.pattern.permute.xlu0 0
      %570 = vperm.xlu0 %569, %v432
      %v571 = vpop.permute.xlu0 %570
      %574 = vset.pattern.permute.xlu0 0
      %575 = vperm.xlu0 %574, %v433
      %v576 = vpop.permute.xlu0 %575
      %579 = vset.pattern.permute.xlu0 0
      %580 = vperm.xlu0 %579, %v434
      %v581 = vpop.permute.xlu0 %580
      %584 = vset.pattern.permute.xlu0 0
      %585 = vperm.xlu0 %584, %v435
      %v586 = vpop.permute.xlu0 %585
      %589 = vset.pattern.permute.xlu0 0
      %590 = vperm.xlu0 %589, %v436
      %v591 = vpop.permute.xlu0 %590
      %594 = vset.pattern.permute.xlu0 0
      %595 = vperm.xlu0 %594, %v437
      %v596 = vpop.permute.xlu0 %595
      %v598 = vmul.f32 %v374, %v441
      %v599 = vmul.f32 %v375, %v446
      %v600 = vmul.f32 %v376, %v451
      %v601 = vmul.f32 %v377, %v456
      %v602 = vmul.f32 %v378, %v461
      %v603 = vmul.f32 %v379, %v466
      %v604 = vmul.f32 %v380, %v471
      %v605 = vmul.f32 %v381, %v476
      %v606 = vmul.f32 %v382, %v481
      %v607 = vmul.f32 %v383, %v486
      %v608 = vmul.f32 %v384, %v491
      %v609 = vmul.f32 %v385, %v496
      %v610 = vmul.f32 %v386, %v501
      %v611 = vmul.f32 %v387, %v506
      %v612 = vmul.f32 %v388, %v511
      %v613 = vmul.f32 %v389, %v516
      %v614 = vmul.f32 %v390, %v521
      %v615 = vmul.f32 %v391, %v526
      %v616 = vmul.f32 %v392, %v531
      %v617 = vmul.f32 %v393, %v536
      %v618 = vmul.f32 %v394, %v541
      %v619 = vmul.f32 %v395, %v546
      %v620 = vmul.f32 %v396, %v551
      %v621 = vmul.f32 %v397, %v556
      %v622 = vmul.f32 %v398, %v561
      %v623 = vmul.f32 %v399, %v566
      %v624 = vmul.f32 %v400, %v571
      %v625 = vmul.f32 %v401, %v576
      %v626 = vmul.f32 %v402, %v581
      %v627 = vmul.f32 %v403, %v586
      %v628 = vmul.f32 %v404, %v591
      %v629 = vmul.f32 %v405, %v596
      %v630 = vpack.c.bf16 %v599, %v598
      %v631 = vpack.c.bf16 %v601, %v600
      %v632 = vpack.c.bf16 %v603, %v602
      %v633 = vpack.c.bf16 %v605, %v604
      %v634 = vpack.c.bf16 %v607, %v606
      %v635 = vpack.c.bf16 %v609, %v608
      %v636 = vpack.c.bf16 %v611, %v610
      %v637 = vpack.c.bf16 %v613, %v612
      %v638 = vpack.c.bf16 %v615, %v614
      %v639 = vpack.c.bf16 %v617, %v616
      %v640 = vpack.c.bf16 %v619, %v618
      %v641 = vpack.c.bf16 %v621, %v620
      %v642 = vpack.c.bf16 %v623, %v622
      %v643 = vpack.c.bf16 %v625, %v624
      %v644 = vpack.c.bf16 %v627, %v626
      %v645 = vpack.c.bf16 %v629, %v628
      %646 = vst [vmem:[#allocation2 + $0x18] sm:$0xff] %v630
      %647 = vst [vmem:[#allocation2 + $0x30] sm:$0xff] %v631
      %648 = vst [vmem:[#allocation2 + $0x48] sm:$0xff] %v632
      %649 = vst [vmem:[#allocation2 + $0x60] sm:$0xff] %v633
      %650 = vst [vmem:[#allocation2 + $0x78] sm:$0xff] %v634
      %651 = vst [vmem:[#allocation2 + $0x90] sm:$0xff] %v635
      %652 = vst [vmem:[#allocation2 + $0xa8] sm:$0xff] %v636
      %653 = vst [vmem:[#allocation2 + $0xc0] sm:$0xff] %v637
      %654 = vst [vmem:[#allocation2 + $0xd8] sm:$0xff] %v638
      %655 = vst [vmem:[#allocation2 + $0xf0] sm:$0xff] %v639
      %656 = vst [vmem:[#allocation2 + $0x108] sm:$0xff] %v640
      %657 = vst [vmem:[#allocation2 + $0x120] sm:$0xff] %v641
      %658 = vst [vmem:[#allocation2 + $0x138] sm:$0xff] %v642
      %659 = vst [vmem:[#allocation2 + $0x150] sm:$0xff] %v643
      %660 = vst [vmem:[#allocation2 + $0x168] sm:$0xff] %v644
      %661 = vst [vmem:[#allocation2 + $0x180] sm:$0xff] %v645
      %v662 = vld [vmem:[#allocation3 + $0x9] sm:$0xff]
      %v663 = vld [vmem:[#allocation3 + $0x11] sm:$0xff]
      %v664 = vld [vmem:[#allocation3 + $0x19] sm:$0xff]
      %v665 = vld [vmem:[#allocation3 + $0x21] sm:$0xff]
      %v666 = vld [vmem:[#allocation3 + $0x29] sm:$0xff]
      %v667 = vld [vmem:[#allocation3 + $0x31] sm:$0xff]
      %v668 = vld [vmem:[#allocation3 + $0x39] sm:$0xff]
      %v669 = vld [vmem:[#allocation3 + $0x41] sm:$0xff]
      %v670 = vld [vmem:[#allocation3 + $0x49] sm:$0xff]
      %v671 = vld [vmem:[#allocation3 + $0x51] sm:$0xff]
      %v672 = vld [vmem:[#allocation3 + $0x59] sm:$0xff]
      %v673 = vld [vmem:[#allocation3 + $0x61] sm:$0xff]
      %v674 = vld [vmem:[#allocation3 + $0x69] sm:$0xff]
      %v675 = vld [vmem:[#allocation3 + $0x71] sm:$0xff]
      %v676 = vld [vmem:[#allocation3 + $0x79] sm:$0xff]
      %v677 = vld [vmem:[#allocation3 + $0x81] sm:$0xff]
      %v678 = vld [vmem:[#allocation3 + $0x89] sm:$0xff]
      %v679 = vld [vmem:[#allocation3 + $0x91] sm:$0xff]
      %v680 = vld [vmem:[#allocation3 + $0x99] sm:$0xff]
      %v681 = vld [vmem:[#allocation3 + $0xa1] sm:$0xff]
      %v682 = vld [vmem:[#allocation3 + $0xa9] sm:$0xff]
      %v683 = vld [vmem:[#allocation3 + $0xb1] sm:$0xff]
      %v684 = vld [vmem:[#allocation3 + $0xb9] sm:$0xff]
      %v685 = vld [vmem:[#allocation3 + $0xc1] sm:$0xff]
      %v686 = vld [vmem:[#allocation3 + $0xc9] sm:$0xff]
      %v687 = vld [vmem:[#allocation3 + $0xd1] sm:$0xff]
      %v688 = vld [vmem:[#allocation3 + $0xd9] sm:$0xff]
      %v689 = vld [vmem:[#allocation3 + $0xe1] sm:$0xff]
      %v690 = vld [vmem:[#allocation3 + $0xe9] sm:$0xff]
      %v691 = vld [vmem:[#allocation3 + $0xf1] sm:$0xff]
      %v692 = vld [vmem:[#allocation3 + $0xf9] sm:$0xff]
      %v693 = vld [vmem:[#allocation3 + $0x101] sm:$0xff]
      %v694 = vld [vmem:[%s3] sm:$0xff]
      %v695 = vld [vmem:[%s3 + $0x8] sm:$0xff]
      %v696 = vld [vmem:[%s3 + $0x10] sm:$0xff]
      %v697 = vld [vmem:[%s3 + $0x18] sm:$0xff]
      %v698 = vld [vmem:[%s3 + $0x20] sm:$0xff]
      %v699 = vld [vmem:[%s3 + $0x28] sm:$0xff]
      %v700 = vld [vmem:[%s3 + $0x30] sm:$0xff]
      %v701 = vld [vmem:[%s3 + $0x38] sm:$0xff]
      %v702 = vld [vmem:[%s3 + $0x40] sm:$0xff]
      %v703 = vld [vmem:[%s3 + $0x48] sm:$0xff]
      %v704 = vld [vmem:[%s3 + $0x50] sm:$0xff]
      %v705 = vld [vmem:[%s3 + $0x58] sm:$0xff]
      %v706 = vld [vmem:[%s3 + $0x60] sm:$0xff]
      %v707 = vld [vmem:[%s3 + $0x68] sm:$0xff]
      %v708 = vld [vmem:[%s3 + $0x70] sm:$0xff]
      %v709 = vld [vmem:[%s3 + $0x78] sm:$0xff]
      %v710 = vld [vmem:[%s3 + $0x80] sm:$0xff]
      %v711 = vld [vmem:[%s3 + $0x88] sm:$0xff]
      %v712 = vld [vmem:[%s3 + $0x90] sm:$0xff]
      %v713 = vld [vmem:[%s3 + $0x98] sm:$0xff]
      %v714 = vld [vmem:[%s3 + $0xa0] sm:$0xff]
      %v715 = vld [vmem:[%s3 + $0xa8] sm:$0xff]
      %v716 = vld [vmem:[%s3 + $0xb0] sm:$0xff]
      %v717 = vld [vmem:[%s3 + $0xb8] sm:$0xff]
      %v718 = vld [vmem:[%s3 + $0xc0] sm:$0xff]
      %v719 = vld [vmem:[%s3 + $0xc8] sm:$0xff]
      %v720 = vld [vmem:[%s3 + $0xd0] sm:$0xff]
      %v721 = vld [vmem:[%s3 + $0xd8] sm:$0xff]
      %v722 = vld [vmem:[%s3 + $0xe0] sm:$0xff]
      %v723 = vld [vmem:[%s3 + $0xe8] sm:$0xff]
      %v724 = vld [vmem:[%s3 + $0xf0] sm:$0xff]
      %v725 = vld [vmem:[%s3 + $0xf8] sm:$0xff]
      %727 = vset.pattern.permute.xlu0 0
      %728 = vperm.xlu0 %727, %v694
      %v729 = vpop.permute.xlu0 %728
      %732 = vset.pattern.permute.xlu0 0
      %733 = vperm.xlu0 %732, %v695
      %v734 = vpop.permute.xlu0 %733
      %737 = vset.pattern.permute.xlu0 0
      %738 = vperm.xlu0 %737, %v696
      %v739 = vpop.permute.xlu0 %738
      %742 = vset.pattern.permute.xlu0 0
      %743 = vperm.xlu0 %742, %v697
      %v744 = vpop.permute.xlu0 %743
      %747 = vset.pattern.permute.xlu0 0
      %748 = vperm.xlu0 %747, %v698
      %v749 = vpop.permute.xlu0 %748
      %752 = vset.pattern.permute.xlu0 0
      %753 = vperm.xlu0 %752, %v699
      %v754 = vpop.permute.xlu0 %753
      %757 = vset.pattern.permute.xlu0 0
      %758 = vperm.xlu0 %757, %v700
      %v759 = vpop.permute.xlu0 %758
      %762 = vset.pattern.permute.xlu0 0
      %763 = vperm.xlu0 %762, %v701
      %v764 = vpop.permute.xlu0 %763
      %767 = vset.pattern.permute.xlu0 0
      %768 = vperm.xlu0 %767, %v702
      %v769 = vpop.permute.xlu0 %768
      %772 = vset.pattern.permute.xlu0 0
      %773 = vperm.xlu0 %772, %v703
      %v774 = vpop.permute.xlu0 %773
      %777 = vset.pattern.permute.xlu0 0
      %778 = vperm.xlu0 %777, %v704
      %v779 = vpop.permute.xlu0 %778
      %782 = vset.pattern.permute.xlu0 0
      %783 = vperm.xlu0 %782, %v705
      %v784 = vpop.permute.xlu0 %783
      %787 = vset.pattern.permute.xlu0 0
      %788 = vperm.xlu0 %787, %v706
      %v789 = vpop.permute.xlu0 %788
      %792 = vset.pattern.permute.xlu0 0
      %793 = vperm.xlu0 %792, %v707
      %v794 = vpop.permute.xlu0 %793
      %797 = vset.pattern.permute.xlu0 0
      %798 = vperm.xlu0 %797, %v708
      %v799 = vpop.permute.xlu0 %798
      %802 = vset.pattern.permute.xlu0 0
      %803 = vperm.xlu0 %802, %v709
      %v804 = vpop.permute.xlu0 %803
      %807 = vset.pattern.permute.xlu0 0
      %808 = vperm.xlu0 %807, %v710
      %v809 = vpop.permute.xlu0 %808
      %812 = vset.pattern.permute.xlu0 0
      %813 = vperm.xlu0 %812, %v711
      %v814 = vpop.permute.xlu0 %813
      %817 = vset.pattern.permute.xlu0 0
      %818 = vperm.xlu0 %817, %v712
      %v819 = vpop.permute.xlu0 %818
      %822 = vset.pattern.permute.xlu0 0
      %823 = vperm.xlu0 %822, %v713
      %v824 = vpop.permute.xlu0 %823
      %827 = vset.pattern.permute.xlu0 0
      %828 = vperm.xlu0 %827, %v714
      %v829 = vpop.permute.xlu0 %828
      %832 = vset.pattern.permute.xlu0 0
      %833 = vperm.xlu0 %832, %v715
      %v834 = vpop.permute.xlu0 %833
      %837 = vset.pattern.permute.xlu0 0
      %838 = vperm.xlu0 %837, %v716
      %v839 = vpop.permute.xlu0 %838
      %842 = vset.pattern.permute.xlu0 0
      %843 = vperm.xlu0 %842, %v717
      %v844 = vpop.permute.xlu0 %843
      %847 = vset.pattern.permute.xlu0 0
      %848 = vperm.xlu0 %847, %v718
      %v849 = vpop.permute.xlu0 %848
      %852 = vset.pattern.permute.xlu0 0
      %853 = vperm.xlu0 %852, %v719
      %v854 = vpop.permute.xlu0 %853
      %857 = vset.pattern.permute.xlu0 0
      %858 = vperm.xlu0 %857, %v720
      %v859 = vpop.permute.xlu0 %858
      %862 = vset.pattern.permute.xlu0 0
      %863 = vperm.xlu0 %862, %v721
      %v864 = vpop.permute.xlu0 %863
      %867 = vset.pattern.permute.xlu0 0
      %868 = vperm.xlu0 %867, %v722
      %v869 = vpop.permute.xlu0 %868
      %872 = vset.pattern.permute.xlu0 0
      %873 = vperm.xlu0 %872, %v723
      %v874 = vpop.permute.xlu0 %873
      %877 = vset.pattern.permute.xlu0 0
      %878 = vperm.xlu0 %877, %v724
      %v879 = vpop.permute.xlu0 %878
      %882 = vset.pattern.permute.xlu0 0
      %883 = vperm.xlu0 %882, %v725
      %v884 = vpop.permute.xlu0 %883
      %v886 = vmul.f32 %v662, %v729
      %v887 = vmul.f32 %v663, %v734
      %v888 = vmul.f32 %v664, %v739
      %v889 = vmul.f32 %v665, %v744
      %v890 = vmul.f32 %v666, %v749
      %v891 = vmul.f32 %v667, %v754
      %v892 = vmul.f32 %v668, %v759
      %v893 = vmul.f32 %v669, %v764
      %v894 = vmul.f32 %v670, %v769
      %v895 = vmul.f32 %v671, %v774
      %v896 = vmul.f32 %v672, %v779
      %v897 = vmul.f32 %v673, %v784
      %v898 = vmul.f32 %v674, %v789
      %v899 = vmul.f32 %v675, %v794
      %v900 = vmul.f32 %v676, %v799
      %v901 = vmul.f32 %v677, %v804
      %v902 = vmul.f32 %v678, %v809
      %v903 = vmul.f32 %v679, %v814
      %v904 = vmul.f32 %v680, %v819
      %v905 = vmul.f32 %v681, %v824
      %v906 = vmul.f32 %v682, %v829
      %v907 = vmul.f32 %v683, %v834
      %v908 = vmul.f32 %v684, %v839
      %v909 = vmul.f32 %v685, %v844
      %v910 = vmul.f32 %v686, %v849
      %v911 = vmul.f32 %v687, %v854
      %v912 = vmul.f32 %v688, %v859
      %v913 = vmul.f32 %v689, %v864
      %v914 = vmul.f32 %v690, %v869
      %v915 = vmul.f32 %v691, %v874
      %v916 = vmul.f32 %v692, %v879
      %v917 = vmul.f32 %v693, %v884
      %v918 = vpack.c.bf16 %v887, %v886
      %v919 = vpack.c.bf16 %v889, %v888
      %v920 = vpack.c.bf16 %v891, %v890
      %v921 = vpack.c.bf16 %v893, %v892
      %v922 = vpack.c.bf16 %v895, %v894
      %v923 = vpack.c.bf16 %v897, %v896
      %v924 = vpack.c.bf16 %v899, %v898
      %v925 = vpack.c.bf16 %v901, %v900
      %v926 = vpack.c.bf16 %v903, %v902
      %v927 = vpack.c.bf16 %v905, %v904
      %v928 = vpack.c.bf16 %v907, %v906
      %v929 = vpack.c.bf16 %v909, %v908
      %v930 = vpack.c.bf16 %v911, %v910
      %v931 = vpack.c.bf16 %v913, %v912
      %v932 = vpack.c.bf16 %v915, %v914
      %v933 = vpack.c.bf16 %v917, %v916
      %934 = vst [vmem:[#allocation2 + $0x28] sm:$0xff] %v918
      %935 = vst [vmem:[#allocation2 + $0x40] sm:$0xff] %v919
      %936 = vst [vmem:[#allocation2 + $0x58] sm:$0xff] %v920
      %937 = vst [vmem:[#allocation2 + $0x70] sm:$0xff] %v921
      %938 = vst [vmem:[#allocation2 + $0x88] sm:$0xff] %v922
      %939 = vst [vmem:[#allocation2 + $0xa0] sm:$0xff] %v923
      %940 = vst [vmem:[#allocation2 + $0xb8] sm:$0xff] %v924
      %941 = vst [vmem:[#allocation2 + $0xd0] sm:$0xff] %v925
      %942 = vst [vmem:[#allocation2 + $0xe8] sm:$0xff] %v926
      %943 = vst [vmem:[#allocation2 + $0x100] sm:$0xff] %v927
      %944 = vst [vmem:[#allocation2 + $0x118] sm:$0xff] %v928
      %945 = vst [vmem:[#allocation2 + $0x130] sm:$0xff] %v929
      %946 = vst [vmem:[#allocation2 + $0x148] sm:$0xff] %v930
      %947 = vst [vmem:[#allocation2 + $0x160] sm:$0xff] %v931
      %948 = vst [vmem:[#allocation2 + $0x178] sm:$0xff] %v932
      %949 = vst [vmem:[#allocation2 + $0x190] sm:$0xff] %v933
      %v950 = vld [vmem:[#allocation2] sm:$0xff]
      %v951 = vld [vmem:[#allocation2 + $0x8] sm:$0xff]
      %v952 = vld [vmem:[#allocation2 + $0x10] sm:$0xff]
      %v953 = vld [vmem:[#allocation2 + $0x18] sm:$0xff]
      %v954 = vld [vmem:[#allocation2 + $0x20] sm:$0xff]
      %v955 = vld [vmem:[#allocation2 + $0x28] sm:$0xff]
      %v956 = vld [vmem:[#allocation2 + $0x30] sm:$0xff]
      %v957 = vld [vmem:[#allocation2 + $0x38] sm:$0xff]
      %v958 = vld [vmem:[#allocation2 + $0x40] sm:$0xff]
      %v959 = vld [vmem:[#allocation2 + $0x48] sm:$0xff]
      %v960 = vld [vmem:[#allocation2 + $0x50] sm:$0xff]
      %v961 = vld [vmem:[#allocation2 + $0x58] sm:$0xff]
      %v962 = vld [vmem:[#allocation2 + $0x60] sm:$0xff]
      %v963 = vld [vmem:[#allocation2 + $0x68] sm:$0xff]
      %v964 = vld [vmem:[#allocation2 + $0x70] sm:$0xff]
      %v965 = vld [vmem:[#allocation2 + $0x78] sm:$0xff]
      %v966 = vld [vmem:[#allocation2 + $0x80] sm:$0xff]
      %v967 = vld [vmem:[#allocation2 + $0x88] sm:$0xff]
      %v968 = vld [vmem:[#allocation2 + $0x90] sm:$0xff]
      %v969 = vld [vmem:[#allocation2 + $0x98] sm:$0xff]
      %v970 = vld [vmem:[#allocation2 + $0xa0] sm:$0xff]
      %v971 = vld [vmem:[#allocation2 + $0xa8] sm:$0xff]
      %v972 = vld [vmem:[#allocation2 + $0xb0] sm:$0xff]
      %v973 = vld [vmem:[#allocation2 + $0xb8] sm:$0xff]
      %v974 = vld [vmem:[#allocation2 + $0xc0] sm:$0xff]
      %v975 = vld [vmem:[#allocation2 + $0xc8] sm:$0xff]
      %v976 = vld [vmem:[#allocation2 + $0xd0] sm:$0xff]
      %v977 = vld [vmem:[#allocation2 + $0xd8] sm:$0xff]
      %v978 = vld [vmem:[#allocation2 + $0xe0] sm:$0xff]
      %v979 = vld [vmem:[#allocation2 + $0xe8] sm:$0xff]
      %v980 = vld [vmem:[#allocation2 + $0xf0] sm:$0xff]
      %v981 = vld [vmem:[#allocation2 + $0xf8] sm:$0xff]
      %v982 = vld [vmem:[#allocation2 + $0x100] sm:$0xff]
      %v983 = vld [vmem:[#allocation2 + $0x108] sm:$0xff]
      %v984 = vld [vmem:[#allocation2 + $0x110] sm:$0xff]
      %v985 = vld [vmem:[#allocation2 + $0x118] sm:$0xff]
      %v986 = vld [vmem:[#allocation2 + $0x120] sm:$0xff]
      %v987 = vld [vmem:[#allocation2 + $0x128] sm:$0xff]
      %v988 = vld [vmem:[#allocation2 + $0x130] sm:$0xff]
      %v989 = vld [vmem:[#allocation2 + $0x138] sm:$0xff]
      %v990 = vld [vmem:[#allocation2 + $0x140] sm:$0xff]
      %v991 = vld [vmem:[#allocation2 + $0x148] sm:$0xff]
      %v992 = vld [vmem:[#allocation2 + $0x150] sm:$0xff]
      %v993 = vld [vmem:[#allocation2 + $0x158] sm:$0xff]
      %v994 = vld [vmem:[#allocation2 + $0x160] sm:$0xff]
      %v995 = vld [vmem:[#allocation2 + $0x168] sm:$0xff]
      %v996 = vld [vmem:[#allocation2 + $0x170] sm:$0xff]
      %v997 = vld [vmem:[#allocation2 + $0x178] sm:$0xff]
      %v998 = vld [vmem:[%s1] sm:$0xf]
      %v999 = vld [vmem:[%s1 + $0x4] sm:$0xf]
      %v1000 = vld [vmem:[%s1 + $0x8] sm:$0xf]
      %v1001 = vld [vmem:[%s1 + $0xc] sm:$0xf]
      %v1002 = vld [vmem:[%s1 + $0x10] sm:$0xf]
      %v1003 = vld [vmem:[%s1 + $0x14] sm:$0xf]
      %v1004 = vld [vmem:[%s1 + $0x18] sm:$0xf]
      %v1005 = vld [vmem:[%s1 + $0x1c] sm:$0xf]
      %v1006 = vld [vmem:[%s1 + $0x20] sm:$0xf]
      %v1007 = vld [vmem:[%s1 + $0x24] sm:$0xf]
      %v1008 = vld [vmem:[%s1 + $0x28] sm:$0xf]
      %v1009 = vld [vmem:[%s1 + $0x2c] sm:$0xf]
      %v1010 = vld [vmem:[%s1 + $0x30] sm:$0xf]
      %v1011 = vld [vmem:[%s1 + $0x34] sm:$0xf]
      %v1012 = vld [vmem:[%s1 + $0x38] sm:$0xf]
      %v1013 = vld [vmem:[%s1 + $0x3c] sm:$0xf]
      %v1014 = vld [vmem:[%s1 + $0x40] sm:$0xf]
      %v1015 = vld [vmem:[%s1 + $0x44] sm:$0xf]
      %v1016 = vld [vmem:[%s1 + $0x48] sm:$0xf]
      %v1017 = vld [vmem:[%s1 + $0x4c] sm:$0xf]
      %v1018 = vld [vmem:[%s1 + $0x50] sm:$0xf]
      %v1019 = vld [vmem:[%s1 + $0x54] sm:$0xf]
      %v1020 = vld [vmem:[%s1 + $0x58] sm:$0xf]
      %v1021 = vld [vmem:[%s1 + $0x5c] sm:$0xf]
      %v1022 = vld [vmem:[%s1 + $0x60] sm:$0xf]
      %v1023 = vld [vmem:[%s1 + $0x64] sm:$0xf]
      %v1024 = vld [vmem:[%s1 + $0x68] sm:$0xf]
      %v1025 = vld [vmem:[%s1 + $0x6c] sm:$0xf]
      %v1026 = vld [vmem:[%s1 + $0x70] sm:$0xf]
      %v1027 = vld [vmem:[%s1 + $0x74] sm:$0xf]
      %v1028 = vld [vmem:[%s1 + $0x78] sm:$0xf]
      %v1029 = vld [vmem:[%s1 + $0x7c] sm:$0xf]
      %v1030 = vld [vmem:[%s1 + $0x80] sm:$0xf]
      %v1031 = vld [vmem:[%s1 + $0x84] sm:$0xf]
      %v1032 = vld [vmem:[%s1 + $0x88] sm:$0xf]
      %v1033 = vld [vmem:[%s1 + $0x8c] sm:$0xf]
      %v1034 = vld [vmem:[%s1 + $0x90] sm:$0xf]
      %v1035 = vld [vmem:[%s1 + $0x94] sm:$0xf]
      %v1036 = vld [vmem:[%s1 + $0x98] sm:$0xf]
      %v1037 = vld [vmem:[%s1 + $0x9c] sm:$0xf]
      %v1038 = vld [vmem:[%s1 + $0xa0] sm:$0xf]
      %v1039 = vld [vmem:[%s1 + $0xa4] sm:$0xf]
      %v1040 = vld [vmem:[%s1 + $0xa8] sm:$0xf]
      %v1041 = vld [vmem:[%s1 + $0xac] sm:$0xf]
      %v1042 = vld [vmem:[%s1 + $0xb0] sm:$0xf]
      %v1043 = vld [vmem:[%s1 + $0xb4] sm:$0xf]
      %v1044 = vld [vmem:[%s1 + $0xb8] sm:$0xf]
      %v1045 = vld [vmem:[%s1 + $0xbc] sm:$0xf]
      %v1046 = vld [vmem:[#allocation2 + $0x180] sm:$0xff]
      %v1047 = vld [vmem:[#allocation2 + $0x188] sm:$0xff]
      %v1048 = vld [vmem:[#allocation2 + $0x190] sm:$0xff]
      %s1049 = scalar_lea.vmem %s1, 192
      %v1050 = vld [vmem:[%s1049] sm:$0xf]
      %v1051 = vld [vmem:[%s1049 + $0x4] sm:$0xf]
      %v1052 = vld [vmem:[%s1049 + $0x8] sm:$0xf]
      %v1053 = vld [vmem:[%s1049 + $0xc] sm:$0xf]
      %v1054 = vld [vmem:[%s1049 + $0x10] sm:$0xf]
      %v1055 = vld [vmem:[%s1049 + $0x14] sm:$0xf]
      %v1056 = vld [vmem:[%s1049 + $0x18] sm:$0xf]
      %v1057 = vld [vmem:[%s1049 + $0x1c] sm:$0xf]
      %v1058 = vld [vmem:[%s1049 + $0x20] sm:$0xf]
      %v1059 = vld [vmem:[%s1049 + $0x24] sm:$0xf]
      %v1060 = vld [vmem:[%s1049 + $0x28] sm:$0xf]
      %v1061 = vld [vmem:[%s1049 + $0x2c] sm:$0xf]
      %v1062 = vld [vmem:[%s1049 + $0x30] sm:$0xf]
      %v1063 = vld [vmem:[%s1049 + $0x34] sm:$0xf]
      %v1064 = vld [vmem:[%s1049 + $0x38] sm:$0xf]
      %v1065 = vld [vmem:[%s1049 + $0x3c] sm:$0xf]
      %v1066 = vld [vmem:[%s1049 + $0x40] sm:$0xf]
      %v1067 = vld [vmem:[%s1049 + $0x44] sm:$0xf]
      %v1068 = vld [vmem:[%s1049 + $0x48] sm:$0xf]
      %v1069 = vld [vmem:[%s1049 + $0x4c] sm:$0xf]
      %v1070 = vld [vmem:[%s1049 + $0x50] sm:$0xf]
      %v1071 = vld [vmem:[%s1049 + $0x54] sm:$0xf]
      %v1072 = vld [vmem:[%s1049 + $0x58] sm:$0xf]
      %v1073 = vld [vmem:[%s1049 + $0x5c] sm:$0xf]
      %v1074 = vld [vmem:[%s1049 + $0x60] sm:$0xf]
      %v1075 = vld [vmem:[%s1049 + $0x64] sm:$0xf]
      %v1076 = vld [vmem:[%s1049 + $0x68] sm:$0xf]
      %v1077 = vld [vmem:[%s1049 + $0x6c] sm:$0xf]
      %v1078 = vld [vmem:[%s1049 + $0x70] sm:$0xf]
      %v1079 = vld [vmem:[%s1049 + $0x74] sm:$0xf]
      %v1080 = vld [vmem:[%s1049 + $0x78] sm:$0xf]
      %v1081 = vld [vmem:[%s1049 + $0x7c] sm:$0xf]
      %v1082 = vld [vmem:[%s1049 + $0x80] sm:$0xf]
      %v1083 = vld [vmem:[%s1049 + $0x84] sm:$0xf]
      %v1084 = vld [vmem:[%s1049 + $0x88] sm:$0xf]
      %v1085 = vld [vmem:[%s1049 + $0x8c] sm:$0xf]
      %v1086 = vld [vmem:[%s1049 + $0x90] sm:$0xf]
      %v1087 = vld [vmem:[%s1049 + $0x94] sm:$0xf]
      %v1088 = vld [vmem:[%s1049 + $0x98] sm:$0xf]
      %v1089 = vld [vmem:[%s1049 + $0x9c] sm:$0xf]
      %v1090 = vld [vmem:[%s1049 + $0xa0] sm:$0xf]
      %v1091 = vld [vmem:[%s1049 + $0xa4] sm:$0xf]
      %v1092 = vld [vmem:[%s1049 + $0xa8] sm:$0xf]
      %v1093 = vld [vmem:[%s1049 + $0xac] sm:$0xf]
      %v1094 = vld [vmem:[%s1049 + $0xb0] sm:$0xf]
      %v1095 = vld [vmem:[%s1049 + $0xb4] sm:$0xf]
      %v1096 = vld [vmem:[%s1049 + $0xb8] sm:$0xf]
      %v1097 = vld [vmem:[%s1049 + $0xbc] sm:$0xf]
      %v1146 = vunpack.c.l.b16 %v1050
      %v1147 = vunpack.c.l.b16 %v1051
      %v1148 = vunpack.c.l.b16 %v1052
      %v1149 = vunpack.c.l.b16 %v1053
      %v1150 = vunpack.c.l.b16 %v1054
      %v1151 = vunpack.c.l.b16 %v1055
      %v1152 = vunpack.c.l.b16 %v1056
      %v1153 = vunpack.c.l.b16 %v1057
      %v1154 = vunpack.c.l.b16 %v1058
      %v1155 = vunpack.c.l.b16 %v1059
      %v1156 = vunpack.c.l.b16 %v1060
      %v1157 = vunpack.c.l.b16 %v1061
      %v1158 = vunpack.c.l.b16 %v1062
      %v1159 = vunpack.c.l.b16 %v1063
      %v1160 = vunpack.c.l.b16 %v1064
      %v1161 = vunpack.c.l.b16 %v1065
      %v1162 = vunpack.c.l.b16 %v1066
      %v1163 = vunpack.c.l.b16 %v1067
      %v1164 = vunpack.c.l.b16 %v1068
      %v1165 = vunpack.c.l.b16 %v1069
      %v1166 = vunpack.c.l.b16 %v1070
      %v1167 = vunpack.c.l.b16 %v1071
      %v1168 = vunpack.c.l.b16 %v1072
      %v1169 = vunpack.c.l.b16 %v1073
      %v1170 = vunpack.c.l.b16 %v1074
      %v1171 = vunpack.c.l.b16 %v1075
      %v1172 = vunpack.c.l.b16 %v1076
      %v1173 = vunpack.c.l.b16 %v1077
      %v1174 = vunpack.c.l.b16 %v1078
      %v1175 = vunpack.c.l.b16 %v1079
      %v1176 = vunpack.c.l.b16 %v1080
      %v1177 = vunpack.c.l.b16 %v1081
      %v1178 = vunpack.c.l.b16 %v1082
      %v1179 = vunpack.c.l.b16 %v1083
      %v1180 = vunpack.c.l.b16 %v1084
      %v1181 = vunpack.c.l.b16 %v1085
      %v1182 = vunpack.c.l.b16 %v1086
      %v1183 = vunpack.c.l.b16 %v1087
      %v1184 = vunpack.c.l.b16 %v1088
      %v1185 = vunpack.c.l.b16 %v1089
      %v1186 = vunpack.c.l.b16 %v1090
      %v1187 = vunpack.c.l.b16 %v1091
      %v1188 = vunpack.c.l.b16 %v1092
      %v1189 = vunpack.c.l.b16 %v1093
      %v1190 = vunpack.c.l.b16 %v1094
      %v1191 = vunpack.c.l.b16 %v1095
      %v1192 = vunpack.c.l.b16 %v1096
      %v1193 = vunpack.c.l.b16 %v1097
      %v1194 = vpack.c.b16 %v1147, %v1146
      %v1195 = vpack.c.b16 %v1149, %v1148
      %v1196 = vpack.c.b16 %v1151, %v1150
      %v1197 = vpack.c.b16 %v1153, %v1152
      %v1198 = vpack.c.b16 %v1155, %v1154
      %v1199 = vpack.c.b16 %v1157, %v1156
      %v1200 = vpack.c.b16 %v1159, %v1158
      %v1201 = vpack.c.b16 %v1161, %v1160
      %v1202 = vpack.c.b16 %v1163, %v1162
      %v1203 = vpack.c.b16 %v1165, %v1164
      %v1204 = vpack.c.b16 %v1167, %v1166
      %v1205 = vpack.c.b16 %v1169, %v1168
      %v1206 = vpack.c.b16 %v1171, %v1170
      %v1207 = vpack.c.b16 %v1173, %v1172
      %v1208 = vpack.c.b16 %v1175, %v1174
      %v1209 = vpack.c.b16 %v1177, %v1176
      %v1210 = vpack.c.b16 %v1179, %v1178
      %v1211 = vpack.c.b16 %v1181, %v1180
      %v1212 = vpack.c.b16 %v1183, %v1182
      %v1213 = vpack.c.b16 %v1185, %v1184
      %v1214 = vpack.c.b16 %v1187, %v1186
      %v1215 = vpack.c.b16 %v1189, %v1188
      %v1216 = vpack.c.b16 %v1191, %v1190
      %v1217 = vpack.c.b16 %v1193, %v1192
      %1242 = vmatprep.subr.bf16.mxu0 0
      %1243 = vmatpush1.bf16.msra.mxu0 %v1194
      %1244 = vmatprep.subr.bf16.mxu0 0
      %1245 = vmatpush1.bf16.msra.mxu0 %v1195
      %1246 = vmatprep.subr.bf16.mxu0 0
      %1247 = vmatpush1.bf16.msra.mxu0 %v1196
      %1248 = vmatprep.subr.bf16.mxu0 0
      %1249 = vmatpush1.bf16.msra.mxu0 %v1197
      %1250 = vmatprep.subr.bf16.mxu0 0
      %1251 = vmatpush1.bf16.msra.mxu0 %v1198
      %1252 = vmatprep.subr.bf16.mxu0 0
      %1253 = vmatpush1.bf16.msra.mxu0 %v1199
      %1254 = vmatprep.subr.bf16.mxu0 0
      %1255 = vmatpush1.bf16.msra.mxu0 %v1200
      %1256 = vmatprep.subr.bf16.mxu0 0
      %1257 = vmatpush1.bf16.msra.mxu0 %v1201
      %1258 = vmatprep.subr.bf16.mxu0 0
      %1259 = vmatpush1.bf16.msra.mxu0 %v1202
      %1260 = vmatprep.subr.bf16.mxu0 0
      %1261 = vmatpush1.bf16.msra.mxu0 %v1203
      %1262 = vmatprep.subr.bf16.mxu0 0
      %1263 = vmatpush1.bf16.msra.mxu0 %v1204
      %1264 = vmatprep.subr.bf16.mxu0 0
      %1265 = vmatpush1.bf16.msra.mxu0 %v1205
      %1266 = vmatprep.subr.bf16.mxu0 0
      %1267 = vmatpush1.bf16.msra.mxu0 %v1206
      %1268 = vmatprep.subr.bf16.mxu0 0
      %1269 = vmatpush1.bf16.msra.mxu0 %v1207
      %1270 = vmatprep.subr.bf16.mxu0 0
      %1271 = vmatpush1.bf16.msra.mxu0 %v1208
      %1272 = vmatprep.subr.bf16.mxu0 0
      %1273 = vmatpush1.bf16.msra.mxu0 %v1209
      %1274 = vmatprep.mubr.bf16.mxu0 %v954
      %1275 = vmatmul.mubr.bf16.gmra.mrb[0].mxu0 %v953
      %v1276 = vpop.f32.mrb[0].mxu0
      %v1277 = vadd.f32 0.0, %v1276
      %v1278 = vpop.f32.mrb[0].mxu0
      %v1279 = vpop.f32.mrb[0].mxu0
      %v1280 = vadd.f32 0.0, %v1279
      %v1281 = vpop.f32.mrb[0].mxu0
      %1282 = vmatprep.mubr.bf16.mxu0 %v957
      %1283 = vmatmul.mubr.bf16.gmra.mrb[0].mxu0 %v956
      %v1284 = vpop.f32.mrb[0].mxu0
      %v1285 = vadd.f32 0.0, %v1284
      %v1286 = vpop.f32.mrb[0].mxu0
      %v1287 = vpop.f32.mrb[0].mxu0
      %v1288 = vadd.f32 0.0, %v1287
      %v1289 = vpop.f32.mrb[0].mxu0
      %1290 = vmatprep.mubr.bf16.mxu0 %v960
      %1291 = vmatmul.mubr.bf16.gmra.mrb[0].mxu0 %v959
      %v1292 = vpop.f32.mrb[0].mxu0
      %v1293 = vadd.f32 0.0, %v1292
      %v1294 = vpop.f32.mrb[0].mxu0
      %v1295 = vpop.f32.mrb[0].mxu0
      %v1296 = vadd.f32 0.0, %v1295
      %v1297 = vpop.f32.mrb[0].mxu0
      %1298 = vmatprep.mubr.bf16.mxu0 %v963
      %1299 = vmatmul.mubr.bf16.gmra.mrb[0].mxu0 %v962
      %v1300 = vpop.f32.mrb[0].mxu0
      %v1301 = vadd.f32 0.0, %v1300
      %v1302 = vpop.f32.mrb[0].mxu0
      %v1303 = vpop.f32.mrb[0].mxu0
      %v1304 = vadd.f32 0.0, %v1303
      %v1305 = vpop.f32.mrb[0].mxu0
      %1306 = vmatprep.mubr.bf16.mxu0 %v966
      %1307 = vmatmul.mubr.bf16.gmra.mrb[0].mxu0 %v965
      %v1308 = vpop.f32.mrb[0].mxu0
      %v1309 = vadd.f32 0.0, %v1308
      %v1310 = vpop.f32.mrb[0].mxu0
      %v1311 = vpop.f32.mrb[0].mxu0
      %v1312 = vadd.f32 0.0, %v1311
      %v1313 = vpop.f32.mrb[0].mxu0
      %1314 = vmatprep.mubr.bf16.mxu0 %v969
      %1315 = vmatmul.mubr.bf16.gmra.mrb[0].mxu0 %v968
      %v1316 = vpop.f32.mrb[0].mxu0
      %v1317 = vadd.f32 0.0, %v1316
      %v1318 = vpop.f32.mrb[0].mxu0
      %v1319 = vpop.f32.mrb[0].mxu0
      %v1320 = vadd.f32 0.0, %v1319
      %v1321 = vpop.f32.mrb[0].mxu0
      %1322 = vmatprep.mubr.bf16.mxu0 %v972
      %1323 = vmatmul.mubr.bf16.gmra.mrb[0].mxu0 %v971
      %v1324 = vpop.f32.mrb[0].mxu0
      %v1325 = vadd.f32 0.0, %v1324
      %v1326 = vpop.f32.mrb[0].mxu0
      %v1327 = vpop.f32.mrb[0].mxu0
      %v1328 = vadd.f32 0.0, %v1327
      %v1329 = vpop.f32.mrb[0].mxu0
      %1330 = vmatprep.mubr.bf16.mxu0 %v975
      %1331 = vmatmul.mubr.bf16.gmra.mrb[0].mxu0 %v974
      %v1332 = vpop.f32.mrb[0].mxu0
      %v1333 = vadd.f32 0.0, %v1332
      %v1334 = vpop.f32.mrb[0].mxu0
      %v1335 = vpop.f32.mrb[0].mxu0
      %v1336 = vadd.f32 0.0, %v1335
      %v1337 = vpop.f32.mrb[0].mxu0
      %1338 = vmatprep.mubr.bf16.mxu0 %v978
      %1339 = vmatmul.mubr.bf16.gmra.mrb[0].mxu0 %v977
      %v1340 = vpop.f32.mrb[0].mxu0
      %v1341 = vadd.f32 0.0, %v1340
      %v1342 = vpop.f32.mrb[0].mxu0
      %v1343 = vpop.f32.mrb[0].mxu0
      %v1344 = vadd.f32 0.0, %v1343
      %v1345 = vpop.f32.mrb[0].mxu0
      %1346 = vmatprep.mubr.bf16.mxu0 %v981
      %1347 = vmatmul.mubr.bf16.gmra.mrb[0].mxu0 %v980
      %v1348 = vpop.f32.mrb[0].mxu0
      %v1349 = vadd.f32 0.0, %v1348
      %v1350 = vpop.f32.mrb[0].mxu0
      %v1351 = vpop.f32.mrb[0].mxu0
      %v1352 = vadd.f32 0.0, %v1351
      %v1353 = vpop.f32.mrb[0].mxu0
      %1354 = vmatprep.mubr.bf16.mxu0 %v984
      %1355 = vmatmul.mubr.bf16.gmra.mrb[0].mxu0 %v983
      %v1356 = vpop.f32.mrb[0].mxu0
      %v1357 = vadd.f32 0.0, %v1356
      %v1358 = vpop.f32.mrb[0].mxu0
      %v1359 = vpop.f32.mrb[0].mxu0
      %v1360 = vadd.f32 0.0, %v1359
      %v1361 = vpop.f32.mrb[0].mxu0
      %1362 = vmatprep.mubr.bf16.mxu0 %v987
      %1363 = vmatmul.mubr.bf16.gmra.mrb[0].mxu0 %v986
      %v1364 = vpop.f32.mrb[0].mxu0
      %v1365 = vadd.f32 0.0, %v1364
      %v1366 = vpop.f32.mrb[0].mxu0
      %v1367 = vpop.f32.mrb[0].mxu0
      %v1368 = vadd.f32 0.0, %v1367
      %v1369 = vpop.f32.mrb[0].mxu0
      %1370 = vmatprep.mubr.bf16.mxu0 %v990
      %1371 = vmatmul.mubr.bf16.gmra.mrb[0].mxu0 %v989
      %v1372 = vpop.f32.mrb[0].mxu0
      %v1373 = vadd.f32 0.0, %v1372
      %v1374 = vpop.f32.mrb[0].mxu0
      %v1375 = vpop.f32.mrb[0].mxu0
      %v1376 = vadd.f32 0.0, %v1375
      %v1377 = vpop.f32.mrb[0].mxu0
      %1378 = vmatprep.mubr.bf16.mxu0 %v993
      %1379 = vmatmul.mubr.bf16.gmra.mrb[0].mxu0 %v992
      %v1380 = vpop.f32.mrb[0].mxu0
      %v1381 = vadd.f32 0.0, %v1380
      %v1382 = vpop.f32.mrb[0].mxu0
      %v1383 = vpop.f32.mrb[0].mxu0
      %v1384 = vadd.f32 0.0, %v1383
      %v1385 = vpop.f32.mrb[0].mxu0
      %1386 = vmatprep.mubr.bf16.mxu0 %v996
      %1387 = vmatmul.mubr.bf16.gmra.mrb[0].mxu0 %v995
      %v1388 = vpop.f32.mrb[0].mxu0
      %v1389 = vadd.f32 0.0, %v1388
      %v1390 = vpop.f32.mrb[0].mxu0
      %v1391 = vpop.f32.mrb[0].mxu0
      %v1392 = vadd.f32 0.0, %v1391
      %v1393 = vpop.f32.mrb[0].mxu0
      %1394 = vmatprep.mubr.bf16.mxu0 %v1047
      %1395 = vmatmul.mubr.bf16.gmra.mrb[0].mxu0 %v1046
      %v1396 = vpop.f32.mrb[0].mxu0
      %v1397 = vadd.f32 0.0, %v1396
      %v1398 = vpop.f32.mrb[0].mxu0
      %v1399 = vpop.f32.mrb[0].mxu0
      %v1400 = vadd.f32 0.0, %v1399
      %v1401 = vpop.f32.mrb[0].mxu0
      %1402 = vdwg.mxu0
      %1403 = vmatprep.subr.bf16.mxu0 0
      %1404 = vmatpush1.bf16.msra.mxu0 %v1210
      %1405 = vmatprep.subr.bf16.mxu0 0
      %1406 = vmatpush1.bf16.msra.mxu0 %v1211
      %1407 = vmatprep.subr.bf16.mxu0 0
      %1408 = vmatpush1.bf16.msra.mxu0 %v1212
      %1409 = vmatprep.subr.bf16.mxu0 0
      %1410 = vmatpush1.bf16.msra.mxu0 %v1213
      %1411 = vmatprep.subr.bf16.mxu0 0
      %1412 = vmatpush1.bf16.msra.mxu0 %v1214
      %1413 = vmatprep.subr.bf16.mxu0 0
      %1414 = vmatpush1.bf16.msra.mxu0 %v1215
      %1415 = vmatprep.subr.bf16.mxu0 0
      %1416 = vmatpush1.bf16.msra.mxu0 %v1216
      %1417 = vmatprep.subr.bf16.mxu0 0
      %1418 = vmatpush1.bf16.msra.mxu0 %v1217
      %1419 = vmatprep.subr.bf16.mxu0 0
      %1420 = vmatpush1.bf16.msra.mxu0 0
      %1421 = vmatprep.subr.bf16.mxu0 0
      %1422 = vmatpush1.bf16.msra.mxu0 0
      %1423 = vmatprep.subr.bf16.mxu0 0
      %1424 = vmatpush1.bf16.msra.mxu0 0
      %1425 = vmatprep.subr.bf16.mxu0 0
      %1426 = vmatpush1.bf16.msra.mxu0 0
      %1427 = vmatprep.subr.bf16.mxu0 0
      %1428 = vmatpush1.bf16.msra.mxu0 0
      %1429 = vmatprep.subr.bf16.mxu0 0
      %1430 = vmatpush1.bf16.msra.mxu0 0
      %1431 = vmatprep.subr.bf16.mxu0 0
      %1432 = vmatpush1.bf16.msra.mxu0 0
      %1433 = vmatprep.subr.bf16.mxu0 0
      %1434 = vmatpush1.bf16.msra.mxu0 0
      %1435 = vmatprep.mubr.bf16.mxu0 0
      %1436 = vmatmul.mubr.bf16.gmra.mrb[0].mxu0 %v955
      %v1437 = vpop.f32.mrb[0].mxu0
      %v1438 = vadd.f32 %v1277, %v1437
      %v1439 = vpop.f32.mrb[0].mxu0
      %v1440 = vpop.f32.mrb[0].mxu0
      %v1441 = vadd.f32 %v1280, %v1440
      %v1442 = vpop.f32.mrb[0].mxu0
      %1443 = vmatprep.mubr.bf16.mxu0 0
      %1444 = vmatmul.mubr.bf16.gmra.mrb[0].mxu0 %v958
      %v1445 = vpop.f32.mrb[0].mxu0
      %v1446 = vadd.f32 %v1285, %v1445
      %v1447 = vpop.f32.mrb[0].mxu0
      %v1448 = vpop.f32.mrb[0].mxu0
      %v1449 = vadd.f32 %v1288, %v1448
      %v1450 = vpop.f32.mrb[0].mxu0
      %1451 = vmatprep.mubr.bf16.mxu0 0
      %1452 = vmatmul.mubr.bf16.gmra.mrb[0].mxu0 %v961
      %v1453 = vpop.f32.mrb[0].mxu0
      %v1454 = vadd.f32 %v1293, %v1453
      %v1455 = vpop.f32.mrb[0].mxu0
      %v1456 = vpop.f32.mrb[0].mxu0
      %v1457 = vadd.f32 %v1296, %v1456
      %v1458 = vpop.f32.mrb[0].mxu0
      %1459 = vmatprep.mubr.bf16.mxu0 0
      %1460 = vmatmul.mubr.bf16.gmra.mrb[0].mxu0 %v964
      %v1461 = vpop.f32.mrb[0].mxu0
      %v1462 = vadd.f32 %v1301, %v1461
      %v1463 = vpop.f32.mrb[0].mxu0
      %v1464 = vpop.f32.mrb[0].mxu0
      %v1465 = vadd.f32 %v1304, %v1464
      %v1466 = vpop.f32.mrb[0].mxu0
      %1467 = vmatprep.mubr.bf16.mxu0 0
      %1468 = vmatmul.mubr.bf16.gmra.mrb[0].mxu0 %v967
      %v1469 = vpop.f32.mrb[0].mxu0
      %v1470 = vadd.f32 %v1309, %v1469
      %v1471 = vpop.f32.mrb[0].mxu0
      %v1472 = vpop.f32.mrb[0].mxu0
      %v1473 = vadd.f32 %v1312, %v1472
      %v1474 = vpop.f32.mrb[0].mxu0
      %1475 = vmatprep.mubr.bf16.mxu0 0
      %1476 = vmatmul.mubr.bf16.gmra.mrb[0].mxu0 %v970
      %v1477 = vpop.f32.mrb[0].mxu0
      %v1478 = vadd.f32 %v1317, %v1477
      %v1479 = vpop.f32.mrb[0].mxu0
      %v1480 = vpop.f32.mrb[0].mxu0
      %v1481 = vadd.f32 %v1320, %v1480
      %v1482 = vpop.f32.mrb[0].mxu0
      %1483 = vmatprep.mubr.bf16.mxu0 0
      %1484 = vmatmul.mubr.bf16.gmra.mrb[0].mxu0 %v973
      %v1485 = vpop.f32.mrb[0].mxu0
      %v1486 = vadd.f32 %v1325, %v1485
      %v1487 = vpop.f32.mrb[0].mxu0
      %v1488 = vpop.f32.mrb[0].mxu0
      %v1489 = vadd.f32 %v1328, %v1488
      %v1490 = vpop.f32.mrb[0].mxu0
      %1491 = vmatprep.mubr.bf16.mxu0 0
      %1492 = vmatmul.mubr.bf16.gmra.mrb[0].mxu0 %v976
      %v1493 = vpop.f32.mrb[0].mxu0
      %v1494 = vadd.f32 %v1333, %v1493
      %v1495 = vpop.f32.mrb[0].mxu0
      %v1496 = vpop.f32.mrb[0].mxu0
      %v1497 = vadd.f32 %v1336, %v1496
      %v1498 = vpop.f32.mrb[0].mxu0
      %1499 = vmatprep.mubr.bf16.mxu0 0
      %1500 = vmatmul.mubr.bf16.gmra.mrb[0].mxu0 %v979
      %v1501 = vpop.f32.mrb[0].mxu0
      %v1502 = vadd.f32 %v1341, %v1501
      %v1503 = vpop.f32.mrb[0].mxu0
      %v1504 = vpop.f32.mrb[0].mxu0
      %v1505 = vadd.f32 %v1344, %v1504
      %v1506 = vpop.f32.mrb[0].mxu0
      %1507 = vmatprep.mubr.bf16.mxu0 0
      %1508 = vmatmul.mubr.bf16.gmra.mrb[0].mxu0 %v982
      %v1509 = vpop.f32.mrb[0].mxu0
      %v1510 = vadd.f32 %v1349, %v1509
      %v1511 = vpop.f32.mrb[0].mxu0
      %v1512 = vpop.f32.mrb[0].mxu0
      %v1513 = vadd.f32 %v1352, %v1512
      %v1514 = vpop.f32.mrb[0].mxu0
      %1515 = vmatprep.mubr.bf16.mxu0 0
      %1516 = vmatmul.mubr.bf16.gmra.mrb[0].mxu0 %v985
      %v1517 = vpop.f32.mrb[0].mxu0
      %v1518 = vadd.f32 %v1357, %v1517
      %v1519 = vpop.f32.mrb[0].mxu0
      %v1520 = vpop.f32.mrb[0].mxu0
      %v1521 = vadd.f32 %v1360, %v1520
      %v1522 = vpop.f32.mrb[0].mxu0
      %1523 = vmatprep.mubr.bf16.mxu0 0
      %1524 = vmatmul.mubr.bf16.gmra.mrb[0].mxu0 %v988
      %v1525 = vpop.f32.mrb[0].mxu0
      %v1526 = vadd.f32 %v1365, %v1525
      %v1527 = vpop.f32.mrb[0].mxu0
      %v1528 = vpop.f32.mrb[0].mxu0
      %v1529 = vadd.f32 %v1368, %v1528
      %v1530 = vpop.f32.mrb[0].mxu0
      %1531 = vmatprep.mubr.bf16.mxu0 0
      %1532 = vmatmul.mubr.bf16.gmra.mrb[0].mxu0 %v991
      %v1533 = vpop.f32.mrb[0].mxu0
      %v1534 = vadd.f32 %v1373, %v1533
      %v1535 = vpop.f32.mrb[0].mxu0
      %v1536 = vpop.f32.mrb[0].mxu0
      %v1537 = vadd.f32 %v1376, %v1536
      %v1538 = vpop.f32.mrb[0].mxu0
      %1539 = vmatprep.mubr.bf16.mxu0 0
      %1540 = vmatmul.mubr.bf16.gmra.mrb[0].mxu0 %v994
      %v1541 = vpop.f32.mrb[0].mxu0
      %v1542 = vadd.f32 %v1381, %v1541
      %v1543 = vpop.f32.mrb[0].mxu0
      %v1544 = vpop.f32.mrb[0].mxu0
      %v1545 = vadd.f32 %v1384, %v1544
      %v1546 = vpop.f32.mrb[0].mxu0
      %1547 = vmatprep.mubr.bf16.mxu0 0
      %1548 = vmatmul.mubr.bf16.gmra.mrb[0].mxu0 %v997
      %v1549 = vpop.f32.mrb[0].mxu0
      %v1550 = vadd.f32 %v1389, %v1549
      %v1551 = vpop.f32.mrb[0].mxu0
      %v1552 = vpop.f32.mrb[0].mxu0
      %v1553 = vadd.f32 %v1392, %v1552
      %v1554 = vpop.f32.mrb[0].mxu0
      %1555 = vmatprep.mubr.bf16.mxu0 0
      %1556 = vmatmul.mubr.bf16.gmra.mrb[0].mxu0 %v1048
      %v1557 = vpop.f32.mrb[0].mxu0
      %v1558 = vadd.f32 %v1397, %v1557
      %v1559 = vpop.f32.mrb[0].mxu0
      %v1560 = vpop.f32.mrb[0].mxu0
      %v1561 = vadd.f32 %v1400, %v1560
      %v1562 = vpop.f32.mrb[0].mxu0
      %1563 = vdwg.mxu0
      %v1612 = vunpack.c.l.b16 %v998
      %v1613 = vunpack.c.l.b16 %v999
      %v1614 = vunpack.c.l.b16 %v1000
      %v1615 = vunpack.c.l.b16 %v1001
      %v1616 = vunpack.c.l.b16 %v1002
      %v1617 = vunpack.c.l.b16 %v1003
      %v1618 = vunpack.c.l.b16 %v1004
      %v1619 = vunpack.c.l.b16 %v1005
      %v1620 = vunpack.c.l.b16 %v1006
      %v1621 = vunpack.c.l.b16 %v1007
      %v1622 = vunpack.c.l.b16 %v1008
      %v1623 = vunpack.c.l.b16 %v1009
      %v1624 = vunpack.c.l.b16 %v1010
      %v1625 = vunpack.c.l.b16 %v1011
      %v1626 = vunpack.c.l.b16 %v1012
      %v1627 = vunpack.c.l.b16 %v1013
      %v1628 = vunpack.c.l.b16 %v1014
      %v1629 = vunpack.c.l.b16 %v1015
      %v1630 = vunpack.c.l.b16 %v1016
      %v1631 = vunpack.c.l.b16 %v1017
      %v1632 = vunpack.c.l.b16 %v1018
      %v1633 = vunpack.c.l.b16 %v1019
      %v1634 = vunpack.c.l.b16 %v1020
      %v1635 = vunpack.c.l.b16 %v1021
      %v1636 = vunpack.c.l.b16 %v1022
      %v1637 = vunpack.c.l.b16 %v1023
      %v1638 = vunpack.c.l.b16 %v1024
      %v1639 = vunpack.c.l.b16 %v1025
      %v1640 = vunpack.c.l.b16 %v1026
      %v1641 = vunpack.c.l.b16 %v1027
      %v1642 = vunpack.c.l.b16 %v1028
      %v1643 = vunpack.c.l.b16 %v1029
      %v1644 = vunpack.c.l.b16 %v1030
      %v1645 = vunpack.c.l.b16 %v1031
      %v1646 = vunpack.c.l.b16 %v1032
      %v1647 = vunpack.c.l.b16 %v1033
      %v1648 = vunpack.c.l.b16 %v1034
      %v1649 = vunpack.c.l.b16 %v1035
      %v1650 = vunpack.c.l.b16 %v1036
      %v1651 = vunpack.c.l.b16 %v1037
      %v1652 = vunpack.c.l.b16 %v1038
      %v1653 = vunpack.c.l.b16 %v1039
      %v1654 = vunpack.c.l.b16 %v1040
      %v1655 = vunpack.c.l.b16 %v1041
      %v1656 = vunpack.c.l.b16 %v1042
      %v1657 = vunpack.c.l.b16 %v1043
      %v1658 = vunpack.c.l.b16 %v1044
      %v1659 = vunpack.c.l.b16 %v1045
      %v1660 = vpack.c.b16 %v1613, %v1612
      %v1661 = vpack.c.b16 %v1615, %v1614
      %v1662 = vpack.c.b16 %v1617, %v1616
      %v1663 = vpack.c.b16 %v1619, %v1618
      %v1664 = vpack.c.b16 %v1621, %v1620
      %v1665 = vpack.c.b16 %v1623, %v1622
      %v1666 = vpack.c.b16 %v1625, %v1624
      %v1667 = vpack.c.b16 %v1627, %v1626
      %v1668 = vpack.c.b16 %v1629, %v1628
      %v1669 = vpack.c.b16 %v1631, %v1630
      %v1670 = vpack.c.b16 %v1633, %v1632
      %v1671 = vpack.c.b16 %v1635, %v1634
      %v1672 = vpack.c.b16 %v1637, %v1636
      %v1673 = vpack.c.b16 %v1639, %v1638
      %v1674 = vpack.c.b16 %v1641, %v1640
      %v1675 = vpack.c.b16 %v1643, %v1642
      %v1676 = vpack.c.b16 %v1645, %v1644
      %v1677 = vpack.c.b16 %v1647, %v1646
      %v1678 = vpack.c.b16 %v1649, %v1648
      %v1679 = vpack.c.b16 %v1651, %v1650
      %v1680 = vpack.c.b16 %v1653, %v1652
      %v1681 = vpack.c.b16 %v1655, %v1654
      %v1682 = vpack.c.b16 %v1657, %v1656
      %v1683 = vpack.c.b16 %v1659, %v1658
      %1708 = vmatprep.subr.bf16.mxu0 0
      %1709 = vmatpush1.bf16.msra.mxu0 %v1660
      %1710 = vmatprep.subr.bf16.mxu0 0
      %1711 = vmatpush1.bf16.msra.mxu0 %v1661
      %1712 = vmatprep.subr.bf16.mxu0 0
      %1713 = vmatpush1.bf16.msra.mxu0 %v1662
      %1714 = vmatprep.subr.bf16.mxu0 0
      %1715 = vmatpush1.bf16.msra.mxu0 %v1663
      %1716 = vmatprep.subr.bf16.mxu0 0
      %1717 = vmatpush1.bf16.msra.mxu0 %v1664
      %1718 = vmatprep.subr.bf16.mxu0 0
      %1719 = vmatpush1.bf16.msra.mxu0 %v1665
      %1720 = vmatprep.subr.bf16.mxu0 0
      %1721 = vmatpush1.bf16.msra.mxu0 %v1666
      %1722 = vmatprep.subr.bf16.mxu0 0
      %1723 = vmatpush1.bf16.msra.mxu0 %v1667
      %1724 = vmatprep.subr.bf16.mxu0 0
      %1725 = vmatpush1.bf16.msra.mxu0 %v1668
      %1726 = vmatprep.subr.bf16.mxu0 0
      %1727 = vmatpush1.bf16.msra.mxu0 %v1669
      %1728 = vmatprep.subr.bf16.mxu0 0
      %1729 = vmatpush1.bf16.msra.mxu0 %v1670
      %1730 = vmatprep.subr.bf16.mxu0 0
      %1731 = vmatpush1.bf16.msra.mxu0 %v1671
      %1732 = vmatprep.subr.bf16.mxu0 0
      %1733 = vmatpush1.bf16.msra.mxu0 %v1672
      %1734 = vmatprep.subr.bf16.mxu0 0
      %1735 = vmatpush1.bf16.msra.mxu0 %v1673
      %1736 = vmatprep.subr.bf16.mxu0 0
      %1737 = vmatpush1.bf16.msra.mxu0 %v1674
      %1738 = vmatprep.subr.bf16.mxu0 0
      %1739 = vmatpush1.bf16.msra.mxu0 %v1675
      %1740 = vmatprep.mubr.bf16.mxu0 %v951
      %1741 = vmatmul.mubr.bf16.gmra.mrb[0].mxu0 %v950
      %v1742 = vpop.f32.mrb[0].mxu0
      %v1743 = vadd.f32 %v1438, %v1742
      %v1744 = vpop.f32.mrb[0].mxu0
      %v1745 = vpop.f32.mrb[0].mxu0
      %v1746 = vadd.f32 %v1441, %v1745
      %v1747 = vpop.f32.mrb[0].mxu0
      %1748 = vmatprep.mubr.bf16.mxu0 %v954
      %1749 = vmatmul.mubr.bf16.gmra.mrb[0].mxu0 %v953
      %v1750 = vpop.f32.mrb[0].mxu0
      %v1751 = vadd.f32 %v1446, %v1750
      %v1752 = vpop.f32.mrb[0].mxu0
      %v1753 = vpop.f32.mrb[0].mxu0
      %v1754 = vadd.f32 %v1449, %v1753
      %v1755 = vpop.f32.mrb[0].mxu0
      %1756 = vmatprep.mubr.bf16.mxu0 %v957
      %1757 = vmatmul.mubr.bf16.gmra.mrb[0].mxu0 %v956
      %v1758 = vpop.f32.mrb[0].mxu0
      %v1759 = vadd.f32 %v1454, %v1758
      %v1760 = vpop.f32.mrb[0].mxu0
      %v1761 = vpop.f32.mrb[0].mxu0
      %v1762 = vadd.f32 %v1457, %v1761
      %v1763 = vpop.f32.mrb[0].mxu0
      %1764 = vmatprep.mubr.bf16.mxu0 %v960
      %1765 = vmatmul.mubr.bf16.gmra.mrb[0].mxu0 %v959
      %v1766 = vpop.f32.mrb[0].mxu0
      %v1767 = vadd.f32 %v1462, %v1766
      %v1768 = vpop.f32.mrb[0].mxu0
      %v1769 = vpop.f32.mrb[0].mxu0
      %v1770 = vadd.f32 %v1465, %v1769
      %v1771 = vpop.f32.mrb[0].mxu0
      %1772 = vmatprep.mubr.bf16.mxu0 %v963
      %1773 = vmatmul.mubr.bf16.gmra.mrb[0].mxu0 %v962
      %v1774 = vpop.f32.mrb[0].mxu0
      %v1775 = vadd.f32 %v1470, %v1774
      %v1776 = vpop.f32.mrb[0].mxu0
      %v1777 = vpop.f32.mrb[0].mxu0
      %v1778 = vadd.f32 %v1473, %v1777
      %v1779 = vpop.f32.mrb[0].mxu0
      %1780 = vmatprep.mubr.bf16.mxu0 %v966
      %1781 = vmatmul.mubr.bf16.gmra.mrb[0].mxu0 %v965
      %v1782 = vpop.f32.mrb[0].mxu0
      %v1783 = vadd.f32 %v1478, %v1782
      %v1784 = vpop.f32.mrb[0].mxu0
      %v1785 = vpop.f32.mrb[0].mxu0
      %v1786 = vadd.f32 %v1481, %v1785
      %v1787 = vpop.f32.mrb[0].mxu0
      %1788 = vmatprep.mubr.bf16.mxu0 %v969
      %1789 = vmatmul.mubr.bf16.gmra.mrb[0].mxu0 %v968
      %v1790 = vpop.f32.mrb[0].mxu0
      %v1791 = vadd.f32 %v1486, %v1790
      %v1792 = vpop.f32.mrb[0].mxu0
      %v1793 = vpop.f32.mrb[0].mxu0
      %v1794 = vadd.f32 %v1489, %v1793
      %v1795 = vpop.f32.mrb[0].mxu0
      %1796 = vmatprep.mubr.bf16.mxu0 %v972
      %1797 = vmatmul.mubr.bf16.gmra.mrb[0].mxu0 %v971
      %v1798 = vpop.f32.mrb[0].mxu0
      %v1799 = vadd.f32 %v1494, %v1798
      %v1800 = vpop.f32.mrb[0].mxu0
      %v1801 = vpop.f32.mrb[0].mxu0
      %v1802 = vadd.f32 %v1497, %v1801
      %v1803 = vpop.f32.mrb[0].mxu0
      %1804 = vmatprep.mubr.bf16.mxu0 %v975
      %1805 = vmatmul.mubr.bf16.gmra.mrb[0].mxu0 %v974
      %v1806 = vpop.f32.mrb[0].mxu0
      %v1807 = vadd.f32 %v1502, %v1806
      %v1808 = vpop.f32.mrb[0].mxu0
      %v1809 = vpop.f32.mrb[0].mxu0
      %v1810 = vadd.f32 %v1505, %v1809
      %v1811 = vpop.f32.mrb[0].mxu0
      %1812 = vmatprep.mubr.bf16.mxu0 %v978
      %1813 = vmatmul.mubr.bf16.gmra.mrb[0].mxu0 %v977
      %v1814 = vpop.f32.mrb[0].mxu0
      %v1815 = vadd.f32 %v1510, %v1814
      %v1816 = vpop.f32.mrb[0].mxu0
      %v1817 = vpop.f32.mrb[0].mxu0
      %v1818 = vadd.f32 %v1513, %v1817
      %v1819 = vpop.f32.mrb[0].mxu0
      %1820 = vmatprep.mubr.bf16.mxu0 %v981
      %1821 = vmatmul.mubr.bf16.gmra.mrb[0].mxu0 %v980
      %v1822 = vpop.f32.mrb[0].mxu0
      %v1823 = vadd.f32 %v1518, %v1822
      %v1824 = vpop.f32.mrb[0].mxu0
      %v1825 = vpop.f32.mrb[0].mxu0
      %v1826 = vadd.f32 %v1521, %v1825
      %v1827 = vpop.f32.mrb[0].mxu0
      %1828 = vmatprep.mubr.bf16.mxu0 %v984
      %1829 = vmatmul.mubr.bf16.gmra.mrb[0].mxu0 %v983
      %v1830 = vpop.f32.mrb[0].mxu0
      %v1831 = vadd.f32 %v1526, %v1830
      %v1832 = vpop.f32.mrb[0].mxu0
      %v1833 = vpop.f32.mrb[0].mxu0
      %v1834 = vadd.f32 %v1529, %v1833
      %v1835 = vpop.f32.mrb[0].mxu0
      %1836 = vmatprep.mubr.bf16.mxu0 %v987
      %1837 = vmatmul.mubr.bf16.gmra.mrb[0].mxu0 %v986
      %v1838 = vpop.f32.mrb[0].mxu0
      %v1839 = vadd.f32 %v1534, %v1838
      %v1840 = vpop.f32.mrb[0].mxu0
      %v1841 = vpop.f32.mrb[0].mxu0
      %v1842 = vadd.f32 %v1537, %v1841
      %v1843 = vpop.f32.mrb[0].mxu0
      %1844 = vmatprep.mubr.bf16.mxu0 %v990
      %1845 = vmatmul.mubr.bf16.gmra.mrb[0].mxu0 %v989
      %v1846 = vpop.f32.mrb[0].mxu0
      %v1847 = vadd.f32 %v1542, %v1846
      %v1848 = vpop.f32.mrb[0].mxu0
      %v1849 = vpop.f32.mrb[0].mxu0
      %v1850 = vadd.f32 %v1545, %v1849
      %v1851 = vpop.f32.mrb[0].mxu0
      %1852 = vmatprep.mubr.bf16.mxu0 %v993
      %1853 = vmatmul.mubr.bf16.gmra.mrb[0].mxu0 %v992
      %v1854 = vpop.f32.mrb[0].mxu0
      %v1855 = vadd.f32 %v1550, %v1854
      %v1856 = vpop.f32.mrb[0].mxu0
      %v1857 = vpop.f32.mrb[0].mxu0
      %v1858 = vadd.f32 %v1553, %v1857
      %v1859 = vpop.f32.mrb[0].mxu0
      %1860 = vmatprep.mubr.bf16.mxu0 %v996
      %1861 = vmatmul.mubr.bf16.gmra.mrb[0].mxu0 %v995
      %v1862 = vpop.f32.mrb[0].mxu0
      %v1863 = vadd.f32 %v1558, %v1862
      %v1864 = vpop.f32.mrb[0].mxu0
      %v1865 = vpop.f32.mrb[0].mxu0
      %v1866 = vadd.f32 %v1561, %v1865
      %v1867 = vpop.f32.mrb[0].mxu0
      %1868 = vdwg.mxu0
      %1869 = vmatprep.subr.bf16.mxu0 0
      %1870 = vmatpush1.bf16.msra.mxu0 %v1676
      %1871 = vmatprep.subr.bf16.mxu0 0
      %1872 = vmatpush1.bf16.msra.mxu0 %v1677
      %1873 = vmatprep.subr.bf16.mxu0 0
      %1874 = vmatpush1.bf16.msra.mxu0 %v1678
      %1875 = vmatprep.subr.bf16.mxu0 0
      %1876 = vmatpush1.bf16.msra.mxu0 %v1679
      %1877 = vmatprep.subr.bf16.mxu0 0
      %1878 = vmatpush1.bf16.msra.mxu0 %v1680
      %1879 = vmatprep.subr.bf16.mxu0 0
      %1880 = vmatpush1.bf16.msra.mxu0 %v1681
      %1881 = vmatprep.subr.bf16.mxu0 0
      %1882 = vmatpush1.bf16.msra.mxu0 %v1682
      %1883 = vmatprep.subr.bf16.mxu0 0
      %1884 = vmatpush1.bf16.msra.mxu0 %v1683
      %1885 = vmatprep.subr.bf16.mxu0 0
      %1886 = vmatpush1.bf16.msra.mxu0 0
      %1887 = vmatprep.subr.bf16.mxu0 0
      %1888 = vmatpush1.bf16.msra.mxu0 0
      %1889 = vmatprep.subr.bf16.mxu0 0
      %1890 = vmatpush1.bf16.msra.mxu0 0
      %1891 = vmatprep.subr.bf16.mxu0 0
      %1892 = vmatpush1.bf16.msra.mxu0 0
      %1893 = vmatprep.subr.bf16.mxu0 0
      %1894 = vmatpush1.bf16.msra.mxu0 0
      %1895 = vmatprep.subr.bf16.mxu0 0
      %1896 = vmatpush1.bf16.msra.mxu0 0
      %1897 = vmatprep.subr.bf16.mxu0 0
      %1898 = vmatpush1.bf16.msra.mxu0 0
      %1899 = vmatprep.subr.bf16.mxu0 0
      %1900 = vmatpush1.bf16.msra.mxu0 0
      %1901 = vmatprep.mubr.bf16.mxu0 0
      %1902 = vmatmul.mubr.bf16.gmra.mrb[0].mxu0 %v952
      %v1903 = vpop.f32.mrb[0].mxu0
      %v1904 = vadd.f32 %v1743, %v1903
      %v1905 = vpop.f32.mrb[0].mxu0
      %v1906 = vpop.f32.mrb[0].mxu0
      %v1907 = vadd.f32 %v1746, %v1906
      %v1908 = vpop.f32.mrb[0].mxu0
      %1909 = vmatprep.mubr.bf16.mxu0 0
      %1910 = vmatmul.mubr.bf16.gmra.mrb[0].mxu0 %v955
      %v1911 = vpop.f32.mrb[0].mxu0
      %v1912 = vadd.f32 %v1751, %v1911
      %v1913 = vpop.f32.mrb[0].mxu0
      %v1914 = vpop.f32.mrb[0].mxu0
      %v1915 = vadd.f32 %v1754, %v1914
      %v1916 = vpop.f32.mrb[0].mxu0
      %1917 = vmatprep.mubr.bf16.mxu0 0
      %1918 = vmatmul.mubr.bf16.gmra.mrb[0].mxu0 %v958
      %v1919 = vpop.f32.mrb[0].mxu0
      %v1920 = vadd.f32 %v1759, %v1919
      %v1921 = vpop.f32.mrb[0].mxu0
      %v1922 = vpop.f32.mrb[0].mxu0
      %v1923 = vadd.f32 %v1762, %v1922
      %v1924 = vpop.f32.mrb[0].mxu0
      %1925 = vmatprep.mubr.bf16.mxu0 0
      %1926 = vmatmul.mubr.bf16.gmra.mrb[0].mxu0 %v961
      %v1927 = vpop.f32.mrb[0].mxu0
      %v1928 = vadd.f32 %v1767, %v1927
      %v1929 = vpop.f32.mrb[0].mxu0
      %v1930 = vpop.f32.mrb[0].mxu0
      %v1931 = vadd.f32 %v1770, %v1930
      %v1932 = vpop.f32.mrb[0].mxu0
      %1933 = vmatprep.mubr.bf16.mxu0 0
      %1934 = vmatmul.mubr.bf16.gmra.mrb[0].mxu0 %v964
      %v1935 = vpop.f32.mrb[0].mxu0
      %v1936 = vadd.f32 %v1775, %v1935
      %v1937 = vpop.f32.mrb[0].mxu0
      %v1938 = vpop.f32.mrb[0].mxu0
      %v1939 = vadd.f32 %v1778, %v1938
      %v1940 = vpop.f32.mrb[0].mxu0
      %1941 = vmatprep.mubr.bf16.mxu0 0
      %1942 = vmatmul.mubr.bf16.gmra.mrb[0].mxu0 %v967
      %v1943 = vpop.f32.mrb[0].mxu0
      %v1944 = vadd.f32 %v1783, %v1943
      %v1945 = vpop.f32.mrb[0].mxu0
      %v1946 = vpop.f32.mrb[0].mxu0
      %v1947 = vadd.f32 %v1786, %v1946
      %v1948 = vpop.f32.mrb[0].mxu0
      %1949 = vmatprep.mubr.bf16.mxu0 0
      %1950 = vmatmul.mubr.bf16.gmra.mrb[0].mxu0 %v970
      %v1951 = vpop.f32.mrb[0].mxu0
      %v1952 = vadd.f32 %v1791, %v1951
      %v1953 = vpop.f32.mrb[0].mxu0
      %v1954 = vpop.f32.mrb[0].mxu0
      %v1955 = vadd.f32 %v1794, %v1954
      %v1956 = vpop.f32.mrb[0].mxu0
      %1957 = vmatprep.mubr.bf16.mxu0 0
      %1958 = vmatmul.mubr.bf16.gmra.mrb[0].mxu0 %v973
      %v1959 = vpop.f32.mrb[0].mxu0
      %v1960 = vadd.f32 %v1799, %v1959
      %v1961 = vpop.f32.mrb[0].mxu0
      %v1962 = vpop.f32.mrb[0].mxu0
      %v1963 = vadd.f32 %v1802, %v1962
      %v1964 = vpop.f32.mrb[0].mxu0
      %1965 = vmatprep.mubr.bf16.mxu0 0
      %1966 = vmatmul.mubr.bf16.gmra.mrb[0].mxu0 %v976
      %v1967 = vpop.f32.mrb[0].mxu0
      %v1968 = vadd.f32 %v1807, %v1967
      %v1969 = vpop.f32.mrb[0].mxu0
      %v1970 = vpop.f32.mrb[0].mxu0
      %v1971 = vadd.f32 %v1810, %v1970
      %v1972 = vpop.f32.mrb[0].mxu0
      %1973 = vmatprep.mubr.bf16.mxu0 0
      %1974 = vmatmul.mubr.bf16.gmra.mrb[0].mxu0 %v979
      %v1975 = vpop.f32.mrb[0].mxu0
      %v1976 = vadd.f32 %v1815, %v1975
      %v1977 = vpop.f32.mrb[0].mxu0
      %v1978 = vpop.f32.mrb[0].mxu0
      %v1979 = vadd.f32 %v1818, %v1978
      %v1980 = vpop.f32.mrb[0].mxu0
      %1981 = vmatprep.mubr.bf16.mxu0 0
      %1982 = vmatmul.mubr.bf16.gmra.mrb[0].mxu0 %v982
      %v1983 = vpop.f32.mrb[0].mxu0
      %v1984 = vadd.f32 %v1823, %v1983
      %v1985 = vpop.f32.mrb[0].mxu0
      %v1986 = vpop.f32.mrb[0].mxu0
      %v1987 = vadd.f32 %v1826, %v1986
      %v1988 = vpop.f32.mrb[0].mxu0
      %1989 = vmatprep.mubr.bf16.mxu0 0
      %1990 = vmatmul.mubr.bf16.gmra.mrb[0].mxu0 %v985
      %v1991 = vpop.f32.mrb[0].mxu0
      %v1992 = vadd.f32 %v1831, %v1991
      %v1993 = vpop.f32.mrb[0].mxu0
      %v1994 = vpop.f32.mrb[0].mxu0
      %v1995 = vadd.f32 %v1834, %v1994
      %v1996 = vpop.f32.mrb[0].mxu0
      %1997 = vmatprep.mubr.bf16.mxu0 0
      %1998 = vmatmul.mubr.bf16.gmra.mrb[0].mxu0 %v988
      %v1999 = vpop.f32.mrb[0].mxu0
      %v2000 = vadd.f32 %v1839, %v1999
      %v2001 = vpop.f32.mrb[0].mxu0
      %v2002 = vpop.f32.mrb[0].mxu0
      %v2003 = vadd.f32 %v1842, %v2002
      %v2004 = vpop.f32.mrb[0].mxu0
      %2005 = vmatprep.mubr.bf16.mxu0 0
      %2006 = vmatmul.mubr.bf16.gmra.mrb[0].mxu0 %v991
      %v2007 = vpop.f32.mrb[0].mxu0
      %v2008 = vadd.f32 %v1847, %v2007
      %v2009 = vpop.f32.mrb[0].mxu0
      %v2010 = vpop.f32.mrb[0].mxu0
      %v2011 = vadd.f32 %v1850, %v2010
      %v2012 = vpop.f32.mrb[0].mxu0
      %2013 = vmatprep.mubr.bf16.mxu0 0
      %2014 = vmatmul.mubr.bf16.gmra.mrb[0].mxu0 %v994
      %v2015 = vpop.f32.mrb[0].mxu0
      %v2016 = vadd.f32 %v1855, %v2015
      %v2017 = vpop.f32.mrb[0].mxu0
      %v2018 = vpop.f32.mrb[0].mxu0
      %v2019 = vadd.f32 %v1858, %v2018
      %v2020 = vpop.f32.mrb[0].mxu0
      %2021 = vmatprep.mubr.bf16.mxu0 0
      %2022 = vmatmul.mubr.bf16.gmra.mrb[0].mxu0 %v997
      %v2023 = vpop.f32.mrb[0].mxu0
      %v2024 = vadd.f32 %v1863, %v2023
      %v2025 = vpop.f32.mrb[0].mxu0
      %v2026 = vpop.f32.mrb[0].mxu0
      %v2027 = vadd.f32 %v1866, %v2026
      %v2028 = vpop.f32.mrb[0].mxu0
      %2029 = vdwg.mxu0
      %v2030 = vld [vmem:[#allocation2 + $0x30] sm:$0xff]
      %v2031 = vld [vmem:[#allocation2 + $0x38] sm:$0xff]
      %v2032 = vld [vmem:[#allocation2 + $0x40] sm:$0xff]
      %v2033 = vld [vmem:[#allocation2 + $0x48] sm:$0xff]
      %v2034 = vld [vmem:[#allocation2 + $0x50] sm:$0xff]
      %v2035 = vld [vmem:[#allocation2 + $0x58] sm:$0xff]
      %v2036 = vld [vmem:[#allocation2 + $0x60] sm:$0xff]
      %v2037 = vld [vmem:[#allocation2 + $0x68] sm:$0xff]
      %v2038 = vld [vmem:[#allocation2 + $0x70] sm:$0xff]
      %v2039 = vld [vmem:[#allocation2 + $0x78] sm:$0xff]
      %v2040 = vld [vmem:[#allocation2 + $0x80] sm:$0xff]
      %v2041 = vld [vmem:[#allocation2 + $0x88] sm:$0xff]
      %v2042 = vld [vmem:[#allocation2 + $0x90] sm:$0xff]
      %v2043 = vld [vmem:[#allocation2 + $0x98] sm:$0xff]
      %v2044 = vld [vmem:[#allocation2 + $0xa0] sm:$0xff]
      %v2045 = vld [vmem:[#allocation2 + $0xa8] sm:$0xff]
      %v2046 = vld [vmem:[#allocation2 + $0xb0] sm:$0xff]
      %v2047 = vld [vmem:[#allocation2 + $0xb8] sm:$0xff]
      %v2048 = vld [vmem:[#allocation2 + $0xc0] sm:$0xff]
      %v2049 = vld [vmem:[#allocation2 + $0xc8] sm:$0xff]
      %v2050 = vld [vmem:[#allocation2 + $0xd0] sm:$0xff]
      %v2051 = vld [vmem:[#allocation2 + $0xd8] sm:$0xff]
      %v2052 = vld [vmem:[#allocation2 + $0xe0] sm:$0xff]
      %v2053 = vld [vmem:[#allocation2 + $0xe8] sm:$0xff]
      %v2054 = vld [vmem:[#allocation2 + $0xf0] sm:$0xff]
      %v2055 = vld [vmem:[#allocation2 + $0xf8] sm:$0xff]
      %v2056 = vld [vmem:[#allocation2 + $0x100] sm:$0xff]
      %v2057 = vld [vmem:[#allocation2 + $0x108] sm:$0xff]
      %v2058 = vld [vmem:[#allocation2 + $0x110] sm:$0xff]
      %v2059 = vld [vmem:[#allocation2 + $0x118] sm:$0xff]
      %v2060 = vld [vmem:[#allocation2 + $0x120] sm:$0xff]
      %v2061 = vld [vmem:[#allocation2 + $0x128] sm:$0xff]
      %v2062 = vld [vmem:[#allocation2 + $0x130] sm:$0xff]
      %v2063 = vld [vmem:[#allocation2 + $0x138] sm:$0xff]
      %v2064 = vld [vmem:[#allocation2 + $0x140] sm:$0xff]
      %v2065 = vld [vmem:[#allocation2 + $0x148] sm:$0xff]
      %v2066 = vld [vmem:[#allocation2 + $0x150] sm:$0xff]
      %v2067 = vld [vmem:[#allocation2 + $0x158] sm:$0xff]
      %v2068 = vld [vmem:[#allocation2 + $0x160] sm:$0xff]
      %v2069 = vld [vmem:[#allocation2 + $0x168] sm:$0xff]
      %v2070 = vld [vmem:[#allocation2 + $0x170] sm:$0xff]
      %v2071 = vld [vmem:[#allocation2 + $0x178] sm:$0xff]
      %v2072 = vld [vmem:[#allocation2 + $0x180] sm:$0xff]
      %v2073 = vld [vmem:[#allocation2 + $0x188] sm:$0xff]
      %v2074 = vld [vmem:[#allocation2 + $0x190] sm:$0xff]
      %v2075 = vld [vmem:[#allocation2 + $0x198] sm:$0xff]
      %v2076 = vld [vmem:[#allocation2 + $0x1a0] sm:$0xff]
      %v2077 = vld [vmem:[#allocation2 + $0x1a8] sm:$0xff]
      %s2078 = scalar_lea.vmem %s1, 384
      %v2079 = vld [vmem:[%s2078] sm:$0xf]
      %v2080 = vld [vmem:[%s2078 + $0x4] sm:$0xf]
      %v2081 = vld [vmem:[%s2078 + $0x8] sm:$0xf]
      %v2082 = vld [vmem:[%s2078 + $0xc] sm:$0xf]
      %v2083 = vld [vmem:[%s2078 + $0x10] sm:$0xf]
      %v2084 = vld [vmem:[%s2078 + $0x14] sm:$0xf]
      %v2085 = vld [vmem:[%s2078 + $0x18] sm:$0xf]
      %v2086 = vld [vmem:[%s2078 + $0x1c] sm:$0xf]
      %v2087 = vld [vmem:[%s2078 + $0x20] sm:$0xf]
      %v2088 = vld [vmem:[%s2078 + $0x24] sm:$0xf]
      %v2089 = vld [vmem:[%s2078 + $0x28] sm:$0xf]
      %v2090 = vld [vmem:[%s2078 + $0x2c] sm:$0xf]
      %v2091 = vld [vmem:[%s2078 + $0x30] sm:$0xf]
      %v2092 = vld [vmem:[%s2078 + $0x34] sm:$0xf]
      %v2093 = vld [vmem:[%s2078 + $0x38] sm:$0xf]
      %v2094 = vld [vmem:[%s2078 + $0x3c] sm:$0xf]
      %v2095 = vld [vmem:[%s2078 + $0x40] sm:$0xf]
      %v2096 = vld [vmem:[%s2078 + $0x44] sm:$0xf]
      %v2097 = vld [vmem:[%s2078 + $0x48] sm:$0xf]
      %v2098 = vld [vmem:[%s2078 + $0x4c] sm:$0xf]
      %v2099 = vld [vmem:[%s2078 + $0x50] sm:$0xf]
      %v2100 = vld [vmem:[%s2078 + $0x54] sm:$0xf]
      %v2101 = vld [vmem:[%s2078 + $0x58] sm:$0xf]
      %v2102 = vld [vmem:[%s2078 + $0x5c] sm:$0xf]
      %v2103 = vld [vmem:[%s2078 + $0x60] sm:$0xf]
      %v2104 = vld [vmem:[%s2078 + $0x64] sm:$0xf]
      %v2105 = vld [vmem:[%s2078 + $0x68] sm:$0xf]
      %v2106 = vld [vmem:[%s2078 + $0x6c] sm:$0xf]
      %v2107 = vld [vmem:[%s2078 + $0x70] sm:$0xf]
      %v2108 = vld [vmem:[%s2078 + $0x74] sm:$0xf]
      %v2109 = vld [vmem:[%s2078 + $0x78] sm:$0xf]
      %v2110 = vld [vmem:[%s2078 + $0x7c] sm:$0xf]
      %v2111 = vld [vmem:[%s2078 + $0x80] sm:$0xf]
      %v2112 = vld [vmem:[%s2078 + $0x84] sm:$0xf]
      %v2113 = vld [vmem:[%s2078 + $0x88] sm:$0xf]
      %v2114 = vld [vmem:[%s2078 + $0x8c] sm:$0xf]
      %v2115 = vld [vmem:[%s2078 + $0x90] sm:$0xf]
      %v2116 = vld [vmem:[%s2078 + $0x94] sm:$0xf]
      %v2117 = vld [vmem:[%s2078 + $0x98] sm:$0xf]
      %v2118 = vld [vmem:[%s2078 + $0x9c] sm:$0xf]
      %v2119 = vld [vmem:[%s2078 + $0xa0] sm:$0xf]
      %v2120 = vld [vmem:[%s2078 + $0xa4] sm:$0xf]
      %v2121 = vld [vmem:[%s2078 + $0xa8] sm:$0xf]
      %v2122 = vld [vmem:[%s2078 + $0xac] sm:$0xf]
      %v2123 = vld [vmem:[%s2078 + $0xb0] sm:$0xf]
      %v2124 = vld [vmem:[%s2078 + $0xb4] sm:$0xf]
      %v2125 = vld [vmem:[%s2078 + $0xb8] sm:$0xf]
      %v2126 = vld [vmem:[%s2078 + $0xbc] sm:$0xf]
      %v2175 = vunpack.c.l.b16 %v2079
      %v2176 = vunpack.c.l.b16 %v2080
      %v2177 = vunpack.c.l.b16 %v2081
      %v2178 = vunpack.c.l.b16 %v2082
      %v2179 = vunpack.c.l.b16 %v2083
      %v2180 = vunpack.c.l.b16 %v2084
      %v2181 = vunpack.c.l.b16 %v2085
      %v2182 = vunpack.c.l.b16 %v2086
      %v2183 = vunpack.c.l.b16 %v2087
      %v2184 = vunpack.c.l.b16 %v2088
      %v2185 = vunpack.c.l.b16 %v2089
      %v2186 = vunpack.c.l.b16 %v2090
      %v2187 = vunpack.c.l.b16 %v2091
      %v2188 = vunpack.c.l.b16 %v2092
      %v2189 = vunpack.c.l.b16 %v2093
      %v2190 = vunpack.c.l.b16 %v2094
      %v2191 = vunpack.c.l.b16 %v2095
      %v2192 = vunpack.c.l.b16 %v2096
      %v2193 = vunpack.c.l.b16 %v2097
      %v2194 = vunpack.c.l.b16 %v2098
      %v2195 = vunpack.c.l.b16 %v2099
      %v2196 = vunpack.c.l.b16 %v2100
      %v2197 = vunpack.c.l.b16 %v2101
      %v2198 = vunpack.c.l.b16 %v2102
      %v2199 = vunpack.c.l.b16 %v2103
      %v2200 = vunpack.c.l.b16 %v2104
      %v2201 = vunpack.c.l.b16 %v2105
      %v2202 = vunpack.c.l.b16 %v2106
      %v2203 = vunpack.c.l.b16 %v2107
      %v2204 = vunpack.c.l.b16 %v2108
      %v2205 = vunpack.c.l.b16 %v2109
      %v2206 = vunpack.c.l.b16 %v2110
      %v2207 = vunpack.c.l.b16 %v2111
      %v2208 = vunpack.c.l.b16 %v2112
      %v2209 = vunpack.c.l.b16 %v2113
      %v2210 = vunpack.c.l.b16 %v2114
      %v2211 = vunpack.c.l.b16 %v2115
      %v2212 = vunpack.c.l.b16 %v2116
      %v2213 = vunpack.c.l.b16 %v2117
      %v2214 = vunpack.c.l.b16 %v2118
      %v2215 = vunpack.c.l.b16 %v2119
      %v2216 = vunpack.c.l.b16 %v2120
      %v2217 = vunpack.c.l.b16 %v2121
      %v2218 = vunpack.c.l.b16 %v2122
      %v2219 = vunpack.c.l.b16 %v2123
      %v2220 = vunpack.c.l.b16 %v2124
      %v2221 = vunpack.c.l.b16 %v2125
      %v2222 = vunpack.c.l.b16 %v2126
      %v2223 = vpack.c.b16 %v2176, %v2175
      %v2224 = vpack.c.b16 %v2178, %v2177
      %v2225 = vpack.c.b16 %v2180, %v2179
      %v2226 = vpack.c.b16 %v2182, %v2181
      %v2227 = vpack.c.b16 %v2184, %v2183
      %v2228 = vpack.c.b16 %v2186, %v2185
      %v2229 = vpack.c.b16 %v2188, %v2187
      %v2230 = vpack.c.b16 %v2190, %v2189
      %v2231 = vpack.c.b16 %v2192, %v2191
      %v2232 = vpack.c.b16 %v2194, %v2193
      %v2233 = vpack.c.b16 %v2196, %v2195
      %v2234 = vpack.c.b16 %v2198, %v2197
      %v2235 = vpack.c.b16 %v2200, %v2199
      %v2236 = vpack.c.b16 %v2202, %v2201
      %v2237 = vpack.c.b16 %v2204, %v2203
      %v2238 = vpack.c.b16 %v2206, %v2205
      %v2239 = vpack.c.b16 %v2208, %v2207
      %v2240 = vpack.c.b16 %v2210, %v2209
      %v2241 = vpack.c.b16 %v2212, %v2211
      %v2242 = vpack.c.b16 %v2214, %v2213
      %v2243 = vpack.c.b16 %v2216, %v2215
      %v2244 = vpack.c.b16 %v2218, %v2217
      %v2245 = vpack.c.b16 %v2220, %v2219
      %v2246 = vpack.c.b16 %v2222, %v2221
      %2271 = vmatprep.subr.bf16.mxu0 0
      %2272 = vmatpush1.bf16.msra.mxu0 %v2223
      %2273 = vmatprep.subr.bf16.mxu0 0
      %2274 = vmatpush1.bf16.msra.mxu0 %v2224
      %2275 = vmatprep.subr.bf16.mxu0 0
      %2276 = vmatpush1.bf16.msra.mxu0 %v2225
      %2277 = vmatprep.subr.bf16.mxu0 0
      %2278 = vmatpush1.bf16.msra.mxu0 %v2226
      %2279 = vmatprep.subr.bf16.mxu0 0
      %2280 = vmatpush1.bf16.msra.mxu0 %v2227
      %2281 = vmatprep.subr.bf16.mxu0 0
      %2282 = vmatpush1.bf16.msra.mxu0 %v2228
      %2283 = vmatprep.subr.bf16.mxu0 0
      %2284 = vmatpush1.bf16.msra.mxu0 %v2229
      %2285 = vmatprep.subr.bf16.mxu0 0
      %2286 = vmatpush1.bf16.msra.mxu0 %v2230
      %2287 = vmatprep.subr.bf16.mxu0 0
      %2288 = vmatpush1.bf16.msra.mxu0 %v2231
      %2289 = vmatprep.subr.bf16.mxu0 0
      %2290 = vmatpush1.bf16.msra.mxu0 %v2232
      %2291 = vmatprep.subr.bf16.mxu0 0
      %2292 = vmatpush1.bf16.msra.mxu0 %v2233
      %2293 = vmatprep.subr.bf16.mxu0 0
      %2294 = vmatpush1.bf16.msra.mxu0 %v2234
      %2295 = vmatprep.subr.bf16.mxu0 0
      %2296 = vmatpush1.bf16.msra.mxu0 %v2235
      %2297 = vmatprep.subr.bf16.mxu0 0
      %2298 = vmatpush1.bf16.msra.mxu0 %v2236
      %2299 = vmatprep.subr.bf16.mxu0 0
      %2300 = vmatpush1.bf16.msra.mxu0 %v2237
      %2301 = vmatprep.subr.bf16.mxu0 0
      %2302 = vmatpush1.bf16.msra.mxu0 %v2238
      %2303 = vmatprep.mubr.bf16.mxu0 %v2031
      %2304 = vmatmul.mubr.bf16.gmra.mrb[0].mxu0 %v2030
      %v2305 = vpop.f32.mrb[0].mxu0
      %v2306 = vadd.f32 0.0, %v2305
      %v2307 = vpop.f32.mrb[0].mxu0
      %v2308 = vpop.f32.mrb[0].mxu0
      %v2309 = vadd.f32 0.0, %v2308
      %v2310 = vpop.f32.mrb[0].mxu0
      %2311 = vmatprep.mubr.bf16.mxu0 %v2034
      %2312 = vmatmul.mubr.bf16.gmra.mrb[0].mxu0 %v2033
      %v2313 = vpop.f32.mrb[0].mxu0
      %v2314 = vadd.f32 0.0, %v2313
      %v2315 = vpop.f32.mrb[0].mxu0
      %v2316 = vpop.f32.mrb[0].mxu0
      %v2317 = vadd.f32 0.0, %v2316
      %v2318 = vpop.f32.mrb[0].mxu0
      %2319 = vmatprep.mubr.bf16.mxu0 %v2037
      %2320 = vmatmul.mubr.bf16.gmra.mrb[0].mxu0 %v2036
      %v2321 = vpop.f32.mrb[0].mxu0
      %v2322 = vadd.f32 0.0, %v2321
      %v2323 = vpop.f32.mrb[0].mxu0
      %v2324 = vpop.f32.mrb[0].mxu0
      %v2325 = vadd.f32 0.0, %v2324
      %v2326 = vpop.f32.mrb[0].mxu0
      %2327 = vmatprep.mubr.bf16.mxu0 %v2040
      %2328 = vmatmul.mubr.bf16.gmra.mrb[0].mxu0 %v2039
      %v2329 = vpop.f32.mrb[0].mxu0
      %v2330 = vadd.f32 0.0, %v2329
      %v2331 = vpop.f32.mrb[0].mxu0
      %v2332 = vpop.f32.mrb[0].mxu0
      %v2333 = vadd.f32 0.0, %v2332
      %v2334 = vpop.f32.mrb[0].mxu0
      %2335 = vmatprep.mubr.bf16.mxu0 %v2043
      %2336 = vmatmul.mubr.bf16.gmra.mrb[0].mxu0 %v2042
      %v2337 = vpop.f32.mrb[0].mxu0
      %v2338 = vadd.f32 0.0, %v2337
      %v2339 = vpop.f32.mrb[0].mxu0
      %v2340 = vpop.f32.mrb[0].mxu0
      %v2341 = vadd.f32 0.0, %v2340
      %v2342 = vpop.f32.mrb[0].mxu0
      %2343 = vmatprep.mubr.bf16.mxu0 %v2046
      %2344 = vmatmul.mubr.bf16.gmra.mrb[0].mxu0 %v2045
      %v2345 = vpop.f32.mrb[0].mxu0
      %v2346 = vadd.f32 0.0, %v2345
      %v2347 = vpop.f32.mrb[0].mxu0
      %v2348 = vpop.f32.mrb[0].mxu0
      %v2349 = vadd.f32 0.0, %v2348
      %v2350 = vpop.f32.mrb[0].mxu0
      %2351 = vmatprep.mubr.bf16.mxu0 %v2049
      %2352 = vmatmul.mubr.bf16.gmra.mrb[0].mxu0 %v2048
      %v2353 = vpop.f32.mrb[0].mxu0
      %v2354 = vadd.f32 0.0, %v2353
      %v2355 = vpop.f32.mrb[0].mxu0
      %v2356 = vpop.f32.mrb[0].mxu0
      %v2357 = vadd.f32 0.0, %v2356
      %v2358 = vpop.f32.mrb[0].mxu0
      %2359 = vmatprep.mubr.bf16.mxu0 %v2052
      %2360 = vmatmul.mubr.bf16.gmra.mrb[0].mxu0 %v2051
      %v2361 = vpop.f32.mrb[0].mxu0
      %v2362 = vadd.f32 0.0, %v2361
      %v2363 = vpop.f32.mrb[0].mxu0
      %v2364 = vpop.f32.mrb[0].mxu0
      %v2365 = vadd.f32 0.0, %v2364
      %v2366 = vpop.f32.mrb[0].mxu0
      %2367 = vmatprep.mubr.bf16.mxu0 %v2055
      %2368 = vmatmul.mubr.bf16.gmra.mrb[0].mxu0 %v2054
      %v2369 = vpop.f32.mrb[0].mxu0
      %v2370 = vadd.f32 0.0, %v2369
      %v2371 = vpop.f32.mrb[0].mxu0
      %v2372 = vpop.f32.mrb[0].mxu0
      %v2373 = vadd.f32 0.0, %v2372
      %v2374 = vpop.f32.mrb[0].mxu0
      %2375 = vmatprep.mubr.bf16.mxu0 %v2058
      %2376 = vmatmul.mubr.bf16.gmra.mrb[0].mxu0 %v2057
      %v2377 = vpop.f32.mrb[0].mxu0
      %v2378 = vadd.f32 0.0, %v2377
      %v2379 = vpop.f32.mrb[0].mxu0
      %v2380 = vpop.f32.mrb[0].mxu0
      %v2381 = vadd.f32 0.0, %v2380
      %v2382 = vpop.f32.mrb[0].mxu0
      %2383 = vmatprep.mubr.bf16.mxu0 %v2061
      %2384 = vmatmul.mubr.bf16.gmra.mrb[0].mxu0 %v2060
      %v2385 = vpop.f32.mrb[0].mxu0
      %v2386 = vadd.f32 0.0, %v2385
      %v2387 = vpop.f32.mrb[0].mxu0
      %v2388 = vpop.f32.mrb[0].mxu0
      %v2389 = vadd.f32 0.0, %v2388
      %v2390 = vpop.f32.mrb[0].mxu0
      %2391 = vmatprep.mubr.bf16.mxu0 %v2064
      %2392 = vmatmul.mubr.bf16.gmra.mrb[0].mxu0 %v2063
      %v2393 = vpop.f32.mrb[0].mxu0
      %v2394 = vadd.f32 0.0, %v2393
      %v2395 = vpop.f32.mrb[0].mxu0
      %v2396 = vpop.f32.mrb[0].mxu0
      %v2397 = vadd.f32 0.0, %v2396
      %v2398 = vpop.f32.mrb[0].mxu0
      %2399 = vmatprep.mubr.bf16.mxu0 %v2067
      %2400 = vmatmul.mubr.bf16.gmra.mrb[0].mxu0 %v2066
      %v2401 = vpop.f32.mrb[0].mxu0
      %v2402 = vadd.f32 0.0, %v2401
      %v2403 = vpop.f32.mrb[0].mxu0
      %v2404 = vpop.f32.mrb[0].mxu0
      %v2405 = vadd.f32 0.0, %v2404
      %v2406 = vpop.f32.mrb[0].mxu0
      %2407 = vmatprep.mubr.bf16.mxu0 %v2070
      %2408 = vmatmul.mubr.bf16.gmra.mrb[0].mxu0 %v2069
      %v2409 = vpop.f32.mrb[0].mxu0
      %v2410 = vadd.f32 0.0, %v2409
      %v2411 = vpop.f32.mrb[0].mxu0
      %v2412 = vpop.f32.mrb[0].mxu0
      %v2413 = vadd.f32 0.0, %v2412
      %v2414 = vpop.f32.mrb[0].mxu0
      %2415 = vmatprep.mubr.bf16.mxu0 %v2073
      %2416 = vmatmul.mubr.bf16.gmra.mrb[0].mxu0 %v2072
      %v2417 = vpop.f32.mrb[0].mxu0
      %v2418 = vadd.f32 0.0, %v2417
      %v2419 = vpop.f32.mrb[0].mxu0
      %v2420 = vpop.f32.mrb[0].mxu0
      %v2421 = vadd.f32 0.0, %v2420
      %v2422 = vpop.f32.mrb[0].mxu0
      %2423 = vmatprep.mubr.bf16.mxu0 %v2076
      %2424 = vmatmul.mubr.bf16.gmra.mrb[0].mxu0 %v2075
      %v2425 = vpop.f32.mrb[0].mxu0
      %v2426 = vadd.f32 0.0, %v2425
      %v2427 = vpop.f32.mrb[0].mxu0
      %v2428 = vpop.f32.mrb[0].mxu0
      %v2429 = vadd.f32 0.0, %v2428
      %v2430 = vpop.f32.mrb[0].mxu0
      %2431 = vdwg.mxu0
      %2432 = vmatprep.subr.bf16.mxu0 0
      %2433 = vmatpush1.bf16.msra.mxu0 %v2239
      %2434 = vmatprep.subr.bf16.mxu0 0
      %2435 = vmatpush1.bf16.msra.mxu0 %v2240
      %2436 = vmatprep.subr.bf16.mxu0 0
      %2437 = vmatpush1.bf16.msra.mxu0 %v2241
      %2438 = vmatprep.subr.bf16.mxu0 0
      %2439 = vmatpush1.bf16.msra.mxu0 %v2242
      %2440 = vmatprep.subr.bf16.mxu0 0
      %2441 = vmatpush1.bf16.msra.mxu0 %v2243
      %2442 = vmatprep.subr.bf16.mxu0 0
      %2443 = vmatpush1.bf16.msra.mxu0 %v2244
      %2444 = vmatprep.subr.bf16.mxu0 0
      %2445 = vmatpush1.bf16.msra.mxu0 %v2245
      %2446 = vmatprep.subr.bf16.mxu0 0
      %2447 = vmatpush1.bf16.msra.mxu0 %v2246
      %2448 = vmatprep.subr.bf16.mxu0 0
      %2449 = vmatpush1.bf16.msra.mxu0 0
      %2450 = vmatprep.subr.bf16.mxu0 0
      %2451 = vmatpush1.bf16.msra.mxu0 0
      %2452 = vmatprep.subr.bf16.mxu0 0
      %2453 = vmatpush1.bf16.msra.mxu0 0
      %2454 = vmatprep.subr.bf16.mxu0 0
      %2455 = vmatpush1.bf16.msra.mxu0 0
      %2456 = vmatprep.subr.bf16.mxu0 0
      %2457 = vmatpush1.bf16.msra.mxu0 0
      %2458 = vmatprep.subr.bf16.mxu0 0
      %2459 = vmatpush1.bf16.msra.mxu0 0
      %2460 = vmatprep.subr.bf16.mxu0 0
      %2461 = vmatpush1.bf16.msra.mxu0 0
      %2462 = vmatprep.subr.bf16.mxu0 0
      %2463 = vmatpush1.bf16.msra.mxu0 0
      %2464 = vmatprep.mubr.bf16.mxu0 0
      %2465 = vmatmul.mubr.bf16.gmra.mrb[0].mxu0 %v2032
      %v2466 = vpop.f32.mrb[0].mxu0
      %v2467 = vadd.f32 %v2306, %v2466
      %v2468 = vpop.f32.mrb[0].mxu0
      %v2469 = vpop.f32.mrb[0].mxu0
      %v2470 = vadd.f32 %v2309, %v2469
      %v2471 = vpop.f32.mrb[0].mxu0
      %2472 = vmatprep.mubr.bf16.mxu0 0
      %2473 = vmatmul.mubr.bf16.gmra.mrb[0].mxu0 %v2035
      %v2474 = vpop.f32.mrb[0].mxu0
      %v2475 = vadd.f32 %v2314, %v2474
      %v2476 = vpop.f32.mrb[0].mxu0
      %v2477 = vpop.f32.mrb[0].mxu0
      %v2478 = vadd.f32 %v2317, %v2477
      %v2479 = vpop.f32.mrb[0].mxu0
      %2480 = vmatprep.mubr.bf16.mxu0 0
      %2481 = vmatmul.mubr.bf16.gmra.mrb[0].mxu0 %v2038
      %v2482 = vpop.f32.mrb[0].mxu0
      %v2483 = vadd.f32 %v2322, %v2482
      %v2484 = vpop.f32.mrb[0].mxu0
      %v2485 = vpop.f32.mrb[0].mxu0
      %v2486 = vadd.f32 %v2325, %v2485
      %v2487 = vpop.f32.mrb[0].mxu0
      %2488 = vmatprep.mubr.bf16.mxu0 0
      %2489 = vmatmul.mubr.bf16.gmra.mrb[0].mxu0 %v2041
      %v2490 = vpop.f32.mrb[0].mxu0
      %v2491 = vadd.f32 %v2330, %v2490
      %v2492 = vpop.f32.mrb[0].mxu0
      %v2493 = vpop.f32.mrb[0].mxu0
      %v2494 = vadd.f32 %v2333, %v2493
      %v2495 = vpop.f32.mrb[0].mxu0
      %2496 = vmatprep.mubr.bf16.mxu0 0
      %2497 = vmatmul.mubr.bf16.gmra.mrb[0].mxu0 %v2044
      %v2498 = vpop.f32.mrb[0].mxu0
      %v2499 = vadd.f32 %v2338, %v2498
      %v2500 = vpop.f32.mrb[0].mxu0
      %v2501 = vpop.f32.mrb[0].mxu0
      %v2502 = vadd.f32 %v2341, %v2501
      %v2503 = vpop.f32.mrb[0].mxu0
      %2504 = vmatprep.mubr.bf16.mxu0 0
      %2505 = vmatmul.mubr.bf16.gmra.mrb[0].mxu0 %v2047
      %v2506 = vpop.f32.mrb[0].mxu0
      %v2507 = vadd.f32 %v2346, %v2506
      %v2508 = vpop.f32.mrb[0].mxu0
      %v2509 = vpop.f32.mrb[0].mxu0
      %v2510 = vadd.f32 %v2349, %v2509
      %v2511 = vpop.f32.mrb[0].mxu0
      %2512 = vmatprep.mubr.bf16.mxu0 0
      %2513 = vmatmul.mubr.bf16.gmra.mrb[0].mxu0 %v2050
      %v2514 = vpop.f32.mrb[0].mxu0
      %v2515 = vadd.f32 %v2354, %v2514
      %v2516 = vpop.f32.mrb[0].mxu0
      %v2517 = vpop.f32.mrb[0].mxu0
      %v2518 = vadd.f32 %v2357, %v2517
      %v2519 = vpop.f32.mrb[0].mxu0
      %2520 = vmatprep.mubr.bf16.mxu0 0
      %2521 = vmatmul.mubr.bf16.gmra.mrb[0].mxu0 %v2053
      %v2522 = vpop.f32.mrb[0].mxu0
      %v2523 = vadd.f32 %v2362, %v2522
      %v2524 = vpop.f32.mrb[0].mxu0
      %v2525 = vpop.f32.mrb[0].mxu0
      %v2526 = vadd.f32 %v2365, %v2525
      %v2527 = vpop.f32.mrb[0].mxu0
      %2528 = vmatprep.mubr.bf16.mxu0 0
      %2529 = vmatmul.mubr.bf16.gmra.mrb[0].mxu0 %v2056
      %v2530 = vpop.f32.mrb[0].mxu0
      %v2531 = vadd.f32 %v2370, %v2530
      %v2532 = vpop.f32.mrb[0].mxu0
      %v2533 = vpop.f32.mrb[0].mxu0
      %v2534 = vadd.f32 %v2373, %v2533
      %v2535 = vpop.f32.mrb[0].mxu0
      %2536 = vmatprep.mubr.bf16.mxu0 0
      %2537 = vmatmul.mubr.bf16.gmra.mrb[0].mxu0 %v2059
      %v2538 = vpop.f32.mrb[0].mxu0
      %v2539 = vadd.f32 %v2378, %v2538
      %v2540 = vpop.f32.mrb[0].mxu0
      %v2541 = vpop.f32.mrb[0].mxu0
      %v2542 = vadd.f32 %v2381, %v2541
      %v2543 = vpop.f32.mrb[0].mxu0
      %2544 = vmatprep.mubr.bf16.mxu0 0
      %2545 = vmatmul.mubr.bf16.gmra.mrb[0].mxu0 %v2062
      %v2546 = vpop.f32.mrb[0].mxu0
      %v2547 = vadd.f32 %v2386, %v2546
      %v2548 = vpop.f32.mrb[0].mxu0
      %v2549 = vpop.f32.mrb[0].mxu0
      %v2550 = vadd.f32 %v2389, %v2549
      %v2551 = vpop.f32.mrb[0].mxu0
      %2552 = vmatprep.mubr.bf16.mxu0 0
      %2553 = vmatmul.mubr.bf16.gmra.mrb[0].mxu0 %v2065
      %v2554 = vpop.f32.mrb[0].mxu0
      %v2555 = vadd.f32 %v2394, %v2554
      %v2556 = vpop.f32.mrb[0].mxu0
      %v2557 = vpop.f32.mrb[0].mxu0
      %v2558 = vadd.f32 %v2397, %v2557
      %v2559 = vpop.f32.mrb[0].mxu0
      %2560 = vmatprep.mubr.bf16.mxu0 0
      %2561 = vmatmul.mubr.bf16.gmra.mrb[0].mxu0 %v2068
      %v2562 = vpop.f32.mrb[0].mxu0
      %v2563 = vadd.f32 %v2402, %v2562
      %v2564 = vpop.f32.mrb[0].mxu0
      %v2565 = vpop.f32.mrb[0].mxu0
      %v2566 = vadd.f32 %v2405, %v2565
      %v2567 = vpop.f32.mrb[0].mxu0
      %2568 = vmatprep.mubr.bf16.mxu0 0
      %2569 = vmatmul.mubr.bf16.gmra.mrb[0].mxu0 %v2071
      %v2570 = vpop.f32.mrb[0].mxu0
      %v2571 = vadd.f32 %v2410, %v2570
      %v2572 = vpop.f32.mrb[0].mxu0
      %v2573 = vpop.f32.mrb[0].mxu0
      %v2574 = vadd.f32 %v2413, %v2573
      %v2575 = vpop.f32.mrb[0].mxu0
      %2576 = vmatprep.mubr.bf16.mxu0 0
      %2577 = vmatmul.mubr.bf16.gmra.mrb[0].mxu0 %v2074
      %v2578 = vpop.f32.mrb[0].mxu0
      %v2579 = vadd.f32 %v2418, %v2578
      %v2580 = vpop.f32.mrb[0].mxu0
      %v2581 = vpop.f32.mrb[0].mxu0
      %v2582 = vadd.f32 %v2421, %v2581
      %v2583 = vpop.f32.mrb[0].mxu0
      %2584 = vmatprep.mubr.bf16.mxu0 0
      %2585 = vmatmul.mubr.bf16.gmra.mrb[0].mxu0 %v2077
      %v2586 = vpop.f32.mrb[0].mxu0
      %v2587 = vadd.f32 %v2426, %v2586
      %v2588 = vpop.f32.mrb[0].mxu0
      %v2589 = vpop.f32.mrb[0].mxu0
      %v2590 = vadd.f32 %v2429, %v2589
      %v2591 = vpop.f32.mrb[0].mxu0
      %2592 = vdwg.mxu0
      %v2593 = vadd.f32 %v1904, %v2467
      %v2594 = vadd.f32 %v1907, %v2470
      %v2595 = vadd.f32 %v1912, %v2475
      %v2596 = vadd.f32 %v1915, %v2478
      %v2597 = vadd.f32 %v1920, %v2483
      %v2598 = vadd.f32 %v1923, %v2486
      %v2599 = vadd.f32 %v1928, %v2491
      %v2600 = vadd.f32 %v1931, %v2494
      %v2601 = vadd.f32 %v1936, %v2499
      %v2602 = vadd.f32 %v1939, %v2502
      %v2603 = vadd.f32 %v1944, %v2507
      %v2604 = vadd.f32 %v1947, %v2510
      %v2605 = vadd.f32 %v1952, %v2515
      %v2606 = vadd.f32 %v1955, %v2518
      %v2607 = vadd.f32 %v1960, %v2523
      %v2608 = vadd.f32 %v1963, %v2526
      %v2609 = vadd.f32 %v1968, %v2531
      %v2610 = vadd.f32 %v1971, %v2534
      %v2611 = vadd.f32 %v1976, %v2539
      %v2612 = vadd.f32 %v1979, %v2542
      %v2613 = vadd.f32 %v1984, %v2547
      %v2614 = vadd.f32 %v1987, %v2550
      %v2615 = vadd.f32 %v1992, %v2555
      %v2616 = vadd.f32 %v1995, %v2558
      %v2617 = vadd.f32 %v2000, %v2563
      %v2618 = vadd.f32 %v2003, %v2566
      %v2619 = vadd.f32 %v2008, %v2571
      %v2620 = vadd.f32 %v2011, %v2574
      %v2621 = vadd.f32 %v2016, %v2579
      %v2622 = vadd.f32 %v2019, %v2582
      %v2623 = vadd.f32 %v2024, %v2587
      %v2624 = vadd.f32 %v2027, %v2590
      %v2625 = vpack.c.bf16 %v2594, %v2593
      %v2626 = vpack.c.bf16 %v2596, %v2595
      %v2627 = vpack.c.bf16 %v2598, %v2597
      %v2628 = vpack.c.bf16 %v2600, %v2599
      %v2629 = vpack.c.bf16 %v2602, %v2601
      %v2630 = vpack.c.bf16 %v2604, %v2603
      %v2631 = vpack.c.bf16 %v2606, %v2605
      %v2632 = vpack.c.bf16 %v2608, %v2607
      %v2633 = vpack.c.bf16 %v2610, %v2609
      %v2634 = vpack.c.bf16 %v2612, %v2611
      %v2635 = vpack.c.bf16 %v2614, %v2613
      %v2636 = vpack.c.bf16 %v2616, %v2615
      %v2637 = vpack.c.bf16 %v2618, %v2617
      %v2638 = vpack.c.bf16 %v2620, %v2619
      %v2639 = vpack.c.bf16 %v2622, %v2621
      %v2640 = vpack.c.bf16 %v2624, %v2623
      %v2657 = vunpack.c.l.b16 %v2625
      %v2658 = vunpack.c.h.b16 %v2625
      %v2659 = vunpack.c.l.b16 %v2626
      %v2660 = vunpack.c.h.b16 %v2626
      %v2661 = vunpack.c.l.b16 %v2627
      %v2662 = vunpack.c.h.b16 %v2627
      %v2663 = vunpack.c.l.b16 %v2628
      %v2664 = vunpack.c.h.b16 %v2628
      %v2665 = vunpack.c.l.b16 %v2629
      %v2666 = vunpack.c.h.b16 %v2629
      %v2667 = vunpack.c.l.b16 %v2630
      %v2668 = vunpack.c.h.b16 %v2630
      %v2669 = vunpack.c.l.b16 %v2631
      %v2670 = vunpack.c.h.b16 %v2631
      %v2671 = vunpack.c.l.b16 %v2632
      %v2672 = vunpack.c.h.b16 %v2632
      %v2673 = vunpack.c.l.b16 %v2633
      %v2674 = vunpack.c.h.b16 %v2633
      %v2675 = vunpack.c.l.b16 %v2634
      %v2676 = vunpack.c.h.b16 %v2634
      %v2677 = vunpack.c.l.b16 %v2635
      %v2678 = vunpack.c.h.b16 %v2635
      %v2679 = vunpack.c.l.b16 %v2636
      %v2680 = vunpack.c.h.b16 %v2636
      %v2681 = vunpack.c.l.b16 %v2637
      %v2682 = vunpack.c.h.b16 %v2637
      %v2683 = vunpack.c.l.b16 %v2638
      %v2684 = vunpack.c.h.b16 %v2638
      %v2685 = vunpack.c.l.b16 %v2639
      %v2686 = vunpack.c.h.b16 %v2639
      %v2687 = vunpack.c.l.b16 %v2640
      %v2688 = vunpack.c.h.b16 %v2640
      %v2689 = vpack.c.b16 %v2657, %v2657
      %v2690 = vpack.c.b16 %v2658, %v2658
      %v2691 = vpack.c.b16 %v2659, %v2659
      %v2692 = vpack.c.b16 %v2660, %v2660
      %v2693 = vpack.c.b16 %v2661, %v2661
      %v2694 = vpack.c.b16 %v2662, %v2662
      %v2695 = vpack.c.b16 %v2663, %v2663
      %v2696 = vpack.c.b16 %v2664, %v2664
      %v2697 = vpack.c.b16 %v2665, %v2665
      %v2698 = vpack.c.b16 %v2666, %v2666
      %v2699 = vpack.c.b16 %v2667, %v2667
      %v2700 = vpack.c.b16 %v2668, %v2668
      %v2701 = vpack.c.b16 %v2669, %v2669
      %v2702 = vpack.c.b16 %v2670, %v2670
      %v2703 = vpack.c.b16 %v2671, %v2671
      %v2704 = vpack.c.b16 %v2672, %v2672
      %v2705 = vpack.c.b16 %v2673, %v2673
      %v2706 = vpack.c.b16 %v2674, %v2674
      %v2707 = vpack.c.b16 %v2675, %v2675
      %v2708 = vpack.c.b16 %v2676, %v2676
      %v2709 = vpack.c.b16 %v2677, %v2677
      %v2710 = vpack.c.b16 %v2678, %v2678
      %v2711 = vpack.c.b16 %v2679, %v2679
      %v2712 = vpack.c.b16 %v2680, %v2680
      %v2713 = vpack.c.b16 %v2681, %v2681
      %v2714 = vpack.c.b16 %v2682, %v2682
      %v2715 = vpack.c.b16 %v2683, %v2683
      %v2716 = vpack.c.b16 %v2684, %v2684
      %v2717 = vpack.c.b16 %v2685, %v2685
      %v2718 = vpack.c.b16 %v2686, %v2686
      %v2719 = vpack.c.b16 %v2687, %v2687
      %v2720 = vpack.c.b16 %v2688, %v2688
      %2753 = vst [vmem:[%s262] sm:$0xf] %v2689
      %2754 = vst [vmem:[%s262 + $0x4] sm:$0xf] %v2690
      %2755 = vst [vmem:[%s262 + $0x8] sm:$0xf] %v2691
      %2756 = vst [vmem:[%s262 + $0xc] sm:$0xf] %v2692
      %2757 = vst [vmem:[%s262 + $0x10] sm:$0xf] %v2693
      %2758 = vst [vmem:[%s262 + $0x14] sm:$0xf] %v2694
      %2759 = vst [vmem:[%s262 + $0x18] sm:$0xf] %v2695
      %2760 = vst [vmem:[%s262 + $0x1c] sm:$0xf] %v2696
      %2761 = vst [vmem:[%s262 + $0x20] sm:$0xf] %v2697
      %2762 = vst [vmem:[%s262 + $0x24] sm:$0xf] %v2698
      %2763 = vst [vmem:[%s262 + $0x28] sm:$0xf] %v2699
      %2764 = vst [vmem:[%s262 + $0x2c] sm:$0xf] %v2700
      %2765 = vst [vmem:[%s262 + $0x30] sm:$0xf] %v2701
      %2766 = vst [vmem:[%s262 + $0x34] sm:$0xf] %v2702
      %2767 = vst [vmem:[%s262 + $0x38] sm:$0xf] %v2703
      %2768 = vst [vmem:[%s262 + $0x3c] sm:$0xf] %v2704
      %2769 = vst [vmem:[%s262 + $0x40] sm:$0xf] %v2705
      %2770 = vst [vmem:[%s262 + $0x44] sm:$0xf] %v2706
      %2771 = vst [vmem:[%s262 + $0x48] sm:$0xf] %v2707
      %2772 = vst [vmem:[%s262 + $0x4c] sm:$0xf] %v2708
      %2773 = vst [vmem:[%s262 + $0x50] sm:$0xf] %v2709
      %2774 = vst [vmem:[%s262 + $0x54] sm:$0xf] %v2710
      %2775 = vst [vmem:[%s262 + $0x58] sm:$0xf] %v2711
      %2776 = vst [vmem:[%s262 + $0x5c] sm:$0xf] %v2712
      %2777 = vst [vmem:[%s262 + $0x60] sm:$0xf] %v2713
      %2778 = vst [vmem:[%s262 + $0x64] sm:$0xf] %v2714
      %2779 = vst [vmem:[%s262 + $0x68] sm:$0xf] %v2715
      %2780 = vst [vmem:[%s262 + $0x6c] sm:$0xf] %v2716
      %2781 = vst [vmem:[%s262 + $0x70] sm:$0xf] %v2717
      %2782 = vst [vmem:[%s262 + $0x74] sm:$0xf] %v2718
      %2783 = vst [vmem:[%s262 + $0x78] sm:$0xf] %v2719
      %2784 = vst [vmem:[%s262 + $0x7c] sm:$0xf] %v2720
      %v2785 = vadd.f32 %v2593, %v2594
      %v2786 = vadd.f32 %v2785, %v2595
      %v2787 = vadd.f32 %v2786, %v2596
      %v2788 = vadd.f32 %v2787, %v2597
      %v2789 = vadd.f32 %v2788, %v2598
      %v2790 = vadd.f32 %v2789, %v2599
      %v2791 = vadd.f32 %v2790, %v2600
      %v2792 = vadd.f32 %v2791, %v2601
      %v2793 = vadd.f32 %v2792, %v2602
      %v2794 = vadd.f32 %v2793, %v2603
      %v2795 = vadd.f32 %v2794, %v2604
      %v2796 = vadd.f32 %v2795, %v2605
      %v2797 = vadd.f32 %v2796, %v2606
      %v2798 = vadd.f32 %v2797, %v2607
      %v2799 = vadd.f32 %v2798, %v2608
      %v2800 = vadd.f32 %v2799, %v2609
      %v2801 = vadd.f32 %v2800, %v2610
      %v2802 = vadd.f32 %v2801, %v2611
      %v2803 = vadd.f32 %v2802, %v2612
      %v2804 = vadd.f32 %v2803, %v2613
      %v2805 = vadd.f32 %v2804, %v2614
      %v2806 = vadd.f32 %v2805, %v2615
      %v2807 = vadd.f32 %v2806, %v2616
      %v2808 = vadd.f32 %v2807, %v2617
      %v2809 = vadd.f32 %v2808, %v2618
      %v2810 = vadd.f32 %v2809, %v2619
      %v2811 = vadd.f32 %v2810, %v2620
      %v2812 = vadd.f32 %v2811, %v2621
      %v2813 = vadd.f32 %v2812, %v2622
      %v2814 = vadd.f32 %v2813, %v2623
      %v2815 = vadd.f32 %v2814, %v2624
      %v2816 = vrot.slane %v2815, 4
      %v2817 = vadd.f32 %v2815, %v2816
      %v2818 = vrot.slane %v2817, 2
      %v2819 = vadd.f32 %v2817, %v2818
      %v2820 = vrot.slane %v2819, 1
      %v2821 = vadd.f32 %v2819, %v2820
      %v2822 = vadd.f32 %v2821, 0.0
      %v2823 = vmul.f32 %v2593, %v2593
      %v2824 = vmul.f32 %v2594, %v2594
      %v2825 = vmul.f32 %v2595, %v2595
      %v2826 = vmul.f32 %v2596, %v2596
      %v2827 = vmul.f32 %v2597, %v2597
      %v2828 = vmul.f32 %v2598, %v2598
      %v2829 = vmul.f32 %v2599, %v2599
      %v2830 = vmul.f32 %v2600, %v2600
      %v2831 = vmul.f32 %v2601, %v2601
      %v2832 = vmul.f32 %v2602, %v2602
      %v2833 = vmul.f32 %v2603, %v2603
      %v2834 = vmul.f32 %v2604, %v2604
      %v2835 = vmul.f32 %v2605, %v2605
      %v2836 = vmul.f32 %v2606, %v2606
      %v2837 = vmul.f32 %v2607, %v2607
      %v2838 = vmul.f32 %v2608, %v2608
      %v2839 = vmul.f32 %v2609, %v2609
      %v2840 = vmul.f32 %v2610, %v2610
      %v2841 = vmul.f32 %v2611, %v2611
      %v2842 = vmul.f32 %v2612, %v2612
      %v2843 = vmul.f32 %v2613, %v2613
      %v2844 = vmul.f32 %v2614, %v2614
      %v2845 = vmul.f32 %v2615, %v2615
      %v2846 = vmul.f32 %v2616, %v2616
      %v2847 = vmul.f32 %v2617, %v2617
      %v2848 = vmul.f32 %v2618, %v2618
      %v2849 = vmul.f32 %v2619, %v2619
      %v2850 = vmul.f32 %v2620, %v2620
      %v2851 = vmul.f32 %v2621, %v2621
      %v2852 = vmul.f32 %v2622, %v2622
      %v2853 = vmul.f32 %v2623, %v2623
      %v2854 = vmul.f32 %v2624, %v2624
      %v2855 = vadd.f32 %v2823, %v2824
      %v2856 = vadd.f32 %v2855, %v2825
      %v2857 = vadd.f32 %v2856, %v2826
      %v2858 = vadd.f32 %v2857, %v2827
      %v2859 = vadd.f32 %v2858, %v2828
      %v2860 = vadd.f32 %v2859, %v2829
      %v2861 = vadd.f32 %v2860, %v2830
      %v2862 = vadd.f32 %v2861, %v2831
      %v2863 = vadd.f32 %v2862, %v2832
      %v2864 = vadd.f32 %v2863, %v2833
      %v2865 = vadd.f32 %v2864, %v2834
      %v2866 = vadd.f32 %v2865, %v2835
      %v2867 = vadd.f32 %v2866, %v2836
      %v2868 = vadd.f32 %v2867, %v2837
      %v2869 = vadd.f32 %v2868, %v2838
      %v2870 = vadd.f32 %v2869, %v2839
      %v2871 = vadd.f32 %v2870, %v2840
      %v2872 = vadd.f32 %v2871, %v2841
      %v2873 = vadd.f32 %v2872, %v2842
      %v2874 = vadd.f32 %v2873, %v2843
      %v2875 = vadd.f32 %v2874, %v2844
      %v2876 = vadd.f32 %v2875, %v2845
      %v2877 = vadd.f32 %v2876, %v2846
      %v2878 = vadd.f32 %v2877, %v2847
      %v2879 = vadd.f32 %v2878, %v2848
      %v2880 = vadd.f32 %v2879, %v2849
      %v2881 = vadd.f32 %v2880, %v2850
      %v2882 = vadd.f32 %v2881, %v2851
      %v2883 = vadd.f32 %v2882, %v2852
      %v2884 = vadd.f32 %v2883, %v2853
      %v2885 = vadd.f32 %v2884, %v2854
      %v2886 = vrot.slane %v2885, 4
      %v2887 = vadd.f32 %v2885, %v2886
      %v2888 = vrot.slane %v2887, 2
      %v2889 = vadd.f32 %v2887, %v2888
      %v2890 = vrot.slane %v2889, 1
      %v2891 = vadd.f32 %v2889, %v2890
      %v2892 = vadd.f32 %v2891, 0.0
      %2893 = vst [vmem:[%s265] sm:$0x1] %v2822
      %2894 = vst [vmem:[%s268] sm:$0x1] %v2892
      %p2895 = scmp.lt.s32.totalorder %s18, 1
      %s2896 = scalar_select %p2895, %s18, 1
      %s2897 = smul.addr %s2896, 32
      %s2898 = smul.addr %s2897, 4
      %s2899 = scalar_lea.vmem %s4, %s2898
      %p2900 = scmp.lt.s32.totalorder %s18, 1
      %s2901 = scalar_select %p2900, %s18, 1
      %s2902 = scalar_lea.vmem %s5, %s2901
      %p2903 = scmp.lt.s32.totalorder %s18, 1
      %s2904 = scalar_select %p2903, %s18, 1
      %s2905 = scalar_lea.vmem %s6, %s2904
      // Predicated region
      $region37: #{basic_block_forward.3} parent=35 // pred_check
        %p2906 = pneg %p125
      $region38: #{basic_block_forward.3} parent=35 // pred_check_branch
        %2908 = sbr.rel (%p2906) target = $region40
      $region39: #{basic_block_forward.3} parent=35 // pred_region
        _
      $region40: #{basic_block_forward.3} parent=35 // pred_fallthru
        _
      // Predicated region
      $region41: #{basic_block_forward.3} parent=35 // pred_check
        %p2909 = pneg %p151
      $region42: #{basic_block_forward.3} parent=35 // pred_check_branch
        %2911 = sbr.rel (%p2909) target = $region44
      $region43: #{basic_block_forward.3} parent=35 // pred_region
        _
      $region44: #{basic_block_forward.3} parent=35 // pred_fallthru
        _
      // Predicated region
      $region45: #{basic_block_forward.3} parent=35 // pred_check
        %p2912 = pneg %p177
      $region46: #{basic_block_forward.3} parent=35 // pred_check_branch
        %2914 = sbr.rel (%p2912) target = $region48
      $region47: #{basic_block_forward.3} parent=35 // pred_region
        _
      $region48: #{basic_block_forward.3} parent=35 // pred_fallthru
        _
    $region36: #{basic_block_forward.3} parent=5 // pred_fallthru
      _
    %p2915 = scmp.le.s32.totalorder 2, %s13
    // Predicated region
    $region49: #{basic_block_forward.3} parent=5 // pred_check
      %p2916 = pneg %p2915
    $region50: #{basic_block_forward.3} parent=5 // pred_check_branch
      %2918 = sbr.rel (%p2916) target = $region52
    $region51: #{basic_block_forward.3} parent=5 // pred_region
      %s2919 = ssub.s32 %s13, 2
      // Predicated region
      $region53: #{basic_block_forward.3} parent=51 // pred_check
        %p2920 = pneg %p131
      $region54: #{basic_block_forward.3} parent=51 // pred_check_branch
        %2922 = sbr.rel (%p2920) target = $region56
      $region55: #{basic_block_forward.3} parent=51 // pred_region
        %p2923 = scmp.lt.s32.totalorder %s19, 1
        %s2924 = scalar_select %p2923, %s19, 1
        %s2925 = smul.addr %s2924, 32
        %s2926 = smul.addr %s2925, 4
        %s2927 = scalar_lea.vmem %s4, %s2926
      $region56: #{basic_block_forward.3} parent=51 // pred_fallthru
        _
      // Predicated region
      $region57: #{basic_block_forward.3} parent=51 // pred_check
        %p2928 = pneg %p157
      $region58: #{basic_block_forward.3} parent=51 // pred_check_branch
        %2930 = sbr.rel (%p2928) target = $region60
      $region59: #{basic_block_forward.3} parent=51 // pred_region
        %p2931 = scmp.lt.s32.totalorder %s19, 1
        %s2932 = scalar_select %p2931, %s19, 1
        %s2933 = scalar_lea.vmem %s5, %s2932
      $region60: #{basic_block_forward.3} parent=51 // pred_fallthru
        _
      // Predicated region
      $region61: #{basic_block_forward.3} parent=51 // pred_check
        %p2934 = pneg %p183
      $region62: #{basic_block_forward.3} parent=51 // pred_check_branch
        %2936 = sbr.rel (%p2934) target = $region64
      $region63: #{basic_block_forward.3} parent=51 // pred_region
        %p2937 = scmp.lt.s32.totalorder %s19, 1
        %s2938 = scalar_select %p2937, %s19, 1
        %s2939 = scalar_lea.vmem %s6, %s2938
      $region64: #{basic_block_forward.3} parent=51 // pred_fallthru
        _
    $region52: #{basic_block_forward.3} parent=5 // pred_fallthru
      _
  $region6: #{basic_block_forward.3} parent=0 // loop_footer
    %s17 = sadd.s32 1, %s13
  $region7: #{basic_block_forward.3} parent=0 // loop_footer_branch
    %12 = sbr.rel target = $region3
  $region8: #{basic_block_forward.3} parent=0 // loop_exit
    _

</llo_original>
